<compile_context>
chip_gen: v7x
topology: tpu7x:2x2x1
jax: 0.10.0
libtpu: 0.0.40
codegen_flags: <defaults>
</compile_context>

<pallas_src>
import functools

import jax
import jax.numpy as jnp
import numpy as np
from jax.experimental import pallas as pl
from jax.experimental.pallas import tpu as pltpu

KH = 7
KW = 7
PAD = 3


def cbam_kernel(x_ref, w1t_ref, b1_ref, w2_ref, b2_ref, cw_ref, cb_ref, o_ref,
                *, H, W):
    # x_ref block: (Bt, C, H*W)  -- lane-dense.
    Bt, C, HW = x_ref.shape

    x = x_ref[...].astype(jnp.float32)                      # (Bt, C, HW)

    w1t = w1t_ref[...]                                      # (C, Cr)  == fc[0].weight.T
    b1 = b1_ref[...]                                        # (1, Cr)
    w2 = w2_ref[...]                                        # (C, Cr)  == fc[2].weight
    b2 = b2_ref[...]                                        # (1, C)

    # --- channel attention (AdaptiveAvg/MaxPool2d(1) == per-image mean/max) ---
    avg_v = jnp.mean(x, axis=2)                             # (Bt, C)
    max_v = jnp.max(x, axis=2)                              # (Bt, C)

    def channel_mlp(v):                                     # (Bt, C) -> (Bt, C)
        # hidden[b, j] = relu(sum_c w1[j, c] * v[b, c] + b1[j])
        h = jnp.maximum(
            jnp.sum(v[:, :, None] * w1t[None, :, :], axis=1) + b1, 0.0)      # (Bt, Cr)
        # out[b, c] = sum_j w2[c, j] * h[b, j] + b2[c]
        return jnp.sum(w2[None, :, :] * h[:, None, :], axis=2) + b2          # (Bt, C)

    channel_out = jax.nn.sigmoid(channel_mlp(avg_v) + channel_mlp(max_v))     # (Bt, C)

    x_att = x * channel_out[:, :, None]                     # (Bt, C, HW), lane-dense

    # --- spatial attention ---
    avg_sp = jnp.mean(x_att, axis=1)                        # (Bt, HW)
    max_sp = jnp.max(x_att, axis=1)                         # (Bt, HW)

    # Only the tiny spatial maps are relaid out to (Bt, H, W).
    ap = avg_sp.reshape(Bt, H, W)
    mp = max_sp.reshape(Bt, H, W)

    def zero_pad(a):                                        # (Bt, H, W) -> (Bt, H+6, W+6)
        zc = jnp.zeros((Bt, H, PAD), jnp.float32)
        zr = jnp.zeros((Bt, PAD, W + 2 * PAD), jnp.float32)
        mid = jnp.concatenate([zc, a, zc], axis=2)
        return jnp.concatenate([zr, mid, zr], axis=1)

    app = zero_pad(ap)
    mpp = zero_pad(mp)

    # Hoist the lane-direction (column) shifts out of the tap loop:
    # 7 pre-shifted maps per branch instead of 49 unaligned 2-D slices each.
    ap_cols = [app[:, :, kj:kj + W] for kj in range(KW)]    # each (Bt, H+6, W)
    mp_cols = [mpp[:, :, kj:kj + W] for kj in range(KW)]

    # 7x7 conv, 2 input channels (avg, max), 1 output channel, padding=3.
    # Four independent accumulators break the serial FP dependency chain.
    accs = [jnp.zeros((Bt, H, W), jnp.float32) for _ in range(4)]
    t = 0
    for ki in range(KH):
        for kj in range(KW):
            accs[t & 3] = accs[t & 3] + cw_ref[0, ki * KW + kj] * \
                ap_cols[kj][:, ki:ki + H, :]
            t += 1
            accs[t & 3] = accs[t & 3] + cw_ref[0, KH * KW + ki * KW + kj] * \
                mp_cols[kj][:, ki:ki + H, :]
            t += 1
    acc = (accs[0] + accs[1]) + (accs[2] + accs[3]) + cb_ref[0, 0]

    # Sequential's nn.Sigmoid followed by the outer torch.sigmoid (double sigmoid).
    spatial_out = jax.nn.sigmoid(jax.nn.sigmoid(acc))       # (Bt, H, W)
    spatial_flat = spatial_out.reshape(Bt, 1, HW)           # tiny relayout only

    # Final multiply + store stay lane-dense on (Bt, C, HW).
    o_ref[...] = (x_att * spatial_flat).astype(o_ref.dtype)


def cbam_pallas(x, w1, b1, w2, b2, cw, cb, *, max_block_bytes=2 << 20):
    B, C, H, W = x.shape
    Cr = w1.shape[0]
    HW = H * W

    # Free row-major reshape: (B, C, H, W) -> (B, C, H*W) so the kernel blocks
    # are lane-dense (last dim a multiple of 128 for H*W >= 128).
    x_flat = x.reshape(B, C, HW)

    # Batch as many images per grid step as comfortably fits (double-buffered
    # blocks stay well under the scoped VMEM limit, incl. v7x's 64 MiB).
    bytes_per_image = C * HW * jnp.dtype(x.dtype).itemsize
    bt = int(max(1, min(B, max_block_bytes // max(1, bytes_per_image))))
    while B % bt != 0:
        bt -= 1

    w1t = jnp.asarray(w1, jnp.float32).T                    # (C, Cr)
    b1r = jnp.asarray(b1, jnp.float32).reshape(1, Cr)
    w2m = jnp.asarray(w2, jnp.float32)                      # (C, Cr)
    b2r = jnp.asarray(b2, jnp.float32).reshape(1, C)
    cwf = jnp.asarray(cw, jnp.float32).reshape(1, 2 * KH * KW)   # (1, 98)
    cbf = jnp.asarray(cb, jnp.float32).reshape(1, 1)

    kernel = functools.partial(cbam_kernel, H=H, W=W)

    grid_spec = pltpu.PrefetchScalarGridSpec(
        num_scalar_prefetch=0,
        grid=(B // bt,),
        in_specs=[
            pl.BlockSpec((bt, C, HW), lambda b: (b, 0, 0)),
            pl.BlockSpec((C, Cr), lambda b: (0, 0)),
            pl.BlockSpec((1, Cr), lambda b: (0, 0)),
            pl.BlockSpec((C, Cr), lambda b: (0, 0)),
            pl.BlockSpec((1, C), lambda b: (0, 0)),
            pl.BlockSpec((1, 2 * KH * KW), lambda b: (0, 0),
                         memory_space=pltpu.MemorySpace.SMEM),
            pl.BlockSpec((1, 1), lambda b: (0, 0),
                         memory_space=pltpu.MemorySpace.SMEM),
        ],
        out_specs=pl.BlockSpec((bt, C, HW), lambda b: (b, 0, 0)),
    )

    itemsize = jnp.dtype(x.dtype).itemsize
    cost = pl.CostEstimate(
        flops=int(B * (2 * 2 * KH * KW * HW + 8 * C * HW)),
        transcendentals=int(B * (C + 2 * HW)),
        bytes_accessed=int(2 * B * C * HW * itemsize),
    )

    out_flat = pl.pallas_call(
        kernel,
        out_shape=jax.ShapeDtypeStruct((B, C, HW), x.dtype),
        grid_spec=grid_spec,
        compiler_params=pltpu.CompilerParams(
            dimension_semantics=("parallel",)),
        cost_estimate=cost,
    )(x_flat, w1t, b1r, w2m, b2r, cwf, cbf)

    return out_flat.reshape(B, C, H, W)


def cbam_reference(x, w1, b1, w2, b2, cw, cb):
    # Pure-JAX reference matching the PyTorch forward.
    avg = jnp.mean(x, axis=(2, 3), keepdims=True)
    mx = jnp.max(x, axis=(2, 3), keepdims=True)

    def fc(v):                                  # v: (B, C, 1, 1)
        vv = v[:, :, 0, 0]
        h = jax.nn.relu(vv @ w1.T + b1)
        o = h @ w2.T + b2
        return o[:, :, None, None]

    ch = jax.nn.sigmoid(fc(avg) + fc(mx))
    x = x * ch
    avg_sp = jnp.mean(x, axis=1, keepdims=True)
    max_sp = jnp.max(x, axis=1, keepdims=True)
    cat = jnp.concatenate([avg_sp, max_sp], axis=1)
    conv = jax.lax.conv_general_dilated(
        cat, cw, window_strides=(1, 1), padding=((PAD, PAD), (PAD, PAD)),
        dimension_numbers=("NCHW", "OIHW", "NCHW")) + cb.reshape(1, 1, 1, 1)
    sp = jax.nn.sigmoid(jax.nn.sigmoid(conv))   # double sigmoid, as in the module
    return x * sp


if __name__ == "__main__":
    B, C, H, W = 4, 16, 16, 16
    Cr = C // 8

    key = jax.random.PRNGKey(0)
    kx, k1, k2, k3, k4, k5, k6 = jax.random.split(key, 7)

    x = jax.random.normal(kx, (B, C, H, W), jnp.float32)
    # fc: Conv2d(C, C//8, 1) -> ReLU -> Conv2d(C//8, C, 1)
    w1 = 0.2 * jax.random.normal(k1, (Cr, C), jnp.float32)
    b1 = 0.1 * jax.random.normal(k2, (Cr,), jnp.float32)
    w2 = 0.2 * jax.random.normal(k3, (C, Cr), jnp.float32)
    b2 = 0.1 * jax.random.normal(k4, (C,), jnp.float32)
    # spatial conv: Conv2d(2, 1, kernel_size=7, padding=3)
    cw = 0.2 * jax.random.normal(k5, (1, 2, KH, KW), jnp.float32)
    cb = 0.1 * jax.random.normal(k6, (1,), jnp.float32)

    out = cbam_pallas(x, w1, b1, w2, b2, cw, cb)
    out = jax.block_until_ready(out)

    ref = jax.block_until_ready(cbam_reference(x, w1, b1, w2, b2, cw, cb))
    err = float(jnp.max(jnp.abs(out - ref)))
    if not np.isfinite(err) or err > 1e-4:
        raise AssertionError(f"Pallas CBAM mismatch vs reference, max abs err = {err}")

    print("KERNEL_OK")
</pallas_src>

<mosaic_0001>
module attributes {stable_mosaic.version = 11 : i64} {
  func.func @cbam_kernel(%arg0: i32, %arg1: memref<4x16x256xf32, #tpu.memory_space<vmem>>, %arg2: memref<16x2xf32, #tpu.memory_space<vmem>>, %arg3: memref<1x2xf32, #tpu.memory_space<vmem>>, %arg4: memref<16x2xf32, #tpu.memory_space<vmem>>, %arg5: memref<1x16xf32, #tpu.memory_space<vmem>>, %arg6: memref<1x98xf32, #tpu.memory_space<smem>>, %arg7: memref<1x1xf32, #tpu.memory_space<smem>>, %arg8: memref<4x16x256xf32, #tpu.memory_space<vmem>>) attributes {dimension_semantics = [#tpu.dimension_semantics<parallel>], iteration_bounds = array<i64: 1>, scalar_prefetch = 0 : i64, scratch_operands = 0 : i64, tpu.core_type = #tpu.core_type<tc>, window_params = [{transform_indices = @transform_0, window_bounds = array<i64: 4, 16, 256>}, {pipeline_mode = #tpu.pipeline_mode<synchronous>, transform_indices = @transform_1, window_bounds = array<i64: 16, 2>}, {pipeline_mode = #tpu.pipeline_mode<synchronous>, transform_indices = @transform_2, window_bounds = array<i64: 1, 2>}, {pipeline_mode = #tpu.pipeline_mode<synchronous>, transform_indices = @transform_3, window_bounds = array<i64: 16, 2>}, {pipeline_mode = #tpu.pipeline_mode<synchronous>, transform_indices = @transform_4, window_bounds = array<i64: 1, 16>}, {transform_indices = @transform_5, window_bounds = array<i64: 1, 98>}, {transform_indices = @transform_6, window_bounds = array<i64: 1, 1>}, {transform_indices = @transform_7, window_bounds = array<i64: 4, 16, 256>}]} {
    %c0 = arith.constant 0 : index
    %c0_0 = arith.constant 0 : index
    %c0_1 = arith.constant 0 : index
    %0 = vector.load %arg1[%c0, %c0_0, %c0_1] : memref<4x16x256xf32, #tpu.memory_space<vmem>>, vector<4x16x256xf32>
    %c0_2 = arith.constant 0 : index
    %c0_3 = arith.constant 0 : index
    %1 = vector.load %arg2[%c0_2, %c0_3] : memref<16x2xf32, #tpu.memory_space<vmem>>, vector<16x2xf32>
    %c0_4 = arith.constant 0 : index
    %c0_5 = arith.constant 0 : index
    %2 = vector.load %arg3[%c0_4, %c0_5] : memref<1x2xf32, #tpu.memory_space<vmem>>, vector<1x2xf32>
    %c0_6 = arith.constant 0 : index
    %c0_7 = arith.constant 0 : index
    %3 = vector.load %arg4[%c0_6, %c0_7] : memref<16x2xf32, #tpu.memory_space<vmem>>, vector<16x2xf32>
    %c0_8 = arith.constant 0 : index
    %c0_9 = arith.constant 0 : index
    %4 = vector.load %arg5[%c0_8, %c0_9] : memref<1x16xf32, #tpu.memory_space<vmem>>, vector<1x16xf32>
    %cst = arith.constant dense<0.000000e+00> : vector<4x16xf32>
    %5 = vector.multi_reduction <add>, %0, %cst [2] : vector<4x16x256xf32> to vector<4x16xf32>
    %cst_10 = arith.constant 2.560000e+02 : f32
    %6 = vector.broadcast %cst_10 : f32 to vector<4x16xf32>
    %7 = arith.divf %5, %6 : vector<4x16xf32>
    %cst_11 = arith.constant dense<0xFF800000> : vector<4x16xf32>
    %8 = vector.multi_reduction <maximumf>, %0, %cst_11 [2] : vector<4x16x256xf32> to vector<4x16xf32>
    %9 = vector.shape_cast %7 : vector<4x16xf32> to vector<4x16x1xf32>
    %10 = vector.shape_cast %1 : vector<16x2xf32> to vector<1x16x2xf32>
    %11 = vector.broadcast %9 : vector<4x16x1xf32> to vector<4x16x2xf32>
    %12 = vector.broadcast %10 : vector<1x16x2xf32> to vector<4x16x2xf32>
    %13 = arith.mulf %11, %12 : vector<4x16x2xf32>
    %cst_12 = arith.constant dense<0.000000e+00> : vector<4x2xf32>
    %14 = vector.multi_reduction <add>, %13, %cst_12 [1] : vector<4x16x2xf32> to vector<4x2xf32>
    %15 = vector.broadcast %2 : vector<1x2xf32> to vector<4x2xf32>
    %16 = arith.addf %14, %15 : vector<4x2xf32>
    %cst_13 = arith.constant 0.000000e+00 : f32
    %17 = vector.broadcast %cst_13 : f32 to vector<4x2xf32>
    %18 = arith.maximumf %16, %17 : vector<4x2xf32>
    %19 = vector.shape_cast %3 : vector<16x2xf32> to vector<1x16x2xf32>
    %20 = vector.shape_cast %18 : vector<4x2xf32> to vector<4x1x2xf32>
    %21 = vector.broadcast %19 : vector<1x16x2xf32> to vector<4x16x2xf32>
    %22 = vector.broadcast %20 : vector<4x1x2xf32> to vector<4x16x2xf32>
    %23 = arith.mulf %21, %22 : vector<4x16x2xf32>
    %cst_14 = arith.constant dense<0.000000e+00> : vector<4x16xf32>
    %24 = vector.multi_reduction <add>, %23, %cst_14 [2] : vector<4x16x2xf32> to vector<4x16xf32>
    %25 = vector.broadcast %4 : vector<1x16xf32> to vector<4x16xf32>
    %26 = arith.addf %24, %25 : vector<4x16xf32>
    %27 = vector.shape_cast %8 : vector<4x16xf32> to vector<4x16x1xf32>
    %28 = vector.shape_cast %1 : vector<16x2xf32> to vector<1x16x2xf32>
    %29 = vector.broadcast %27 : vector<4x16x1xf32> to vector<4x16x2xf32>
    %30 = vector.broadcast %28 : vector<1x16x2xf32> to vector<4x16x2xf32>
    %31 = arith.mulf %29, %30 : vector<4x16x2xf32>
    %cst_15 = arith.constant dense<0.000000e+00> : vector<4x2xf32>
    %32 = vector.multi_reduction <add>, %31, %cst_15 [1] : vector<4x16x2xf32> to vector<4x2xf32>
    %33 = vector.broadcast %2 : vector<1x2xf32> to vector<4x2xf32>
    %34 = arith.addf %32, %33 : vector<4x2xf32>
    %cst_16 = arith.constant 0.000000e+00 : f32
    %35 = vector.broadcast %cst_16 : f32 to vector<4x2xf32>
    %36 = arith.maximumf %34, %35 : vector<4x2xf32>
    %37 = vector.shape_cast %3 : vector<16x2xf32> to vector<1x16x2xf32>
    %38 = vector.shape_cast %36 : vector<4x2xf32> to vector<4x1x2xf32>
    %39 = vector.broadcast %37 : vector<1x16x2xf32> to vector<4x16x2xf32>
    %40 = vector.broadcast %38 : vector<4x1x2xf32> to vector<4x16x2xf32>
    %41 = arith.mulf %39, %40 : vector<4x16x2xf32>
    %cst_17 = arith.constant dense<0.000000e+00> : vector<4x16xf32>
    %42 = vector.multi_reduction <add>, %41, %cst_17 [2] : vector<4x16x2xf32> to vector<4x16xf32>
    %43 = vector.broadcast %4 : vector<1x16xf32> to vector<4x16xf32>
    %44 = arith.addf %42, %43 : vector<4x16xf32>
    %45 = arith.addf %26, %44 : vector<4x16xf32>
    %46 = arith.negf %45 : vector<4x16xf32>
    %47 = math.exp %46 : vector<4x16xf32>
    %cst_18 = arith.constant 1.000000e+00 : f32
    %48 = vector.broadcast %cst_18 : f32 to vector<4x16xf32>
    %49 = arith.addf %48, %47 : vector<4x16xf32>
    %50 = arith.divf %48, %49 : vector<4x16xf32>
    %51 = vector.shape_cast %50 : vector<4x16xf32> to vector<4x16x1xf32>
    %52 = vector.broadcast %51 : vector<4x16x1xf32> to vector<4x16x256xf32>
    %53 = arith.mulf %0, %52 : vector<4x16x256xf32>
    %cst_19 = arith.constant dense<0.000000e+00> : vector<4x256xf32>
    %54 = vector.multi_reduction <add>, %53, %cst_19 [1] : vector<4x16x256xf32> to vector<4x256xf32>
    %cst_20 = arith.constant 1.600000e+01 : f32
    %55 = vector.broadcast %cst_20 : f32 to vector<4x256xf32>
    %56 = arith.divf %54, %55 : vector<4x256xf32>
    %cst_21 = arith.constant dense<0xFF800000> : vector<4x256xf32>
    %57 = vector.multi_reduction <maximumf>, %53, %cst_21 [1] : vector<4x16x256xf32> to vector<4x256xf32>
    %58 = vector.shape_cast %56 : vector<4x256xf32> to vector<4x16x16xf32>
    %59 = vector.shape_cast %57 : vector<4x256xf32> to vector<4x16x16xf32>
    %cst_22 = arith.constant 0.000000e+00 : f32
    %60 = vector.broadcast %cst_22 : f32 to vector<4x16x3xf32>
    %cst_23 = arith.constant 0.000000e+00 : f32
    %61 = vector.broadcast %cst_23 : f32 to vector<4x3x22xf32>
    %62 = tpu.concatenate %60, %58, %60 in 2 : vector<4x16x3xf32>, vector<4x16x16xf32>, vector<4x16x3xf32> -> vector<4x16x22xf32>
    %63 = tpu.concatenate %61, %62, %61 in 1 : vector<4x3x22xf32>, vector<4x16x22xf32>, vector<4x3x22xf32> -> vector<4x22x22xf32>
    %cst_24 = arith.constant 0.000000e+00 : f32
    %64 = vector.broadcast %cst_24 : f32 to vector<4x16x3xf32>
    %cst_25 = arith.constant 0.000000e+00 : f32
    %65 = vector.broadcast %cst_25 : f32 to vector<4x3x22xf32>
    %66 = tpu.concatenate %64, %59, %64 in 2 : vector<4x16x3xf32>, vector<4x16x16xf32>, vector<4x16x3xf32> -> vector<4x16x22xf32>
    %67 = tpu.concatenate %65, %66, %65 in 1 : vector<4x3x22xf32>, vector<4x16x22xf32>, vector<4x3x22xf32> -> vector<4x22x22xf32>
    %68 = vector.extract_strided_slice %63 {offsets = [0, 0, 0], sizes = [4, 22, 16], strides = [1, 1, 1]} : vector<4x22x22xf32> to vector<4x22x16xf32>
    %69 = vector.extract_strided_slice %63 {offsets = [0, 0, 1], sizes = [4, 22, 16], strides = [1, 1, 1]} : vector<4x22x22xf32> to vector<4x22x16xf32>
    %70 = vector.extract_strided_slice %63 {offsets = [0, 0, 2], sizes = [4, 22, 16], strides = [1, 1, 1]} : vector<4x22x22xf32> to vector<4x22x16xf32>
    %71 = vector.extract_strided_slice %63 {offsets = [0, 0, 3], sizes = [4, 22, 16], strides = [1, 1, 1]} : vector<4x22x22xf32> to vector<4x22x16xf32>
    %72 = vector.extract_strided_slice %63 {offsets = [0, 0, 4], sizes = [4, 22, 16], strides = [1, 1, 1]} : vector<4x22x22xf32> to vector<4x22x16xf32>
    %73 = vector.extract_strided_slice %63 {offsets = [0, 0, 5], sizes = [4, 22, 16], strides = [1, 1, 1]} : vector<4x22x22xf32> to vector<4x22x16xf32>
    %74 = vector.extract_strided_slice %63 {offsets = [0, 0, 6], sizes = [4, 22, 16], strides = [1, 1, 1]} : vector<4x22x22xf32> to vector<4x22x16xf32>
    %75 = vector.extract_strided_slice %67 {offsets = [0, 0, 0], sizes = [4, 22, 16], strides = [1, 1, 1]} : vector<4x22x22xf32> to vector<4x22x16xf32>
    %76 = vector.extract_strided_slice %67 {offsets = [0, 0, 1], sizes = [4, 22, 16], strides = [1, 1, 1]} : vector<4x22x22xf32> to vector<4x22x16xf32>
    %77 = vector.extract_strided_slice %67 {offsets = [0, 0, 2], sizes = [4, 22, 16], strides = [1, 1, 1]} : vector<4x22x22xf32> to vector<4x22x16xf32>
    %78 = vector.extract_strided_slice %67 {offsets = [0, 0, 3], sizes = [4, 22, 16], strides = [1, 1, 1]} : vector<4x22x22xf32> to vector<4x22x16xf32>
    %79 = vector.extract_strided_slice %67 {offsets = [0, 0, 4], sizes = [4, 22, 16], strides = [1, 1, 1]} : vector<4x22x22xf32> to vector<4x22x16xf32>
    %80 = vector.extract_strided_slice %67 {offsets = [0, 0, 5], sizes = [4, 22, 16], strides = [1, 1, 1]} : vector<4x22x22xf32> to vector<4x22x16xf32>
    %81 = vector.extract_strided_slice %67 {offsets = [0, 0, 6], sizes = [4, 22, 16], strides = [1, 1, 1]} : vector<4x22x22xf32> to vector<4x22x16xf32>
    %cst_26 = arith.constant 0.000000e+00 : f32
    %82 = vector.broadcast %cst_26 : f32 to vector<4x16x16xf32>
    %cst_27 = arith.constant 0.000000e+00 : f32
    %83 = vector.broadcast %cst_27 : f32 to vector<4x16x16xf32>
    %cst_28 = arith.constant 0.000000e+00 : f32
    %84 = vector.broadcast %cst_28 : f32 to vector<4x16x16xf32>
    %cst_29 = arith.constant 0.000000e+00 : f32
    %85 = vector.broadcast %cst_29 : f32 to vector<4x16x16xf32>
    %c0_30 = arith.constant 0 : index
    %c0_31 = arith.constant 0 : index
    %86 = memref.load %arg6[%c0_30, %c0_31] : memref<1x98xf32, #tpu.memory_space<smem>>
    %87 = vector.extract_strided_slice %68 {offsets = [0, 0, 0], sizes = [4, 16, 16], strides = [1, 1, 1]} : vector<4x22x16xf32> to vector<4x16x16xf32>
    %88 = vector.broadcast %86 : f32 to vector<4x16x16xf32>
    %89 = arith.mulf %88, %87 : vector<4x16x16xf32>
    %90 = arith.addf %82, %89 : vector<4x16x16xf32>
    %c0_32 = arith.constant 0 : index
    %c49 = arith.constant 49 : index
    %91 = memref.load %arg6[%c0_32, %c49] : memref<1x98xf32, #tpu.memory_space<smem>>
    %92 = vector.extract_strided_slice %75 {offsets = [0, 0, 0], sizes = [4, 16, 16], strides = [1, 1, 1]} : vector<4x22x16xf32> to vector<4x16x16xf32>
    %93 = vector.broadcast %91 : f32 to vector<4x16x16xf32>
    %94 = arith.mulf %93, %92 : vector<4x16x16xf32>
    %95 = arith.addf %83, %94 : vector<4x16x16xf32>
    %c0_33 = arith.constant 0 : index
    %c1 = arith.constant 1 : index
    %96 = memref.load %arg6[%c0_33, %c1] : memref<1x98xf32, #tpu.memory_space<smem>>
    %97 = vector.extract_strided_slice %69 {offsets = [0, 0, 0], sizes = [4, 16, 16], strides = [1, 1, 1]} : vector<4x22x16xf32> to vector<4x16x16xf32>
    %98 = vector.broadcast %96 : f32 to vector<4x16x16xf32>
    %99 = arith.mulf %98, %97 : vector<4x16x16xf32>
    %100 = arith.addf %84, %99 : vector<4x16x16xf32>
    %c0_34 = arith.constant 0 : index
    %c50 = arith.constant 50 : index
    %101 = memref.load %arg6[%c0_34, %c50] : memref<1x98xf32, #tpu.memory_space<smem>>
    %102 = vector.extract_strided_slice %76 {offsets = [0, 0, 0], sizes = [4, 16, 16], strides = [1, 1, 1]} : vector<4x22x16xf32> to vector<4x16x16xf32>
    %103 = vector.broadcast %101 : f32 to vector<4x16x16xf32>
    %104 = arith.mulf %103, %102 : vector<4x16x16xf32>
    %105 = arith.addf %85, %104 : vector<4x16x16xf32>
    %c0_35 = arith.constant 0 : index
    %c2 = arith.constant 2 : index
    %106 = memref.load %arg6[%c0_35, %c2] : memref<1x98xf32, #tpu.memory_space<smem>>
    %107 = vector.extract_strided_slice %70 {offsets = [0, 0, 0], sizes = [4, 16, 16], strides = [1, 1, 1]} : vector<4x22x16xf32> to vector<4x16x16xf32>
    %108 = vector.broadcast %106 : f32 to vector<4x16x16xf32>
    %109 = arith.mulf %108, %107 : vector<4x16x16xf32>
    %110 = arith.addf %90, %109 : vector<4x16x16xf32>
    %c0_36 = arith.constant 0 : index
    %c51 = arith.constant 51 : index
    %111 = memref.load %arg6[%c0_36, %c51] : memref<1x98xf32, #tpu.memory_space<smem>>
    %112 = vector.extract_strided_slice %77 {offsets = [0, 0, 0], sizes = [4, 16, 16], strides = [1, 1, 1]} : vector<4x22x16xf32> to vector<4x16x16xf32>
    %113 = vector.broadcast %111 : f32 to vector<4x16x16xf32>
    %114 = arith.mulf %113, %112 : vector<4x16x16xf32>
    %115 = arith.addf %95, %114 : vector<4x16x16xf32>
    %c0_37 = arith.constant 0 : index
    %c3 = arith.constant 3 : index
    %116 = memref.load %arg6[%c0_37, %c3] : memref<1x98xf32, #tpu.memory_space<smem>>
    %117 = vector.extract_strided_slice %71 {offsets = [0, 0, 0], sizes = [4, 16, 16], strides = [1, 1, 1]} : vector<4x22x16xf32> to vector<4x16x16xf32>
    %118 = vector.broadcast %116 : f32 to vector<4x16x16xf32>
    %119 = arith.mulf %118, %117 : vector<4x16x16xf32>
    %120 = arith.addf %100, %119 : vector<4x16x16xf32>
    %c0_38 = arith.constant 0 : index
    %c52 = arith.constant 52 : index
    %121 = memref.load %arg6[%c0_38, %c52] : memref<1x98xf32, #tpu.memory_space<smem>>
    %122 = vector.extract_strided_slice %78 {offsets = [0, 0, 0], sizes = [4, 16, 16], strides = [1, 1, 1]} : vector<4x22x16xf32> to vector<4x16x16xf32>
    %123 = vector.broadcast %121 : f32 to vector<4x16x16xf32>
    %124 = arith.mulf %123, %122 : vector<4x16x16xf32>
    %125 = arith.addf %105, %124 : vector<4x16x16xf32>
    %c0_39 = arith.constant 0 : index
    %c4 = arith.constant 4 : index
    %126 = memref.load %arg6[%c0_39, %c4] : memref<1x98xf32, #tpu.memory_space<smem>>
    %127 = vector.extract_strided_slice %72 {offsets = [0, 0, 0], sizes = [4, 16, 16], strides = [1, 1, 1]} : vector<4x22x16xf32> to vector<4x16x16xf32>
    %128 = vector.broadcast %126 : f32 to vector<4x16x16xf32>
    %129 = arith.mulf %128, %127 : vector<4x16x16xf32>
    %130 = arith.addf %110, %129 : vector<4x16x16xf32>
    %c0_40 = arith.constant 0 : index
    %c53 = arith.constant 53 : index
    %131 = memref.load %arg6[%c0_40, %c53] : memref<1x98xf32, #tpu.memory_space<smem>>
    %132 = vector.extract_strided_slice %79 {offsets = [0, 0, 0], sizes = [4, 16, 16], strides = [1, 1, 1]} : vector<4x22x16xf32> to vector<4x16x16xf32>
    %133 = vector.broadcast %131 : f32 to vector<4x16x16xf32>
    %134 = arith.mulf %133, %132 : vector<4x16x16xf32>
    %135 = arith.addf %115, %134 : vector<4x16x16xf32>
    %c0_41 = arith.constant 0 : index
    %c5 = arith.constant 5 : index
    %136 = memref.load %arg6[%c0_41, %c5] : memref<1x98xf32, #tpu.memory_space<smem>>
    %137 = vector.extract_strided_slice %73 {offsets = [0, 0, 0], sizes = [4, 16, 16], strides = [1, 1, 1]} : vector<4x22x16xf32> to vector<4x16x16xf32>
    %138 = vector.broadcast %136 : f32 to vector<4x16x16xf32>
    %139 = arith.mulf %138, %137 : vector<4x16x16xf32>
    %140 = arith.addf %120, %139 : vector<4x16x16xf32>
    %c0_42 = arith.constant 0 : index
    %c54 = arith.constant 54 : index
    %141 = memref.load %arg6[%c0_42, %c54] : memref<1x98xf32, #tpu.memory_space<smem>>
    %142 = vector.extract_strided_slice %80 {offsets = [0, 0, 0], sizes = [4, 16, 16], strides = [1, 1, 1]} : vector<4x22x16xf32> to vector<4x16x16xf32>
    %143 = vector.broadcast %141 : f32 to vector<4x16x16xf32>
    %144 = arith.mulf %143, %142 : vector<4x16x16xf32>
    %145 = arith.addf %125, %144 : vector<4x16x16xf32>
    %c0_43 = arith.constant 0 : index
    %c6 = arith.constant 6 : index
    %146 = memref.load %arg6[%c0_43, %c6] : memref<1x98xf32, #tpu.memory_space<smem>>
    %147 = vector.extract_strided_slice %74 {offsets = [0, 0, 0], sizes = [4, 16, 16], strides = [1, 1, 1]} : vector<4x22x16xf32> to vector<4x16x16xf32>
    %148 = vector.broadcast %146 : f32 to vector<4x16x16xf32>
    %149 = arith.mulf %148, %147 : vector<4x16x16xf32>
    %150 = arith.addf %130, %149 : vector<4x16x16xf32>
    %c0_44 = arith.constant 0 : index
    %c55 = arith.constant 55 : index
    %151 = memref.load %arg6[%c0_44, %c55] : memref<1x98xf32, #tpu.memory_space<smem>>
    %152 = vector.extract_strided_slice %81 {offsets = [0, 0, 0], sizes = [4, 16, 16], strides = [1, 1, 1]} : vector<4x22x16xf32> to vector<4x16x16xf32>
    %153 = vector.broadcast %151 : f32 to vector<4x16x16xf32>
    %154 = arith.mulf %153, %152 : vector<4x16x16xf32>
    %155 = arith.addf %135, %154 : vector<4x16x16xf32>
    %c0_45 = arith.constant 0 : index
    %c7 = arith.constant 7 : index
    %156 = memref.load %arg6[%c0_45, %c7] : memref<1x98xf32, #tpu.memory_space<smem>>
    %157 = vector.extract_strided_slice %68 {offsets = [0, 1, 0], sizes = [4, 16, 16], strides = [1, 1, 1]} : vector<4x22x16xf32> to vector<4x16x16xf32>
    %158 = vector.broadcast %156 : f32 to vector<4x16x16xf32>
    %159 = arith.mulf %158, %157 : vector<4x16x16xf32>
    %160 = arith.addf %140, %159 : vector<4x16x16xf32>
    %c0_46 = arith.constant 0 : index
    %c56 = arith.constant 56 : index
    %161 = memref.load %arg6[%c0_46, %c56] : memref<1x98xf32, #tpu.memory_space<smem>>
    %162 = vector.extract_strided_slice %75 {offsets = [0, 1, 0], sizes = [4, 16, 16], strides = [1, 1, 1]} : vector<4x22x16xf32> to vector<4x16x16xf32>
    %163 = vector.broadcast %161 : f32 to vector<4x16x16xf32>
    %164 = arith.mulf %163, %162 : vector<4x16x16xf32>
    %165 = arith.addf %145, %164 : vector<4x16x16xf32>
    %c0_47 = arith.constant 0 : index
    %c8 = arith.constant 8 : index
    %166 = memref.load %arg6[%c0_47, %c8] : memref<1x98xf32, #tpu.memory_space<smem>>
    %167 = vector.extract_strided_slice %69 {offsets = [0, 1, 0], sizes = [4, 16, 16], strides = [1, 1, 1]} : vector<4x22x16xf32> to vector<4x16x16xf32>
    %168 = vector.broadcast %166 : f32 to vector<4x16x16xf32>
    %169 = arith.mulf %168, %167 : vector<4x16x16xf32>
    %170 = arith.addf %150, %169 : vector<4x16x16xf32>
    %c0_48 = arith.constant 0 : index
    %c57 = arith.constant 57 : index
    %171 = memref.load %arg6[%c0_48, %c57] : memref<1x98xf32, #tpu.memory_space<smem>>
    %172 = vector.extract_strided_slice %76 {offsets = [0, 1, 0], sizes = [4, 16, 16], strides = [1, 1, 1]} : vector<4x22x16xf32> to vector<4x16x16xf32>
    %173 = vector.broadcast %171 : f32 to vector<4x16x16xf32>
    %174 = arith.mulf %173, %172 : vector<4x16x16xf32>
    %175 = arith.addf %155, %174 : vector<4x16x16xf32>
    %c0_49 = arith.constant 0 : index
    %c9 = arith.constant 9 : index
    %176 = memref.load %arg6[%c0_49, %c9] : memref<1x98xf32, #tpu.memory_space<smem>>
    %177 = vector.extract_strided_slice %70 {offsets = [0, 1, 0], sizes = [4, 16, 16], strides = [1, 1, 1]} : vector<4x22x16xf32> to vector<4x16x16xf32>
    %178 = vector.broadcast %176 : f32 to vector<4x16x16xf32>
    %179 = arith.mulf %178, %177 : vector<4x16x16xf32>
    %180 = arith.addf %160, %179 : vector<4x16x16xf32>
    %c0_50 = arith.constant 0 : index
    %c58 = arith.constant 58 : index
    %181 = memref.load %arg6[%c0_50, %c58] : memref<1x98xf32, #tpu.memory_space<smem>>
    %182 = vector.extract_strided_slice %77 {offsets = [0, 1, 0], sizes = [4, 16, 16], strides = [1, 1, 1]} : vector<4x22x16xf32> to vector<4x16x16xf32>
    %183 = vector.broadcast %181 : f32 to vector<4x16x16xf32>
    %184 = arith.mulf %183, %182 : vector<4x16x16xf32>
    %185 = arith.addf %165, %184 : vector<4x16x16xf32>
    %c0_51 = arith.constant 0 : index
    %c10 = arith.constant 10 : index
    %186 = memref.load %arg6[%c0_51, %c10] : memref<1x98xf32, #tpu.memory_space<smem>>
    %187 = vector.extract_strided_slice %71 {offsets = [0, 1, 0], sizes = [4, 16, 16], strides = [1, 1, 1]} : vector<4x22x16xf32> to vector<4x16x16xf32>
    %188 = vector.broadcast %186 : f32 to vector<4x16x16xf32>
    %189 = arith.mulf %188, %187 : vector<4x16x16xf32>
    %190 = arith.addf %170, %189 : vector<4x16x16xf32>
    %c0_52 = arith.constant 0 : index
    %c59 = arith.constant 59 : index
    %191 = memref.load %arg6[%c0_52, %c59] : memref<1x98xf32, #tpu.memory_space<smem>>
    %192 = vector.extract_strided_slice %78 {offsets = [0, 1, 0], sizes = [4, 16, 16], strides = [1, 1, 1]} : vector<4x22x16xf32> to vector<4x16x16xf32>
    %193 = vector.broadcast %191 : f32 to vector<4x16x16xf32>
    %194 = arith.mulf %193, %192 : vector<4x16x16xf32>
    %195 = arith.addf %175, %194 : vector<4x16x16xf32>
    %c0_53 = arith.constant 0 : index
    %c11 = arith.constant 11 : index
    %196 = memref.load %arg6[%c0_53, %c11] : memref<1x98xf32, #tpu.memory_space<smem>>
    %197 = vector.extract_strided_slice %72 {offsets = [0, 1, 0], sizes = [4, 16, 16], strides = [1, 1, 1]} : vector<4x22x16xf32> to vector<4x16x16xf32>
    %198 = vector.broadcast %196 : f32 to vector<4x16x16xf32>
    %199 = arith.mulf %198, %197 : vector<4x16x16xf32>
    %200 = arith.addf %180, %199 : vector<4x16x16xf32>
    %c0_54 = arith.constant 0 : index
    %c60 = arith.constant 60 : index
    %201 = memref.load %arg6[%c0_54, %c60] : memref<1x98xf32, #tpu.memory_space<smem>>
    %202 = vector.extract_strided_slice %79 {offsets = [0, 1, 0], sizes = [4, 16, 16], strides = [1, 1, 1]} : vector<4x22x16xf32> to vector<4x16x16xf32>
    %203 = vector.broadcast %201 : f32 to vector<4x16x16xf32>
    %204 = arith.mulf %203, %202 : vector<4x16x16xf32>
    %205 = arith.addf %185, %204 : vector<4x16x16xf32>
    %c0_55 = arith.constant 0 : index
    %c12 = arith.constant 12 : index
    %206 = memref.load %arg6[%c0_55, %c12] : memref<1x98xf32, #tpu.memory_space<smem>>
    %207 = vector.extract_strided_slice %73 {offsets = [0, 1, 0], sizes = [4, 16, 16], strides = [1, 1, 1]} : vector<4x22x16xf32> to vector<4x16x16xf32>
    %208 = vector.broadcast %206 : f32 to vector<4x16x16xf32>
    %209 = arith.mulf %208, %207 : vector<4x16x16xf32>
    %210 = arith.addf %190, %209 : vector<4x16x16xf32>
    %c0_56 = arith.constant 0 : index
    %c61 = arith.constant 61 : index
    %211 = memref.load %arg6[%c0_56, %c61] : memref<1x98xf32, #tpu.memory_space<smem>>
    %212 = vector.extract_strided_slice %80 {offsets = [0, 1, 0], sizes = [4, 16, 16], strides = [1, 1, 1]} : vector<4x22x16xf32> to vector<4x16x16xf32>
    %213 = vector.broadcast %211 : f32 to vector<4x16x16xf32>
    %214 = arith.mulf %213, %212 : vector<4x16x16xf32>
    %215 = arith.addf %195, %214 : vector<4x16x16xf32>
    %c0_57 = arith.constant 0 : index
    %c13 = arith.constant 13 : index
    %216 = memref.load %arg6[%c0_57, %c13] : memref<1x98xf32, #tpu.memory_space<smem>>
    %217 = vector.extract_strided_slice %74 {offsets = [0, 1, 0], sizes = [4, 16, 16], strides = [1, 1, 1]} : vector<4x22x16xf32> to vector<4x16x16xf32>
    %218 = vector.broadcast %216 : f32 to vector<4x16x16xf32>
    %219 = arith.mulf %218, %217 : vector<4x16x16xf32>
    %220 = arith.addf %200, %219 : vector<4x16x16xf32>
    %c0_58 = arith.constant 0 : index
    %c62 = arith.constant 62 : index
    %221 = memref.load %arg6[%c0_58, %c62] : memref<1x98xf32, #tpu.memory_space<smem>>
    %222 = vector.extract_strided_slice %81 {offsets = [0, 1, 0], sizes = [4, 16, 16], strides = [1, 1, 1]} : vector<4x22x16xf32> to vector<4x16x16xf32>
    %223 = vector.broadcast %221 : f32 to vector<4x16x16xf32>
    %224 = arith.mulf %223, %222 : vector<4x16x16xf32>
    %225 = arith.addf %205, %224 : vector<4x16x16xf32>
    %c0_59 = arith.constant 0 : index
    %c14 = arith.constant 14 : index
    %226 = memref.load %arg6[%c0_59, %c14] : memref<1x98xf32, #tpu.memory_space<smem>>
    %227 = vector.extract_strided_slice %68 {offsets = [0, 2, 0], sizes = [4, 16, 16], strides = [1, 1, 1]} : vector<4x22x16xf32> to vector<4x16x16xf32>
    %228 = vector.broadcast %226 : f32 to vector<4x16x16xf32>
    %229 = arith.mulf %228, %227 : vector<4x16x16xf32>
    %230 = arith.addf %210, %229 : vector<4x16x16xf32>
    %c0_60 = arith.constant 0 : index
    %c63 = arith.constant 63 : index
    %231 = memref.load %arg6[%c0_60, %c63] : memref<1x98xf32, #tpu.memory_space<smem>>
    %232 = vector.extract_strided_slice %75 {offsets = [0, 2, 0], sizes = [4, 16, 16], strides = [1, 1, 1]} : vector<4x22x16xf32> to vector<4x16x16xf32>
    %233 = vector.broadcast %231 : f32 to vector<4x16x16xf32>
    %234 = arith.mulf %233, %232 : vector<4x16x16xf32>
    %235 = arith.addf %215, %234 : vector<4x16x16xf32>
    %c0_61 = arith.constant 0 : index
    %c15 = arith.constant 15 : index
    %236 = memref.load %arg6[%c0_61, %c15] : memref<1x98xf32, #tpu.memory_space<smem>>
    %237 = vector.extract_strided_slice %69 {offsets = [0, 2, 0], sizes = [4, 16, 16], strides = [1, 1, 1]} : vector<4x22x16xf32> to vector<4x16x16xf32>
    %238 = vector.broadcast %236 : f32 to vector<4x16x16xf32>
    %239 = arith.mulf %238, %237 : vector<4x16x16xf32>
    %240 = arith.addf %220, %239 : vector<4x16x16xf32>
    %c0_62 = arith.constant 0 : index
    %c64 = arith.constant 64 : index
    %241 = memref.load %arg6[%c0_62, %c64] : memref<1x98xf32, #tpu.memory_space<smem>>
    %242 = vector.extract_strided_slice %76 {offsets = [0, 2, 0], sizes = [4, 16, 16], strides = [1, 1, 1]} : vector<4x22x16xf32> to vector<4x16x16xf32>
    %243 = vector.broadcast %241 : f32 to vector<4x16x16xf32>
    %244 = arith.mulf %243, %242 : vector<4x16x16xf32>
    %245 = arith.addf %225, %244 : vector<4x16x16xf32>
    %c0_63 = arith.constant 0 : index
    %c16 = arith.constant 16 : index
    %246 = memref.load %arg6[%c0_63, %c16] : memref<1x98xf32, #tpu.memory_space<smem>>
    %247 = vector.extract_strided_slice %70 {offsets = [0, 2, 0], sizes = [4, 16, 16], strides = [1, 1, 1]} : vector<4x22x16xf32> to vector<4x16x16xf32>
    %248 = vector.broadcast %246 : f32 to vector<4x16x16xf32>
    %249 = arith.mulf %248, %247 : vector<4x16x16xf32>
    %250 = arith.addf %230, %249 : vector<4x16x16xf32>
    %c0_64 = arith.constant 0 : index
    %c65 = arith.constant 65 : index
    %251 = memref.load %arg6[%c0_64, %c65] : memref<1x98xf32, #tpu.memory_space<smem>>
    %252 = vector.extract_strided_slice %77 {offsets = [0, 2, 0], sizes = [4, 16, 16], strides = [1, 1, 1]} : vector<4x22x16xf32> to vector<4x16x16xf32>
    %253 = vector.broadcast %251 : f32 to vector<4x16x16xf32>
    %254 = arith.mulf %253, %252 : vector<4x16x16xf32>
    %255 = arith.addf %235, %254 : vector<4x16x16xf32>
    %c0_65 = arith.constant 0 : index
    %c17 = arith.constant 17 : index
    %256 = memref.load %arg6[%c0_65, %c17] : memref<1x98xf32, #tpu.memory_space<smem>>
    %257 = vector.extract_strided_slice %71 {offsets = [0, 2, 0], sizes = [4, 16, 16], strides = [1, 1, 1]} : vector<4x22x16xf32> to vector<4x16x16xf32>
    %258 = vector.broadcast %256 : f32 to vector<4x16x16xf32>
    %259 = arith.mulf %258, %257 : vector<4x16x16xf32>
    %260 = arith.addf %240, %259 : vector<4x16x16xf32>
    %c0_66 = arith.constant 0 : index
    %c66 = arith.constant 66 : index
    %261 = memref.load %arg6[%c0_66, %c66] : memref<1x98xf32, #tpu.memory_space<smem>>
    %262 = vector.extract_strided_slice %78 {offsets = [0, 2, 0], sizes = [4, 16, 16], strides = [1, 1, 1]} : vector<4x22x16xf32> to vector<4x16x16xf32>
    %263 = vector.broadcast %261 : f32 to vector<4x16x16xf32>
    %264 = arith.mulf %263, %262 : vector<4x16x16xf32>
    %265 = arith.addf %245, %264 : vector<4x16x16xf32>
    %c0_67 = arith.constant 0 : index
    %c18 = arith.constant 18 : index
    %266 = memref.load %arg6[%c0_67, %c18] : memref<1x98xf32, #tpu.memory_space<smem>>
    %267 = vector.extract_strided_slice %72 {offsets = [0, 2, 0], sizes = [4, 16, 16], strides = [1, 1, 1]} : vector<4x22x16xf32> to vector<4x16x16xf32>
    %268 = vector.broadcast %266 : f32 to vector<4x16x16xf32>
    %269 = arith.mulf %268, %267 : vector<4x16x16xf32>
    %270 = arith.addf %250, %269 : vector<4x16x16xf32>
    %c0_68 = arith.constant 0 : index
    %c67 = arith.constant 67 : index
    %271 = memref.load %arg6[%c0_68, %c67] : memref<1x98xf32, #tpu.memory_space<smem>>
    %272 = vector.extract_strided_slice %79 {offsets = [0, 2, 0], sizes = [4, 16, 16], strides = [1, 1, 1]} : vector<4x22x16xf32> to vector<4x16x16xf32>
    %273 = vector.broadcast %271 : f32 to vector<4x16x16xf32>
    %274 = arith.mulf %273, %272 : vector<4x16x16xf32>
    %275 = arith.addf %255, %274 : vector<4x16x16xf32>
    %c0_69 = arith.constant 0 : index
    %c19 = arith.constant 19 : index
    %276 = memref.load %arg6[%c0_69, %c19] : memref<1x98xf32, #tpu.memory_space<smem>>
    %277 = vector.extract_strided_slice %73 {offsets = [0, 2, 0], sizes = [4, 16, 16], strides = [1, 1, 1]} : vector<4x22x16xf32> to vector<4x16x16xf32>
    %278 = vector.broadcast %276 : f32 to vector<4x16x16xf32>
    %279 = arith.mulf %278, %277 : vector<4x16x16xf32>
    %280 = arith.addf %260, %279 : vector<4x16x16xf32>
    %c0_70 = arith.constant 0 : index
    %c68 = arith.constant 68 : index
    %281 = memref.load %arg6[%c0_70, %c68] : memref<1x98xf32, #tpu.memory_space<smem>>
    %282 = vector.extract_strided_slice %80 {offsets = [0, 2, 0], sizes = [4, 16, 16], strides = [1, 1, 1]} : vector<4x22x16xf32> to vector<4x16x16xf32>
    %283 = vector.broadcast %281 : f32 to vector<4x16x16xf32>
    %284 = arith.mulf %283, %282 : vector<4x16x16xf32>
    %285 = arith.addf %265, %284 : vector<4x16x16xf32>
    %c0_71 = arith.constant 0 : index
    %c20 = arith.constant 20 : index
    %286 = memref.load %arg6[%c0_71, %c20] : memref<1x98xf32, #tpu.memory_space<smem>>
    %287 = vector.extract_strided_slice %74 {offsets = [0, 2, 0], sizes = [4, 16, 16], strides = [1, 1, 1]} : vector<4x22x16xf32> to vector<4x16x16xf32>
    %288 = vector.broadcast %286 : f32 to vector<4x16x16xf32>
    %289 = arith.mulf %288, %287 : vector<4x16x16xf32>
    %290 = arith.addf %270, %289 : vector<4x16x16xf32>
    %c0_72 = arith.constant 0 : index
    %c69 = arith.constant 69 : index
    %291 = memref.load %arg6[%c0_72, %c69] : memref<1x98xf32, #tpu.memory_space<smem>>
    %292 = vector.extract_strided_slice %81 {offsets = [0, 2, 0], sizes = [4, 16, 16], strides = [1, 1, 1]} : vector<4x22x16xf32> to vector<4x16x16xf32>
    %293 = vector.broadcast %291 : f32 to vector<4x16x16xf32>
    %294 = arith.mulf %293, %292 : vector<4x16x16xf32>
    %295 = arith.addf %275, %294 : vector<4x16x16xf32>
    %c0_73 = arith.constant 0 : index
    %c21 = arith.constant 21 : index
    %296 = memref.load %arg6[%c0_73, %c21] : memref<1x98xf32, #tpu.memory_space<smem>>
    %297 = vector.extract_strided_slice %68 {offsets = [0, 3, 0], sizes = [4, 16, 16], strides = [1, 1, 1]} : vector<4x22x16xf32> to vector<4x16x16xf32>
    %298 = vector.broadcast %296 : f32 to vector<4x16x16xf32>
    %299 = arith.mulf %298, %297 : vector<4x16x16xf32>
    %300 = arith.addf %280, %299 : vector<4x16x16xf32>
    %c0_74 = arith.constant 0 : index
    %c70 = arith.constant 70 : index
    %301 = memref.load %arg6[%c0_74, %c70] : memref<1x98xf32, #tpu.memory_space<smem>>
    %302 = vector.extract_strided_slice %75 {offsets = [0, 3, 0], sizes = [4, 16, 16], strides = [1, 1, 1]} : vector<4x22x16xf32> to vector<4x16x16xf32>
    %303 = vector.broadcast %301 : f32 to vector<4x16x16xf32>
    %304 = arith.mulf %303, %302 : vector<4x16x16xf32>
    %305 = arith.addf %285, %304 : vector<4x16x16xf32>
    %c0_75 = arith.constant 0 : index
    %c22 = arith.constant 22 : index
    %306 = memref.load %arg6[%c0_75, %c22] : memref<1x98xf32, #tpu.memory_space<smem>>
    %307 = vector.extract_strided_slice %69 {offsets = [0, 3, 0], sizes = [4, 16, 16], strides = [1, 1, 1]} : vector<4x22x16xf32> to vector<4x16x16xf32>
    %308 = vector.broadcast %306 : f32 to vector<4x16x16xf32>
    %309 = arith.mulf %308, %307 : vector<4x16x16xf32>
    %310 = arith.addf %290, %309 : vector<4x16x16xf32>
    %c0_76 = arith.constant 0 : index
    %c71 = arith.constant 71 : index
    %311 = memref.load %arg6[%c0_76, %c71] : memref<1x98xf32, #tpu.memory_space<smem>>
    %312 = vector.extract_strided_slice %76 {offsets = [0, 3, 0], sizes = [4, 16, 16], strides = [1, 1, 1]} : vector<4x22x16xf32> to vector<4x16x16xf32>
    %313 = vector.broadcast %311 : f32 to vector<4x16x16xf32>
    %314 = arith.mulf %313, %312 : vector<4x16x16xf32>
    %315 = arith.addf %295, %314 : vector<4x16x16xf32>
    %c0_77 = arith.constant 0 : index
    %c23 = arith.constant 23 : index
    %316 = memref.load %arg6[%c0_77, %c23] : memref<1x98xf32, #tpu.memory_space<smem>>
    %317 = vector.extract_strided_slice %70 {offsets = [0, 3, 0], sizes = [4, 16, 16], strides = [1, 1, 1]} : vector<4x22x16xf32> to vector<4x16x16xf32>
    %318 = vector.broadcast %316 : f32 to vector<4x16x16xf32>
    %319 = arith.mulf %318, %317 : vector<4x16x16xf32>
    %320 = arith.addf %300, %319 : vector<4x16x16xf32>
    %c0_78 = arith.constant 0 : index
    %c72 = arith.constant 72 : index
    %321 = memref.load %arg6[%c0_78, %c72] : memref<1x98xf32, #tpu.memory_space<smem>>
    %322 = vector.extract_strided_slice %77 {offsets = [0, 3, 0], sizes = [4, 16, 16], strides = [1, 1, 1]} : vector<4x22x16xf32> to vector<4x16x16xf32>
    %323 = vector.broadcast %321 : f32 to vector<4x16x16xf32>
    %324 = arith.mulf %323, %322 : vector<4x16x16xf32>
    %325 = arith.addf %305, %324 : vector<4x16x16xf32>
    %c0_79 = arith.constant 0 : index
    %c24 = arith.constant 24 : index
    %326 = memref.load %arg6[%c0_79, %c24] : memref<1x98xf32, #tpu.memory_space<smem>>
    %327 = vector.extract_strided_slice %71 {offsets = [0, 3, 0], sizes = [4, 16, 16], strides = [1, 1, 1]} : vector<4x22x16xf32> to vector<4x16x16xf32>
    %328 = vector.broadcast %326 : f32 to vector<4x16x16xf32>
    %329 = arith.mulf %328, %327 : vector<4x16x16xf32>
    %330 = arith.addf %310, %329 : vector<4x16x16xf32>
    %c0_80 = arith.constant 0 : index
    %c73 = arith.constant 73 : index
    %331 = memref.load %arg6[%c0_80, %c73] : memref<1x98xf32, #tpu.memory_space<smem>>
    %332 = vector.extract_strided_slice %78 {offsets = [0, 3, 0], sizes = [4, 16, 16], strides = [1, 1, 1]} : vector<4x22x16xf32> to vector<4x16x16xf32>
    %333 = vector.broadcast %331 : f32 to vector<4x16x16xf32>
    %334 = arith.mulf %333, %332 : vector<4x16x16xf32>
    %335 = arith.addf %315, %334 : vector<4x16x16xf32>
    %c0_81 = arith.constant 0 : index
    %c25 = arith.constant 25 : index
    %336 = memref.load %arg6[%c0_81, %c25] : memref<1x98xf32, #tpu.memory_space<smem>>
    %337 = vector.extract_strided_slice %72 {offsets = [0, 3, 0], sizes = [4, 16, 16], strides = [1, 1, 1]} : vector<4x22x16xf32> to vector<4x16x16xf32>
    %338 = vector.broadcast %336 : f32 to vector<4x16x16xf32>
    %339 = arith.mulf %338, %337 : vector<4x16x16xf32>
    %340 = arith.addf %320, %339 : vector<4x16x16xf32>
    %c0_82 = arith.constant 0 : index
    %c74 = arith.constant 74 : index
    %341 = memref.load %arg6[%c0_82, %c74] : memref<1x98xf32, #tpu.memory_space<smem>>
    %342 = vector.extract_strided_slice %79 {offsets = [0, 3, 0], sizes = [4, 16, 16], strides = [1, 1, 1]} : vector<4x22x16xf32> to vector<4x16x16xf32>
    %343 = vector.broadcast %341 : f32 to vector<4x16x16xf32>
    %344 = arith.mulf %343, %342 : vector<4x16x16xf32>
    %345 = arith.addf %325, %344 : vector<4x16x16xf32>
    %c0_83 = arith.constant 0 : index
    %c26 = arith.constant 26 : index
    %346 = memref.load %arg6[%c0_83, %c26] : memref<1x98xf32, #tpu.memory_space<smem>>
    %347 = vector.extract_strided_slice %73 {offsets = [0, 3, 0], sizes = [4, 16, 16], strides = [1, 1, 1]} : vector<4x22x16xf32> to vector<4x16x16xf32>
    %348 = vector.broadcast %346 : f32 to vector<4x16x16xf32>
    %349 = arith.mulf %348, %347 : vector<4x16x16xf32>
    %350 = arith.addf %330, %349 : vector<4x16x16xf32>
    %c0_84 = arith.constant 0 : index
    %c75 = arith.constant 75 : index
    %351 = memref.load %arg6[%c0_84, %c75] : memref<1x98xf32, #tpu.memory_space<smem>>
    %352 = vector.extract_strided_slice %80 {offsets = [0, 3, 0], sizes = [4, 16, 16], strides = [1, 1, 1]} : vector<4x22x16xf32> to vector<4x16x16xf32>
    %353 = vector.broadcast %351 : f32 to vector<4x16x16xf32>
    %354 = arith.mulf %353, %352 : vector<4x16x16xf32>
    %355 = arith.addf %335, %354 : vector<4x16x16xf32>
    %c0_85 = arith.constant 0 : index
    %c27 = arith.constant 27 : index
    %356 = memref.load %arg6[%c0_85, %c27] : memref<1x98xf32, #tpu.memory_space<smem>>
    %357 = vector.extract_strided_slice %74 {offsets = [0, 3, 0], sizes = [4, 16, 16], strides = [1, 1, 1]} : vector<4x22x16xf32> to vector<4x16x16xf32>
    %358 = vector.broadcast %356 : f32 to vector<4x16x16xf32>
    %359 = arith.mulf %358, %357 : vector<4x16x16xf32>
    %360 = arith.addf %340, %359 : vector<4x16x16xf32>
    %c0_86 = arith.constant 0 : index
    %c76 = arith.constant 76 : index
    %361 = memref.load %arg6[%c0_86, %c76] : memref<1x98xf32, #tpu.memory_space<smem>>
    %362 = vector.extract_strided_slice %81 {offsets = [0, 3, 0], sizes = [4, 16, 16], strides = [1, 1, 1]} : vector<4x22x16xf32> to vector<4x16x16xf32>
    %363 = vector.broadcast %361 : f32 to vector<4x16x16xf32>
    %364 = arith.mulf %363, %362 : vector<4x16x16xf32>
    %365 = arith.addf %345, %364 : vector<4x16x16xf32>
    %c0_87 = arith.constant 0 : index
    %c28 = arith.constant 28 : index
    %366 = memref.load %arg6[%c0_87, %c28] : memref<1x98xf32, #tpu.memory_space<smem>>
    %367 = vector.extract_strided_slice %68 {offsets = [0, 4, 0], sizes = [4, 16, 16], strides = [1, 1, 1]} : vector<4x22x16xf32> to vector<4x16x16xf32>
    %368 = vector.broadcast %366 : f32 to vector<4x16x16xf32>
    %369 = arith.mulf %368, %367 : vector<4x16x16xf32>
    %370 = arith.addf %350, %369 : vector<4x16x16xf32>
    %c0_88 = arith.constant 0 : index
    %c77 = arith.constant 77 : index
    %371 = memref.load %arg6[%c0_88, %c77] : memref<1x98xf32, #tpu.memory_space<smem>>
    %372 = vector.extract_strided_slice %75 {offsets = [0, 4, 0], sizes = [4, 16, 16], strides = [1, 1, 1]} : vector<4x22x16xf32> to vector<4x16x16xf32>
    %373 = vector.broadcast %371 : f32 to vector<4x16x16xf32>
    %374 = arith.mulf %373, %372 : vector<4x16x16xf32>
    %375 = arith.addf %355, %374 : vector<4x16x16xf32>
    %c0_89 = arith.constant 0 : index
    %c29 = arith.constant 29 : index
    %376 = memref.load %arg6[%c0_89, %c29] : memref<1x98xf32, #tpu.memory_space<smem>>
    %377 = vector.extract_strided_slice %69 {offsets = [0, 4, 0], sizes = [4, 16, 16], strides = [1, 1, 1]} : vector<4x22x16xf32> to vector<4x16x16xf32>
    %378 = vector.broadcast %376 : f32 to vector<4x16x16xf32>
    %379 = arith.mulf %378, %377 : vector<4x16x16xf32>
    %380 = arith.addf %360, %379 : vector<4x16x16xf32>
    %c0_90 = arith.constant 0 : index
    %c78 = arith.constant 78 : index
    %381 = memref.load %arg6[%c0_90, %c78] : memref<1x98xf32, #tpu.memory_space<smem>>
    %382 = vector.extract_strided_slice %76 {offsets = [0, 4, 0], sizes = [4, 16, 16], strides = [1, 1, 1]} : vector<4x22x16xf32> to vector<4x16x16xf32>
    %383 = vector.broadcast %381 : f32 to vector<4x16x16xf32>
    %384 = arith.mulf %383, %382 : vector<4x16x16xf32>
    %385 = arith.addf %365, %384 : vector<4x16x16xf32>
    %c0_91 = arith.constant 0 : index
    %c30 = arith.constant 30 : index
    %386 = memref.load %arg6[%c0_91, %c30] : memref<1x98xf32, #tpu.memory_space<smem>>
    %387 = vector.extract_strided_slice %70 {offsets = [0, 4, 0], sizes = [4, 16, 16], strides = [1, 1, 1]} : vector<4x22x16xf32> to vector<4x16x16xf32>
    %388 = vector.broadcast %386 : f32 to vector<4x16x16xf32>
    %389 = arith.mulf %388, %387 : vector<4x16x16xf32>
    %390 = arith.addf %370, %389 : vector<4x16x16xf32>
    %c0_92 = arith.constant 0 : index
    %c79 = arith.constant 79 : index
    %391 = memref.load %arg6[%c0_92, %c79] : memref<1x98xf32, #tpu.memory_space<smem>>
    %392 = vector.extract_strided_slice %77 {offsets = [0, 4, 0], sizes = [4, 16, 16], strides = [1, 1, 1]} : vector<4x22x16xf32> to vector<4x16x16xf32>
    %393 = vector.broadcast %391 : f32 to vector<4x16x16xf32>
    %394 = arith.mulf %393, %392 : vector<4x16x16xf32>
    %395 = arith.addf %375, %394 : vector<4x16x16xf32>
    %c0_93 = arith.constant 0 : index
    %c31 = arith.constant 31 : index
    %396 = memref.load %arg6[%c0_93, %c31] : memref<1x98xf32, #tpu.memory_space<smem>>
    %397 = vector.extract_strided_slice %71 {offsets = [0, 4, 0], sizes = [4, 16, 16], strides = [1, 1, 1]} : vector<4x22x16xf32> to vector<4x16x16xf32>
    %398 = vector.broadcast %396 : f32 to vector<4x16x16xf32>
    %399 = arith.mulf %398, %397 : vector<4x16x16xf32>
    %400 = arith.addf %380, %399 : vector<4x16x16xf32>
    %c0_94 = arith.constant 0 : index
    %c80 = arith.constant 80 : index
    %401 = memref.load %arg6[%c0_94, %c80] : memref<1x98xf32, #tpu.memory_space<smem>>
    %402 = vector.extract_strided_slice %78 {offsets = [0, 4, 0], sizes = [4, 16, 16], strides = [1, 1, 1]} : vector<4x22x16xf32> to vector<4x16x16xf32>
    %403 = vector.broadcast %401 : f32 to vector<4x16x16xf32>
    %404 = arith.mulf %403, %402 : vector<4x16x16xf32>
    %405 = arith.addf %385, %404 : vector<4x16x16xf32>
    %c0_95 = arith.constant 0 : index
    %c32 = arith.constant 32 : index
    %406 = memref.load %arg6[%c0_95, %c32] : memref<1x98xf32, #tpu.memory_space<smem>>
    %407 = vector.extract_strided_slice %72 {offsets = [0, 4, 0], sizes = [4, 16, 16], strides = [1, 1, 1]} : vector<4x22x16xf32> to vector<4x16x16xf32>
    %408 = vector.broadcast %406 : f32 to vector<4x16x16xf32>
    %409 = arith.mulf %408, %407 : vector<4x16x16xf32>
    %410 = arith.addf %390, %409 : vector<4x16x16xf32>
    %c0_96 = arith.constant 0 : index
    %c81 = arith.constant 81 : index
    %411 = memref.load %arg6[%c0_96, %c81] : memref<1x98xf32, #tpu.memory_space<smem>>
    %412 = vector.extract_strided_slice %79 {offsets = [0, 4, 0], sizes = [4, 16, 16], strides = [1, 1, 1]} : vector<4x22x16xf32> to vector<4x16x16xf32>
    %413 = vector.broadcast %411 : f32 to vector<4x16x16xf32>
    %414 = arith.mulf %413, %412 : vector<4x16x16xf32>
    %415 = arith.addf %395, %414 : vector<4x16x16xf32>
    %c0_97 = arith.constant 0 : index
    %c33 = arith.constant 33 : index
    %416 = memref.load %arg6[%c0_97, %c33] : memref<1x98xf32, #tpu.memory_space<smem>>
    %417 = vector.extract_strided_slice %73 {offsets = [0, 4, 0], sizes = [4, 16, 16], strides = [1, 1, 1]} : vector<4x22x16xf32> to vector<4x16x16xf32>
    %418 = vector.broadcast %416 : f32 to vector<4x16x16xf32>
    %419 = arith.mulf %418, %417 : vector<4x16x16xf32>
    %420 = arith.addf %400, %419 : vector<4x16x16xf32>
    %c0_98 = arith.constant 0 : index
    %c82 = arith.constant 82 : index
    %421 = memref.load %arg6[%c0_98, %c82] : memref<1x98xf32, #tpu.memory_space<smem>>
    %422 = vector.extract_strided_slice %80 {offsets = [0, 4, 0], sizes = [4, 16, 16], strides = [1, 1, 1]} : vector<4x22x16xf32> to vector<4x16x16xf32>
    %423 = vector.broadcast %421 : f32 to vector<4x16x16xf32>
    %424 = arith.mulf %423, %422 : vector<4x16x16xf32>
    %425 = arith.addf %405, %424 : vector<4x16x16xf32>
    %c0_99 = arith.constant 0 : index
    %c34 = arith.constant 34 : index
    %426 = memref.load %arg6[%c0_99, %c34] : memref<1x98xf32, #tpu.memory_space<smem>>
    %427 = vector.extract_strided_slice %74 {offsets = [0, 4, 0], sizes = [4, 16, 16], strides = [1, 1, 1]} : vector<4x22x16xf32> to vector<4x16x16xf32>
    %428 = vector.broadcast %426 : f32 to vector<4x16x16xf32>
    %429 = arith.mulf %428, %427 : vector<4x16x16xf32>
    %430 = arith.addf %410, %429 : vector<4x16x16xf32>
    %c0_100 = arith.constant 0 : index
    %c83 = arith.constant 83 : index
    %431 = memref.load %arg6[%c0_100, %c83] : memref<1x98xf32, #tpu.memory_space<smem>>
    %432 = vector.extract_strided_slice %81 {offsets = [0, 4, 0], sizes = [4, 16, 16], strides = [1, 1, 1]} : vector<4x22x16xf32> to vector<4x16x16xf32>
    %433 = vector.broadcast %431 : f32 to vector<4x16x16xf32>
    %434 = arith.mulf %433, %432 : vector<4x16x16xf32>
    %435 = arith.addf %415, %434 : vector<4x16x16xf32>
    %c0_101 = arith.constant 0 : index
    %c35 = arith.constant 35 : index
    %436 = memref.load %arg6[%c0_101, %c35] : memref<1x98xf32, #tpu.memory_space<smem>>
    %437 = vector.extract_strided_slice %68 {offsets = [0, 5, 0], sizes = [4, 16, 16], strides = [1, 1, 1]} : vector<4x22x16xf32> to vector<4x16x16xf32>
    %438 = vector.broadcast %436 : f32 to vector<4x16x16xf32>
    %439 = arith.mulf %438, %437 : vector<4x16x16xf32>
    %440 = arith.addf %420, %439 : vector<4x16x16xf32>
    %c0_102 = arith.constant 0 : index
    %c84 = arith.constant 84 : index
    %441 = memref.load %arg6[%c0_102, %c84] : memref<1x98xf32, #tpu.memory_space<smem>>
    %442 = vector.extract_strided_slice %75 {offsets = [0, 5, 0], sizes = [4, 16, 16], strides = [1, 1, 1]} : vector<4x22x16xf32> to vector<4x16x16xf32>
    %443 = vector.broadcast %441 : f32 to vector<4x16x16xf32>
    %444 = arith.mulf %443, %442 : vector<4x16x16xf32>
    %445 = arith.addf %425, %444 : vector<4x16x16xf32>
    %c0_103 = arith.constant 0 : index
    %c36 = arith.constant 36 : index
    %446 = memref.load %arg6[%c0_103, %c36] : memref<1x98xf32, #tpu.memory_space<smem>>
    %447 = vector.extract_strided_slice %69 {offsets = [0, 5, 0], sizes = [4, 16, 16], strides = [1, 1, 1]} : vector<4x22x16xf32> to vector<4x16x16xf32>
    %448 = vector.broadcast %446 : f32 to vector<4x16x16xf32>
    %449 = arith.mulf %448, %447 : vector<4x16x16xf32>
    %450 = arith.addf %430, %449 : vector<4x16x16xf32>
    %c0_104 = arith.constant 0 : index
    %c85 = arith.constant 85 : index
    %451 = memref.load %arg6[%c0_104, %c85] : memref<1x98xf32, #tpu.memory_space<smem>>
    %452 = vector.extract_strided_slice %76 {offsets = [0, 5, 0], sizes = [4, 16, 16], strides = [1, 1, 1]} : vector<4x22x16xf32> to vector<4x16x16xf32>
    %453 = vector.broadcast %451 : f32 to vector<4x16x16xf32>
    %454 = arith.mulf %453, %452 : vector<4x16x16xf32>
    %455 = arith.addf %435, %454 : vector<4x16x16xf32>
    %c0_105 = arith.constant 0 : index
    %c37 = arith.constant 37 : index
    %456 = memref.load %arg6[%c0_105, %c37] : memref<1x98xf32, #tpu.memory_space<smem>>
    %457 = vector.extract_strided_slice %70 {offsets = [0, 5, 0], sizes = [4, 16, 16], strides = [1, 1, 1]} : vector<4x22x16xf32> to vector<4x16x16xf32>
    %458 = vector.broadcast %456 : f32 to vector<4x16x16xf32>
    %459 = arith.mulf %458, %457 : vector<4x16x16xf32>
    %460 = arith.addf %440, %459 : vector<4x16x16xf32>
    %c0_106 = arith.constant 0 : index
    %c86 = arith.constant 86 : index
    %461 = memref.load %arg6[%c0_106, %c86] : memref<1x98xf32, #tpu.memory_space<smem>>
    %462 = vector.extract_strided_slice %77 {offsets = [0, 5, 0], sizes = [4, 16, 16], strides = [1, 1, 1]} : vector<4x22x16xf32> to vector<4x16x16xf32>
    %463 = vector.broadcast %461 : f32 to vector<4x16x16xf32>
    %464 = arith.mulf %463, %462 : vector<4x16x16xf32>
    %465 = arith.addf %445, %464 : vector<4x16x16xf32>
    %c0_107 = arith.constant 0 : index
    %c38 = arith.constant 38 : index
    %466 = memref.load %arg6[%c0_107, %c38] : memref<1x98xf32, #tpu.memory_space<smem>>
    %467 = vector.extract_strided_slice %71 {offsets = [0, 5, 0], sizes = [4, 16, 16], strides = [1, 1, 1]} : vector<4x22x16xf32> to vector<4x16x16xf32>
    %468 = vector.broadcast %466 : f32 to vector<4x16x16xf32>
    %469 = arith.mulf %468, %467 : vector<4x16x16xf32>
    %470 = arith.addf %450, %469 : vector<4x16x16xf32>
    %c0_108 = arith.constant 0 : index
    %c87 = arith.constant 87 : index
    %471 = memref.load %arg6[%c0_108, %c87] : memref<1x98xf32, #tpu.memory_space<smem>>
    %472 = vector.extract_strided_slice %78 {offsets = [0, 5, 0], sizes = [4, 16, 16], strides = [1, 1, 1]} : vector<4x22x16xf32> to vector<4x16x16xf32>
    %473 = vector.broadcast %471 : f32 to vector<4x16x16xf32>
    %474 = arith.mulf %473, %472 : vector<4x16x16xf32>
    %475 = arith.addf %455, %474 : vector<4x16x16xf32>
    %c0_109 = arith.constant 0 : index
    %c39 = arith.constant 39 : index
    %476 = memref.load %arg6[%c0_109, %c39] : memref<1x98xf32, #tpu.memory_space<smem>>
    %477 = vector.extract_strided_slice %72 {offsets = [0, 5, 0], sizes = [4, 16, 16], strides = [1, 1, 1]} : vector<4x22x16xf32> to vector<4x16x16xf32>
    %478 = vector.broadcast %476 : f32 to vector<4x16x16xf32>
    %479 = arith.mulf %478, %477 : vector<4x16x16xf32>
    %480 = arith.addf %460, %479 : vector<4x16x16xf32>
    %c0_110 = arith.constant 0 : index
    %c88 = arith.constant 88 : index
    %481 = memref.load %arg6[%c0_110, %c88] : memref<1x98xf32, #tpu.memory_space<smem>>
    %482 = vector.extract_strided_slice %79 {offsets = [0, 5, 0], sizes = [4, 16, 16], strides = [1, 1, 1]} : vector<4x22x16xf32> to vector<4x16x16xf32>
    %483 = vector.broadcast %481 : f32 to vector<4x16x16xf32>
    %484 = arith.mulf %483, %482 : vector<4x16x16xf32>
    %485 = arith.addf %465, %484 : vector<4x16x16xf32>
    %c0_111 = arith.constant 0 : index
    %c40 = arith.constant 40 : index
    %486 = memref.load %arg6[%c0_111, %c40] : memref<1x98xf32, #tpu.memory_space<smem>>
    %487 = vector.extract_strided_slice %73 {offsets = [0, 5, 0], sizes = [4, 16, 16], strides = [1, 1, 1]} : vector<4x22x16xf32> to vector<4x16x16xf32>
    %488 = vector.broadcast %486 : f32 to vector<4x16x16xf32>
    %489 = arith.mulf %488, %487 : vector<4x16x16xf32>
    %490 = arith.addf %470, %489 : vector<4x16x16xf32>
    %c0_112 = arith.constant 0 : index
    %c89 = arith.constant 89 : index
    %491 = memref.load %arg6[%c0_112, %c89] : memref<1x98xf32, #tpu.memory_space<smem>>
    %492 = vector.extract_strided_slice %80 {offsets = [0, 5, 0], sizes = [4, 16, 16], strides = [1, 1, 1]} : vector<4x22x16xf32> to vector<4x16x16xf32>
    %493 = vector.broadcast %491 : f32 to vector<4x16x16xf32>
    %494 = arith.mulf %493, %492 : vector<4x16x16xf32>
    %495 = arith.addf %475, %494 : vector<4x16x16xf32>
    %c0_113 = arith.constant 0 : index
    %c41 = arith.constant 41 : index
    %496 = memref.load %arg6[%c0_113, %c41] : memref<1x98xf32, #tpu.memory_space<smem>>
    %497 = vector.extract_strided_slice %74 {offsets = [0, 5, 0], sizes = [4, 16, 16], strides = [1, 1, 1]} : vector<4x22x16xf32> to vector<4x16x16xf32>
    %498 = vector.broadcast %496 : f32 to vector<4x16x16xf32>
    %499 = arith.mulf %498, %497 : vector<4x16x16xf32>
    %500 = arith.addf %480, %499 : vector<4x16x16xf32>
    %c0_114 = arith.constant 0 : index
    %c90 = arith.constant 90 : index
    %501 = memref.load %arg6[%c0_114, %c90] : memref<1x98xf32, #tpu.memory_space<smem>>
    %502 = vector.extract_strided_slice %81 {offsets = [0, 5, 0], sizes = [4, 16, 16], strides = [1, 1, 1]} : vector<4x22x16xf32> to vector<4x16x16xf32>
    %503 = vector.broadcast %501 : f32 to vector<4x16x16xf32>
    %504 = arith.mulf %503, %502 : vector<4x16x16xf32>
    %505 = arith.addf %485, %504 : vector<4x16x16xf32>
    %c0_115 = arith.constant 0 : index
    %c42 = arith.constant 42 : index
    %506 = memref.load %arg6[%c0_115, %c42] : memref<1x98xf32, #tpu.memory_space<smem>>
    %507 = vector.extract_strided_slice %68 {offsets = [0, 6, 0], sizes = [4, 16, 16], strides = [1, 1, 1]} : vector<4x22x16xf32> to vector<4x16x16xf32>
    %508 = vector.broadcast %506 : f32 to vector<4x16x16xf32>
    %509 = arith.mulf %508, %507 : vector<4x16x16xf32>
    %510 = arith.addf %490, %509 : vector<4x16x16xf32>
    %c0_116 = arith.constant 0 : index
    %c91 = arith.constant 91 : index
    %511 = memref.load %arg6[%c0_116, %c91] : memref<1x98xf32, #tpu.memory_space<smem>>
    %512 = vector.extract_strided_slice %75 {offsets = [0, 6, 0], sizes = [4, 16, 16], strides = [1, 1, 1]} : vector<4x22x16xf32> to vector<4x16x16xf32>
    %513 = vector.broadcast %511 : f32 to vector<4x16x16xf32>
    %514 = arith.mulf %513, %512 : vector<4x16x16xf32>
    %515 = arith.addf %495, %514 : vector<4x16x16xf32>
    %c0_117 = arith.constant 0 : index
    %c43 = arith.constant 43 : index
    %516 = memref.load %arg6[%c0_117, %c43] : memref<1x98xf32, #tpu.memory_space<smem>>
    %517 = vector.extract_strided_slice %69 {offsets = [0, 6, 0], sizes = [4, 16, 16], strides = [1, 1, 1]} : vector<4x22x16xf32> to vector<4x16x16xf32>
    %518 = vector.broadcast %516 : f32 to vector<4x16x16xf32>
    %519 = arith.mulf %518, %517 : vector<4x16x16xf32>
    %520 = arith.addf %500, %519 : vector<4x16x16xf32>
    %c0_118 = arith.constant 0 : index
    %c92 = arith.constant 92 : index
    %521 = memref.load %arg6[%c0_118, %c92] : memref<1x98xf32, #tpu.memory_space<smem>>
    %522 = vector.extract_strided_slice %76 {offsets = [0, 6, 0], sizes = [4, 16, 16], strides = [1, 1, 1]} : vector<4x22x16xf32> to vector<4x16x16xf32>
    %523 = vector.broadcast %521 : f32 to vector<4x16x16xf32>
    %524 = arith.mulf %523, %522 : vector<4x16x16xf32>
    %525 = arith.addf %505, %524 : vector<4x16x16xf32>
    %c0_119 = arith.constant 0 : index
    %c44 = arith.constant 44 : index
    %526 = memref.load %arg6[%c0_119, %c44] : memref<1x98xf32, #tpu.memory_space<smem>>
    %527 = vector.extract_strided_slice %70 {offsets = [0, 6, 0], sizes = [4, 16, 16], strides = [1, 1, 1]} : vector<4x22x16xf32> to vector<4x16x16xf32>
    %528 = vector.broadcast %526 : f32 to vector<4x16x16xf32>
    %529 = arith.mulf %528, %527 : vector<4x16x16xf32>
    %530 = arith.addf %510, %529 : vector<4x16x16xf32>
    %c0_120 = arith.constant 0 : index
    %c93 = arith.constant 93 : index
    %531 = memref.load %arg6[%c0_120, %c93] : memref<1x98xf32, #tpu.memory_space<smem>>
    %532 = vector.extract_strided_slice %77 {offsets = [0, 6, 0], sizes = [4, 16, 16], strides = [1, 1, 1]} : vector<4x22x16xf32> to vector<4x16x16xf32>
    %533 = vector.broadcast %531 : f32 to vector<4x16x16xf32>
    %534 = arith.mulf %533, %532 : vector<4x16x16xf32>
    %535 = arith.addf %515, %534 : vector<4x16x16xf32>
    %c0_121 = arith.constant 0 : index
    %c45 = arith.constant 45 : index
    %536 = memref.load %arg6[%c0_121, %c45] : memref<1x98xf32, #tpu.memory_space<smem>>
    %537 = vector.extract_strided_slice %71 {offsets = [0, 6, 0], sizes = [4, 16, 16], strides = [1, 1, 1]} : vector<4x22x16xf32> to vector<4x16x16xf32>
    %538 = vector.broadcast %536 : f32 to vector<4x16x16xf32>
    %539 = arith.mulf %538, %537 : vector<4x16x16xf32>
    %540 = arith.addf %520, %539 : vector<4x16x16xf32>
    %c0_122 = arith.constant 0 : index
    %c94 = arith.constant 94 : index
    %541 = memref.load %arg6[%c0_122, %c94] : memref<1x98xf32, #tpu.memory_space<smem>>
    %542 = vector.extract_strided_slice %78 {offsets = [0, 6, 0], sizes = [4, 16, 16], strides = [1, 1, 1]} : vector<4x22x16xf32> to vector<4x16x16xf32>
    %543 = vector.broadcast %541 : f32 to vector<4x16x16xf32>
    %544 = arith.mulf %543, %542 : vector<4x16x16xf32>
    %545 = arith.addf %525, %544 : vector<4x16x16xf32>
    %c0_123 = arith.constant 0 : index
    %c46 = arith.constant 46 : index
    %546 = memref.load %arg6[%c0_123, %c46] : memref<1x98xf32, #tpu.memory_space<smem>>
    %547 = vector.extract_strided_slice %72 {offsets = [0, 6, 0], sizes = [4, 16, 16], strides = [1, 1, 1]} : vector<4x22x16xf32> to vector<4x16x16xf32>
    %548 = vector.broadcast %546 : f32 to vector<4x16x16xf32>
    %549 = arith.mulf %548, %547 : vector<4x16x16xf32>
    %550 = arith.addf %530, %549 : vector<4x16x16xf32>
    %c0_124 = arith.constant 0 : index
    %c95 = arith.constant 95 : index
    %551 = memref.load %arg6[%c0_124, %c95] : memref<1x98xf32, #tpu.memory_space<smem>>
    %552 = vector.extract_strided_slice %79 {offsets = [0, 6, 0], sizes = [4, 16, 16], strides = [1, 1, 1]} : vector<4x22x16xf32> to vector<4x16x16xf32>
    %553 = vector.broadcast %551 : f32 to vector<4x16x16xf32>
    %554 = arith.mulf %553, %552 : vector<4x16x16xf32>
    %555 = arith.addf %535, %554 : vector<4x16x16xf32>
    %c0_125 = arith.constant 0 : index
    %c47 = arith.constant 47 : index
    %556 = memref.load %arg6[%c0_125, %c47] : memref<1x98xf32, #tpu.memory_space<smem>>
    %557 = vector.extract_strided_slice %73 {offsets = [0, 6, 0], sizes = [4, 16, 16], strides = [1, 1, 1]} : vector<4x22x16xf32> to vector<4x16x16xf32>
    %558 = vector.broadcast %556 : f32 to vector<4x16x16xf32>
    %559 = arith.mulf %558, %557 : vector<4x16x16xf32>
    %560 = arith.addf %540, %559 : vector<4x16x16xf32>
    %c0_126 = arith.constant 0 : index
    %c96 = arith.constant 96 : index
    %561 = memref.load %arg6[%c0_126, %c96] : memref<1x98xf32, #tpu.memory_space<smem>>
    %562 = vector.extract_strided_slice %80 {offsets = [0, 6, 0], sizes = [4, 16, 16], strides = [1, 1, 1]} : vector<4x22x16xf32> to vector<4x16x16xf32>
    %563 = vector.broadcast %561 : f32 to vector<4x16x16xf32>
    %564 = arith.mulf %563, %562 : vector<4x16x16xf32>
    %565 = arith.addf %545, %564 : vector<4x16x16xf32>
    %c0_127 = arith.constant 0 : index
    %c48 = arith.constant 48 : index
    %566 = memref.load %arg6[%c0_127, %c48] : memref<1x98xf32, #tpu.memory_space<smem>>
    %567 = vector.extract_strided_slice %74 {offsets = [0, 6, 0], sizes = [4, 16, 16], strides = [1, 1, 1]} : vector<4x22x16xf32> to vector<4x16x16xf32>
    %568 = vector.broadcast %566 : f32 to vector<4x16x16xf32>
    %569 = arith.mulf %568, %567 : vector<4x16x16xf32>
    %570 = arith.addf %550, %569 : vector<4x16x16xf32>
    %c0_128 = arith.constant 0 : index
    %c97 = arith.constant 97 : index
    %571 = memref.load %arg6[%c0_128, %c97] : memref<1x98xf32, #tpu.memory_space<smem>>
    %572 = vector.extract_strided_slice %81 {offsets = [0, 6, 0], sizes = [4, 16, 16], strides = [1, 1, 1]} : vector<4x22x16xf32> to vector<4x16x16xf32>
    %573 = vector.broadcast %571 : f32 to vector<4x16x16xf32>
    %574 = arith.mulf %573, %572 : vector<4x16x16xf32>
    %575 = arith.addf %555, %574 : vector<4x16x16xf32>
    %576 = arith.addf %570, %575 : vector<4x16x16xf32>
    %577 = arith.addf %560, %565 : vector<4x16x16xf32>
    %578 = arith.addf %576, %577 : vector<4x16x16xf32>
    %c0_129 = arith.constant 0 : index
    %c0_130 = arith.constant 0 : index
    %579 = memref.load %arg7[%c0_129, %c0_130] : memref<1x1xf32, #tpu.memory_space<smem>>
    %580 = vector.broadcast %579 : f32 to vector<4x16x16xf32>
    %581 = arith.addf %578, %580 : vector<4x16x16xf32>
    %582 = arith.negf %581 : vector<4x16x16xf32>
    %583 = math.exp %582 : vector<4x16x16xf32>
    %cst_131 = arith.constant 1.000000e+00 : f32
    %584 = vector.broadcast %cst_131 : f32 to vector<4x16x16xf32>
    %585 = arith.addf %584, %583 : vector<4x16x16xf32>
    %586 = arith.divf %584, %585 : vector<4x16x16xf32>
    %587 = arith.negf %586 : vector<4x16x16xf32>
    %588 = math.exp %587 : vector<4x16x16xf32>
    %cst_132 = arith.constant 1.000000e+00 : f32
    %589 = vector.broadcast %cst_132 : f32 to vector<4x16x16xf32>
    %590 = arith.addf %589, %588 : vector<4x16x16xf32>
    %591 = arith.divf %589, %590 : vector<4x16x16xf32>
    %592 = vector.shape_cast %591 : vector<4x16x16xf32> to vector<4x1x256xf32>
    %593 = vector.broadcast %592 : vector<4x1x256xf32> to vector<4x16x256xf32>
    %594 = arith.mulf %53, %593 : vector<4x16x256xf32>
    %c0_133 = arith.constant 0 : index
    %c0_134 = arith.constant 0 : index
    %c0_135 = arith.constant 0 : index
    %595 = vector.load %arg8[%c0_133, %c0_134, %c0_135] : memref<4x16x256xf32, #tpu.memory_space<vmem>>, vector<4x16x256xf32>
    tpu.vector_store %arg8[%c0_133, %c0_134, %c0_135], %594 {strides = array<i32>} : memref<4x16x256xf32, #tpu.memory_space<vmem>>, vector<4x16x256xf32>,
    return
  }
  func.func @transform_0(%arg0: i32) -> (i32, i32, i32) {
    %c0_i32 = arith.constant 0 : i32
    %c0_i32_0 = arith.constant 0 : i32
    %c0_i32_1 = arith.constant 0 : i32
    return %arg0, %c0_i32, %c0_i32_0 : i32, i32, i32
  }
  func.func @transform_1(%arg0: i32) -> (i32, i32) {
    %c0_i32 = arith.constant 0 : i32
    %c0_i32_0 = arith.constant 0 : i32
    %c0_i32_1 = arith.constant 0 : i32
    return %c0_i32, %c0_i32_0 : i32, i32
  }
  func.func @transform_2(%arg0: i32) -> (i32, i32) {
    %c0_i32 = arith.constant 0 : i32
    %c0_i32_0 = arith.constant 0 : i32
    %c0_i32_1 = arith.constant 0 : i32
    return %c0_i32, %c0_i32_0 : i32, i32
  }
  func.func @transform_3(%arg0: i32) -> (i32, i32) {
    %c0_i32 = arith.constant 0 : i32
    %c0_i32_0 = arith.constant 0 : i32
    %c0_i32_1 = arith.constant 0 : i32
    return %c0_i32, %c0_i32_0 : i32, i32
  }
  func.func @transform_4(%arg0: i32) -> (i32, i32) {
    %c0_i32 = arith.constant 0 : i32
    %c0_i32_0 = arith.constant 0 : i32
    %c0_i32_1 = arith.constant 0 : i32
    return %c0_i32, %c0_i32_0 : i32, i32
  }
  func.func @transform_5(%arg0: i32) -> (i32, i32) {
    %c0_i32 = arith.constant 0 : i32
    %c0_i32_0 = arith.constant 0 : i32
    %c0_i32_1 = arith.constant 0 : i32
    return %c0_i32, %c0_i32_0 : i32, i32
  }
  func.func @transform_6(%arg0: i32) -> (i32, i32) {
    %c0_i32 = arith.constant 0 : i32
    %c0_i32_0 = arith.constant 0 : i32
    %c0_i32_1 = arith.constant 0 : i32
    return %c0_i32, %c0_i32_0 : i32, i32
  }
  func.func @transform_7(%arg0: i32) -> (i32, i32, i32) {
    %c0_i32 = arith.constant 0 : i32
    %c0_i32_0 = arith.constant 0 : i32
    %c0_i32_1 = arith.constant 0 : i32
    return %arg0, %c0_i32, %c0_i32_0 : i32, i32, i32
  }
}

</mosaic_0001>

<llo_original>
// kernel: tpu_custom_call.1
$region0: #{tpu_custom_call.1}
  #allocation0 [shape = 'u32[]', space=smem, size = 0x4, offset = 0x4, fixed_abs, tag = 'smem constant byte address 0x4 - core index']
  #allocation1 [shape = 'u32[144,128]{1,0:T(1,128)}', space=vmem, size = 0x12000, scoped, tag = 'internal scratch']
  #allocation2 [shape = 'f32[1,1]{1,0:T(1,128)S(6)}', space=smem, size = 0x200, scoped, tag = 'scoped memory for tpu_custom_call.1']
  %s0 = inlined_call_operand.hbm [shape: f32[4,16,256], index: 0, kind: input, shape index: {}]
  %s1 = inlined_call_operand.vmem [shape: f32[16,2], index: 1, kind: input, shape index: {}]
  %s2 = inlined_call_operand.vmem [shape: f32[1,2], index: 2, kind: input, shape index: {}]
  %s3 = inlined_call_operand.vmem [shape: f32[16,2], index: 3, kind: input, shape index: {}]
  %s4 = inlined_call_operand.vmem [shape: f32[1,16], index: 4, kind: input, shape index: {}]
  %s5 = inlined_call_operand.vmem [shape: f32[1,98], index: 5, kind: input, shape index: {}]
  %s6 = inlined_call_operand.<no memory space> [shape: f32[1,1], index: 6, kind: input, shape index: {}]
  %s7 = inlined_call_operand.hbm [shape: f32[4,16,256], index: 7, kind: output, shape index: {}]
  %s8 = sld [smem:[#allocation0]]
  $region46: #{tpu_custom_call.1} parent=0
    _
  %s10 = ssub.s32 1, %s8
  %s11 = scalar_select 0, %s10, %s8
  %12 = sst [smem:[#allocation2]] %s6
  $region1: #{tpu_custom_call.1} parent=0
    #allocation3 [shape = 'u8[65536]{0}', space=vmem, size = 0x10000, scoped, tag = 'input window, operand 0, single buffered']
    #allocation4 [shape = 's32[1]{0}', space=sflag, size = 0x4, scoped, tag = 'scoped memory for tpu_custom_call.1']
    #allocation5 [shape = 's32[1]{0}', space=sflag, size = 0x4, scoped, tag = 'scoped memory for tpu_custom_call.1']
    #allocation6 [shape = 's32[1]{0}', space=sflag, size = 0x4, scoped, tag = 'scoped memory for tpu_custom_call.1']
    #allocation7 [shape = 'u8[512]{0}', space=smem, size = 0x200, scoped, tag = 'input window, operand 5, single buffered']
    #allocation8 [shape = 'u8[65536]{0}', space=vmem, size = 0x10000, scoped, tag = 'output window, operand 0, single buffered']
    %13 = vsyncpa [#allocation4], 0
    %14 = vsyncpa [#allocation6], 0
    %15 = vsyncpa [#allocation5], 0
    // Predicated region
    $region2: #{tpu_custom_call.1} parent=1 // pred_check
      _
    $region3: #{tpu_custom_call.1} parent=1 // pred_check_branch
      %17 = sbr.rel (0) target = $region5
    $region4: #{tpu_custom_call.1} parent=1 // pred_region
      %s19 = ssub.s32 2048, 2048
      %20 = vsyncadd [#allocation4], %s19
      %s21 = sshll.u32 [#allocation3], 4
      %s22 = int_to_ptr.vmem [resolvable:$true] %s21
      %27 = dma.hbm_to_vmem [thread:$0]  %s0, 2048, %s22, [#allocation4], 256, 256, 16
    $region5: #{tpu_custom_call.1} parent=1 // pred_fallthru
      _
    // Predicated region
    $region6: #{tpu_custom_call.1} parent=1 // pred_check
      _
    $region7: #{tpu_custom_call.1} parent=1 // pred_check_branch
      %29 = sbr.rel (0) target = $region9
    $region8: #{tpu_custom_call.1} parent=1 // pred_region
      _
    $region9: #{tpu_custom_call.1} parent=1 // pred_fallthru
      _
    // Predicated region
    $region10: #{tpu_custom_call.1} parent=1 // pred_check
      _
    $region11: #{tpu_custom_call.1} parent=1 // pred_check_branch
      %31 = sbr.rel (0) target = $region13
    $region12: #{tpu_custom_call.1} parent=1 // pred_region
      _
    $region13: #{tpu_custom_call.1} parent=1 // pred_fallthru
      _
    // Predicated region
    $region14: #{tpu_custom_call.1} parent=1 // pred_check
      _
    $region15: #{tpu_custom_call.1} parent=1 // pred_check_branch
      %33 = sbr.rel (0) target = $region17
    $region16: #{tpu_custom_call.1} parent=1 // pred_region
      _
    $region17: #{tpu_custom_call.1} parent=1 // pred_fallthru
      _
    // Predicated region
    $region18: #{tpu_custom_call.1} parent=1 // pred_check
      _
    $region19: #{tpu_custom_call.1} parent=1 // pred_check_branch
      %35 = sbr.rel (0) target = $region21
    $region20: #{tpu_custom_call.1} parent=1 // pred_region
      _
    $region21: #{tpu_custom_call.1} parent=1 // pred_fallthru
      _
    // Predicated region
    $region22: #{tpu_custom_call.1} parent=1 // pred_check
      _
    $region23: #{tpu_custom_call.1} parent=1 // pred_check_branch
      %37 = sbr.rel (0) target = $region25
    $region24: #{tpu_custom_call.1} parent=1 // pred_region
      %s39 = ssub.s32 16, 16
      %40 = vsyncadd [#allocation6], %s39
      %s42 = sshll.u32 %s5, 4
      %s43 = int_to_ptr.vmem [resolvable:$true] %s42
      %45 = dma.vmem_to_smem %s43, 16, [#allocation7], [#allocation6]
    $region25: #{tpu_custom_call.1} parent=1 // pred_fallthru
      _
    // Predicated region
    $region26: #{tpu_custom_call.1} parent=1 // pred_check
      _
    $region27: #{tpu_custom_call.1} parent=1 // pred_check_branch
      %47 = sbr.rel (0) target = $region29
    $region28: #{tpu_custom_call.1} parent=1 // pred_region
      _
    $region29: #{tpu_custom_call.1} parent=1 // pred_fallthru
      _
    // Predicated region
    $region30: #{tpu_custom_call.1} parent=1 // pred_check
      _
    $region31: #{tpu_custom_call.1} parent=1 // pred_check_branch
      %49 = sbr.rel (0) target = $region33
    $region32: #{tpu_custom_call.1} parent=1 // pred_region
      %50 = dma.done [#allocation4], 2048
    $region33: #{tpu_custom_call.1} parent=1 // pred_fallthru
      _
    // Predicated region
    $region34: #{tpu_custom_call.1} parent=1 // pred_check
      _
    $region35: #{tpu_custom_call.1} parent=1 // pred_check_branch
      %52 = sbr.rel (0) target = $region37
    $region36: #{tpu_custom_call.1} parent=1 // pred_region
      %53 = dma.done [#allocation6], 16
    $region37: #{tpu_custom_call.1} parent=1 // pred_fallthru
      _
    %54 = sfence
    %v55 = vld [vmem:[#allocation3] sm:$0xff]
    %v56 = vld [vmem:[#allocation3 + $0x8] sm:$0xff]
    %v57 = vld [vmem:[#allocation3 + $0x10] sm:$0xff]
    %v58 = vld [vmem:[#allocation3 + $0x18] sm:$0xff]
    %v59 = vld [vmem:[#allocation3 + $0x20] sm:$0xff]
    %v60 = vld [vmem:[#allocation3 + $0x28] sm:$0xff]
    %v61 = vld [vmem:[#allocation3 + $0x30] sm:$0xff]
    %v62 = vld [vmem:[#allocation3 + $0x38] sm:$0xff]
    %v63 = vld [vmem:[#allocation3 + $0x40] sm:$0xff]
    %v64 = vld [vmem:[#allocation3 + $0x48] sm:$0xff]
    %v65 = vld [vmem:[#allocation3 + $0x50] sm:$0xff]
    %v66 = vld [vmem:[#allocation3 + $0x58] sm:$0xff]
    %v67 = vld [vmem:[#allocation3 + $0x60] sm:$0xff]
    %v68 = vld [vmem:[#allocation3 + $0x68] sm:$0xff]
    %v69 = vld [vmem:[#allocation3 + $0x70] sm:$0xff]
    %v70 = vld [vmem:[#allocation3 + $0x78] sm:$0xff]
    %v71 = vld [vmem:[%s1] sm:$0xff]
    %v72 = vld [vmem:[%s1 + $0x8] sm:$0xff]
    %v73 = vld [vmem:[%s2] sm:$0x1]
    %v74 = vld [vmem:[%s3] sm:$0xff]
    %v75 = vld [vmem:[%s3 + $0x8] sm:$0xff]
    %v76 = vld [vmem:[%s4] sm:$0x1]
    %v77 = vadd.f32 %v55, %v56
    %78 = vadd.xlane.f32.xlu0 %v77
    %v79 = vpop.xlane.xlu0 %78
    %v80 = vadd.f32 %v57, %v58
    %81 = vadd.xlane.f32.xlu0 %v80
    %v82 = vpop.xlane.xlu0 %81
    %v83 = vadd.f32 %v59, %v60
    %84 = vadd.xlane.f32.xlu0 %v83
    %v85 = vpop.xlane.xlu0 %84
    %v86 = vadd.f32 %v61, %v62
    %87 = vadd.xlane.f32.xlu0 %v86
    %v88 = vpop.xlane.xlu0 %87
    %v89 = vadd.f32 %v63, %v64
    %90 = vadd.xlane.f32.xlu0 %v89
    %v91 = vpop.xlane.xlu0 %90
    %v92 = vadd.f32 %v65, %v66
    %93 = vadd.xlane.f32.xlu0 %v92
    %v94 = vpop.xlane.xlu0 %93
    %v95 = vadd.f32 %v67, %v68
    %96 = vadd.xlane.f32.xlu0 %v95
    %v97 = vpop.xlane.xlu0 %96
    %v98 = vadd.f32 %v69, %v70
    %99 = vadd.xlane.f32.xlu0 %v98
    %v100 = vpop.xlane.xlu0 %99
    %v101 = vrcp.pop 256.0
    %v102 = vmul.f32 %v79, %v101
    %v103 = vmul.f32 %v82, %v101
    %v104 = vmul.f32 %v85, %v101
    %v105 = vmul.f32 %v88, %v101
    %v106 = vmul.f32 %v91, %v101
    %v107 = vmul.f32 %v94, %v101
    %v108 = vmul.f32 %v97, %v101
    %v109 = vmul.f32 %v100, %v101
    %v110 = vmax.f32 %v55, %v56
    %111 = vmax.xlane.f32.xlu0 %v110
    %v112 = vpop.xlane.xlu0 %111
    %v113 = vmax.f32 %v57, %v58
    %114 = vmax.xlane.f32.xlu0 %v113
    %v115 = vpop.xlane.xlu0 %114
    %v116 = vmax.f32 %v59, %v60
    %117 = vmax.xlane.f32.xlu0 %v116
    %v118 = vpop.xlane.xlu0 %117
    %v119 = vmax.f32 %v61, %v62
    %120 = vmax.xlane.f32.xlu0 %v119
    %v121 = vpop.xlane.xlu0 %120
    %v122 = vmax.f32 %v63, %v64
    %123 = vmax.xlane.f32.xlu0 %v122
    %v124 = vpop.xlane.xlu0 %123
    %v125 = vmax.f32 %v65, %v66
    %126 = vmax.xlane.f32.xlu0 %v125
    %v127 = vpop.xlane.xlu0 %126
    %v128 = vmax.f32 %v67, %v68
    %129 = vmax.xlane.f32.xlu0 %v128
    %v130 = vpop.xlane.xlu0 %129
    %v131 = vmax.f32 %v69, %v70
    %132 = vmax.xlane.f32.xlu0 %v131
    %v133 = vpop.xlane.xlu0 %132
    %v134 = vmul.f32 %v102, %v71
    %v135 = vmul.f32 %v103, %v72
    %v136 = vmul.f32 %v104, %v71
    %v137 = vmul.f32 %v105, %v72
    %v138 = vmul.f32 %v106, %v71
    %v139 = vmul.f32 %v107, %v72
    %v140 = vmul.f32 %v108, %v71
    %v141 = vmul.f32 %v109, %v72
    %vm142 = vcmask 15360
    %v143 = vsel %vm142, %v134, 0.0
    %v144 = vsel %vm142, %v135, 0.0
    %v145 = vadd.f32 %v143, %v144
    %v146 = vrot.slane %v145, 4
    %v147 = vadd.f32 %v145, %v146
    %v148 = vrot.slane %v147, 2
    %v149 = vadd.f32 %v147, %v148
    %v150 = vrot.slane %v149, 1
    %v151 = vadd.f32 %v149, %v150
    %v152 = vsel %vm142, %v136, 0.0
    %v153 = vsel %vm142, %v137, 0.0
    %v154 = vadd.f32 %v152, %v153
    %v155 = vrot.slane %v154, 4
    %v156 = vadd.f32 %v154, %v155
    %v157 = vrot.slane %v156, 2
    %v158 = vadd.f32 %v156, %v157
    %v159 = vrot.slane %v158, 1
    %v160 = vadd.f32 %v158, %v159
    %v161 = vsel %vm142, %v138, 0.0
    %v162 = vsel %vm142, %v139, 0.0
    %v163 = vadd.f32 %v161, %v162
    %v164 = vrot.slane %v163, 4
    %v165 = vadd.f32 %v163, %v164
    %v166 = vrot.slane %v165, 2
    %v167 = vadd.f32 %v165, %v166
    %v168 = vrot.slane %v167, 1
    %v169 = vadd.f32 %v167, %v168
    %v170 = vsel %vm142, %v140, 0.0
    %v171 = vsel %vm142, %v141, 0.0
    %v172 = vadd.f32 %v170, %v171
    %v173 = vrot.slane %v172, 4
    %v174 = vadd.f32 %v172, %v173
    %v175 = vrot.slane %v174, 2
    %v176 = vadd.f32 %v174, %v175
    %v177 = vrot.slane %v176, 1
    %v178 = vadd.f32 %v176, %v177
    %v180 = vlaneseq
    %v181 = vshrl.u32 %v180, 7
    %v182 = vsub.s32 0, %v181
    %v183 = vrot.slane %v73, %v182
    %v185 = vadd.f32 %v151, %v183
    %v186 = vadd.f32 %v160, %v183
    %v187 = vadd.f32 %v169, %v183
    %v188 = vadd.f32 %v178, %v183
    %v189 = vmax.f32 %v185, 0.0
    %v190 = vmax.f32 %v186, 0.0
    %v191 = vmax.f32 %v187, 0.0
    %v192 = vmax.f32 %v188, 0.0
    %v193 = vlaneseq
    %v194 = vshrl.u32 %v193, 7
    %v195 = vsub.s32 0, %v194
    %v196 = vrot.slane %v189, %v195
    %v197 = vlaneseq
    %v198 = vshrl.u32 %v197, 7
    %v199 = vsub.s32 0, %v198
    %v200 = vrot.slane %v190, %v199
    %v201 = vlaneseq
    %v202 = vshrl.u32 %v201, 7
    %v203 = vsub.s32 0, %v202
    %v204 = vrot.slane %v191, %v203
    %v205 = vlaneseq
    %v206 = vshrl.u32 %v205, 7
    %v207 = vsub.s32 0, %v206
    %v208 = vrot.slane %v192, %v207
    %v209 = vmul.f32 %v74, %v196
    %v210 = vmul.f32 %v75, %v196
    %v211 = vmul.f32 %v74, %v200
    %v212 = vmul.f32 %v75, %v200
    %v213 = vmul.f32 %v74, %v204
    %v214 = vmul.f32 %v75, %v204
    %v215 = vmul.f32 %v74, %v208
    %v216 = vmul.f32 %v75, %v208
    %v217 = vsel %vm142, %v209, 0.0
    %218 = vadd.xlane.f32.xlu0 %v217
    %v219 = vpop.xlane.xlu0 %218
    %v220 = vsel %vm142, %v210, 0.0
    %221 = vadd.xlane.f32.xlu0 %v220
    %v222 = vpop.xlane.xlu0 %221
    %v223 = vsel %vm142, %v211, 0.0
    %224 = vadd.xlane.f32.xlu0 %v223
    %v225 = vpop.xlane.xlu0 %224
    %v226 = vsel %vm142, %v212, 0.0
    %227 = vadd.xlane.f32.xlu0 %v226
    %v228 = vpop.xlane.xlu0 %227
    %v229 = vsel %vm142, %v213, 0.0
    %230 = vadd.xlane.f32.xlu0 %v229
    %v231 = vpop.xlane.xlu0 %230
    %v232 = vsel %vm142, %v214, 0.0
    %233 = vadd.xlane.f32.xlu0 %v232
    %v234 = vpop.xlane.xlu0 %233
    %v235 = vsel %vm142, %v215, 0.0
    %236 = vadd.xlane.f32.xlu0 %v235
    %v237 = vpop.xlane.xlu0 %236
    %v238 = vsel %vm142, %v216, 0.0
    %239 = vadd.xlane.f32.xlu0 %v238
    %v240 = vpop.xlane.xlu0 %239
    %v242 = vlaneseq
    %v243 = vshrl.u32 %v242, 7
    %v244 = vsub.s32 0, %v243
    %v245 = vrot.slane %v76, %v244
    %247 = vbcast.lane.b32.xlu0 %v245, 256
    %v248 = vpop.permute.xlu0 %247
    %s250 = sor.u32 256, 8
    %251 = vbcast.lane.b32.xlu0 %v245, %s250
    %v252 = vpop.permute.xlu0 %251
    %v255 = vadd.f32 %v219, %v248
    %v256 = vadd.f32 %v222, %v252
    %v257 = vadd.f32 %v225, %v248
    %v258 = vadd.f32 %v228, %v252
    %v259 = vadd.f32 %v231, %v248
    %v260 = vadd.f32 %v234, %v252
    %v261 = vadd.f32 %v237, %v248
    %v262 = vadd.f32 %v240, %v252
    %v263 = vmul.f32 %v112, %v71
    %v264 = vmul.f32 %v115, %v72
    %v265 = vmul.f32 %v118, %v71
    %v266 = vmul.f32 %v121, %v72
    %v267 = vmul.f32 %v124, %v71
    %v268 = vmul.f32 %v127, %v72
    %v269 = vmul.f32 %v130, %v71
    %v270 = vmul.f32 %v133, %v72
    %v271 = vsel %vm142, %v263, 0.0
    %v272 = vsel %vm142, %v264, 0.0
    %v273 = vadd.f32 %v271, %v272
    %v274 = vrot.slane %v273, 4
    %v275 = vadd.f32 %v273, %v274
    %v276 = vrot.slane %v275, 2
    %v277 = vadd.f32 %v275, %v276
    %v278 = vrot.slane %v277, 1
    %v279 = vadd.f32 %v277, %v278
    %v280 = vsel %vm142, %v265, 0.0
    %v281 = vsel %vm142, %v266, 0.0
    %v282 = vadd.f32 %v280, %v281
    %v283 = vrot.slane %v282, 4
    %v284 = vadd.f32 %v282, %v283
    %v285 = vrot.slane %v284, 2
    %v286 = vadd.f32 %v284, %v285
    %v287 = vrot.slane %v286, 1
    %v288 = vadd.f32 %v286, %v287
    %v289 = vsel %vm142, %v267, 0.0
    %v290 = vsel %vm142, %v268, 0.0
    %v291 = vadd.f32 %v289, %v290
    %v292 = vrot.slane %v291, 4
    %v293 = vadd.f32 %v291, %v292
    %v294 = vrot.slane %v293, 2
    %v295 = vadd.f32 %v293, %v294
    %v296 = vrot.slane %v295, 1
    %v297 = vadd.f32 %v295, %v296
    %v298 = vsel %vm142, %v269, 0.0
    %v299 = vsel %vm142, %v270, 0.0
    %v300 = vadd.f32 %v298, %v299
    %v301 = vrot.slane %v300, 4
    %v302 = vadd.f32 %v300, %v301
    %v303 = vrot.slane %v302, 2
    %v304 = vadd.f32 %v302, %v303
    %v305 = vrot.slane %v304, 1
    %v306 = vadd.f32 %v304, %v305
    %v307 = vadd.f32 %v279, %v183
    %v308 = vadd.f32 %v288, %v183
    %v309 = vadd.f32 %v297, %v183
    %v310 = vadd.f32 %v306, %v183
    %v311 = vmax.f32 %v307, 0.0
    %v312 = vmax.f32 %v308, 0.0
    %v313 = vmax.f32 %v309, 0.0
    %v314 = vmax.f32 %v310, 0.0
    %v315 = vlaneseq
    %v316 = vshrl.u32 %v315, 7
    %v317 = vsub.s32 0, %v316
    %v318 = vrot.slane %v311, %v317
    %v319 = vlaneseq
    %v320 = vshrl.u32 %v319, 7
    %v321 = vsub.s32 0, %v320
    %v322 = vrot.slane %v312, %v321
    %v323 = vlaneseq
    %v324 = vshrl.u32 %v323, 7
    %v325 = vsub.s32 0, %v324
    %v326 = vrot.slane %v313, %v325
    %v327 = vlaneseq
    %v328 = vshrl.u32 %v327, 7
    %v329 = vsub.s32 0, %v328
    %v330 = vrot.slane %v314, %v329
    %v331 = vmul.f32 %v74, %v318
    %v332 = vmul.f32 %v75, %v318
    %v333 = vmul.f32 %v74, %v322
    %v334 = vmul.f32 %v75, %v322
    %v335 = vmul.f32 %v74, %v326
    %v336 = vmul.f32 %v75, %v326
    %v337 = vmul.f32 %v74, %v330
    %v338 = vmul.f32 %v75, %v330
    %v339 = vsel %vm142, %v331, 0.0
    %340 = vadd.xlane.f32.xlu0 %v339
    %v341 = vpop.xlane.xlu0 %340
    %v342 = vsel %vm142, %v332, 0.0
    %343 = vadd.xlane.f32.xlu0 %v342
    %v344 = vpop.xlane.xlu0 %343
    %v345 = vsel %vm142, %v333, 0.0
    %346 = vadd.xlane.f32.xlu0 %v345
    %v347 = vpop.xlane.xlu0 %346
    %v348 = vsel %vm142, %v334, 0.0
    %349 = vadd.xlane.f32.xlu0 %v348
    %v350 = vpop.xlane.xlu0 %349
    %v351 = vsel %vm142, %v335, 0.0
    %352 = vadd.xlane.f32.xlu0 %v351
    %v353 = vpop.xlane.xlu0 %352
    %v354 = vsel %vm142, %v336, 0.0
    %355 = vadd.xlane.f32.xlu0 %v354
    %v356 = vpop.xlane.xlu0 %355
    %v357 = vsel %vm142, %v337, 0.0
    %358 = vadd.xlane.f32.xlu0 %v357
    %v359 = vpop.xlane.xlu0 %358
    %v360 = vsel %vm142, %v338, 0.0
    %361 = vadd.xlane.f32.xlu0 %v360
    %v362 = vpop.xlane.xlu0 %361
    %v363 = vadd.f32 %v341, %v248
    %v364 = vadd.f32 %v344, %v252
    %v365 = vadd.f32 %v347, %v248
    %v366 = vadd.f32 %v350, %v252
    %v367 = vadd.f32 %v353, %v248
    %v368 = vadd.f32 %v356, %v252
    %v369 = vadd.f32 %v359, %v248
    %v370 = vadd.f32 %v362, %v252
    %v371 = vadd.f32 %v255, %v363
    %v372 = vadd.f32 %v256, %v364
    %v373 = vadd.f32 %v257, %v365
    %v374 = vadd.f32 %v258, %v366
    %v375 = vadd.f32 %v259, %v367
    %v376 = vadd.f32 %v260, %v368
    %v377 = vadd.f32 %v261, %v369
    %v378 = vadd.f32 %v262, %v370
    %v379 = vxor.u32 %v371, 2147483648
    %v380 = vxor.u32 %v372, 2147483648
    %v381 = vxor.u32 %v373, 2147483648
    %v382 = vxor.u32 %v374, 2147483648
    %v383 = vxor.u32 %v375, 2147483648
    %v384 = vxor.u32 %v376, 2147483648
    %v385 = vxor.u32 %v377, 2147483648
    %v386 = vxor.u32 %v378, 2147483648
    %v387 = vmul.f32 %v379, 1.442695
    %v388 = vpow.pop %v387
    %v389 = vmul.f32 %v380, 1.442695
    %v390 = vpow.pop %v389
    %v391 = vmul.f32 %v381, 1.442695
    %v392 = vpow.pop %v391
    %v393 = vmul.f32 %v382, 1.442695
    %v394 = vpow.pop %v393
    %v395 = vmul.f32 %v383, 1.442695
    %v396 = vpow.pop %v395
    %v397 = vmul.f32 %v384, 1.442695
    %v398 = vpow.pop %v397
    %v399 = vmul.f32 %v385, 1.442695
    %v400 = vpow.pop %v399
    %v401 = vmul.f32 %v386, 1.442695
    %v402 = vpow.pop %v401
    %v403 = vadd.f32 %v388, 1.0
    %v404 = vadd.f32 %v390, 1.0
    %v405 = vadd.f32 %v392, 1.0
    %v406 = vadd.f32 %v394, 1.0
    %v407 = vadd.f32 %v396, 1.0
    %v408 = vadd.f32 %v398, 1.0
    %v409 = vadd.f32 %v400, 1.0
    %v410 = vadd.f32 %v402, 1.0
    %v411 = vrcp.pop %v403
    %v412 = vmul.f32 1.0, %v411
    %v413 = vrcp.pop %v404
    %v414 = vmul.f32 1.0, %v413
    %v415 = vrcp.pop %v405
    %v416 = vmul.f32 1.0, %v415
    %v417 = vrcp.pop %v406
    %v418 = vmul.f32 1.0, %v417
    %v419 = vrcp.pop %v407
    %v420 = vmul.f32 1.0, %v419
    %v421 = vrcp.pop %v408
    %v422 = vmul.f32 1.0, %v421
    %v423 = vrcp.pop %v409
    %v424 = vmul.f32 1.0, %v423
    %v425 = vrcp.pop %v410
    %v426 = vmul.f32 1.0, %v425
    %428 = vset.pattern.permute.xlu0 0
    %429 = vperm.xlu0 %428, %v412
    %v430 = vpop.permute.xlu0 %429
    %433 = vset.pattern.permute.xlu0 0
    %434 = vperm.xlu0 %433, %v414
    %v435 = vpop.permute.xlu0 %434
    %438 = vset.pattern.permute.xlu0 0
    %439 = vperm.xlu0 %438, %v416
    %v440 = vpop.permute.xlu0 %439
    %443 = vset.pattern.permute.xlu0 0
    %444 = vperm.xlu0 %443, %v418
    %v445 = vpop.permute.xlu0 %444
    %448 = vset.pattern.permute.xlu0 0
    %449 = vperm.xlu0 %448, %v420
    %v450 = vpop.permute.xlu0 %449
    %453 = vset.pattern.permute.xlu0 0
    %454 = vperm.xlu0 %453, %v422
    %v455 = vpop.permute.xlu0 %454
    %458 = vset.pattern.permute.xlu0 0
    %459 = vperm.xlu0 %458, %v424
    %v460 = vpop.permute.xlu0 %459
    %463 = vset.pattern.permute.xlu0 0
    %464 = vperm.xlu0 %463, %v426
    %v465 = vpop.permute.xlu0 %464
    %v467 = vmul.f32 %v55, %v430
    %v468 = vmul.f32 %v56, %v430
    %v469 = vmul.f32 %v57, %v435
    %v470 = vmul.f32 %v58, %v435
    %v471 = vmul.f32 %v59, %v440
    %v472 = vmul.f32 %v60, %v440
    %v473 = vmul.f32 %v61, %v445
    %v474 = vmul.f32 %v62, %v445
    %v475 = vmul.f32 %v63, %v450
    %v476 = vmul.f32 %v64, %v450
    %v477 = vmul.f32 %v65, %v455
    %v478 = vmul.f32 %v66, %v455
    %v479 = vmul.f32 %v67, %v460
    %v480 = vmul.f32 %v68, %v460
    %v481 = vmul.f32 %v69, %v465
    %v482 = vmul.f32 %v70, %v465
    %v483 = vadd.f32 %v467, %v469
    %v484 = vrot.slane %v483, 4
    %v485 = vadd.f32 %v483, %v484
    %v486 = vrot.slane %v485, 2
    %v487 = vadd.f32 %v485, %v486
    %v488 = vrot.slane %v487, 1
    %v489 = vadd.f32 %v487, %v488
    %v490 = vadd.f32 %v468, %v470
    %v491 = vrot.slane %v490, 4
    %v492 = vadd.f32 %v490, %v491
    %v493 = vrot.slane %v492, 2
    %v494 = vadd.f32 %v492, %v493
    %v495 = vrot.slane %v494, 1
    %v496 = vadd.f32 %v494, %v495
    %v497 = vadd.f32 %v471, %v473
    %v498 = vrot.slane %v497, 4
    %v499 = vadd.f32 %v497, %v498
    %v500 = vrot.slane %v499, 2
    %v501 = vadd.f32 %v499, %v500
    %v502 = vrot.slane %v501, 1
    %v503 = vadd.f32 %v501, %v502
    %v504 = vadd.f32 %v472, %v474
    %v505 = vrot.slane %v504, 4
    %v506 = vadd.f32 %v504, %v505
    %v507 = vrot.slane %v506, 2
    %v508 = vadd.f32 %v506, %v507
    %v509 = vrot.slane %v508, 1
    %v510 = vadd.f32 %v508, %v509
    %v511 = vadd.f32 %v475, %v477
    %v512 = vrot.slane %v511, 4
    %v513 = vadd.f32 %v511, %v512
    %v514 = vrot.slane %v513, 2
    %v515 = vadd.f32 %v513, %v514
    %v516 = vrot.slane %v515, 1
    %v517 = vadd.f32 %v515, %v516
    %v518 = vadd.f32 %v476, %v478
    %v519 = vrot.slane %v518, 4
    %v520 = vadd.f32 %v518, %v519
    %v521 = vrot.slane %v520, 2
    %v522 = vadd.f32 %v520, %v521
    %v523 = vrot.slane %v522, 1
    %v524 = vadd.f32 %v522, %v523
    %v525 = vadd.f32 %v479, %v481
    %v526 = vrot.slane %v525, 4
    %v527 = vadd.f32 %v525, %v526
    %v528 = vrot.slane %v527, 2
    %v529 = vadd.f32 %v527, %v528
    %v530 = vrot.slane %v529, 1
    %v531 = vadd.f32 %v529, %v530
    %v532 = vadd.f32 %v480, %v482
    %v533 = vrot.slane %v532, 4
    %v534 = vadd.f32 %v532, %v533
    %v535 = vrot.slane %v534, 2
    %v536 = vadd.f32 %v534, %v535
    %v537 = vrot.slane %v536, 1
    %v538 = vadd.f32 %v536, %v537
    %v539 = vrcp.pop 16.0
    %v540 = vmul.f32 %v489, %v539
    %v541 = vmul.f32 %v496, %v539
    %v542 = vmul.f32 %v503, %v539
    %v543 = vmul.f32 %v510, %v539
    %v544 = vmul.f32 %v517, %v539
    %v545 = vmul.f32 %v524, %v539
    %v546 = vmul.f32 %v531, %v539
    %v547 = vmul.f32 %v538, %v539
    %v548 = vmax.f32 %v467, %v469
    %v549 = vrot.slane %v548, 4
    %v550 = vmax.f32 %v548, %v549
    %v551 = vrot.slane %v550, 2
    %v552 = vmax.f32 %v550, %v551
    %v553 = vrot.slane %v552, 1
    %v554 = vmax.f32 %v552, %v553
    %v555 = vmax.f32 %v468, %v470
    %v556 = vrot.slane %v555, 4
    %v557 = vmax.f32 %v555, %v556
    %v558 = vrot.slane %v557, 2
    %v559 = vmax.f32 %v557, %v558
    %v560 = vrot.slane %v559, 1
    %v561 = vmax.f32 %v559, %v560
    %v562 = vmax.f32 %v471, %v473
    %v563 = vrot.slane %v562, 4
    %v564 = vmax.f32 %v562, %v563
    %v565 = vrot.slane %v564, 2
    %v566 = vmax.f32 %v564, %v565
    %v567 = vrot.slane %v566, 1
    %v568 = vmax.f32 %v566, %v567
    %v569 = vmax.f32 %v472, %v474
    %v570 = vrot.slane %v569, 4
    %v571 = vmax.f32 %v569, %v570
    %v572 = vrot.slane %v571, 2
    %v573 = vmax.f32 %v571, %v572
    %v574 = vrot.slane %v573, 1
    %v575 = vmax.f32 %v573, %v574
    %v576 = vmax.f32 %v475, %v477
    %v577 = vrot.slane %v576, 4
    %v578 = vmax.f32 %v576, %v577
    %v579 = vrot.slane %v578, 2
    %v580 = vmax.f32 %v578, %v579
    %v581 = vrot.slane %v580, 1
    %v582 = vmax.f32 %v580, %v581
    %v583 = vmax.f32 %v476, %v478
    %v584 = vrot.slane %v583, 4
    %v585 = vmax.f32 %v583, %v584
    %v586 = vrot.slane %v585, 2
    %v587 = vmax.f32 %v585, %v586
    %v588 = vrot.slane %v587, 1
    %v589 = vmax.f32 %v587, %v588
    %v590 = vmax.f32 %v479, %v481
    %v591 = vrot.slane %v590, 4
    %v592 = vmax.f32 %v590, %v591
    %v593 = vrot.slane %v592, 2
    %v594 = vmax.f32 %v592, %v593
    %v595 = vrot.slane %v594, 1
    %v596 = vmax.f32 %v594, %v595
    %v597 = vmax.f32 %v480, %v482
    %v598 = vrot.slane %v597, 4
    %v599 = vmax.f32 %v597, %v598
    %v600 = vrot.slane %v599, 2
    %v601 = vmax.f32 %v599, %v600
    %v602 = vrot.slane %v601, 1
    %v603 = vmax.f32 %v601, %v602
    %608 = vrot.lane.b32.xlu0 %v540, 112
    %v609 = vpop.permute.xlu0 %608
    %610 = vrot.lane.b32.xlu0 %v542, 112
    %v611 = vpop.permute.xlu0 %610
    %612 = vrot.lane.b32.xlu0 %v544, 112
    %v613 = vpop.permute.xlu0 %612
    %614 = vrot.lane.b32.xlu0 %v546, 112
    %v615 = vpop.permute.xlu0 %614
    %616 = vrot.lane.b32.xlu0 %v540, 96
    %v617 = vpop.permute.xlu0 %616
    %618 = vrot.lane.b32.xlu0 %v542, 96
    %v619 = vpop.permute.xlu0 %618
    %620 = vrot.lane.b32.xlu0 %v544, 96
    %v621 = vpop.permute.xlu0 %620
    %622 = vrot.lane.b32.xlu0 %v546, 96
    %v623 = vpop.permute.xlu0 %622
    %624 = vrot.lane.b32.xlu0 %v540, 80
    %v625 = vpop.permute.xlu0 %624
    %626 = vrot.lane.b32.xlu0 %v542, 80
    %v627 = vpop.permute.xlu0 %626
    %628 = vrot.lane.b32.xlu0 %v544, 80
    %v629 = vpop.permute.xlu0 %628
    %630 = vrot.lane.b32.xlu0 %v546, 80
    %v631 = vpop.permute.xlu0 %630
    %632 = vrot.lane.b32.xlu0 %v540, 64
    %v633 = vpop.permute.xlu0 %632
    %634 = vrot.lane.b32.xlu0 %v542, 64
    %v635 = vpop.permute.xlu0 %634
    %636 = vrot.lane.b32.xlu0 %v544, 64
    %v637 = vpop.permute.xlu0 %636
    %638 = vrot.lane.b32.xlu0 %v546, 64
    %v639 = vpop.permute.xlu0 %638
    %640 = vrot.lane.b32.xlu0 %v540, 48
    %v641 = vpop.permute.xlu0 %640
    %642 = vrot.lane.b32.xlu0 %v542, 48
    %v643 = vpop.permute.xlu0 %642
    %644 = vrot.lane.b32.xlu0 %v544, 48
    %v645 = vpop.permute.xlu0 %644
    %646 = vrot.lane.b32.xlu0 %v546, 48
    %v647 = vpop.permute.xlu0 %646
    %648 = vrot.lane.b32.xlu0 %v540, 32
    %v649 = vpop.permute.xlu0 %648
    %650 = vrot.lane.b32.xlu0 %v542, 32
    %v651 = vpop.permute.xlu0 %650
    %652 = vrot.lane.b32.xlu0 %v544, 32
    %v653 = vpop.permute.xlu0 %652
    %654 = vrot.lane.b32.xlu0 %v546, 32
    %v655 = vpop.permute.xlu0 %654
    %656 = vrot.lane.b32.xlu0 %v540, 16
    %v657 = vpop.permute.xlu0 %656
    %658 = vrot.lane.b32.xlu0 %v542, 16
    %v659 = vpop.permute.xlu0 %658
    %660 = vrot.lane.b32.xlu0 %v544, 16
    %v661 = vpop.permute.xlu0 %660
    %662 = vrot.lane.b32.xlu0 %v546, 16
    %v663 = vpop.permute.xlu0 %662
    %668 = vrot.lane.b32.xlu0 %v541, 112
    %v669 = vpop.permute.xlu0 %668
    %670 = vrot.lane.b32.xlu0 %v543, 112
    %v671 = vpop.permute.xlu0 %670
    %672 = vrot.lane.b32.xlu0 %v545, 112
    %v673 = vpop.permute.xlu0 %672
    %674 = vrot.lane.b32.xlu0 %v547, 112
    %v675 = vpop.permute.xlu0 %674
    %676 = vrot.lane.b32.xlu0 %v541, 96
    %v677 = vpop.permute.xlu0 %676
    %678 = vrot.lane.b32.xlu0 %v543, 96
    %v679 = vpop.permute.xlu0 %678
    %680 = vrot.lane.b32.xlu0 %v545, 96
    %v681 = vpop.permute.xlu0 %680
    %682 = vrot.lane.b32.xlu0 %v547, 96
    %v683 = vpop.permute.xlu0 %682
    %684 = vrot.lane.b32.xlu0 %v541, 80
    %v685 = vpop.permute.xlu0 %684
    %686 = vrot.lane.b32.xlu0 %v543, 80
    %v687 = vpop.permute.xlu0 %686
    %688 = vrot.lane.b32.xlu0 %v545, 80
    %v689 = vpop.permute.xlu0 %688
    %690 = vrot.lane.b32.xlu0 %v547, 80
    %v691 = vpop.permute.xlu0 %690
    %692 = vrot.lane.b32.xlu0 %v541, 64
    %v693 = vpop.permute.xlu0 %692
    %694 = vrot.lane.b32.xlu0 %v543, 64
    %v695 = vpop.permute.xlu0 %694
    %696 = vrot.lane.b32.xlu0 %v545, 64
    %v697 = vpop.permute.xlu0 %696
    %698 = vrot.lane.b32.xlu0 %v547, 64
    %v699 = vpop.permute.xlu0 %698
    %700 = vrot.lane.b32.xlu0 %v541, 48
    %v701 = vpop.permute.xlu0 %700
    %702 = vrot.lane.b32.xlu0 %v543, 48
    %v703 = vpop.permute.xlu0 %702
    %704 = vrot.lane.b32.xlu0 %v545, 48
    %v705 = vpop.permute.xlu0 %704
    %706 = vrot.lane.b32.xlu0 %v547, 48
    %v707 = vpop.permute.xlu0 %706
    %708 = vrot.lane.b32.xlu0 %v541, 32
    %v709 = vpop.permute.xlu0 %708
    %710 = vrot.lane.b32.xlu0 %v543, 32
    %v711 = vpop.permute.xlu0 %710
    %712 = vrot.lane.b32.xlu0 %v545, 32
    %v713 = vpop.permute.xlu0 %712
    %714 = vrot.lane.b32.xlu0 %v547, 32
    %v715 = vpop.permute.xlu0 %714
    %716 = vrot.lane.b32.xlu0 %v541, 16
    %v717 = vpop.permute.xlu0 %716
    %718 = vrot.lane.b32.xlu0 %v543, 16
    %v719 = vpop.permute.xlu0 %718
    %720 = vrot.lane.b32.xlu0 %v545, 16
    %v721 = vpop.permute.xlu0 %720
    %722 = vrot.lane.b32.xlu0 %v547, 16
    %v723 = vpop.permute.xlu0 %722
    %v724 = vrot.slane %v542, 7
    %vm725 = vcmask 1041409
    %v726 = vsel %vm725, %v724, %v540
    %v727 = vrot.slane %v544, 6
    %vm728 = vcmask 1042434
    %v729 = vsel %vm728, %v727, %v726
    %v730 = vrot.slane %v546, 5
    %vm731 = vcmask 1043459
    %v732 = vsel %vm731, %v730, %v729
    %v733 = vrot.slane %v611, 7
    %v734 = vsel %vm725, %v733, %v609
    %v735 = vrot.slane %v613, 6
    %v736 = vsel %vm728, %v735, %v734
    %v737 = vrot.slane %v615, 5
    %v738 = vsel %vm731, %v737, %v736
    %v739 = vrot.slane %v619, 7
    %v740 = vsel %vm725, %v739, %v617
    %v741 = vrot.slane %v621, 6
    %v742 = vsel %vm728, %v741, %v740
    %v743 = vrot.slane %v623, 5
    %v744 = vsel %vm731, %v743, %v742
    %v745 = vrot.slane %v627, 7
    %v746 = vsel %vm725, %v745, %v625
    %v747 = vrot.slane %v629, 6
    %v748 = vsel %vm728, %v747, %v746
    %v749 = vrot.slane %v631, 5
    %v750 = vsel %vm731, %v749, %v748
    %v751 = vrot.slane %v635, 7
    %v752 = vsel %vm725, %v751, %v633
    %v753 = vrot.slane %v637, 6
    %v754 = vsel %vm728, %v753, %v752
    %v755 = vrot.slane %v639, 5
    %v756 = vsel %vm731, %v755, %v754
    %v757 = vrot.slane %v643, 7
    %v758 = vsel %vm725, %v757, %v641
    %v759 = vrot.slane %v645, 6
    %v760 = vsel %vm728, %v759, %v758
    %v761 = vrot.slane %v647, 5
    %v762 = vsel %vm731, %v761, %v760
    %v763 = vrot.slane %v651, 7
    %v764 = vsel %vm725, %v763, %v649
    %v765 = vrot.slane %v653, 6
    %v766 = vsel %vm728, %v765, %v764
    %v767 = vrot.slane %v655, 5
    %v768 = vsel %vm731, %v767, %v766
    %v769 = vrot.slane %v659, 7
    %v770 = vsel %vm725, %v769, %v657
    %v771 = vrot.slane %v661, 6
    %v772 = vsel %vm728, %v771, %v770
    %v773 = vrot.slane %v663, 5
    %v774 = vsel %vm731, %v773, %v772
    %v775 = vrot.slane %v543, 7
    %v776 = vsel %vm725, %v775, %v541
    %v777 = vrot.slane %v545, 6
    %v778 = vsel %vm728, %v777, %v776
    %v779 = vrot.slane %v547, 5
    %v780 = vsel %vm731, %v779, %v778
    %v781 = vrot.slane %v671, 7
    %v782 = vsel %vm725, %v781, %v669
    %v783 = vrot.slane %v673, 6
    %v784 = vsel %vm728, %v783, %v782
    %v785 = vrot.slane %v675, 5
    %v786 = vsel %vm731, %v785, %v784
    %v787 = vrot.slane %v679, 7
    %v788 = vsel %vm725, %v787, %v677
    %v789 = vrot.slane %v681, 6
    %v790 = vsel %vm728, %v789, %v788
    %v791 = vrot.slane %v683, 5
    %v792 = vsel %vm731, %v791, %v790
    %v793 = vrot.slane %v687, 7
    %v794 = vsel %vm725, %v793, %v685
    %v795 = vrot.slane %v689, 6
    %v796 = vsel %vm728, %v795, %v794
    %v797 = vrot.slane %v691, 5
    %v798 = vsel %vm731, %v797, %v796
    %v799 = vrot.slane %v695, 7
    %v800 = vsel %vm725, %v799, %v693
    %v801 = vrot.slane %v697, 6
    %v802 = vsel %vm728, %v801, %v800
    %v803 = vrot.slane %v699, 5
    %v804 = vsel %vm731, %v803, %v802
    %v805 = vrot.slane %v703, 7
    %v806 = vsel %vm725, %v805, %v701
    %v807 = vrot.slane %v705, 6
    %v808 = vsel %vm728, %v807, %v806
    %v809 = vrot.slane %v707, 5
    %v810 = vsel %vm731, %v809, %v808
    %v811 = vrot.slane %v711, 7
    %v812 = vsel %vm725, %v811, %v709
    %v813 = vrot.slane %v713, 6
    %v814 = vsel %vm728, %v813, %v812
    %v815 = vrot.slane %v715, 5
    %v816 = vsel %vm731, %v815, %v814
    %v817 = vrot.slane %v719, 7
    %v818 = vsel %vm725, %v817, %v717
    %v819 = vrot.slane %v721, 6
    %v820 = vsel %vm728, %v819, %v818
    %v821 = vrot.slane %v723, 5
    %v822 = vsel %vm731, %v821, %v820
    %v839 = vcombine.low %v732, %v744
    %v841 = vunpack.c.l.s4 1983009808
    %v842 = vunpack.c.0.s8 %v841
    %v843 = vlaneseq
    %v844 = vshrl.u32 %v843, 7
    %v845 = vsub.s32 %v842, %v844
    %v846 = vrot.slane %v839, %v845
    %v847 = vcombine.low %v738, %v750
    %v849 = vunpack.c.l.s4 1983009808
    %v850 = vunpack.c.0.s8 %v849
    %v851 = vlaneseq
    %v852 = vshrl.u32 %v851, 7
    %v853 = vsub.s32 %v850, %v852
    %v854 = vrot.slane %v847, %v853
    %v855 = vcombine.low %v756, %v768
    %v857 = vunpack.c.l.s4 1983009808
    %v858 = vunpack.c.0.s8 %v857
    %v859 = vlaneseq
    %v860 = vshrl.u32 %v859, 7
    %v861 = vsub.s32 %v858, %v860
    %v862 = vrot.slane %v855, %v861
    %v863 = vcombine.low %v762, %v774
    %v865 = vunpack.c.l.s4 1983009808
    %v866 = vunpack.c.0.s8 %v865
    %v867 = vlaneseq
    %v868 = vshrl.u32 %v867, 7
    %v869 = vsub.s32 %v866, %v868
    %v870 = vrot.slane %v863, %v869
    %v871 = vcombine.low %v846, %v854
    %v872 = vcombine.high %v846, %v854
    %v874 = vunpack.c.l.s4 1934713408
    %v875 = vunpack.c.0.s8 %v874
    %v876 = vlaneseq
    %v877 = vshrl.u32 %v876, 7
    %v878 = vsub.s32 %v875, %v877
    %v879 = vrot.slane %v871, %v878
    %v881 = vunpack.c.l.s4 1934713408
    %v882 = vunpack.c.0.s8 %v881
    %v883 = vlaneseq
    %v884 = vshrl.u32 %v883, 7
    %v885 = vsub.s32 %v882, %v884
    %v886 = vrot.slane %v872, %v885
    %v887 = vcombine.low %v862, %v870
    %v888 = vcombine.high %v862, %v870
    %v890 = vunpack.c.l.s4 1934713408
    %v891 = vunpack.c.0.s8 %v890
    %v892 = vlaneseq
    %v893 = vshrl.u32 %v892, 7
    %v894 = vsub.s32 %v891, %v893
    %v895 = vrot.slane %v887, %v894
    %v897 = vunpack.c.l.s4 1934713408
    %v898 = vunpack.c.0.s8 %v897
    %v899 = vlaneseq
    %v900 = vshrl.u32 %v899, 7
    %v901 = vsub.s32 %v898, %v900
    %v902 = vrot.slane %v888, %v901
    %v903 = vcombine.low %v879, %v895
    %v904 = vcombine.high %v879, %v895
    %v905 = vcombine.low %v886, %v902
    %v906 = vcombine.high %v886, %v902
    %v907 = vcombine.low %v780, %v792
    %v909 = vunpack.c.l.s4 1983009808
    %v910 = vunpack.c.0.s8 %v909
    %v911 = vlaneseq
    %v912 = vshrl.u32 %v911, 7
    %v913 = vsub.s32 %v910, %v912
    %v914 = vrot.slane %v907, %v913
    %v915 = vcombine.low %v786, %v798
    %v917 = vunpack.c.l.s4 1983009808
    %v918 = vunpack.c.0.s8 %v917
    %v919 = vlaneseq
    %v920 = vshrl.u32 %v919, 7
    %v921 = vsub.s32 %v918, %v920
    %v922 = vrot.slane %v915, %v921
    %v923 = vcombine.low %v804, %v816
    %v925 = vunpack.c.l.s4 1983009808
    %v926 = vunpack.c.0.s8 %v925
    %v927 = vlaneseq
    %v928 = vshrl.u32 %v927, 7
    %v929 = vsub.s32 %v926, %v928
    %v930 = vrot.slane %v923, %v929
    %v931 = vcombine.low %v810, %v822
    %v933 = vunpack.c.l.s4 1983009808
    %v934 = vunpack.c.0.s8 %v933
    %v935 = vlaneseq
    %v936 = vshrl.u32 %v935, 7
    %v937 = vsub.s32 %v934, %v936
    %v938 = vrot.slane %v931, %v937
    %v939 = vcombine.low %v914, %v922
    %v940 = vcombine.high %v914, %v922
    %v942 = vunpack.c.l.s4 1934713408
    %v943 = vunpack.c.0.s8 %v942
    %v944 = vlaneseq
    %v945 = vshrl.u32 %v944, 7
    %v946 = vsub.s32 %v943, %v945
    %v947 = vrot.slane %v939, %v946
    %v949 = vunpack.c.l.s4 1934713408
    %v950 = vunpack.c.0.s8 %v949
    %v951 = vlaneseq
    %v952 = vshrl.u32 %v951, 7
    %v953 = vsub.s32 %v950, %v952
    %v954 = vrot.slane %v940, %v953
    %v955 = vcombine.low %v930, %v938
    %v956 = vcombine.high %v930, %v938
    %v958 = vunpack.c.l.s4 1934713408
    %v959 = vunpack.c.0.s8 %v958
    %v960 = vlaneseq
    %v961 = vshrl.u32 %v960, 7
    %v962 = vsub.s32 %v959, %v961
    %v963 = vrot.slane %v955, %v962
    %v965 = vunpack.c.l.s4 1934713408
    %v966 = vunpack.c.0.s8 %v965
    %v967 = vlaneseq
    %v968 = vshrl.u32 %v967, 7
    %v969 = vsub.s32 %v966, %v968
    %v970 = vrot.slane %v956, %v969
    %v971 = vcombine.low %v947, %v963
    %v972 = vcombine.high %v947, %v963
    %v973 = vcombine.low %v954, %v970
    %v974 = vcombine.high %v954, %v970
    %979 = vrot.lane.b32.xlu0 %v554, 112
    %v980 = vpop.permute.xlu0 %979
    %981 = vrot.lane.b32.xlu0 %v568, 112
    %v982 = vpop.permute.xlu0 %981
    %983 = vrot.lane.b32.xlu0 %v582, 112
    %v984 = vpop.permute.xlu0 %983
    %985 = vrot.lane.b32.xlu0 %v596, 112
    %v986 = vpop.permute.xlu0 %985
    %987 = vrot.lane.b32.xlu0 %v554, 96
    %v988 = vpop.permute.xlu0 %987
    %989 = vrot.lane.b32.xlu0 %v568, 96
    %v990 = vpop.permute.xlu0 %989
    %991 = vrot.lane.b32.xlu0 %v582, 96
    %v992 = vpop.permute.xlu0 %991
    %993 = vrot.lane.b32.xlu0 %v596, 96
    %v994 = vpop.permute.xlu0 %993
    %995 = vrot.lane.b32.xlu0 %v554, 80
    %v996 = vpop.permute.xlu0 %995
    %997 = vrot.lane.b32.xlu0 %v568, 80
    %v998 = vpop.permute.xlu0 %997
    %999 = vrot.lane.b32.xlu0 %v582, 80
    %v1000 = vpop.permute.xlu0 %999
    %1001 = vrot.lane.b32.xlu0 %v596, 80
    %v1002 = vpop.permute.xlu0 %1001
    %1003 = vrot.lane.b32.xlu0 %v554, 64
    %v1004 = vpop.permute.xlu0 %1003
    %1005 = vrot.lane.b32.xlu0 %v568, 64
    %v1006 = vpop.permute.xlu0 %1005
    %1007 = vrot.lane.b32.xlu0 %v582, 64
    %v1008 = vpop.permute.xlu0 %1007
    %1009 = vrot.lane.b32.xlu0 %v596, 64
    %v1010 = vpop.permute.xlu0 %1009
    %1011 = vrot.lane.b32.xlu0 %v554, 48
    %v1012 = vpop.permute.xlu0 %1011
    %1013 = vrot.lane.b32.xlu0 %v568, 48
    %v1014 = vpop.permute.xlu0 %1013
    %1015 = vrot.lane.b32.xlu0 %v582, 48
    %v1016 = vpop.permute.xlu0 %1015
    %1017 = vrot.lane.b32.xlu0 %v596, 48
    %v1018 = vpop.permute.xlu0 %1017
    %1019 = vrot.lane.b32.xlu0 %v554, 32
    %v1020 = vpop.permute.xlu0 %1019
    %1021 = vrot.lane.b32.xlu0 %v568, 32
    %v1022 = vpop.permute.xlu0 %1021
    %1023 = vrot.lane.b32.xlu0 %v582, 32
    %v1024 = vpop.permute.xlu0 %1023
    %1025 = vrot.lane.b32.xlu0 %v596, 32
    %v1026 = vpop.permute.xlu0 %1025
    %1027 = vrot.lane.b32.xlu0 %v554, 16
    %v1028 = vpop.permute.xlu0 %1027
    %1029 = vrot.lane.b32.xlu0 %v568, 16
    %v1030 = vpop.permute.xlu0 %1029
    %1031 = vrot.lane.b32.xlu0 %v582, 16
    %v1032 = vpop.permute.xlu0 %1031
    %1033 = vrot.lane.b32.xlu0 %v596, 16
    %v1034 = vpop.permute.xlu0 %1033
    %1039 = vrot.lane.b32.xlu0 %v561, 112
    %v1040 = vpop.permute.xlu0 %1039
    %1041 = vrot.lane.b32.xlu0 %v575, 112
    %v1042 = vpop.permute.xlu0 %1041
    %1043 = vrot.lane.b32.xlu0 %v589, 112
    %v1044 = vpop.permute.xlu0 %1043
    %1045 = vrot.lane.b32.xlu0 %v603, 112
    %v1046 = vpop.permute.xlu0 %1045
    %1047 = vrot.lane.b32.xlu0 %v561, 96
    %v1048 = vpop.permute.xlu0 %1047
    %1049 = vrot.lane.b32.xlu0 %v575, 96
    %v1050 = vpop.permute.xlu0 %1049
    %1051 = vrot.lane.b32.xlu0 %v589, 96
    %v1052 = vpop.permute.xlu0 %1051
    %1053 = vrot.lane.b32.xlu0 %v603, 96
    %v1054 = vpop.permute.xlu0 %1053
    %1055 = vrot.lane.b32.xlu0 %v561, 80
    %v1056 = vpop.permute.xlu0 %1055
    %1057 = vrot.lane.b32.xlu0 %v575, 80
    %v1058 = vpop.permute.xlu0 %1057
    %1059 = vrot.lane.b32.xlu0 %v589, 80
    %v1060 = vpop.permute.xlu0 %1059
    %1061 = vrot.lane.b32.xlu0 %v603, 80
    %v1062 = vpop.permute.xlu0 %1061
    %1063 = vrot.lane.b32.xlu0 %v561, 64
    %v1064 = vpop.permute.xlu0 %1063
    %1065 = vrot.lane.b32.xlu0 %v575, 64
    %v1066 = vpop.permute.xlu0 %1065
    %1067 = vrot.lane.b32.xlu0 %v589, 64
    %v1068 = vpop.permute.xlu0 %1067
    %1069 = vrot.lane.b32.xlu0 %v603, 64
    %v1070 = vpop.permute.xlu0 %1069
    %1071 = vrot.lane.b32.xlu0 %v561, 48
    %v1072 = vpop.permute.xlu0 %1071
    %1073 = vrot.lane.b32.xlu0 %v575, 48
    %v1074 = vpop.permute.xlu0 %1073
    %1075 = vrot.lane.b32.xlu0 %v589, 48
    %v1076 = vpop.permute.xlu0 %1075
    %1077 = vrot.lane.b32.xlu0 %v603, 48
    %v1078 = vpop.permute.xlu0 %1077
    %1079 = vrot.lane.b32.xlu0 %v561, 32
    %v1080 = vpop.permute.xlu0 %1079
    %1081 = vrot.lane.b32.xlu0 %v575, 32
    %v1082 = vpop.permute.xlu0 %1081
    %1083 = vrot.lane.b32.xlu0 %v589, 32
    %v1084 = vpop.permute.xlu0 %1083
    %1085 = vrot.lane.b32.xlu0 %v603, 32
    %v1086 = vpop.permute.xlu0 %1085
    %1087 = vrot.lane.b32.xlu0 %v561, 16
    %v1088 = vpop.permute.xlu0 %1087
    %1089 = vrot.lane.b32.xlu0 %v575, 16
    %v1090 = vpop.permute.xlu0 %1089
    %1091 = vrot.lane.b32.xlu0 %v589, 16
    %v1092 = vpop.permute.xlu0 %1091
    %1093 = vrot.lane.b32.xlu0 %v603, 16
    %v1094 = vpop.permute.xlu0 %1093
    %v1095 = vrot.slane %v568, 7
    %v1096 = vsel %vm725, %v1095, %v554
    %v1097 = vrot.slane %v582, 6
    %v1098 = vsel %vm728, %v1097, %v1096
    %v1099 = vrot.slane %v596, 5
    %v1100 = vsel %vm731, %v1099, %v1098
    %v1101 = vrot.slane %v982, 7
    %v1102 = vsel %vm725, %v1101, %v980
    %v1103 = vrot.slane %v984, 6
    %v1104 = vsel %vm728, %v1103, %v1102
    %v1105 = vrot.slane %v986, 5
    %v1106 = vsel %vm731, %v1105, %v1104
    %v1107 = vrot.slane %v990, 7
    %v1108 = vsel %vm725, %v1107, %v988
    %v1109 = vrot.slane %v992, 6
    %v1110 = vsel %vm728, %v1109, %v1108
    %v1111 = vrot.slane %v994, 5
    %v1112 = vsel %vm731, %v1111, %v1110
    %v1113 = vrot.slane %v998, 7
    %v1114 = vsel %vm725, %v1113, %v996
    %v1115 = vrot.slane %v1000, 6
    %v1116 = vsel %vm728, %v1115, %v1114
    %v1117 = vrot.slane %v1002, 5
    %v1118 = vsel %vm731, %v1117, %v1116
    %v1119 = vrot.slane %v1006, 7
    %v1120 = vsel %vm725, %v1119, %v1004
    %v1121 = vrot.slane %v1008, 6
    %v1122 = vsel %vm728, %v1121, %v1120
    %v1123 = vrot.slane %v1010, 5
    %v1124 = vsel %vm731, %v1123, %v1122
    %v1125 = vrot.slane %v1014, 7
    %v1126 = vsel %vm725, %v1125, %v1012
    %v1127 = vrot.slane %v1016, 6
    %v1128 = vsel %vm728, %v1127, %v1126
    %v1129 = vrot.slane %v1018, 5
    %v1130 = vsel %vm731, %v1129, %v1128
    %v1131 = vrot.slane %v1022, 7
    %v1132 = vsel %vm725, %v1131, %v1020
    %v1133 = vrot.slane %v1024, 6
    %v1134 = vsel %vm728, %v1133, %v1132
    %v1135 = vrot.slane %v1026, 5
    %v1136 = vsel %vm731, %v1135, %v1134
    %v1137 = vrot.slane %v1030, 7
    %v1138 = vsel %vm725, %v1137, %v1028
    %v1139 = vrot.slane %v1032, 6
    %v1140 = vsel %vm728, %v1139, %v1138
    %v1141 = vrot.slane %v1034, 5
    %v1142 = vsel %vm731, %v1141, %v1140
    %v1143 = vrot.slane %v575, 7
    %v1144 = vsel %vm725, %v1143, %v561
    %v1145 = vrot.slane %v589, 6
    %v1146 = vsel %vm728, %v1145, %v1144
    %v1147 = vrot.slane %v603, 5
    %v1148 = vsel %vm731, %v1147, %v1146
    %v1149 = vrot.slane %v1042, 7
    %v1150 = vsel %vm725, %v1149, %v1040
    %v1151 = vrot.slane %v1044, 6
    %v1152 = vsel %vm728, %v1151, %v1150
    %v1153 = vrot.slane %v1046, 5
    %v1154 = vsel %vm731, %v1153, %v1152
    %v1155 = vrot.slane %v1050, 7
    %v1156 = vsel %vm725, %v1155, %v1048
    %v1157 = vrot.slane %v1052, 6
    %v1158 = vsel %vm728, %v1157, %v1156
    %v1159 = vrot.slane %v1054, 5
    %v1160 = vsel %vm731, %v1159, %v1158
    %v1161 = vrot.slane %v1058, 7
    %v1162 = vsel %vm725, %v1161, %v1056
    %v1163 = vrot.slane %v1060, 6
    %v1164 = vsel %vm728, %v1163, %v1162
    %v1165 = vrot.slane %v1062, 5
    %v1166 = vsel %vm731, %v1165, %v1164
    %v1167 = vrot.slane %v1066, 7
    %v1168 = vsel %vm725, %v1167, %v1064
    %v1169 = vrot.slane %v1068, 6
    %v1170 = vsel %vm728, %v1169, %v1168
    %v1171 = vrot.slane %v1070, 5
    %v1172 = vsel %vm731, %v1171, %v1170
    %v1173 = vrot.slane %v1074, 7
    %v1174 = vsel %vm725, %v1173, %v1072
    %v1175 = vrot.slane %v1076, 6
    %v1176 = vsel %vm728, %v1175, %v1174
    %v1177 = vrot.slane %v1078, 5
    %v1178 = vsel %vm731, %v1177, %v1176
    %v1179 = vrot.slane %v1082, 7
    %v1180 = vsel %vm725, %v1179, %v1080
    %v1181 = vrot.slane %v1084, 6
    %v1182 = vsel %vm728, %v1181, %v1180
    %v1183 = vrot.slane %v1086, 5
    %v1184 = vsel %vm731, %v1183, %v1182
    %v1185 = vrot.slane %v1090, 7
    %v1186 = vsel %vm725, %v1185, %v1088
    %v1187 = vrot.slane %v1092, 6
    %v1188 = vsel %vm728, %v1187, %v1186
    %v1189 = vrot.slane %v1094, 5
    %v1190 = vsel %vm731, %v1189, %v1188
    %v1207 = vcombine.low %v1100, %v1112
    %v1209 = vunpack.c.l.s4 1983009808
    %v1210 = vunpack.c.0.s8 %v1209
    %v1211 = vlaneseq
    %v1212 = vshrl.u32 %v1211, 7
    %v1213 = vsub.s32 %v1210, %v1212
    %v1214 = vrot.slane %v1207, %v1213
    %v1215 = vcombine.low %v1106, %v1118
    %v1217 = vunpack.c.l.s4 1983009808
    %v1218 = vunpack.c.0.s8 %v1217
    %v1219 = vlaneseq
    %v1220 = vshrl.u32 %v1219, 7
    %v1221 = vsub.s32 %v1218, %v1220
    %v1222 = vrot.slane %v1215, %v1221
    %v1223 = vcombine.low %v1124, %v1136
    %v1225 = vunpack.c.l.s4 1983009808
    %v1226 = vunpack.c.0.s8 %v1225
    %v1227 = vlaneseq
    %v1228 = vshrl.u32 %v1227, 7
    %v1229 = vsub.s32 %v1226, %v1228
    %v1230 = vrot.slane %v1223, %v1229
    %v1231 = vcombine.low %v1130, %v1142
    %v1233 = vunpack.c.l.s4 1983009808
    %v1234 = vunpack.c.0.s8 %v1233
    %v1235 = vlaneseq
    %v1236 = vshrl.u32 %v1235, 7
    %v1237 = vsub.s32 %v1234, %v1236
    %v1238 = vrot.slane %v1231, %v1237
    %v1239 = vcombine.low %v1214, %v1222
    %v1240 = vcombine.high %v1214, %v1222
    %v1242 = vunpack.c.l.s4 1934713408
    %v1243 = vunpack.c.0.s8 %v1242
    %v1244 = vlaneseq
    %v1245 = vshrl.u32 %v1244, 7
    %v1246 = vsub.s32 %v1243, %v1245
    %v1247 = vrot.slane %v1239, %v1246
    %v1249 = vunpack.c.l.s4 1934713408
    %v1250 = vunpack.c.0.s8 %v1249
    %v1251 = vlaneseq
    %v1252 = vshrl.u32 %v1251, 7
    %v1253 = vsub.s32 %v1250, %v1252
    %v1254 = vrot.slane %v1240, %v1253
    %v1255 = vcombine.low %v1230, %v1238
    %v1256 = vcombine.high %v1230, %v1238
    %v1258 = vunpack.c.l.s4 1934713408
    %v1259 = vunpack.c.0.s8 %v1258
    %v1260 = vlaneseq
    %v1261 = vshrl.u32 %v1260, 7
    %v1262 = vsub.s32 %v1259, %v1261
    %v1263 = vrot.slane %v1255, %v1262
    %v1265 = vunpack.c.l.s4 1934713408
    %v1266 = vunpack.c.0.s8 %v1265
    %v1267 = vlaneseq
    %v1268 = vshrl.u32 %v1267, 7
    %v1269 = vsub.s32 %v1266, %v1268
    %v1270 = vrot.slane %v1256, %v1269
    %v1271 = vcombine.low %v1247, %v1263
    %v1272 = vcombine.high %v1247, %v1263
    %v1273 = vcombine.low %v1254, %v1270
    %v1274 = vcombine.high %v1254, %v1270
    %v1275 = vcombine.low %v1148, %v1160
    %v1277 = vunpack.c.l.s4 1983009808
    %v1278 = vunpack.c.0.s8 %v1277
    %v1279 = vlaneseq
    %v1280 = vshrl.u32 %v1279, 7
    %v1281 = vsub.s32 %v1278, %v1280
    %v1282 = vrot.slane %v1275, %v1281
    %v1283 = vcombine.low %v1154, %v1166
    %v1285 = vunpack.c.l.s4 1983009808
    %v1286 = vunpack.c.0.s8 %v1285
    %v1287 = vlaneseq
    %v1288 = vshrl.u32 %v1287, 7
    %v1289 = vsub.s32 %v1286, %v1288
    %v1290 = vrot.slane %v1283, %v1289
    %v1291 = vcombine.low %v1172, %v1184
    %v1293 = vunpack.c.l.s4 1983009808
    %v1294 = vunpack.c.0.s8 %v1293
    %v1295 = vlaneseq
    %v1296 = vshrl.u32 %v1295, 7
    %v1297 = vsub.s32 %v1294, %v1296
    %v1298 = vrot.slane %v1291, %v1297
    %v1299 = vcombine.low %v1178, %v1190
    %v1301 = vunpack.c.l.s4 1983009808
    %v1302 = vunpack.c.0.s8 %v1301
    %v1303 = vlaneseq
    %v1304 = vshrl.u32 %v1303, 7
    %v1305 = vsub.s32 %v1302, %v1304
    %v1306 = vrot.slane %v1299, %v1305
    %v1307 = vcombine.low %v1282, %v1290
    %v1308 = vcombine.high %v1282, %v1290
    %v1310 = vunpack.c.l.s4 1934713408
    %v1311 = vunpack.c.0.s8 %v1310
    %v1312 = vlaneseq
    %v1313 = vshrl.u32 %v1312, 7
    %v1314 = vsub.s32 %v1311, %v1313
    %v1315 = vrot.slane %v1307, %v1314
    %v1317 = vunpack.c.l.s4 1934713408
    %v1318 = vunpack.c.0.s8 %v1317
    %v1319 = vlaneseq
    %v1320 = vshrl.u32 %v1319, 7
    %v1321 = vsub.s32 %v1318, %v1320
    %v1322 = vrot.slane %v1308, %v1321
    %v1323 = vcombine.low %v1298, %v1306
    %v1324 = vcombine.high %v1298, %v1306
    %v1326 = vunpack.c.l.s4 1934713408
    %v1327 = vunpack.c.0.s8 %v1326
    %v1328 = vlaneseq
    %v1329 = vshrl.u32 %v1328, 7
    %v1330 = vsub.s32 %v1327, %v1329
    %v1331 = vrot.slane %v1323, %v1330
    %v1333 = vunpack.c.l.s4 1934713408
    %v1334 = vunpack.c.0.s8 %v1333
    %v1335 = vlaneseq
    %v1336 = vshrl.u32 %v1335, 7
    %v1337 = vsub.s32 %v1334, %v1336
    %v1338 = vrot.slane %v1324, %v1337
    %v1339 = vcombine.low %v1315, %v1331
    %v1340 = vcombine.high %v1315, %v1331
    %v1341 = vcombine.low %v1322, %v1338
    %v1342 = vcombine.high %v1322, %v1338
    %1351 = vrot.lane.b32.xlu0 %v903, 3
    %v1352 = vpop.permute.xlu0 %1351
    %1353 = vrot.lane.b32.xlu0 %v971, 3
    %v1354 = vpop.permute.xlu0 %1353
    %1355 = vrot.lane.b32.xlu0 %v904, 3
    %v1356 = vpop.permute.xlu0 %1355
    %1357 = vrot.lane.b32.xlu0 %v972, 3
    %v1358 = vpop.permute.xlu0 %1357
    %1359 = vrot.lane.b32.xlu0 %v905, 3
    %v1360 = vpop.permute.xlu0 %1359
    %1361 = vrot.lane.b32.xlu0 %v973, 3
    %v1362 = vpop.permute.xlu0 %1361
    %1363 = vrot.lane.b32.xlu0 %v906, 3
    %v1364 = vpop.permute.xlu0 %1363
    %1365 = vrot.lane.b32.xlu0 %v974, 3
    %v1366 = vpop.permute.xlu0 %1365
    %vm1375 = vcmask 23552
    %v1376 = vsel %vm1375, 0.0, %v1352
    %v1377 = vsel %vm1375, 0.0, %v1354
    %v1378 = vsel %vm1375, 0.0, %v1356
    %v1379 = vsel %vm1375, 0.0, %v1358
    %v1380 = vsel %vm1375, 0.0, %v1360
    %v1381 = vsel %vm1375, 0.0, %v1362
    %v1382 = vsel %vm1375, 0.0, %v1364
    %v1383 = vsel %vm1375, 0.0, %v1366
    %vm1384 = vcmask 154624
    %v1385 = vsel %vm1384, %v1376, 0.0
    %v1386 = vsel %vm1384, %v1377, 0.0
    %v1387 = vsel %vm1384, %v1378, 0.0
    %v1388 = vsel %vm1384, %v1379, 0.0
    %v1389 = vsel %vm1384, %v1380, 0.0
    %v1390 = vsel %vm1384, %v1381, 0.0
    %v1391 = vsel %vm1384, %v1382, 0.0
    %v1392 = vsel %vm1384, %v1383, 0.0
    %vm1401 = vcmask 1042432
    %v1402 = vrot.slane %v1385, 5
    %v1403 = vrot.slane %v1386, 5
    %v1404 = vsel %vm1401, %v1402, %v1403
    %v1405 = vrot.slane %v1387, 5
    %v1406 = vrot.slane %v1388, 5
    %v1407 = vsel %vm1401, %v1405, %v1406
    %v1408 = vrot.slane %v1389, 5
    %v1409 = vrot.slane %v1390, 5
    %v1410 = vsel %vm1401, %v1408, %v1409
    %v1411 = vrot.slane %v1391, 5
    %v1412 = vrot.slane %v1392, 5
    %v1413 = vsel %vm1401, %v1411, %v1412
    %v1426 = vsel %vm1401, 0.0, %v1402
    %v1427 = vsel %vm1401, 0.0, %v1405
    %v1428 = vsel %vm1401, 0.0, %v1408
    %v1429 = vsel %vm1401, 0.0, %v1411
    %v1430 = vsel %vm1401, %v1403, 0.0
    %v1431 = vsel %vm1401, %v1406, 0.0
    %v1432 = vsel %vm1401, %v1409, 0.0
    %v1433 = vsel %vm1401, %v1412, 0.0
    %1442 = vrot.lane.b32.xlu0 %v1271, 3
    %v1443 = vpop.permute.xlu0 %1442
    %1444 = vrot.lane.b32.xlu0 %v1339, 3
    %v1445 = vpop.permute.xlu0 %1444
    %1446 = vrot.lane.b32.xlu0 %v1272, 3
    %v1447 = vpop.permute.xlu0 %1446
    %1448 = vrot.lane.b32.xlu0 %v1340, 3
    %v1449 = vpop.permute.xlu0 %1448
    %1450 = vrot.lane.b32.xlu0 %v1273, 3
    %v1451 = vpop.permute.xlu0 %1450
    %1452 = vrot.lane.b32.xlu0 %v1341, 3
    %v1453 = vpop.permute.xlu0 %1452
    %1454 = vrot.lane.b32.xlu0 %v1274, 3
    %v1455 = vpop.permute.xlu0 %1454
    %1456 = vrot.lane.b32.xlu0 %v1342, 3
    %v1457 = vpop.permute.xlu0 %1456
    %v1466 = vsel %vm1375, 0.0, %v1443
    %v1467 = vsel %vm1375, 0.0, %v1445
    %v1468 = vsel %vm1375, 0.0, %v1447
    %v1469 = vsel %vm1375, 0.0, %v1449
    %v1470 = vsel %vm1375, 0.0, %v1451
    %v1471 = vsel %vm1375, 0.0, %v1453
    %v1472 = vsel %vm1375, 0.0, %v1455
    %v1473 = vsel %vm1375, 0.0, %v1457
    %v1474 = vsel %vm1384, %v1466, 0.0
    %v1475 = vsel %vm1384, %v1467, 0.0
    %v1476 = vsel %vm1384, %v1468, 0.0
    %v1477 = vsel %vm1384, %v1469, 0.0
    %v1478 = vsel %vm1384, %v1470, 0.0
    %v1479 = vsel %vm1384, %v1471, 0.0
    %v1480 = vsel %vm1384, %v1472, 0.0
    %v1481 = vsel %vm1384, %v1473, 0.0
    %v1490 = vrot.slane %v1474, 5
    %v1491 = vrot.slane %v1475, 5
    %v1492 = vsel %vm1401, %v1490, %v1491
    %v1493 = vrot.slane %v1476, 5
    %v1494 = vrot.slane %v1477, 5
    %v1495 = vsel %vm1401, %v1493, %v1494
    %v1496 = vrot.slane %v1478, 5
    %v1497 = vrot.slane %v1479, 5
    %v1498 = vsel %vm1401, %v1496, %v1497
    %v1499 = vrot.slane %v1480, 5
    %v1500 = vrot.slane %v1481, 5
    %v1501 = vsel %vm1401, %v1499, %v1500
    %v1514 = vsel %vm1401, 0.0, %v1490
    %v1515 = vsel %vm1401, 0.0, %v1493
    %v1516 = vsel %vm1401, 0.0, %v1496
    %v1517 = vsel %vm1401, 0.0, %v1499
    %v1518 = vsel %vm1401, %v1491, 0.0
    %v1519 = vsel %vm1401, %v1494, 0.0
    %v1520 = vsel %vm1401, %v1497, 0.0
    %v1521 = vsel %vm1401, %v1500, 0.0
    %s1522 = sld [smem:[#allocation7]]
    %v1523 = vstv %s1522
    %v1524 = vmul.f32 %v1523, %v1426
    %v1525 = vmul.f32 %v1523, %v1404
    %v1526 = vmul.f32 %v1523, %v1427
    %v1527 = vmul.f32 %v1523, %v1407
    %v1528 = vmul.f32 %v1523, %v1428
    %v1529 = vmul.f32 %v1523, %v1410
    %v1530 = vmul.f32 %v1523, %v1429
    %v1531 = vmul.f32 %v1523, %v1413
    %v1532 = vadd.f32 %v1524, 0.0
    %v1533 = vadd.f32 %v1525, 0.0
    %v1534 = vadd.f32 %v1526, 0.0
    %v1535 = vadd.f32 %v1527, 0.0
    %v1536 = vadd.f32 %v1528, 0.0
    %v1537 = vadd.f32 %v1529, 0.0
    %v1538 = vadd.f32 %v1530, 0.0
    %v1539 = vadd.f32 %v1531, 0.0
    %s1540 = sld [smem:[#allocation7 + $0x31]]
    %v1541 = vstv %s1540
    %v1542 = vmul.f32 %v1541, %v1514
    %v1543 = vmul.f32 %v1541, %v1492
    %v1544 = vmul.f32 %v1541, %v1515
    %v1545 = vmul.f32 %v1541, %v1495
    %v1546 = vmul.f32 %v1541, %v1516
    %v1547 = vmul.f32 %v1541, %v1498
    %v1548 = vmul.f32 %v1541, %v1517
    %v1549 = vmul.f32 %v1541, %v1501
    %v1550 = vadd.f32 %v1542, 0.0
    %v1551 = vadd.f32 %v1543, 0.0
    %v1552 = vadd.f32 %v1544, 0.0
    %v1553 = vadd.f32 %v1545, 0.0
    %v1554 = vadd.f32 %v1546, 0.0
    %v1555 = vadd.f32 %v1547, 0.0
    %v1556 = vadd.f32 %v1548, 0.0
    %v1557 = vadd.f32 %v1549, 0.0
    %s1558 = sld [smem:[#allocation7 + $0x1]]
    %v1559 = vstv %s1558
    %v1560 = vmul.f32 %v1559, %v1426
    %v1561 = vmul.f32 %v1559, %v1404
    %v1562 = vmul.f32 %v1559, %v1427
    %v1563 = vmul.f32 %v1559, %v1407
    %v1564 = vmul.f32 %v1559, %v1428
    %v1565 = vmul.f32 %v1559, %v1410
    %v1566 = vmul.f32 %v1559, %v1429
    %v1567 = vmul.f32 %v1559, %v1413
    %v1568 = vadd.f32 %v1560, 0.0
    %v1569 = vadd.f32 %v1561, 0.0
    %v1570 = vadd.f32 %v1562, 0.0
    %v1571 = vadd.f32 %v1563, 0.0
    %v1572 = vadd.f32 %v1564, 0.0
    %v1573 = vadd.f32 %v1565, 0.0
    %v1574 = vadd.f32 %v1566, 0.0
    %v1575 = vadd.f32 %v1567, 0.0
    %s1576 = sld [smem:[#allocation7 + $0x32]]
    %v1577 = vstv %s1576
    %v1578 = vmul.f32 %v1577, %v1514
    %v1579 = vmul.f32 %v1577, %v1492
    %v1580 = vmul.f32 %v1577, %v1515
    %v1581 = vmul.f32 %v1577, %v1495
    %v1582 = vmul.f32 %v1577, %v1516
    %v1583 = vmul.f32 %v1577, %v1498
    %v1584 = vmul.f32 %v1577, %v1517
    %v1585 = vmul.f32 %v1577, %v1501
    %v1586 = vadd.f32 %v1578, 0.0
    %v1587 = vadd.f32 %v1579, 0.0
    %v1588 = vadd.f32 %v1580, 0.0
    %v1589 = vadd.f32 %v1581, 0.0
    %v1590 = vadd.f32 %v1582, 0.0
    %v1591 = vadd.f32 %v1583, 0.0
    %v1592 = vadd.f32 %v1584, 0.0
    %v1593 = vadd.f32 %v1585, 0.0
    %s1594 = sld [smem:[#allocation7 + $0x2]]
    %v1595 = vstv %s1594
    %v1596 = vmul.f32 %v1595, %v1426
    %v1597 = vmul.f32 %v1595, %v1404
    %v1598 = vmul.f32 %v1595, %v1427
    %v1599 = vmul.f32 %v1595, %v1407
    %v1600 = vmul.f32 %v1595, %v1428
    %v1601 = vmul.f32 %v1595, %v1410
    %v1602 = vmul.f32 %v1595, %v1429
    %v1603 = vmul.f32 %v1595, %v1413
    %1612 = vrot.lane.b32.xlu0 %v1596, 126
    %v1613 = vpop.permute.xlu0 %1612
    %1614 = vrot.lane.b32.xlu0 %v1597, 126
    %v1615 = vpop.permute.xlu0 %1614
    %1616 = vrot.lane.b32.xlu0 %v1598, 126
    %v1617 = vpop.permute.xlu0 %1616
    %1618 = vrot.lane.b32.xlu0 %v1599, 126
    %v1619 = vpop.permute.xlu0 %1618
    %1620 = vrot.lane.b32.xlu0 %v1600, 126
    %v1621 = vpop.permute.xlu0 %1620
    %1622 = vrot.lane.b32.xlu0 %v1601, 126
    %v1623 = vpop.permute.xlu0 %1622
    %1624 = vrot.lane.b32.xlu0 %v1602, 126
    %v1625 = vpop.permute.xlu0 %1624
    %1626 = vrot.lane.b32.xlu0 %v1603, 126
    %v1627 = vpop.permute.xlu0 %1626
    %v1636 = vadd.f32 %v1532, %v1613
    %v1637 = vadd.f32 %v1533, %v1615
    %v1638 = vadd.f32 %v1534, %v1617
    %v1639 = vadd.f32 %v1535, %v1619
    %v1640 = vadd.f32 %v1536, %v1621
    %v1641 = vadd.f32 %v1537, %v1623
    %v1642 = vadd.f32 %v1538, %v1625
    %v1643 = vadd.f32 %v1539, %v1627
    %s1644 = sld [smem:[#allocation7 + $0x33]]
    %v1645 = vstv %s1644
    %v1646 = vmul.f32 %v1645, %v1514
    %v1647 = vmul.f32 %v1645, %v1492
    %v1648 = vmul.f32 %v1645, %v1515
    %v1649 = vmul.f32 %v1645, %v1495
    %v1650 = vmul.f32 %v1645, %v1516
    %v1651 = vmul.f32 %v1645, %v1498
    %v1652 = vmul.f32 %v1645, %v1517
    %v1653 = vmul.f32 %v1645, %v1501
    %1662 = vrot.lane.b32.xlu0 %v1646, 126
    %v1663 = vpop.permute.xlu0 %1662
    %1664 = vrot.lane.b32.xlu0 %v1647, 126
    %v1665 = vpop.permute.xlu0 %1664
    %1666 = vrot.lane.b32.xlu0 %v1648, 126
    %v1667 = vpop.permute.xlu0 %1666
    %1668 = vrot.lane.b32.xlu0 %v1649, 126
    %v1669 = vpop.permute.xlu0 %1668
    %1670 = vrot.lane.b32.xlu0 %v1650, 126
    %v1671 = vpop.permute.xlu0 %1670
    %1672 = vrot.lane.b32.xlu0 %v1651, 126
    %v1673 = vpop.permute.xlu0 %1672
    %1674 = vrot.lane.b32.xlu0 %v1652, 126
    %v1675 = vpop.permute.xlu0 %1674
    %1676 = vrot.lane.b32.xlu0 %v1653, 126
    %v1677 = vpop.permute.xlu0 %1676
    %v1686 = vadd.f32 %v1550, %v1663
    %v1687 = vadd.f32 %v1551, %v1665
    %v1688 = vadd.f32 %v1552, %v1667
    %v1689 = vadd.f32 %v1553, %v1669
    %v1690 = vadd.f32 %v1554, %v1671
    %v1691 = vadd.f32 %v1555, %v1673
    %v1692 = vadd.f32 %v1556, %v1675
    %v1693 = vadd.f32 %v1557, %v1677
    %s1694 = sld [smem:[#allocation7 + $0x3]]
    %v1695 = vstv %s1694
    %v1696 = vmul.f32 %v1695, %v1426
    %v1697 = vmul.f32 %v1695, %v1404
    %v1698 = vmul.f32 %v1695, %v1427
    %v1699 = vmul.f32 %v1695, %v1407
    %v1700 = vmul.f32 %v1695, %v1428
    %v1701 = vmul.f32 %v1695, %v1410
    %v1702 = vmul.f32 %v1695, %v1429
    %v1703 = vmul.f32 %v1695, %v1413
    %1712 = vrot.lane.b32.xlu0 %v1696, 126
    %v1713 = vpop.permute.xlu0 %1712
    %1714 = vrot.lane.b32.xlu0 %v1697, 126
    %v1715 = vpop.permute.xlu0 %1714
    %1716 = vrot.lane.b32.xlu0 %v1698, 126
    %v1717 = vpop.permute.xlu0 %1716
    %1718 = vrot.lane.b32.xlu0 %v1699, 126
    %v1719 = vpop.permute.xlu0 %1718
    %1720 = vrot.lane.b32.xlu0 %v1700, 126
    %v1721 = vpop.permute.xlu0 %1720
    %1722 = vrot.lane.b32.xlu0 %v1701, 126
    %v1723 = vpop.permute.xlu0 %1722
    %1724 = vrot.lane.b32.xlu0 %v1702, 126
    %v1725 = vpop.permute.xlu0 %1724
    %1726 = vrot.lane.b32.xlu0 %v1703, 126
    %v1727 = vpop.permute.xlu0 %1726
    %v1736 = vadd.f32 %v1568, %v1713
    %v1737 = vadd.f32 %v1569, %v1715
    %v1738 = vadd.f32 %v1570, %v1717
    %v1739 = vadd.f32 %v1571, %v1719
    %v1740 = vadd.f32 %v1572, %v1721
    %v1741 = vadd.f32 %v1573, %v1723
    %v1742 = vadd.f32 %v1574, %v1725
    %v1743 = vadd.f32 %v1575, %v1727
    %s1744 = sld [smem:[#allocation7 + $0x34]]
    %v1745 = vstv %s1744
    %v1746 = vmul.f32 %v1745, %v1514
    %v1747 = vmul.f32 %v1745, %v1492
    %v1748 = vmul.f32 %v1745, %v1515
    %v1749 = vmul.f32 %v1745, %v1495
    %v1750 = vmul.f32 %v1745, %v1516
    %v1751 = vmul.f32 %v1745, %v1498
    %v1752 = vmul.f32 %v1745, %v1517
    %v1753 = vmul.f32 %v1745, %v1501
    %1762 = vrot.lane.b32.xlu0 %v1746, 126
    %v1763 = vpop.permute.xlu0 %1762
    %1764 = vrot.lane.b32.xlu0 %v1747, 126
    %v1765 = vpop.permute.xlu0 %1764
    %1766 = vrot.lane.b32.xlu0 %v1748, 126
    %v1767 = vpop.permute.xlu0 %1766
    %1768 = vrot.lane.b32.xlu0 %v1749, 126
    %v1769 = vpop.permute.xlu0 %1768
    %1770 = vrot.lane.b32.xlu0 %v1750, 126
    %v1771 = vpop.permute.xlu0 %1770
    %1772 = vrot.lane.b32.xlu0 %v1751, 126
    %v1773 = vpop.permute.xlu0 %1772
    %1774 = vrot.lane.b32.xlu0 %v1752, 126
    %v1775 = vpop.permute.xlu0 %1774
    %1776 = vrot.lane.b32.xlu0 %v1753, 126
    %v1777 = vpop.permute.xlu0 %1776
    %v1786 = vadd.f32 %v1586, %v1763
    %v1787 = vadd.f32 %v1587, %v1765
    %v1788 = vadd.f32 %v1588, %v1767
    %v1789 = vadd.f32 %v1589, %v1769
    %v1790 = vadd.f32 %v1590, %v1771
    %v1791 = vadd.f32 %v1591, %v1773
    %v1792 = vadd.f32 %v1592, %v1775
    %v1793 = vadd.f32 %v1593, %v1777
    %s1794 = sld [smem:[#allocation7 + $0x4]]
    %v1795 = vstv %s1794
    %v1796 = vmul.f32 %v1795, %v1426
    %v1797 = vmul.f32 %v1795, %v1404
    %v1798 = vmul.f32 %v1795, %v1427
    %v1799 = vmul.f32 %v1795, %v1407
    %v1800 = vmul.f32 %v1795, %v1428
    %v1801 = vmul.f32 %v1795, %v1410
    %v1802 = vmul.f32 %v1795, %v1429
    %v1803 = vmul.f32 %v1795, %v1413
    %1812 = vrot.lane.b32.xlu0 %v1796, 124
    %v1813 = vpop.permute.xlu0 %1812
    %1814 = vrot.lane.b32.xlu0 %v1797, 124
    %v1815 = vpop.permute.xlu0 %1814
    %1816 = vrot.lane.b32.xlu0 %v1798, 124
    %v1817 = vpop.permute.xlu0 %1816
    %1818 = vrot.lane.b32.xlu0 %v1799, 124
    %v1819 = vpop.permute.xlu0 %1818
    %1820 = vrot.lane.b32.xlu0 %v1800, 124
    %v1821 = vpop.permute.xlu0 %1820
    %1822 = vrot.lane.b32.xlu0 %v1801, 124
    %v1823 = vpop.permute.xlu0 %1822
    %1824 = vrot.lane.b32.xlu0 %v1802, 124
    %v1825 = vpop.permute.xlu0 %1824
    %1826 = vrot.lane.b32.xlu0 %v1803, 124
    %v1827 = vpop.permute.xlu0 %1826
    %v1836 = vadd.f32 %v1636, %v1813
    %v1837 = vadd.f32 %v1637, %v1815
    %v1838 = vadd.f32 %v1638, %v1817
    %v1839 = vadd.f32 %v1639, %v1819
    %v1840 = vadd.f32 %v1640, %v1821
    %v1841 = vadd.f32 %v1641, %v1823
    %v1842 = vadd.f32 %v1642, %v1825
    %v1843 = vadd.f32 %v1643, %v1827
    %s1844 = sld [smem:[#allocation7 + $0x35]]
    %v1845 = vstv %s1844
    %v1846 = vmul.f32 %v1845, %v1514
    %v1847 = vmul.f32 %v1845, %v1492
    %v1848 = vmul.f32 %v1845, %v1515
    %v1849 = vmul.f32 %v1845, %v1495
    %v1850 = vmul.f32 %v1845, %v1516
    %v1851 = vmul.f32 %v1845, %v1498
    %v1852 = vmul.f32 %v1845, %v1517
    %v1853 = vmul.f32 %v1845, %v1501
    %1862 = vrot.lane.b32.xlu0 %v1846, 124
    %v1863 = vpop.permute.xlu0 %1862
    %1864 = vrot.lane.b32.xlu0 %v1847, 124
    %v1865 = vpop.permute.xlu0 %1864
    %1866 = vrot.lane.b32.xlu0 %v1848, 124
    %v1867 = vpop.permute.xlu0 %1866
    %1868 = vrot.lane.b32.xlu0 %v1849, 124
    %v1869 = vpop.permute.xlu0 %1868
    %1870 = vrot.lane.b32.xlu0 %v1850, 124
    %v1871 = vpop.permute.xlu0 %1870
    %1872 = vrot.lane.b32.xlu0 %v1851, 124
    %v1873 = vpop.permute.xlu0 %1872
    %1874 = vrot.lane.b32.xlu0 %v1852, 124
    %v1875 = vpop.permute.xlu0 %1874
    %1876 = vrot.lane.b32.xlu0 %v1853, 124
    %v1877 = vpop.permute.xlu0 %1876
    %v1886 = vadd.f32 %v1686, %v1863
    %v1887 = vadd.f32 %v1687, %v1865
    %v1888 = vadd.f32 %v1688, %v1867
    %v1889 = vadd.f32 %v1689, %v1869
    %v1890 = vadd.f32 %v1690, %v1871
    %v1891 = vadd.f32 %v1691, %v1873
    %v1892 = vadd.f32 %v1692, %v1875
    %v1893 = vadd.f32 %v1693, %v1877
    %s1894 = sld [smem:[#allocation7 + $0x5]]
    %v1895 = vstv %s1894
    %v1896 = vmul.f32 %v1895, %v1426
    %v1897 = vmul.f32 %v1895, %v1404
    %v1898 = vmul.f32 %v1895, %v1427
    %v1899 = vmul.f32 %v1895, %v1407
    %v1900 = vmul.f32 %v1895, %v1428
    %v1901 = vmul.f32 %v1895, %v1410
    %v1902 = vmul.f32 %v1895, %v1429
    %v1903 = vmul.f32 %v1895, %v1413
    %1912 = vrot.lane.b32.xlu0 %v1896, 124
    %v1913 = vpop.permute.xlu0 %1912
    %1914 = vrot.lane.b32.xlu0 %v1897, 124
    %v1915 = vpop.permute.xlu0 %1914
    %1916 = vrot.lane.b32.xlu0 %v1898, 124
    %v1917 = vpop.permute.xlu0 %1916
    %1918 = vrot.lane.b32.xlu0 %v1899, 124
    %v1919 = vpop.permute.xlu0 %1918
    %1920 = vrot.lane.b32.xlu0 %v1900, 124
    %v1921 = vpop.permute.xlu0 %1920
    %1922 = vrot.lane.b32.xlu0 %v1901, 124
    %v1923 = vpop.permute.xlu0 %1922
    %1924 = vrot.lane.b32.xlu0 %v1902, 124
    %v1925 = vpop.permute.xlu0 %1924
    %1926 = vrot.lane.b32.xlu0 %v1903, 124
    %v1927 = vpop.permute.xlu0 %1926
    %v1936 = vadd.f32 %v1736, %v1913
    %v1937 = vadd.f32 %v1737, %v1915
    %v1938 = vadd.f32 %v1738, %v1917
    %v1939 = vadd.f32 %v1739, %v1919
    %v1940 = vadd.f32 %v1740, %v1921
    %v1941 = vadd.f32 %v1741, %v1923
    %v1942 = vadd.f32 %v1742, %v1925
    %v1943 = vadd.f32 %v1743, %v1927
    %s1944 = sld [smem:[#allocation7 + $0x36]]
    %v1945 = vstv %s1944
    %v1946 = vmul.f32 %v1945, %v1514
    %v1947 = vmul.f32 %v1945, %v1492
    %v1948 = vmul.f32 %v1945, %v1515
    %v1949 = vmul.f32 %v1945, %v1495
    %v1950 = vmul.f32 %v1945, %v1516
    %v1951 = vmul.f32 %v1945, %v1498
    %v1952 = vmul.f32 %v1945, %v1517
    %v1953 = vmul.f32 %v1945, %v1501
    %1962 = vrot.lane.b32.xlu0 %v1946, 124
    %v1963 = vpop.permute.xlu0 %1962
    %1964 = vrot.lane.b32.xlu0 %v1947, 124
    %v1965 = vpop.permute.xlu0 %1964
    %1966 = vrot.lane.b32.xlu0 %v1948, 124
    %v1967 = vpop.permute.xlu0 %1966
    %1968 = vrot.lane.b32.xlu0 %v1949, 124
    %v1969 = vpop.permute.xlu0 %1968
    %1970 = vrot.lane.b32.xlu0 %v1950, 124
    %v1971 = vpop.permute.xlu0 %1970
    %1972 = vrot.lane.b32.xlu0 %v1951, 124
    %v1973 = vpop.permute.xlu0 %1972
    %1974 = vrot.lane.b32.xlu0 %v1952, 124
    %v1975 = vpop.permute.xlu0 %1974
    %1976 = vrot.lane.b32.xlu0 %v1953, 124
    %v1977 = vpop.permute.xlu0 %1976
    %v1986 = vadd.f32 %v1786, %v1963
    %v1987 = vadd.f32 %v1787, %v1965
    %v1988 = vadd.f32 %v1788, %v1967
    %v1989 = vadd.f32 %v1789, %v1969
    %v1990 = vadd.f32 %v1790, %v1971
    %v1991 = vadd.f32 %v1791, %v1973
    %v1992 = vadd.f32 %v1792, %v1975
    %v1993 = vadd.f32 %v1793, %v1977
    %s1994 = sld [smem:[#allocation7 + $0x6]]
    %v1995 = vstv %s1994
    %v1996 = vmul.f32 %v1995, %v1426
    %v1997 = vmul.f32 %v1995, %v1404
    %v1998 = vmul.f32 %v1995, %v1427
    %v1999 = vmul.f32 %v1995, %v1407
    %v2000 = vmul.f32 %v1995, %v1428
    %v2001 = vmul.f32 %v1995, %v1410
    %v2002 = vmul.f32 %v1995, %v1429
    %v2003 = vmul.f32 %v1995, %v1413
    %2012 = vrot.lane.b32.xlu0 %v1996, 122
    %v2013 = vpop.permute.xlu0 %2012
    %2014 = vrot.lane.b32.xlu0 %v1997, 122
    %v2015 = vpop.permute.xlu0 %2014
    %2016 = vrot.lane.b32.xlu0 %v1998, 122
    %v2017 = vpop.permute.xlu0 %2016
    %2018 = vrot.lane.b32.xlu0 %v1999, 122
    %v2019 = vpop.permute.xlu0 %2018
    %2020 = vrot.lane.b32.xlu0 %v2000, 122
    %v2021 = vpop.permute.xlu0 %2020
    %2022 = vrot.lane.b32.xlu0 %v2001, 122
    %v2023 = vpop.permute.xlu0 %2022
    %2024 = vrot.lane.b32.xlu0 %v2002, 122
    %v2025 = vpop.permute.xlu0 %2024
    %2026 = vrot.lane.b32.xlu0 %v2003, 122
    %v2027 = vpop.permute.xlu0 %2026
    %v2036 = vadd.f32 %v1836, %v2013
    %v2037 = vadd.f32 %v1837, %v2015
    %v2038 = vadd.f32 %v1838, %v2017
    %v2039 = vadd.f32 %v1839, %v2019
    %v2040 = vadd.f32 %v1840, %v2021
    %v2041 = vadd.f32 %v1841, %v2023
    %v2042 = vadd.f32 %v1842, %v2025
    %v2043 = vadd.f32 %v1843, %v2027
    %s2044 = sld [smem:[#allocation7 + $0x37]]
    %v2045 = vstv %s2044
    %v2046 = vmul.f32 %v2045, %v1514
    %v2047 = vmul.f32 %v2045, %v1492
    %v2048 = vmul.f32 %v2045, %v1515
    %v2049 = vmul.f32 %v2045, %v1495
    %v2050 = vmul.f32 %v2045, %v1516
    %v2051 = vmul.f32 %v2045, %v1498
    %v2052 = vmul.f32 %v2045, %v1517
    %v2053 = vmul.f32 %v2045, %v1501
    %2062 = vrot.lane.b32.xlu0 %v2046, 122
    %v2063 = vpop.permute.xlu0 %2062
    %2064 = vrot.lane.b32.xlu0 %v2047, 122
    %v2065 = vpop.permute.xlu0 %2064
    %2066 = vrot.lane.b32.xlu0 %v2048, 122
    %v2067 = vpop.permute.xlu0 %2066
    %2068 = vrot.lane.b32.xlu0 %v2049, 122
    %v2069 = vpop.permute.xlu0 %2068
    %2070 = vrot.lane.b32.xlu0 %v2050, 122
    %v2071 = vpop.permute.xlu0 %2070
    %2072 = vrot.lane.b32.xlu0 %v2051, 122
    %v2073 = vpop.permute.xlu0 %2072
    %2074 = vrot.lane.b32.xlu0 %v2052, 122
    %v2075 = vpop.permute.xlu0 %2074
    %2076 = vrot.lane.b32.xlu0 %v2053, 122
    %v2077 = vpop.permute.xlu0 %2076
    %v2086 = vadd.f32 %v1886, %v2063
    %v2087 = vadd.f32 %v1887, %v2065
    %v2088 = vadd.f32 %v1888, %v2067
    %v2089 = vadd.f32 %v1889, %v2069
    %v2090 = vadd.f32 %v1890, %v2071
    %v2091 = vadd.f32 %v1891, %v2073
    %v2092 = vadd.f32 %v1892, %v2075
    %v2093 = vadd.f32 %v1893, %v2077
    %s2094 = sld [smem:[#allocation7 + $0x7]]
    %v2095 = vstv %s2094
    %v2096 = vmul.f32 %v2095, %v1426
    %v2097 = vmul.f32 %v2095, %v1404
    %v2098 = vmul.f32 %v2095, %v1430
    %v2099 = vmul.f32 %v2095, %v1427
    %v2100 = vmul.f32 %v2095, %v1407
    %v2101 = vmul.f32 %v2095, %v1431
    %v2102 = vmul.f32 %v2095, %v1428
    %v2103 = vmul.f32 %v2095, %v1410
    %v2104 = vmul.f32 %v2095, %v1432
    %v2105 = vmul.f32 %v2095, %v1429
    %v2106 = vmul.f32 %v2095, %v1413
    %v2107 = vmul.f32 %v2095, %v1433
    %vm2120 = vcmask 1046528
    %v2121 = vrot.slane %v2096, 1
    %v2122 = vrot.slane %v2097, 1
    %v2123 = vsel %vm2120, %v2121, %v2122
    %v2124 = vrot.slane %v2098, 1
    %v2125 = vsel %vm2120, %v2122, %v2124
    %v2126 = vrot.slane %v2099, 1
    %v2127 = vrot.slane %v2100, 1
    %v2128 = vsel %vm2120, %v2126, %v2127
    %v2129 = vrot.slane %v2101, 1
    %v2130 = vsel %vm2120, %v2127, %v2129
    %v2131 = vrot.slane %v2102, 1
    %v2132 = vrot.slane %v2103, 1
    %v2133 = vsel %vm2120, %v2131, %v2132
    %v2134 = vrot.slane %v2104, 1
    %v2135 = vsel %vm2120, %v2132, %v2134
    %v2136 = vrot.slane %v2105, 1
    %v2137 = vrot.slane %v2106, 1
    %v2138 = vsel %vm2120, %v2136, %v2137
    %v2139 = vrot.slane %v2107, 1
    %v2140 = vsel %vm2120, %v2137, %v2139
    %2141 = vrot.lane.b32.xlu0 %v2123, 1
    %v2142 = vpop.permute.xlu0 %2141
    %2143 = vrot.lane.b32.xlu0 %v2125, 1
    %v2144 = vpop.permute.xlu0 %2143
    %2145 = vrot.lane.b32.xlu0 %v2128, 1
    %v2146 = vpop.permute.xlu0 %2145
    %2147 = vrot.lane.b32.xlu0 %v2130, 1
    %v2148 = vpop.permute.xlu0 %2147
    %2149 = vrot.lane.b32.xlu0 %v2133, 1
    %v2150 = vpop.permute.xlu0 %2149
    %2151 = vrot.lane.b32.xlu0 %v2135, 1
    %v2152 = vpop.permute.xlu0 %2151
    %2153 = vrot.lane.b32.xlu0 %v2138, 1
    %v2154 = vpop.permute.xlu0 %2153
    %2155 = vrot.lane.b32.xlu0 %v2140, 1
    %v2156 = vpop.permute.xlu0 %2155
    %v2165 = vadd.f32 %v1936, %v2142
    %v2166 = vadd.f32 %v1937, %v2144
    %v2167 = vadd.f32 %v1938, %v2146
    %v2168 = vadd.f32 %v1939, %v2148
    %v2169 = vadd.f32 %v1940, %v2150
    %v2170 = vadd.f32 %v1941, %v2152
    %v2171 = vadd.f32 %v1942, %v2154
    %v2172 = vadd.f32 %v1943, %v2156
    %s2173 = sld [smem:[#allocation7 + $0x38]]
    %v2174 = vstv %s2173
    %v2175 = vmul.f32 %v2174, %v1514
    %v2176 = vmul.f32 %v2174, %v1492
    %v2177 = vmul.f32 %v2174, %v1518
    %v2178 = vmul.f32 %v2174, %v1515
    %v2179 = vmul.f32 %v2174, %v1495
    %v2180 = vmul.f32 %v2174, %v1519
    %v2181 = vmul.f32 %v2174, %v1516
    %v2182 = vmul.f32 %v2174, %v1498
    %v2183 = vmul.f32 %v2174, %v1520
    %v2184 = vmul.f32 %v2174, %v1517
    %v2185 = vmul.f32 %v2174, %v1501
    %v2186 = vmul.f32 %v2174, %v1521
    %v2199 = vrot.slane %v2175, 1
    %v2200 = vrot.slane %v2176, 1
    %v2201 = vsel %vm2120, %v2199, %v2200
    %v2202 = vrot.slane %v2177, 1
    %v2203 = vsel %vm2120, %v2200, %v2202
    %v2204 = vrot.slane %v2178, 1
    %v2205 = vrot.slane %v2179, 1
    %v2206 = vsel %vm2120, %v2204, %v2205
    %v2207 = vrot.slane %v2180, 1
    %v2208 = vsel %vm2120, %v2205, %v2207
    %v2209 = vrot.slane %v2181, 1
    %v2210 = vrot.slane %v2182, 1
    %v2211 = vsel %vm2120, %v2209, %v2210
    %v2212 = vrot.slane %v2183, 1
    %v2213 = vsel %vm2120, %v2210, %v2212
    %v2214 = vrot.slane %v2184, 1
    %v2215 = vrot.slane %v2185, 1
    %v2216 = vsel %vm2120, %v2214, %v2215
    %v2217 = vrot.slane %v2186, 1
    %v2218 = vsel %vm2120, %v2215, %v2217
    %2219 = vrot.lane.b32.xlu0 %v2201, 1
    %v2220 = vpop.permute.xlu0 %2219
    %2221 = vrot.lane.b32.xlu0 %v2203, 1
    %v2222 = vpop.permute.xlu0 %2221
    %2223 = vrot.lane.b32.xlu0 %v2206, 1
    %v2224 = vpop.permute.xlu0 %2223
    %2225 = vrot.lane.b32.xlu0 %v2208, 1
    %v2226 = vpop.permute.xlu0 %2225
    %2227 = vrot.lane.b32.xlu0 %v2211, 1
    %v2228 = vpop.permute.xlu0 %2227
    %2229 = vrot.lane.b32.xlu0 %v2213, 1
    %v2230 = vpop.permute.xlu0 %2229
    %2231 = vrot.lane.b32.xlu0 %v2216, 1
    %v2232 = vpop.permute.xlu0 %2231
    %2233 = vrot.lane.b32.xlu0 %v2218, 1
    %v2234 = vpop.permute.xlu0 %2233
    %v2243 = vadd.f32 %v1986, %v2220
    %v2244 = vadd.f32 %v1987, %v2222
    %v2245 = vadd.f32 %v1988, %v2224
    %v2246 = vadd.f32 %v1989, %v2226
    %v2247 = vadd.f32 %v1990, %v2228
    %v2248 = vadd.f32 %v1991, %v2230
    %v2249 = vadd.f32 %v1992, %v2232
    %v2250 = vadd.f32 %v1993, %v2234
    %s2251 = sld [smem:[#allocation7 + $0x8]]
    %v2252 = vstv %s2251
    %v2253 = vmul.f32 %v2252, %v1426
    %v2254 = vmul.f32 %v2252, %v1404
    %v2255 = vmul.f32 %v2252, %v1430
    %v2256 = vmul.f32 %v2252, %v1427
    %v2257 = vmul.f32 %v2252, %v1407
    %v2258 = vmul.f32 %v2252, %v1431
    %v2259 = vmul.f32 %v2252, %v1428
    %v2260 = vmul.f32 %v2252, %v1410
    %v2261 = vmul.f32 %v2252, %v1432
    %v2262 = vmul.f32 %v2252, %v1429
    %v2263 = vmul.f32 %v2252, %v1413
    %v2264 = vmul.f32 %v2252, %v1433
    %v2277 = vrot.slane %v2253, 1
    %v2278 = vrot.slane %v2254, 1
    %v2279 = vsel %vm2120, %v2277, %v2278
    %v2280 = vrot.slane %v2255, 1
    %v2281 = vsel %vm2120, %v2278, %v2280
    %v2282 = vrot.slane %v2256, 1
    %v2283 = vrot.slane %v2257, 1
    %v2284 = vsel %vm2120, %v2282, %v2283
    %v2285 = vrot.slane %v2258, 1
    %v2286 = vsel %vm2120, %v2283, %v2285
    %v2287 = vrot.slane %v2259, 1
    %v2288 = vrot.slane %v2260, 1
    %v2289 = vsel %vm2120, %v2287, %v2288
    %v2290 = vrot.slane %v2261, 1
    %v2291 = vsel %vm2120, %v2288, %v2290
    %v2292 = vrot.slane %v2262, 1
    %v2293 = vrot.slane %v2263, 1
    %v2294 = vsel %vm2120, %v2292, %v2293
    %v2295 = vrot.slane %v2264, 1
    %v2296 = vsel %vm2120, %v2293, %v2295
    %2297 = vrot.lane.b32.xlu0 %v2279, 127
    %v2298 = vpop.permute.xlu0 %2297
    %2299 = vrot.lane.b32.xlu0 %v2281, 127
    %v2300 = vpop.permute.xlu0 %2299
    %2301 = vrot.lane.b32.xlu0 %v2284, 127
    %v2302 = vpop.permute.xlu0 %2301
    %2303 = vrot.lane.b32.xlu0 %v2286, 127
    %v2304 = vpop.permute.xlu0 %2303
    %2305 = vrot.lane.b32.xlu0 %v2289, 127
    %v2306 = vpop.permute.xlu0 %2305
    %2307 = vrot.lane.b32.xlu0 %v2291, 127
    %v2308 = vpop.permute.xlu0 %2307
    %2309 = vrot.lane.b32.xlu0 %v2294, 127
    %v2310 = vpop.permute.xlu0 %2309
    %2311 = vrot.lane.b32.xlu0 %v2296, 127
    %v2312 = vpop.permute.xlu0 %2311
    %v2321 = vadd.f32 %v2036, %v2298
    %v2322 = vadd.f32 %v2037, %v2300
    %v2323 = vadd.f32 %v2038, %v2302
    %v2324 = vadd.f32 %v2039, %v2304
    %v2325 = vadd.f32 %v2040, %v2306
    %v2326 = vadd.f32 %v2041, %v2308
    %v2327 = vadd.f32 %v2042, %v2310
    %v2328 = vadd.f32 %v2043, %v2312
    %s2329 = sld [smem:[#allocation7 + $0x39]]
    %v2330 = vstv %s2329
    %v2331 = vmul.f32 %v2330, %v1514
    %v2332 = vmul.f32 %v2330, %v1492
    %v2333 = vmul.f32 %v2330, %v1518
    %v2334 = vmul.f32 %v2330, %v1515
    %v2335 = vmul.f32 %v2330, %v1495
    %v2336 = vmul.f32 %v2330, %v1519
    %v2337 = vmul.f32 %v2330, %v1516
    %v2338 = vmul.f32 %v2330, %v1498
    %v2339 = vmul.f32 %v2330, %v1520
    %v2340 = vmul.f32 %v2330, %v1517
    %v2341 = vmul.f32 %v2330, %v1501
    %v2342 = vmul.f32 %v2330, %v1521
    %v2355 = vrot.slane %v2331, 1
    %v2356 = vrot.slane %v2332, 1
    %v2357 = vsel %vm2120, %v2355, %v2356
    %v2358 = vrot.slane %v2333, 1
    %v2359 = vsel %vm2120, %v2356, %v2358
    %v2360 = vrot.slane %v2334, 1
    %v2361 = vrot.slane %v2335, 1
    %v2362 = vsel %vm2120, %v2360, %v2361
    %v2363 = vrot.slane %v2336, 1
    %v2364 = vsel %vm2120, %v2361, %v2363
    %v2365 = vrot.slane %v2337, 1
    %v2366 = vrot.slane %v2338, 1
    %v2367 = vsel %vm2120, %v2365, %v2366
    %v2368 = vrot.slane %v2339, 1
    %v2369 = vsel %vm2120, %v2366, %v2368
    %v2370 = vrot.slane %v2340, 1
    %v2371 = vrot.slane %v2341, 1
    %v2372 = vsel %vm2120, %v2370, %v2371
    %v2373 = vrot.slane %v2342, 1
    %v2374 = vsel %vm2120, %v2371, %v2373
    %2375 = vrot.lane.b32.xlu0 %v2357, 127
    %v2376 = vpop.permute.xlu0 %2375
    %2377 = vrot.lane.b32.xlu0 %v2359, 127
    %v2378 = vpop.permute.xlu0 %2377
    %2379 = vrot.lane.b32.xlu0 %v2362, 127
    %v2380 = vpop.permute.xlu0 %2379
    %2381 = vrot.lane.b32.xlu0 %v2364, 127
    %v2382 = vpop.permute.xlu0 %2381
    %2383 = vrot.lane.b32.xlu0 %v2367, 127
    %v2384 = vpop.permute.xlu0 %2383
    %2385 = vrot.lane.b32.xlu0 %v2369, 127
    %v2386 = vpop.permute.xlu0 %2385
    %2387 = vrot.lane.b32.xlu0 %v2372, 127
    %v2388 = vpop.permute.xlu0 %2387
    %2389 = vrot.lane.b32.xlu0 %v2374, 127
    %v2390 = vpop.permute.xlu0 %2389
    %v2399 = vadd.f32 %v2086, %v2376
    %v2400 = vadd.f32 %v2087, %v2378
    %v2401 = vadd.f32 %v2088, %v2380
    %v2402 = vadd.f32 %v2089, %v2382
    %v2403 = vadd.f32 %v2090, %v2384
    %v2404 = vadd.f32 %v2091, %v2386
    %v2405 = vadd.f32 %v2092, %v2388
    %v2406 = vadd.f32 %v2093, %v2390
    %s2407 = sld [smem:[#allocation7 + $0x9]]
    %v2408 = vstv %s2407
    %v2409 = vmul.f32 %v2408, %v1426
    %v2410 = vmul.f32 %v2408, %v1404
    %v2411 = vmul.f32 %v2408, %v1430
    %v2412 = vmul.f32 %v2408, %v1427
    %v2413 = vmul.f32 %v2408, %v1407
    %v2414 = vmul.f32 %v2408, %v1431
    %v2415 = vmul.f32 %v2408, %v1428
    %v2416 = vmul.f32 %v2408, %v1410
    %v2417 = vmul.f32 %v2408, %v1432
    %v2418 = vmul.f32 %v2408, %v1429
    %v2419 = vmul.f32 %v2408, %v1413
    %v2420 = vmul.f32 %v2408, %v1433
    %v2433 = vrot.slane %v2409, 1
    %v2434 = vrot.slane %v2410, 1
    %v2435 = vsel %vm2120, %v2433, %v2434
    %v2436 = vrot.slane %v2411, 1
    %v2437 = vsel %vm2120, %v2434, %v2436
    %v2438 = vrot.slane %v2412, 1
    %v2439 = vrot.slane %v2413, 1
    %v2440 = vsel %vm2120, %v2438, %v2439
    %v2441 = vrot.slane %v2414, 1
    %v2442 = vsel %vm2120, %v2439, %v2441
    %v2443 = vrot.slane %v2415, 1
    %v2444 = vrot.slane %v2416, 1
    %v2445 = vsel %vm2120, %v2443, %v2444
    %v2446 = vrot.slane %v2417, 1
    %v2447 = vsel %vm2120, %v2444, %v2446
    %v2448 = vrot.slane %v2418, 1
    %v2449 = vrot.slane %v2419, 1
    %v2450 = vsel %vm2120, %v2448, %v2449
    %v2451 = vrot.slane %v2420, 1
    %v2452 = vsel %vm2120, %v2449, %v2451
    %2453 = vrot.lane.b32.xlu0 %v2435, 127
    %v2454 = vpop.permute.xlu0 %2453
    %2455 = vrot.lane.b32.xlu0 %v2437, 127
    %v2456 = vpop.permute.xlu0 %2455
    %2457 = vrot.lane.b32.xlu0 %v2440, 127
    %v2458 = vpop.permute.xlu0 %2457
    %2459 = vrot.lane.b32.xlu0 %v2442, 127
    %v2460 = vpop.permute.xlu0 %2459
    %2461 = vrot.lane.b32.xlu0 %v2445, 127
    %v2462 = vpop.permute.xlu0 %2461
    %2463 = vrot.lane.b32.xlu0 %v2447, 127
    %v2464 = vpop.permute.xlu0 %2463
    %2465 = vrot.lane.b32.xlu0 %v2450, 127
    %v2466 = vpop.permute.xlu0 %2465
    %2467 = vrot.lane.b32.xlu0 %v2452, 127
    %v2468 = vpop.permute.xlu0 %2467
    %v2477 = vadd.f32 %v2165, %v2454
    %v2478 = vadd.f32 %v2166, %v2456
    %v2479 = vadd.f32 %v2167, %v2458
    %v2480 = vadd.f32 %v2168, %v2460
    %v2481 = vadd.f32 %v2169, %v2462
    %v2482 = vadd.f32 %v2170, %v2464
    %v2483 = vadd.f32 %v2171, %v2466
    %v2484 = vadd.f32 %v2172, %v2468
    %s2485 = sld [smem:[#allocation7 + $0x3a]]
    %v2486 = vstv %s2485
    %v2487 = vmul.f32 %v2486, %v1514
    %v2488 = vmul.f32 %v2486, %v1492
    %v2489 = vmul.f32 %v2486, %v1518
    %v2490 = vmul.f32 %v2486, %v1515
    %v2491 = vmul.f32 %v2486, %v1495
    %v2492 = vmul.f32 %v2486, %v1519
    %v2493 = vmul.f32 %v2486, %v1516
    %v2494 = vmul.f32 %v2486, %v1498
    %v2495 = vmul.f32 %v2486, %v1520
    %v2496 = vmul.f32 %v2486, %v1517
    %v2497 = vmul.f32 %v2486, %v1501
    %v2498 = vmul.f32 %v2486, %v1521
    %v2511 = vrot.slane %v2487, 1
    %v2512 = vrot.slane %v2488, 1
    %v2513 = vsel %vm2120, %v2511, %v2512
    %v2514 = vrot.slane %v2489, 1
    %v2515 = vsel %vm2120, %v2512, %v2514
    %v2516 = vrot.slane %v2490, 1
    %v2517 = vrot.slane %v2491, 1
    %v2518 = vsel %vm2120, %v2516, %v2517
    %v2519 = vrot.slane %v2492, 1
    %v2520 = vsel %vm2120, %v2517, %v2519
    %v2521 = vrot.slane %v2493, 1
    %v2522 = vrot.slane %v2494, 1
    %v2523 = vsel %vm2120, %v2521, %v2522
    %v2524 = vrot.slane %v2495, 1
    %v2525 = vsel %vm2120, %v2522, %v2524
    %v2526 = vrot.slane %v2496, 1
    %v2527 = vrot.slane %v2497, 1
    %v2528 = vsel %vm2120, %v2526, %v2527
    %v2529 = vrot.slane %v2498, 1
    %v2530 = vsel %vm2120, %v2527, %v2529
    %2531 = vrot.lane.b32.xlu0 %v2513, 127
    %v2532 = vpop.permute.xlu0 %2531
    %2533 = vrot.lane.b32.xlu0 %v2515, 127
    %v2534 = vpop.permute.xlu0 %2533
    %2535 = vrot.lane.b32.xlu0 %v2518, 127
    %v2536 = vpop.permute.xlu0 %2535
    %2537 = vrot.lane.b32.xlu0 %v2520, 127
    %v2538 = vpop.permute.xlu0 %2537
    %2539 = vrot.lane.b32.xlu0 %v2523, 127
    %v2540 = vpop.permute.xlu0 %2539
    %2541 = vrot.lane.b32.xlu0 %v2525, 127
    %v2542 = vpop.permute.xlu0 %2541
    %2543 = vrot.lane.b32.xlu0 %v2528, 127
    %v2544 = vpop.permute.xlu0 %2543
    %2545 = vrot.lane.b32.xlu0 %v2530, 127
    %v2546 = vpop.permute.xlu0 %2545
    %v2555 = vadd.f32 %v2243, %v2532
    %v2556 = vadd.f32 %v2244, %v2534
    %v2557 = vadd.f32 %v2245, %v2536
    %v2558 = vadd.f32 %v2246, %v2538
    %v2559 = vadd.f32 %v2247, %v2540
    %v2560 = vadd.f32 %v2248, %v2542
    %v2561 = vadd.f32 %v2249, %v2544
    %v2562 = vadd.f32 %v2250, %v2546
    %s2563 = sld [smem:[#allocation7 + $0xa]]
    %v2564 = vstv %s2563
    %v2565 = vmul.f32 %v2564, %v1426
    %v2566 = vmul.f32 %v2564, %v1404
    %v2567 = vmul.f32 %v2564, %v1430
    %v2568 = vmul.f32 %v2564, %v1427
    %v2569 = vmul.f32 %v2564, %v1407
    %v2570 = vmul.f32 %v2564, %v1431
    %v2571 = vmul.f32 %v2564, %v1428
    %v2572 = vmul.f32 %v2564, %v1410
    %v2573 = vmul.f32 %v2564, %v1432
    %v2574 = vmul.f32 %v2564, %v1429
    %v2575 = vmul.f32 %v2564, %v1413
    %v2576 = vmul.f32 %v2564, %v1433
    %v2589 = vrot.slane %v2565, 1
    %v2590 = vrot.slane %v2566, 1
    %v2591 = vsel %vm2120, %v2589, %v2590
    %v2592 = vrot.slane %v2567, 1
    %v2593 = vsel %vm2120, %v2590, %v2592
    %v2594 = vrot.slane %v2568, 1
    %v2595 = vrot.slane %v2569, 1
    %v2596 = vsel %vm2120, %v2594, %v2595
    %v2597 = vrot.slane %v2570, 1
    %v2598 = vsel %vm2120, %v2595, %v2597
    %v2599 = vrot.slane %v2571, 1
    %v2600 = vrot.slane %v2572, 1
    %v2601 = vsel %vm2120, %v2599, %v2600
    %v2602 = vrot.slane %v2573, 1
    %v2603 = vsel %vm2120, %v2600, %v2602
    %v2604 = vrot.slane %v2574, 1
    %v2605 = vrot.slane %v2575, 1
    %v2606 = vsel %vm2120, %v2604, %v2605
    %v2607 = vrot.slane %v2576, 1
    %v2608 = vsel %vm2120, %v2605, %v2607
    %2609 = vrot.lane.b32.xlu0 %v2591, 125
    %v2610 = vpop.permute.xlu0 %2609
    %2611 = vrot.lane.b32.xlu0 %v2593, 125
    %v2612 = vpop.permute.xlu0 %2611
    %2613 = vrot.lane.b32.xlu0 %v2596, 125
    %v2614 = vpop.permute.xlu0 %2613
    %2615 = vrot.lane.b32.xlu0 %v2598, 125
    %v2616 = vpop.permute.xlu0 %2615
    %2617 = vrot.lane.b32.xlu0 %v2601, 125
    %v2618 = vpop.permute.xlu0 %2617
    %2619 = vrot.lane.b32.xlu0 %v2603, 125
    %v2620 = vpop.permute.xlu0 %2619
    %2621 = vrot.lane.b32.xlu0 %v2606, 125
    %v2622 = vpop.permute.xlu0 %2621
    %2623 = vrot.lane.b32.xlu0 %v2608, 125
    %v2624 = vpop.permute.xlu0 %2623
    %v2633 = vadd.f32 %v2321, %v2610
    %v2634 = vadd.f32 %v2322, %v2612
    %v2635 = vadd.f32 %v2323, %v2614
    %v2636 = vadd.f32 %v2324, %v2616
    %v2637 = vadd.f32 %v2325, %v2618
    %v2638 = vadd.f32 %v2326, %v2620
    %v2639 = vadd.f32 %v2327, %v2622
    %v2640 = vadd.f32 %v2328, %v2624
    %s2641 = sld [smem:[#allocation7 + $0x3b]]
    %v2642 = vstv %s2641
    %v2643 = vmul.f32 %v2642, %v1514
    %v2644 = vmul.f32 %v2642, %v1492
    %v2645 = vmul.f32 %v2642, %v1518
    %v2646 = vmul.f32 %v2642, %v1515
    %v2647 = vmul.f32 %v2642, %v1495
    %v2648 = vmul.f32 %v2642, %v1519
    %v2649 = vmul.f32 %v2642, %v1516
    %v2650 = vmul.f32 %v2642, %v1498
    %v2651 = vmul.f32 %v2642, %v1520
    %v2652 = vmul.f32 %v2642, %v1517
    %v2653 = vmul.f32 %v2642, %v1501
    %v2654 = vmul.f32 %v2642, %v1521
    %v2667 = vrot.slane %v2643, 1
    %v2668 = vrot.slane %v2644, 1
    %v2669 = vsel %vm2120, %v2667, %v2668
    %v2670 = vrot.slane %v2645, 1
    %v2671 = vsel %vm2120, %v2668, %v2670
    %v2672 = vrot.slane %v2646, 1
    %v2673 = vrot.slane %v2647, 1
    %v2674 = vsel %vm2120, %v2672, %v2673
    %v2675 = vrot.slane %v2648, 1
    %v2676 = vsel %vm2120, %v2673, %v2675
    %v2677 = vrot.slane %v2649, 1
    %v2678 = vrot.slane %v2650, 1
    %v2679 = vsel %vm2120, %v2677, %v2678
    %v2680 = vrot.slane %v2651, 1
    %v2681 = vsel %vm2120, %v2678, %v2680
    %v2682 = vrot.slane %v2652, 1
    %v2683 = vrot.slane %v2653, 1
    %v2684 = vsel %vm2120, %v2682, %v2683
    %v2685 = vrot.slane %v2654, 1
    %v2686 = vsel %vm2120, %v2683, %v2685
    %2687 = vrot.lane.b32.xlu0 %v2669, 125
    %v2688 = vpop.permute.xlu0 %2687
    %2689 = vrot.lane.b32.xlu0 %v2671, 125
    %v2690 = vpop.permute.xlu0 %2689
    %2691 = vrot.lane.b32.xlu0 %v2674, 125
    %v2692 = vpop.permute.xlu0 %2691
    %2693 = vrot.lane.b32.xlu0 %v2676, 125
    %v2694 = vpop.permute.xlu0 %2693
    %2695 = vrot.lane.b32.xlu0 %v2679, 125
    %v2696 = vpop.permute.xlu0 %2695
    %2697 = vrot.lane.b32.xlu0 %v2681, 125
    %v2698 = vpop.permute.xlu0 %2697
    %2699 = vrot.lane.b32.xlu0 %v2684, 125
    %v2700 = vpop.permute.xlu0 %2699
    %2701 = vrot.lane.b32.xlu0 %v2686, 125
    %v2702 = vpop.permute.xlu0 %2701
    %v2711 = vadd.f32 %v2399, %v2688
    %v2712 = vadd.f32 %v2400, %v2690
    %v2713 = vadd.f32 %v2401, %v2692
    %v2714 = vadd.f32 %v2402, %v2694
    %v2715 = vadd.f32 %v2403, %v2696
    %v2716 = vadd.f32 %v2404, %v2698
    %v2717 = vadd.f32 %v2405, %v2700
    %v2718 = vadd.f32 %v2406, %v2702
    %s2719 = sld [smem:[#allocation7 + $0xb]]
    %v2720 = vstv %s2719
    %v2721 = vmul.f32 %v2720, %v1426
    %v2722 = vmul.f32 %v2720, %v1404
    %v2723 = vmul.f32 %v2720, %v1430
    %v2724 = vmul.f32 %v2720, %v1427
    %v2725 = vmul.f32 %v2720, %v1407
    %v2726 = vmul.f32 %v2720, %v1431
    %v2727 = vmul.f32 %v2720, %v1428
    %v2728 = vmul.f32 %v2720, %v1410
    %v2729 = vmul.f32 %v2720, %v1432
    %v2730 = vmul.f32 %v2720, %v1429
    %v2731 = vmul.f32 %v2720, %v1413
    %v2732 = vmul.f32 %v2720, %v1433
    %v2745 = vrot.slane %v2721, 1
    %v2746 = vrot.slane %v2722, 1
    %v2747 = vsel %vm2120, %v2745, %v2746
    %v2748 = vrot.slane %v2723, 1
    %v2749 = vsel %vm2120, %v2746, %v2748
    %v2750 = vrot.slane %v2724, 1
    %v2751 = vrot.slane %v2725, 1
    %v2752 = vsel %vm2120, %v2750, %v2751
    %v2753 = vrot.slane %v2726, 1
    %v2754 = vsel %vm2120, %v2751, %v2753
    %v2755 = vrot.slane %v2727, 1
    %v2756 = vrot.slane %v2728, 1
    %v2757 = vsel %vm2120, %v2755, %v2756
    %v2758 = vrot.slane %v2729, 1
    %v2759 = vsel %vm2120, %v2756, %v2758
    %v2760 = vrot.slane %v2730, 1
    %v2761 = vrot.slane %v2731, 1
    %v2762 = vsel %vm2120, %v2760, %v2761
    %v2763 = vrot.slane %v2732, 1
    %v2764 = vsel %vm2120, %v2761, %v2763
    %2765 = vrot.lane.b32.xlu0 %v2747, 125
    %v2766 = vpop.permute.xlu0 %2765
    %2767 = vrot.lane.b32.xlu0 %v2749, 125
    %v2768 = vpop.permute.xlu0 %2767
    %2769 = vrot.lane.b32.xlu0 %v2752, 125
    %v2770 = vpop.permute.xlu0 %2769
    %2771 = vrot.lane.b32.xlu0 %v2754, 125
    %v2772 = vpop.permute.xlu0 %2771
    %2773 = vrot.lane.b32.xlu0 %v2757, 125
    %v2774 = vpop.permute.xlu0 %2773
    %2775 = vrot.lane.b32.xlu0 %v2759, 125
    %v2776 = vpop.permute.xlu0 %2775
    %2777 = vrot.lane.b32.xlu0 %v2762, 125
    %v2778 = vpop.permute.xlu0 %2777
    %2779 = vrot.lane.b32.xlu0 %v2764, 125
    %v2780 = vpop.permute.xlu0 %2779
    %v2789 = vadd.f32 %v2477, %v2766
    %v2790 = vadd.f32 %v2478, %v2768
    %v2791 = vadd.f32 %v2479, %v2770
    %v2792 = vadd.f32 %v2480, %v2772
    %v2793 = vadd.f32 %v2481, %v2774
    %v2794 = vadd.f32 %v2482, %v2776
    %v2795 = vadd.f32 %v2483, %v2778
    %v2796 = vadd.f32 %v2484, %v2780
    %s2797 = sld [smem:[#allocation7 + $0x3c]]
    %v2798 = vstv %s2797
    %v2799 = vmul.f32 %v2798, %v1514
    %v2800 = vmul.f32 %v2798, %v1492
    %v2801 = vmul.f32 %v2798, %v1518
    %v2802 = vmul.f32 %v2798, %v1515
    %v2803 = vmul.f32 %v2798, %v1495
    %v2804 = vmul.f32 %v2798, %v1519
    %v2805 = vmul.f32 %v2798, %v1516
    %v2806 = vmul.f32 %v2798, %v1498
    %v2807 = vmul.f32 %v2798, %v1520
    %v2808 = vmul.f32 %v2798, %v1517
    %v2809 = vmul.f32 %v2798, %v1501
    %v2810 = vmul.f32 %v2798, %v1521
    %v2823 = vrot.slane %v2799, 1
    %v2824 = vrot.slane %v2800, 1
    %v2825 = vsel %vm2120, %v2823, %v2824
    %v2826 = vrot.slane %v2801, 1
    %v2827 = vsel %vm2120, %v2824, %v2826
    %v2828 = vrot.slane %v2802, 1
    %v2829 = vrot.slane %v2803, 1
    %v2830 = vsel %vm2120, %v2828, %v2829
    %v2831 = vrot.slane %v2804, 1
    %v2832 = vsel %vm2120, %v2829, %v2831
    %v2833 = vrot.slane %v2805, 1
    %v2834 = vrot.slane %v2806, 1
    %v2835 = vsel %vm2120, %v2833, %v2834
    %v2836 = vrot.slane %v2807, 1
    %v2837 = vsel %vm2120, %v2834, %v2836
    %v2838 = vrot.slane %v2808, 1
    %v2839 = vrot.slane %v2809, 1
    %v2840 = vsel %vm2120, %v2838, %v2839
    %v2841 = vrot.slane %v2810, 1
    %v2842 = vsel %vm2120, %v2839, %v2841
    %2843 = vrot.lane.b32.xlu0 %v2825, 125
    %v2844 = vpop.permute.xlu0 %2843
    %2845 = vrot.lane.b32.xlu0 %v2827, 125
    %v2846 = vpop.permute.xlu0 %2845
    %2847 = vrot.lane.b32.xlu0 %v2830, 125
    %v2848 = vpop.permute.xlu0 %2847
    %2849 = vrot.lane.b32.xlu0 %v2832, 125
    %v2850 = vpop.permute.xlu0 %2849
    %2851 = vrot.lane.b32.xlu0 %v2835, 125
    %v2852 = vpop.permute.xlu0 %2851
    %2853 = vrot.lane.b32.xlu0 %v2837, 125
    %v2854 = vpop.permute.xlu0 %2853
    %2855 = vrot.lane.b32.xlu0 %v2840, 125
    %v2856 = vpop.permute.xlu0 %2855
    %2857 = vrot.lane.b32.xlu0 %v2842, 125
    %v2858 = vpop.permute.xlu0 %2857
    %v2867 = vadd.f32 %v2555, %v2844
    %v2868 = vadd.f32 %v2556, %v2846
    %v2869 = vadd.f32 %v2557, %v2848
    %v2870 = vadd.f32 %v2558, %v2850
    %v2871 = vadd.f32 %v2559, %v2852
    %v2872 = vadd.f32 %v2560, %v2854
    %v2873 = vadd.f32 %v2561, %v2856
    %v2874 = vadd.f32 %v2562, %v2858
    %s2875 = sld [smem:[#allocation7 + $0xc]]
    %v2876 = vstv %s2875
    %v2877 = vmul.f32 %v2876, %v1426
    %v2878 = vmul.f32 %v2876, %v1404
    %v2879 = vmul.f32 %v2876, %v1430
    %v2880 = vmul.f32 %v2876, %v1427
    %v2881 = vmul.f32 %v2876, %v1407
    %v2882 = vmul.f32 %v2876, %v1431
    %v2883 = vmul.f32 %v2876, %v1428
    %v2884 = vmul.f32 %v2876, %v1410
    %v2885 = vmul.f32 %v2876, %v1432
    %v2886 = vmul.f32 %v2876, %v1429
    %v2887 = vmul.f32 %v2876, %v1413
    %v2888 = vmul.f32 %v2876, %v1433
    %v2901 = vrot.slane %v2877, 1
    %v2902 = vrot.slane %v2878, 1
    %v2903 = vsel %vm2120, %v2901, %v2902
    %v2904 = vrot.slane %v2879, 1
    %v2905 = vsel %vm2120, %v2902, %v2904
    %v2906 = vrot.slane %v2880, 1
    %v2907 = vrot.slane %v2881, 1
    %v2908 = vsel %vm2120, %v2906, %v2907
    %v2909 = vrot.slane %v2882, 1
    %v2910 = vsel %vm2120, %v2907, %v2909
    %v2911 = vrot.slane %v2883, 1
    %v2912 = vrot.slane %v2884, 1
    %v2913 = vsel %vm2120, %v2911, %v2912
    %v2914 = vrot.slane %v2885, 1
    %v2915 = vsel %vm2120, %v2912, %v2914
    %v2916 = vrot.slane %v2886, 1
    %v2917 = vrot.slane %v2887, 1
    %v2918 = vsel %vm2120, %v2916, %v2917
    %v2919 = vrot.slane %v2888, 1
    %v2920 = vsel %vm2120, %v2917, %v2919
    %2921 = vrot.lane.b32.xlu0 %v2903, 123
    %v2922 = vpop.permute.xlu0 %2921
    %2923 = vrot.lane.b32.xlu0 %v2905, 123
    %v2924 = vpop.permute.xlu0 %2923
    %2925 = vrot.lane.b32.xlu0 %v2908, 123
    %v2926 = vpop.permute.xlu0 %2925
    %2927 = vrot.lane.b32.xlu0 %v2910, 123
    %v2928 = vpop.permute.xlu0 %2927
    %2929 = vrot.lane.b32.xlu0 %v2913, 123
    %v2930 = vpop.permute.xlu0 %2929
    %2931 = vrot.lane.b32.xlu0 %v2915, 123
    %v2932 = vpop.permute.xlu0 %2931
    %2933 = vrot.lane.b32.xlu0 %v2918, 123
    %v2934 = vpop.permute.xlu0 %2933
    %2935 = vrot.lane.b32.xlu0 %v2920, 123
    %v2936 = vpop.permute.xlu0 %2935
    %v2945 = vadd.f32 %v2633, %v2922
    %v2946 = vadd.f32 %v2634, %v2924
    %v2947 = vadd.f32 %v2635, %v2926
    %v2948 = vadd.f32 %v2636, %v2928
    %v2949 = vadd.f32 %v2637, %v2930
    %v2950 = vadd.f32 %v2638, %v2932
    %v2951 = vadd.f32 %v2639, %v2934
    %v2952 = vadd.f32 %v2640, %v2936
    %s2953 = sld [smem:[#allocation7 + $0x3d]]
    %v2954 = vstv %s2953
    %v2955 = vmul.f32 %v2954, %v1514
    %v2956 = vmul.f32 %v2954, %v1492
    %v2957 = vmul.f32 %v2954, %v1518
    %v2958 = vmul.f32 %v2954, %v1515
    %v2959 = vmul.f32 %v2954, %v1495
    %v2960 = vmul.f32 %v2954, %v1519
    %v2961 = vmul.f32 %v2954, %v1516
    %v2962 = vmul.f32 %v2954, %v1498
    %v2963 = vmul.f32 %v2954, %v1520
    %v2964 = vmul.f32 %v2954, %v1517
    %v2965 = vmul.f32 %v2954, %v1501
    %v2966 = vmul.f32 %v2954, %v1521
    %v2979 = vrot.slane %v2955, 1
    %v2980 = vrot.slane %v2956, 1
    %v2981 = vsel %vm2120, %v2979, %v2980
    %v2982 = vrot.slane %v2957, 1
    %v2983 = vsel %vm2120, %v2980, %v2982
    %v2984 = vrot.slane %v2958, 1
    %v2985 = vrot.slane %v2959, 1
    %v2986 = vsel %vm2120, %v2984, %v2985
    %v2987 = vrot.slane %v2960, 1
    %v2988 = vsel %vm2120, %v2985, %v2987
    %v2989 = vrot.slane %v2961, 1
    %v2990 = vrot.slane %v2962, 1
    %v2991 = vsel %vm2120, %v2989, %v2990
    %v2992 = vrot.slane %v2963, 1
    %v2993 = vsel %vm2120, %v2990, %v2992
    %v2994 = vrot.slane %v2964, 1
    %v2995 = vrot.slane %v2965, 1
    %v2996 = vsel %vm2120, %v2994, %v2995
    %v2997 = vrot.slane %v2966, 1
    %v2998 = vsel %vm2120, %v2995, %v2997
    %2999 = vrot.lane.b32.xlu0 %v2981, 123
    %v3000 = vpop.permute.xlu0 %2999
    %3001 = vrot.lane.b32.xlu0 %v2983, 123
    %v3002 = vpop.permute.xlu0 %3001
    %3003 = vrot.lane.b32.xlu0 %v2986, 123
    %v3004 = vpop.permute.xlu0 %3003
    %3005 = vrot.lane.b32.xlu0 %v2988, 123
    %v3006 = vpop.permute.xlu0 %3005
    %3007 = vrot.lane.b32.xlu0 %v2991, 123
    %v3008 = vpop.permute.xlu0 %3007
    %3009 = vrot.lane.b32.xlu0 %v2993, 123
    %v3010 = vpop.permute.xlu0 %3009
    %3011 = vrot.lane.b32.xlu0 %v2996, 123
    %v3012 = vpop.permute.xlu0 %3011
    %3013 = vrot.lane.b32.xlu0 %v2998, 123
    %v3014 = vpop.permute.xlu0 %3013
    %v3023 = vadd.f32 %v2711, %v3000
    %v3024 = vadd.f32 %v2712, %v3002
    %v3025 = vadd.f32 %v2713, %v3004
    %v3026 = vadd.f32 %v2714, %v3006
    %v3027 = vadd.f32 %v2715, %v3008
    %v3028 = vadd.f32 %v2716, %v3010
    %v3029 = vadd.f32 %v2717, %v3012
    %v3030 = vadd.f32 %v2718, %v3014
    %s3031 = sld [smem:[#allocation7 + $0xd]]
    %v3032 = vstv %s3031
    %v3033 = vmul.f32 %v3032, %v1426
    %v3034 = vmul.f32 %v3032, %v1404
    %v3035 = vmul.f32 %v3032, %v1430
    %v3036 = vmul.f32 %v3032, %v1427
    %v3037 = vmul.f32 %v3032, %v1407
    %v3038 = vmul.f32 %v3032, %v1431
    %v3039 = vmul.f32 %v3032, %v1428
    %v3040 = vmul.f32 %v3032, %v1410
    %v3041 = vmul.f32 %v3032, %v1432
    %v3042 = vmul.f32 %v3032, %v1429
    %v3043 = vmul.f32 %v3032, %v1413
    %v3044 = vmul.f32 %v3032, %v1433
    %v3057 = vrot.slane %v3033, 1
    %v3058 = vrot.slane %v3034, 1
    %v3059 = vsel %vm2120, %v3057, %v3058
    %v3060 = vrot.slane %v3035, 1
    %v3061 = vsel %vm2120, %v3058, %v3060
    %v3062 = vrot.slane %v3036, 1
    %v3063 = vrot.slane %v3037, 1
    %v3064 = vsel %vm2120, %v3062, %v3063
    %v3065 = vrot.slane %v3038, 1
    %v3066 = vsel %vm2120, %v3063, %v3065
    %v3067 = vrot.slane %v3039, 1
    %v3068 = vrot.slane %v3040, 1
    %v3069 = vsel %vm2120, %v3067, %v3068
    %v3070 = vrot.slane %v3041, 1
    %v3071 = vsel %vm2120, %v3068, %v3070
    %v3072 = vrot.slane %v3042, 1
    %v3073 = vrot.slane %v3043, 1
    %v3074 = vsel %vm2120, %v3072, %v3073
    %v3075 = vrot.slane %v3044, 1
    %v3076 = vsel %vm2120, %v3073, %v3075
    %3077 = vrot.lane.b32.xlu0 %v3059, 123
    %v3078 = vpop.permute.xlu0 %3077
    %3079 = vrot.lane.b32.xlu0 %v3061, 123
    %v3080 = vpop.permute.xlu0 %3079
    %3081 = vrot.lane.b32.xlu0 %v3064, 123
    %v3082 = vpop.permute.xlu0 %3081
    %3083 = vrot.lane.b32.xlu0 %v3066, 123
    %v3084 = vpop.permute.xlu0 %3083
    %3085 = vrot.lane.b32.xlu0 %v3069, 123
    %v3086 = vpop.permute.xlu0 %3085
    %3087 = vrot.lane.b32.xlu0 %v3071, 123
    %v3088 = vpop.permute.xlu0 %3087
    %3089 = vrot.lane.b32.xlu0 %v3074, 123
    %v3090 = vpop.permute.xlu0 %3089
    %3091 = vrot.lane.b32.xlu0 %v3076, 123
    %v3092 = vpop.permute.xlu0 %3091
    %v3101 = vadd.f32 %v2789, %v3078
    %v3102 = vadd.f32 %v2790, %v3080
    %v3103 = vadd.f32 %v2791, %v3082
    %v3104 = vadd.f32 %v2792, %v3084
    %v3105 = vadd.f32 %v2793, %v3086
    %v3106 = vadd.f32 %v2794, %v3088
    %v3107 = vadd.f32 %v2795, %v3090
    %v3108 = vadd.f32 %v2796, %v3092
    %s3109 = sld [smem:[#allocation7 + $0x3e]]
    %v3110 = vstv %s3109
    %v3111 = vmul.f32 %v3110, %v1514
    %v3112 = vmul.f32 %v3110, %v1492
    %v3113 = vmul.f32 %v3110, %v1518
    %v3114 = vmul.f32 %v3110, %v1515
    %v3115 = vmul.f32 %v3110, %v1495
    %v3116 = vmul.f32 %v3110, %v1519
    %v3117 = vmul.f32 %v3110, %v1516
    %v3118 = vmul.f32 %v3110, %v1498
    %v3119 = vmul.f32 %v3110, %v1520
    %v3120 = vmul.f32 %v3110, %v1517
    %v3121 = vmul.f32 %v3110, %v1501
    %v3122 = vmul.f32 %v3110, %v1521
    %v3135 = vrot.slane %v3111, 1
    %v3136 = vrot.slane %v3112, 1
    %v3137 = vsel %vm2120, %v3135, %v3136
    %v3138 = vrot.slane %v3113, 1
    %v3139 = vsel %vm2120, %v3136, %v3138
    %v3140 = vrot.slane %v3114, 1
    %v3141 = vrot.slane %v3115, 1
    %v3142 = vsel %vm2120, %v3140, %v3141
    %v3143 = vrot.slane %v3116, 1
    %v3144 = vsel %vm2120, %v3141, %v3143
    %v3145 = vrot.slane %v3117, 1
    %v3146 = vrot.slane %v3118, 1
    %v3147 = vsel %vm2120, %v3145, %v3146
    %v3148 = vrot.slane %v3119, 1
    %v3149 = vsel %vm2120, %v3146, %v3148
    %v3150 = vrot.slane %v3120, 1
    %v3151 = vrot.slane %v3121, 1
    %v3152 = vsel %vm2120, %v3150, %v3151
    %v3153 = vrot.slane %v3122, 1
    %v3154 = vsel %vm2120, %v3151, %v3153
    %3155 = vrot.lane.b32.xlu0 %v3137, 123
    %v3156 = vpop.permute.xlu0 %3155
    %3157 = vrot.lane.b32.xlu0 %v3139, 123
    %v3158 = vpop.permute.xlu0 %3157
    %3159 = vrot.lane.b32.xlu0 %v3142, 123
    %v3160 = vpop.permute.xlu0 %3159
    %3161 = vrot.lane.b32.xlu0 %v3144, 123
    %v3162 = vpop.permute.xlu0 %3161
    %3163 = vrot.lane.b32.xlu0 %v3147, 123
    %v3164 = vpop.permute.xlu0 %3163
    %3165 = vrot.lane.b32.xlu0 %v3149, 123
    %v3166 = vpop.permute.xlu0 %3165
    %3167 = vrot.lane.b32.xlu0 %v3152, 123
    %v3168 = vpop.permute.xlu0 %3167
    %3169 = vrot.lane.b32.xlu0 %v3154, 123
    %v3170 = vpop.permute.xlu0 %3169
    %v3179 = vadd.f32 %v2867, %v3156
    %v3180 = vadd.f32 %v2868, %v3158
    %v3181 = vadd.f32 %v2869, %v3160
    %v3182 = vadd.f32 %v2870, %v3162
    %v3183 = vadd.f32 %v2871, %v3164
    %v3184 = vadd.f32 %v2872, %v3166
    %v3185 = vadd.f32 %v2873, %v3168
    %v3186 = vadd.f32 %v2874, %v3170
    %s3187 = sld [smem:[#allocation7 + $0xe]]
    %v3188 = vstv %s3187
    %v3189 = vmul.f32 %v3188, %v1426
    %v3190 = vmul.f32 %v3188, %v1404
    %v3191 = vmul.f32 %v3188, %v1430
    %v3192 = vmul.f32 %v3188, %v1427
    %v3193 = vmul.f32 %v3188, %v1407
    %v3194 = vmul.f32 %v3188, %v1431
    %v3195 = vmul.f32 %v3188, %v1428
    %v3196 = vmul.f32 %v3188, %v1410
    %v3197 = vmul.f32 %v3188, %v1432
    %v3198 = vmul.f32 %v3188, %v1429
    %v3199 = vmul.f32 %v3188, %v1413
    %v3200 = vmul.f32 %v3188, %v1433
    %vm3213 = vcmask 1045504
    %v3214 = vrot.slane %v3189, 2
    %v3215 = vrot.slane %v3190, 2
    %v3216 = vsel %vm3213, %v3214, %v3215
    %v3217 = vrot.slane %v3191, 2
    %v3218 = vsel %vm3213, %v3215, %v3217
    %v3219 = vrot.slane %v3192, 2
    %v3220 = vrot.slane %v3193, 2
    %v3221 = vsel %vm3213, %v3219, %v3220
    %v3222 = vrot.slane %v3194, 2
    %v3223 = vsel %vm3213, %v3220, %v3222
    %v3224 = vrot.slane %v3195, 2
    %v3225 = vrot.slane %v3196, 2
    %v3226 = vsel %vm3213, %v3224, %v3225
    %v3227 = vrot.slane %v3197, 2
    %v3228 = vsel %vm3213, %v3225, %v3227
    %v3229 = vrot.slane %v3198, 2
    %v3230 = vrot.slane %v3199, 2
    %v3231 = vsel %vm3213, %v3229, %v3230
    %v3232 = vrot.slane %v3200, 2
    %v3233 = vsel %vm3213, %v3230, %v3232
    %v3242 = vadd.f32 %v2945, %v3216
    %v3243 = vadd.f32 %v2946, %v3218
    %v3244 = vadd.f32 %v2947, %v3221
    %v3245 = vadd.f32 %v2948, %v3223
    %v3246 = vadd.f32 %v2949, %v3226
    %v3247 = vadd.f32 %v2950, %v3228
    %v3248 = vadd.f32 %v2951, %v3231
    %v3249 = vadd.f32 %v2952, %v3233
    %s3250 = sld [smem:[#allocation7 + $0x3f]]
    %v3251 = vstv %s3250
    %v3252 = vmul.f32 %v3251, %v1514
    %v3253 = vmul.f32 %v3251, %v1492
    %v3254 = vmul.f32 %v3251, %v1518
    %v3255 = vmul.f32 %v3251, %v1515
    %v3256 = vmul.f32 %v3251, %v1495
    %v3257 = vmul.f32 %v3251, %v1519
    %v3258 = vmul.f32 %v3251, %v1516
    %v3259 = vmul.f32 %v3251, %v1498
    %v3260 = vmul.f32 %v3251, %v1520
    %v3261 = vmul.f32 %v3251, %v1517
    %v3262 = vmul.f32 %v3251, %v1501
    %v3263 = vmul.f32 %v3251, %v1521
    %v3276 = vrot.slane %v3252, 2
    %v3277 = vrot.slane %v3253, 2
    %v3278 = vsel %vm3213, %v3276, %v3277
    %v3279 = vrot.slane %v3254, 2
    %v3280 = vsel %vm3213, %v3277, %v3279
    %v3281 = vrot.slane %v3255, 2
    %v3282 = vrot.slane %v3256, 2
    %v3283 = vsel %vm3213, %v3281, %v3282
    %v3284 = vrot.slane %v3257, 2
    %v3285 = vsel %vm3213, %v3282, %v3284
    %v3286 = vrot.slane %v3258, 2
    %v3287 = vrot.slane %v3259, 2
    %v3288 = vsel %vm3213, %v3286, %v3287
    %v3289 = vrot.slane %v3260, 2
    %v3290 = vsel %vm3213, %v3287, %v3289
    %v3291 = vrot.slane %v3261, 2
    %v3292 = vrot.slane %v3262, 2
    %v3293 = vsel %vm3213, %v3291, %v3292
    %v3294 = vrot.slane %v3263, 2
    %v3295 = vsel %vm3213, %v3292, %v3294
    %v3304 = vadd.f32 %v3023, %v3278
    %v3305 = vadd.f32 %v3024, %v3280
    %v3306 = vadd.f32 %v3025, %v3283
    %v3307 = vadd.f32 %v3026, %v3285
    %v3308 = vadd.f32 %v3027, %v3288
    %v3309 = vadd.f32 %v3028, %v3290
    %v3310 = vadd.f32 %v3029, %v3293
    %v3311 = vadd.f32 %v3030, %v3295
    %s3312 = sld [smem:[#allocation7 + $0xf]]
    %v3313 = vstv %s3312
    %v3314 = vmul.f32 %v3313, %v1426
    %v3315 = vmul.f32 %v3313, %v1404
    %v3316 = vmul.f32 %v3313, %v1430
    %v3317 = vmul.f32 %v3313, %v1427
    %v3318 = vmul.f32 %v3313, %v1407
    %v3319 = vmul.f32 %v3313, %v1431
    %v3320 = vmul.f32 %v3313, %v1428
    %v3321 = vmul.f32 %v3313, %v1410
    %v3322 = vmul.f32 %v3313, %v1432
    %v3323 = vmul.f32 %v3313, %v1429
    %v3324 = vmul.f32 %v3313, %v1413
    %v3325 = vmul.f32 %v3313, %v1433
    %v3338 = vrot.slane %v3314, 2
    %v3339 = vrot.slane %v3315, 2
    %v3340 = vsel %vm3213, %v3338, %v3339
    %v3341 = vrot.slane %v3316, 2
    %v3342 = vsel %vm3213, %v3339, %v3341
    %v3343 = vrot.slane %v3317, 2
    %v3344 = vrot.slane %v3318, 2
    %v3345 = vsel %vm3213, %v3343, %v3344
    %v3346 = vrot.slane %v3319, 2
    %v3347 = vsel %vm3213, %v3344, %v3346
    %v3348 = vrot.slane %v3320, 2
    %v3349 = vrot.slane %v3321, 2
    %v3350 = vsel %vm3213, %v3348, %v3349
    %v3351 = vrot.slane %v3322, 2
    %v3352 = vsel %vm3213, %v3349, %v3351
    %v3353 = vrot.slane %v3323, 2
    %v3354 = vrot.slane %v3324, 2
    %v3355 = vsel %vm3213, %v3353, %v3354
    %v3356 = vrot.slane %v3325, 2
    %v3357 = vsel %vm3213, %v3354, %v3356
    %v3366 = vadd.f32 %v3101, %v3340
    %v3367 = vadd.f32 %v3102, %v3342
    %v3368 = vadd.f32 %v3103, %v3345
    %v3369 = vadd.f32 %v3104, %v3347
    %v3370 = vadd.f32 %v3105, %v3350
    %v3371 = vadd.f32 %v3106, %v3352
    %v3372 = vadd.f32 %v3107, %v3355
    %v3373 = vadd.f32 %v3108, %v3357
    %s3374 = sld [smem:[#allocation7 + $0x40]]
    %v3375 = vstv %s3374
    %v3376 = vmul.f32 %v3375, %v1514
    %v3377 = vmul.f32 %v3375, %v1492
    %v3378 = vmul.f32 %v3375, %v1518
    %v3379 = vmul.f32 %v3375, %v1515
    %v3380 = vmul.f32 %v3375, %v1495
    %v3381 = vmul.f32 %v3375, %v1519
    %v3382 = vmul.f32 %v3375, %v1516
    %v3383 = vmul.f32 %v3375, %v1498
    %v3384 = vmul.f32 %v3375, %v1520
    %v3385 = vmul.f32 %v3375, %v1517
    %v3386 = vmul.f32 %v3375, %v1501
    %v3387 = vmul.f32 %v3375, %v1521
    %v3400 = vrot.slane %v3376, 2
    %v3401 = vrot.slane %v3377, 2
    %v3402 = vsel %vm3213, %v3400, %v3401
    %v3403 = vrot.slane %v3378, 2
    %v3404 = vsel %vm3213, %v3401, %v3403
    %v3405 = vrot.slane %v3379, 2
    %v3406 = vrot.slane %v3380, 2
    %v3407 = vsel %vm3213, %v3405, %v3406
    %v3408 = vrot.slane %v3381, 2
    %v3409 = vsel %vm3213, %v3406, %v3408
    %v3410 = vrot.slane %v3382, 2
    %v3411 = vrot.slane %v3383, 2
    %v3412 = vsel %vm3213, %v3410, %v3411
    %v3413 = vrot.slane %v3384, 2
    %v3414 = vsel %vm3213, %v3411, %v3413
    %v3415 = vrot.slane %v3385, 2
    %v3416 = vrot.slane %v3386, 2
    %v3417 = vsel %vm3213, %v3415, %v3416
    %v3418 = vrot.slane %v3387, 2
    %v3419 = vsel %vm3213, %v3416, %v3418
    %v3428 = vadd.f32 %v3179, %v3402
    %v3429 = vadd.f32 %v3180, %v3404
    %v3430 = vadd.f32 %v3181, %v3407
    %v3431 = vadd.f32 %v3182, %v3409
    %v3432 = vadd.f32 %v3183, %v3412
    %v3433 = vadd.f32 %v3184, %v3414
    %v3434 = vadd.f32 %v3185, %v3417
    %v3435 = vadd.f32 %v3186, %v3419
    %s3436 = sld [smem:[#allocation7 + $0x10]]
    %v3437 = vstv %s3436
    %v3438 = vmul.f32 %v3437, %v1426
    %v3439 = vmul.f32 %v3437, %v1404
    %v3440 = vmul.f32 %v3437, %v1430
    %v3441 = vmul.f32 %v3437, %v1427
    %v3442 = vmul.f32 %v3437, %v1407
    %v3443 = vmul.f32 %v3437, %v1431
    %v3444 = vmul.f32 %v3437, %v1428
    %v3445 = vmul.f32 %v3437, %v1410
    %v3446 = vmul.f32 %v3437, %v1432
    %v3447 = vmul.f32 %v3437, %v1429
    %v3448 = vmul.f32 %v3437, %v1413
    %v3449 = vmul.f32 %v3437, %v1433
    %v3462 = vrot.slane %v3438, 2
    %v3463 = vrot.slane %v3439, 2
    %v3464 = vsel %vm3213, %v3462, %v3463
    %v3465 = vrot.slane %v3440, 2
    %v3466 = vsel %vm3213, %v3463, %v3465
    %v3467 = vrot.slane %v3441, 2
    %v3468 = vrot.slane %v3442, 2
    %v3469 = vsel %vm3213, %v3467, %v3468
    %v3470 = vrot.slane %v3443, 2
    %v3471 = vsel %vm3213, %v3468, %v3470
    %v3472 = vrot.slane %v3444, 2
    %v3473 = vrot.slane %v3445, 2
    %v3474 = vsel %vm3213, %v3472, %v3473
    %v3475 = vrot.slane %v3446, 2
    %v3476 = vsel %vm3213, %v3473, %v3475
    %v3477 = vrot.slane %v3447, 2
    %v3478 = vrot.slane %v3448, 2
    %v3479 = vsel %vm3213, %v3477, %v3478
    %v3480 = vrot.slane %v3449, 2
    %v3481 = vsel %vm3213, %v3478, %v3480
    %3482 = vrot.lane.b32.xlu0 %v3464, 126
    %v3483 = vpop.permute.xlu0 %3482
    %3484 = vrot.lane.b32.xlu0 %v3466, 126
    %v3485 = vpop.permute.xlu0 %3484
    %3486 = vrot.lane.b32.xlu0 %v3469, 126
    %v3487 = vpop.permute.xlu0 %3486
    %3488 = vrot.lane.b32.xlu0 %v3471, 126
    %v3489 = vpop.permute.xlu0 %3488
    %3490 = vrot.lane.b32.xlu0 %v3474, 126
    %v3491 = vpop.permute.xlu0 %3490
    %3492 = vrot.lane.b32.xlu0 %v3476, 126
    %v3493 = vpop.permute.xlu0 %3492
    %3494 = vrot.lane.b32.xlu0 %v3479, 126
    %v3495 = vpop.permute.xlu0 %3494
    %3496 = vrot.lane.b32.xlu0 %v3481, 126
    %v3497 = vpop.permute.xlu0 %3496
    %v3506 = vadd.f32 %v3242, %v3483
    %v3507 = vadd.f32 %v3243, %v3485
    %v3508 = vadd.f32 %v3244, %v3487
    %v3509 = vadd.f32 %v3245, %v3489
    %v3510 = vadd.f32 %v3246, %v3491
    %v3511 = vadd.f32 %v3247, %v3493
    %v3512 = vadd.f32 %v3248, %v3495
    %v3513 = vadd.f32 %v3249, %v3497
    %s3514 = sld [smem:[#allocation7 + $0x41]]
    %v3515 = vstv %s3514
    %v3516 = vmul.f32 %v3515, %v1514
    %v3517 = vmul.f32 %v3515, %v1492
    %v3518 = vmul.f32 %v3515, %v1518
    %v3519 = vmul.f32 %v3515, %v1515
    %v3520 = vmul.f32 %v3515, %v1495
    %v3521 = vmul.f32 %v3515, %v1519
    %v3522 = vmul.f32 %v3515, %v1516
    %v3523 = vmul.f32 %v3515, %v1498
    %v3524 = vmul.f32 %v3515, %v1520
    %v3525 = vmul.f32 %v3515, %v1517
    %v3526 = vmul.f32 %v3515, %v1501
    %v3527 = vmul.f32 %v3515, %v1521
    %v3540 = vrot.slane %v3516, 2
    %v3541 = vrot.slane %v3517, 2
    %v3542 = vsel %vm3213, %v3540, %v3541
    %v3543 = vrot.slane %v3518, 2
    %v3544 = vsel %vm3213, %v3541, %v3543
    %v3545 = vrot.slane %v3519, 2
    %v3546 = vrot.slane %v3520, 2
    %v3547 = vsel %vm3213, %v3545, %v3546
    %v3548 = vrot.slane %v3521, 2
    %v3549 = vsel %vm3213, %v3546, %v3548
    %v3550 = vrot.slane %v3522, 2
    %v3551 = vrot.slane %v3523, 2
    %v3552 = vsel %vm3213, %v3550, %v3551
    %v3553 = vrot.slane %v3524, 2
    %v3554 = vsel %vm3213, %v3551, %v3553
    %v3555 = vrot.slane %v3525, 2
    %v3556 = vrot.slane %v3526, 2
    %v3557 = vsel %vm3213, %v3555, %v3556
    %v3558 = vrot.slane %v3527, 2
    %v3559 = vsel %vm3213, %v3556, %v3558
    %3560 = vrot.lane.b32.xlu0 %v3542, 126
    %v3561 = vpop.permute.xlu0 %3560
    %3562 = vrot.lane.b32.xlu0 %v3544, 126
    %v3563 = vpop.permute.xlu0 %3562
    %3564 = vrot.lane.b32.xlu0 %v3547, 126
    %v3565 = vpop.permute.xlu0 %3564
    %3566 = vrot.lane.b32.xlu0 %v3549, 126
    %v3567 = vpop.permute.xlu0 %3566
    %3568 = vrot.lane.b32.xlu0 %v3552, 126
    %v3569 = vpop.permute.xlu0 %3568
    %3570 = vrot.lane.b32.xlu0 %v3554, 126
    %v3571 = vpop.permute.xlu0 %3570
    %3572 = vrot.lane.b32.xlu0 %v3557, 126
    %v3573 = vpop.permute.xlu0 %3572
    %3574 = vrot.lane.b32.xlu0 %v3559, 126
    %v3575 = vpop.permute.xlu0 %3574
    %v3584 = vadd.f32 %v3304, %v3561
    %v3585 = vadd.f32 %v3305, %v3563
    %v3586 = vadd.f32 %v3306, %v3565
    %v3587 = vadd.f32 %v3307, %v3567
    %v3588 = vadd.f32 %v3308, %v3569
    %v3589 = vadd.f32 %v3309, %v3571
    %v3590 = vadd.f32 %v3310, %v3573
    %v3591 = vadd.f32 %v3311, %v3575
    %s3592 = sld [smem:[#allocation7 + $0x11]]
    %v3593 = vstv %s3592
    %v3594 = vmul.f32 %v3593, %v1426
    %v3595 = vmul.f32 %v3593, %v1404
    %v3596 = vmul.f32 %v3593, %v1430
    %v3597 = vmul.f32 %v3593, %v1427
    %v3598 = vmul.f32 %v3593, %v1407
    %v3599 = vmul.f32 %v3593, %v1431
    %v3600 = vmul.f32 %v3593, %v1428
    %v3601 = vmul.f32 %v3593, %v1410
    %v3602 = vmul.f32 %v3593, %v1432
    %v3603 = vmul.f32 %v3593, %v1429
    %v3604 = vmul.f32 %v3593, %v1413
    %v3605 = vmul.f32 %v3593, %v1433
    %v3618 = vrot.slane %v3594, 2
    %v3619 = vrot.slane %v3595, 2
    %v3620 = vsel %vm3213, %v3618, %v3619
    %v3621 = vrot.slane %v3596, 2
    %v3622 = vsel %vm3213, %v3619, %v3621
    %v3623 = vrot.slane %v3597, 2
    %v3624 = vrot.slane %v3598, 2
    %v3625 = vsel %vm3213, %v3623, %v3624
    %v3626 = vrot.slane %v3599, 2
    %v3627 = vsel %vm3213, %v3624, %v3626
    %v3628 = vrot.slane %v3600, 2
    %v3629 = vrot.slane %v3601, 2
    %v3630 = vsel %vm3213, %v3628, %v3629
    %v3631 = vrot.slane %v3602, 2
    %v3632 = vsel %vm3213, %v3629, %v3631
    %v3633 = vrot.slane %v3603, 2
    %v3634 = vrot.slane %v3604, 2
    %v3635 = vsel %vm3213, %v3633, %v3634
    %v3636 = vrot.slane %v3605, 2
    %v3637 = vsel %vm3213, %v3634, %v3636
    %3638 = vrot.lane.b32.xlu0 %v3620, 126
    %v3639 = vpop.permute.xlu0 %3638
    %3640 = vrot.lane.b32.xlu0 %v3622, 126
    %v3641 = vpop.permute.xlu0 %3640
    %3642 = vrot.lane.b32.xlu0 %v3625, 126
    %v3643 = vpop.permute.xlu0 %3642
    %3644 = vrot.lane.b32.xlu0 %v3627, 126
    %v3645 = vpop.permute.xlu0 %3644
    %3646 = vrot.lane.b32.xlu0 %v3630, 126
    %v3647 = vpop.permute.xlu0 %3646
    %3648 = vrot.lane.b32.xlu0 %v3632, 126
    %v3649 = vpop.permute.xlu0 %3648
    %3650 = vrot.lane.b32.xlu0 %v3635, 126
    %v3651 = vpop.permute.xlu0 %3650
    %3652 = vrot.lane.b32.xlu0 %v3637, 126
    %v3653 = vpop.permute.xlu0 %3652
    %v3662 = vadd.f32 %v3366, %v3639
    %v3663 = vadd.f32 %v3367, %v3641
    %v3664 = vadd.f32 %v3368, %v3643
    %v3665 = vadd.f32 %v3369, %v3645
    %v3666 = vadd.f32 %v3370, %v3647
    %v3667 = vadd.f32 %v3371, %v3649
    %v3668 = vadd.f32 %v3372, %v3651
    %v3669 = vadd.f32 %v3373, %v3653
    %s3670 = sld [smem:[#allocation7 + $0x42]]
    %v3671 = vstv %s3670
    %v3672 = vmul.f32 %v3671, %v1514
    %v3673 = vmul.f32 %v3671, %v1492
    %v3674 = vmul.f32 %v3671, %v1518
    %v3675 = vmul.f32 %v3671, %v1515
    %v3676 = vmul.f32 %v3671, %v1495
    %v3677 = vmul.f32 %v3671, %v1519
    %v3678 = vmul.f32 %v3671, %v1516
    %v3679 = vmul.f32 %v3671, %v1498
    %v3680 = vmul.f32 %v3671, %v1520
    %v3681 = vmul.f32 %v3671, %v1517
    %v3682 = vmul.f32 %v3671, %v1501
    %v3683 = vmul.f32 %v3671, %v1521
    %v3696 = vrot.slane %v3672, 2
    %v3697 = vrot.slane %v3673, 2
    %v3698 = vsel %vm3213, %v3696, %v3697
    %v3699 = vrot.slane %v3674, 2
    %v3700 = vsel %vm3213, %v3697, %v3699
    %v3701 = vrot.slane %v3675, 2
    %v3702 = vrot.slane %v3676, 2
    %v3703 = vsel %vm3213, %v3701, %v3702
    %v3704 = vrot.slane %v3677, 2
    %v3705 = vsel %vm3213, %v3702, %v3704
    %v3706 = vrot.slane %v3678, 2
    %v3707 = vrot.slane %v3679, 2
    %v3708 = vsel %vm3213, %v3706, %v3707
    %v3709 = vrot.slane %v3680, 2
    %v3710 = vsel %vm3213, %v3707, %v3709
    %v3711 = vrot.slane %v3681, 2
    %v3712 = vrot.slane %v3682, 2
    %v3713 = vsel %vm3213, %v3711, %v3712
    %v3714 = vrot.slane %v3683, 2
    %v3715 = vsel %vm3213, %v3712, %v3714
    %3716 = vrot.lane.b32.xlu0 %v3698, 126
    %v3717 = vpop.permute.xlu0 %3716
    %3718 = vrot.lane.b32.xlu0 %v3700, 126
    %v3719 = vpop.permute.xlu0 %3718
    %3720 = vrot.lane.b32.xlu0 %v3703, 126
    %v3721 = vpop.permute.xlu0 %3720
    %3722 = vrot.lane.b32.xlu0 %v3705, 126
    %v3723 = vpop.permute.xlu0 %3722
    %3724 = vrot.lane.b32.xlu0 %v3708, 126
    %v3725 = vpop.permute.xlu0 %3724
    %3726 = vrot.lane.b32.xlu0 %v3710, 126
    %v3727 = vpop.permute.xlu0 %3726
    %3728 = vrot.lane.b32.xlu0 %v3713, 126
    %v3729 = vpop.permute.xlu0 %3728
    %3730 = vrot.lane.b32.xlu0 %v3715, 126
    %v3731 = vpop.permute.xlu0 %3730
    %v3740 = vadd.f32 %v3428, %v3717
    %v3741 = vadd.f32 %v3429, %v3719
    %v3742 = vadd.f32 %v3430, %v3721
    %v3743 = vadd.f32 %v3431, %v3723
    %v3744 = vadd.f32 %v3432, %v3725
    %v3745 = vadd.f32 %v3433, %v3727
    %v3746 = vadd.f32 %v3434, %v3729
    %v3747 = vadd.f32 %v3435, %v3731
    %s3748 = sld [smem:[#allocation7 + $0x12]]
    %v3749 = vstv %s3748
    %v3750 = vmul.f32 %v3749, %v1426
    %v3751 = vmul.f32 %v3749, %v1404
    %v3752 = vmul.f32 %v3749, %v1430
    %v3753 = vmul.f32 %v3749, %v1427
    %v3754 = vmul.f32 %v3749, %v1407
    %v3755 = vmul.f32 %v3749, %v1431
    %v3756 = vmul.f32 %v3749, %v1428
    %v3757 = vmul.f32 %v3749, %v1410
    %v3758 = vmul.f32 %v3749, %v1432
    %v3759 = vmul.f32 %v3749, %v1429
    %v3760 = vmul.f32 %v3749, %v1413
    %v3761 = vmul.f32 %v3749, %v1433
    %v3774 = vrot.slane %v3750, 2
    %v3775 = vrot.slane %v3751, 2
    %v3776 = vsel %vm3213, %v3774, %v3775
    %v3777 = vrot.slane %v3752, 2
    %v3778 = vsel %vm3213, %v3775, %v3777
    %v3779 = vrot.slane %v3753, 2
    %v3780 = vrot.slane %v3754, 2
    %v3781 = vsel %vm3213, %v3779, %v3780
    %v3782 = vrot.slane %v3755, 2
    %v3783 = vsel %vm3213, %v3780, %v3782
    %v3784 = vrot.slane %v3756, 2
    %v3785 = vrot.slane %v3757, 2
    %v3786 = vsel %vm3213, %v3784, %v3785
    %v3787 = vrot.slane %v3758, 2
    %v3788 = vsel %vm3213, %v3785, %v3787
    %v3789 = vrot.slane %v3759, 2
    %v3790 = vrot.slane %v3760, 2
    %v3791 = vsel %vm3213, %v3789, %v3790
    %v3792 = vrot.slane %v3761, 2
    %v3793 = vsel %vm3213, %v3790, %v3792
    %3794 = vrot.lane.b32.xlu0 %v3776, 124
    %v3795 = vpop.permute.xlu0 %3794
    %3796 = vrot.lane.b32.xlu0 %v3778, 124
    %v3797 = vpop.permute.xlu0 %3796
    %3798 = vrot.lane.b32.xlu0 %v3781, 124
    %v3799 = vpop.permute.xlu0 %3798
    %3800 = vrot.lane.b32.xlu0 %v3783, 124
    %v3801 = vpop.permute.xlu0 %3800
    %3802 = vrot.lane.b32.xlu0 %v3786, 124
    %v3803 = vpop.permute.xlu0 %3802
    %3804 = vrot.lane.b32.xlu0 %v3788, 124
    %v3805 = vpop.permute.xlu0 %3804
    %3806 = vrot.lane.b32.xlu0 %v3791, 124
    %v3807 = vpop.permute.xlu0 %3806
    %3808 = vrot.lane.b32.xlu0 %v3793, 124
    %v3809 = vpop.permute.xlu0 %3808
    %v3818 = vadd.f32 %v3506, %v3795
    %v3819 = vadd.f32 %v3507, %v3797
    %v3820 = vadd.f32 %v3508, %v3799
    %v3821 = vadd.f32 %v3509, %v3801
    %v3822 = vadd.f32 %v3510, %v3803
    %v3823 = vadd.f32 %v3511, %v3805
    %v3824 = vadd.f32 %v3512, %v3807
    %v3825 = vadd.f32 %v3513, %v3809
    %s3826 = sld [smem:[#allocation7 + $0x43]]
    %v3827 = vstv %s3826
    %v3828 = vmul.f32 %v3827, %v1514
    %v3829 = vmul.f32 %v3827, %v1492
    %v3830 = vmul.f32 %v3827, %v1518
    %v3831 = vmul.f32 %v3827, %v1515
    %v3832 = vmul.f32 %v3827, %v1495
    %v3833 = vmul.f32 %v3827, %v1519
    %v3834 = vmul.f32 %v3827, %v1516
    %v3835 = vmul.f32 %v3827, %v1498
    %v3836 = vmul.f32 %v3827, %v1520
    %v3837 = vmul.f32 %v3827, %v1517
    %v3838 = vmul.f32 %v3827, %v1501
    %v3839 = vmul.f32 %v3827, %v1521
    %v3852 = vrot.slane %v3828, 2
    %v3853 = vrot.slane %v3829, 2
    %v3854 = vsel %vm3213, %v3852, %v3853
    %v3855 = vrot.slane %v3830, 2
    %v3856 = vsel %vm3213, %v3853, %v3855
    %v3857 = vrot.slane %v3831, 2
    %v3858 = vrot.slane %v3832, 2
    %v3859 = vsel %vm3213, %v3857, %v3858
    %v3860 = vrot.slane %v3833, 2
    %v3861 = vsel %vm3213, %v3858, %v3860
    %v3862 = vrot.slane %v3834, 2
    %v3863 = vrot.slane %v3835, 2
    %v3864 = vsel %vm3213, %v3862, %v3863
    %v3865 = vrot.slane %v3836, 2
    %v3866 = vsel %vm3213, %v3863, %v3865
    %v3867 = vrot.slane %v3837, 2
    %v3868 = vrot.slane %v3838, 2
    %v3869 = vsel %vm3213, %v3867, %v3868
    %v3870 = vrot.slane %v3839, 2
    %v3871 = vsel %vm3213, %v3868, %v3870
    %3872 = vrot.lane.b32.xlu0 %v3854, 124
    %v3873 = vpop.permute.xlu0 %3872
    %3874 = vrot.lane.b32.xlu0 %v3856, 124
    %v3875 = vpop.permute.xlu0 %3874
    %3876 = vrot.lane.b32.xlu0 %v3859, 124
    %v3877 = vpop.permute.xlu0 %3876
    %3878 = vrot.lane.b32.xlu0 %v3861, 124
    %v3879 = vpop.permute.xlu0 %3878
    %3880 = vrot.lane.b32.xlu0 %v3864, 124
    %v3881 = vpop.permute.xlu0 %3880
    %3882 = vrot.lane.b32.xlu0 %v3866, 124
    %v3883 = vpop.permute.xlu0 %3882
    %3884 = vrot.lane.b32.xlu0 %v3869, 124
    %v3885 = vpop.permute.xlu0 %3884
    %3886 = vrot.lane.b32.xlu0 %v3871, 124
    %v3887 = vpop.permute.xlu0 %3886
    %v3896 = vadd.f32 %v3584, %v3873
    %v3897 = vadd.f32 %v3585, %v3875
    %v3898 = vadd.f32 %v3586, %v3877
    %v3899 = vadd.f32 %v3587, %v3879
    %v3900 = vadd.f32 %v3588, %v3881
    %v3901 = vadd.f32 %v3589, %v3883
    %v3902 = vadd.f32 %v3590, %v3885
    %v3903 = vadd.f32 %v3591, %v3887
    %s3904 = sld [smem:[#allocation7 + $0x13]]
    %v3905 = vstv %s3904
    %v3906 = vmul.f32 %v3905, %v1426
    %v3907 = vmul.f32 %v3905, %v1404
    %v3908 = vmul.f32 %v3905, %v1430
    %v3909 = vmul.f32 %v3905, %v1427
    %v3910 = vmul.f32 %v3905, %v1407
    %v3911 = vmul.f32 %v3905, %v1431
    %v3912 = vmul.f32 %v3905, %v1428
    %v3913 = vmul.f32 %v3905, %v1410
    %v3914 = vmul.f32 %v3905, %v1432
    %v3915 = vmul.f32 %v3905, %v1429
    %v3916 = vmul.f32 %v3905, %v1413
    %v3917 = vmul.f32 %v3905, %v1433
    %v3930 = vrot.slane %v3906, 2
    %v3931 = vrot.slane %v3907, 2
    %v3932 = vsel %vm3213, %v3930, %v3931
    %v3933 = vrot.slane %v3908, 2
    %v3934 = vsel %vm3213, %v3931, %v3933
    %v3935 = vrot.slane %v3909, 2
    %v3936 = vrot.slane %v3910, 2
    %v3937 = vsel %vm3213, %v3935, %v3936
    %v3938 = vrot.slane %v3911, 2
    %v3939 = vsel %vm3213, %v3936, %v3938
    %v3940 = vrot.slane %v3912, 2
    %v3941 = vrot.slane %v3913, 2
    %v3942 = vsel %vm3213, %v3940, %v3941
    %v3943 = vrot.slane %v3914, 2
    %v3944 = vsel %vm3213, %v3941, %v3943
    %v3945 = vrot.slane %v3915, 2
    %v3946 = vrot.slane %v3916, 2
    %v3947 = vsel %vm3213, %v3945, %v3946
    %v3948 = vrot.slane %v3917, 2
    %v3949 = vsel %vm3213, %v3946, %v3948
    %3950 = vrot.lane.b32.xlu0 %v3932, 124
    %v3951 = vpop.permute.xlu0 %3950
    %3952 = vrot.lane.b32.xlu0 %v3934, 124
    %v3953 = vpop.permute.xlu0 %3952
    %3954 = vrot.lane.b32.xlu0 %v3937, 124
    %v3955 = vpop.permute.xlu0 %3954
    %3956 = vrot.lane.b32.xlu0 %v3939, 124
    %v3957 = vpop.permute.xlu0 %3956
    %3958 = vrot.lane.b32.xlu0 %v3942, 124
    %v3959 = vpop.permute.xlu0 %3958
    %3960 = vrot.lane.b32.xlu0 %v3944, 124
    %v3961 = vpop.permute.xlu0 %3960
    %3962 = vrot.lane.b32.xlu0 %v3947, 124
    %v3963 = vpop.permute.xlu0 %3962
    %3964 = vrot.lane.b32.xlu0 %v3949, 124
    %v3965 = vpop.permute.xlu0 %3964
    %v3974 = vadd.f32 %v3662, %v3951
    %v3975 = vadd.f32 %v3663, %v3953
    %v3976 = vadd.f32 %v3664, %v3955
    %v3977 = vadd.f32 %v3665, %v3957
    %v3978 = vadd.f32 %v3666, %v3959
    %v3979 = vadd.f32 %v3667, %v3961
    %v3980 = vadd.f32 %v3668, %v3963
    %v3981 = vadd.f32 %v3669, %v3965
    %s3982 = sld [smem:[#allocation7 + $0x44]]
    %v3983 = vstv %s3982
    %v3984 = vmul.f32 %v3983, %v1514
    %v3985 = vmul.f32 %v3983, %v1492
    %v3986 = vmul.f32 %v3983, %v1518
    %v3987 = vmul.f32 %v3983, %v1515
    %v3988 = vmul.f32 %v3983, %v1495
    %v3989 = vmul.f32 %v3983, %v1519
    %v3990 = vmul.f32 %v3983, %v1516
    %v3991 = vmul.f32 %v3983, %v1498
    %v3992 = vmul.f32 %v3983, %v1520
    %v3993 = vmul.f32 %v3983, %v1517
    %v3994 = vmul.f32 %v3983, %v1501
    %v3995 = vmul.f32 %v3983, %v1521
    %v4008 = vrot.slane %v3984, 2
    %v4009 = vrot.slane %v3985, 2
    %v4010 = vsel %vm3213, %v4008, %v4009
    %v4011 = vrot.slane %v3986, 2
    %v4012 = vsel %vm3213, %v4009, %v4011
    %v4013 = vrot.slane %v3987, 2
    %v4014 = vrot.slane %v3988, 2
    %v4015 = vsel %vm3213, %v4013, %v4014
    %v4016 = vrot.slane %v3989, 2
    %v4017 = vsel %vm3213, %v4014, %v4016
    %v4018 = vrot.slane %v3990, 2
    %v4019 = vrot.slane %v3991, 2
    %v4020 = vsel %vm3213, %v4018, %v4019
    %v4021 = vrot.slane %v3992, 2
    %v4022 = vsel %vm3213, %v4019, %v4021
    %v4023 = vrot.slane %v3993, 2
    %v4024 = vrot.slane %v3994, 2
    %v4025 = vsel %vm3213, %v4023, %v4024
    %v4026 = vrot.slane %v3995, 2
    %v4027 = vsel %vm3213, %v4024, %v4026
    %4028 = vrot.lane.b32.xlu0 %v4010, 124
    %v4029 = vpop.permute.xlu0 %4028
    %4030 = vrot.lane.b32.xlu0 %v4012, 124
    %v4031 = vpop.permute.xlu0 %4030
    %4032 = vrot.lane.b32.xlu0 %v4015, 124
    %v4033 = vpop.permute.xlu0 %4032
    %4034 = vrot.lane.b32.xlu0 %v4017, 124
    %v4035 = vpop.permute.xlu0 %4034
    %4036 = vrot.lane.b32.xlu0 %v4020, 124
    %v4037 = vpop.permute.xlu0 %4036
    %4038 = vrot.lane.b32.xlu0 %v4022, 124
    %v4039 = vpop.permute.xlu0 %4038
    %4040 = vrot.lane.b32.xlu0 %v4025, 124
    %v4041 = vpop.permute.xlu0 %4040
    %4042 = vrot.lane.b32.xlu0 %v4027, 124
    %v4043 = vpop.permute.xlu0 %4042
    %v4052 = vadd.f32 %v3740, %v4029
    %v4053 = vadd.f32 %v3741, %v4031
    %v4054 = vadd.f32 %v3742, %v4033
    %v4055 = vadd.f32 %v3743, %v4035
    %v4056 = vadd.f32 %v3744, %v4037
    %v4057 = vadd.f32 %v3745, %v4039
    %v4058 = vadd.f32 %v3746, %v4041
    %v4059 = vadd.f32 %v3747, %v4043
    %s4060 = sld [smem:[#allocation7 + $0x14]]
    %v4061 = vstv %s4060
    %v4062 = vmul.f32 %v4061, %v1426
    %v4063 = vmul.f32 %v4061, %v1404
    %v4064 = vmul.f32 %v4061, %v1430
    %v4065 = vmul.f32 %v4061, %v1427
    %v4066 = vmul.f32 %v4061, %v1407
    %v4067 = vmul.f32 %v4061, %v1431
    %v4068 = vmul.f32 %v4061, %v1428
    %v4069 = vmul.f32 %v4061, %v1410
    %v4070 = vmul.f32 %v4061, %v1432
    %v4071 = vmul.f32 %v4061, %v1429
    %v4072 = vmul.f32 %v4061, %v1413
    %v4073 = vmul.f32 %v4061, %v1433
    %v4086 = vrot.slane %v4062, 2
    %v4087 = vrot.slane %v4063, 2
    %v4088 = vsel %vm3213, %v4086, %v4087
    %v4089 = vrot.slane %v4064, 2
    %v4090 = vsel %vm3213, %v4087, %v4089
    %v4091 = vrot.slane %v4065, 2
    %v4092 = vrot.slane %v4066, 2
    %v4093 = vsel %vm3213, %v4091, %v4092
    %v4094 = vrot.slane %v4067, 2
    %v4095 = vsel %vm3213, %v4092, %v4094
    %v4096 = vrot.slane %v4068, 2
    %v4097 = vrot.slane %v4069, 2
    %v4098 = vsel %vm3213, %v4096, %v4097
    %v4099 = vrot.slane %v4070, 2
    %v4100 = vsel %vm3213, %v4097, %v4099
    %v4101 = vrot.slane %v4071, 2
    %v4102 = vrot.slane %v4072, 2
    %v4103 = vsel %vm3213, %v4101, %v4102
    %v4104 = vrot.slane %v4073, 2
    %v4105 = vsel %vm3213, %v4102, %v4104
    %4106 = vrot.lane.b32.xlu0 %v4088, 122
    %v4107 = vpop.permute.xlu0 %4106
    %4108 = vrot.lane.b32.xlu0 %v4090, 122
    %v4109 = vpop.permute.xlu0 %4108
    %4110 = vrot.lane.b32.xlu0 %v4093, 122
    %v4111 = vpop.permute.xlu0 %4110
    %4112 = vrot.lane.b32.xlu0 %v4095, 122
    %v4113 = vpop.permute.xlu0 %4112
    %4114 = vrot.lane.b32.xlu0 %v4098, 122
    %v4115 = vpop.permute.xlu0 %4114
    %4116 = vrot.lane.b32.xlu0 %v4100, 122
    %v4117 = vpop.permute.xlu0 %4116
    %4118 = vrot.lane.b32.xlu0 %v4103, 122
    %v4119 = vpop.permute.xlu0 %4118
    %4120 = vrot.lane.b32.xlu0 %v4105, 122
    %v4121 = vpop.permute.xlu0 %4120
    %v4130 = vadd.f32 %v3818, %v4107
    %v4131 = vadd.f32 %v3819, %v4109
    %v4132 = vadd.f32 %v3820, %v4111
    %v4133 = vadd.f32 %v3821, %v4113
    %v4134 = vadd.f32 %v3822, %v4115
    %v4135 = vadd.f32 %v3823, %v4117
    %v4136 = vadd.f32 %v3824, %v4119
    %v4137 = vadd.f32 %v3825, %v4121
    %s4138 = sld [smem:[#allocation7 + $0x45]]
    %v4139 = vstv %s4138
    %v4140 = vmul.f32 %v4139, %v1514
    %v4141 = vmul.f32 %v4139, %v1492
    %v4142 = vmul.f32 %v4139, %v1518
    %v4143 = vmul.f32 %v4139, %v1515
    %v4144 = vmul.f32 %v4139, %v1495
    %v4145 = vmul.f32 %v4139, %v1519
    %v4146 = vmul.f32 %v4139, %v1516
    %v4147 = vmul.f32 %v4139, %v1498
    %v4148 = vmul.f32 %v4139, %v1520
    %v4149 = vmul.f32 %v4139, %v1517
    %v4150 = vmul.f32 %v4139, %v1501
    %v4151 = vmul.f32 %v4139, %v1521
    %v4164 = vrot.slane %v4140, 2
    %v4165 = vrot.slane %v4141, 2
    %v4166 = vsel %vm3213, %v4164, %v4165
    %v4167 = vrot.slane %v4142, 2
    %v4168 = vsel %vm3213, %v4165, %v4167
    %v4169 = vrot.slane %v4143, 2
    %v4170 = vrot.slane %v4144, 2
    %v4171 = vsel %vm3213, %v4169, %v4170
    %v4172 = vrot.slane %v4145, 2
    %v4173 = vsel %vm3213, %v4170, %v4172
    %v4174 = vrot.slane %v4146, 2
    %v4175 = vrot.slane %v4147, 2
    %v4176 = vsel %vm3213, %v4174, %v4175
    %v4177 = vrot.slane %v4148, 2
    %v4178 = vsel %vm3213, %v4175, %v4177
    %v4179 = vrot.slane %v4149, 2
    %v4180 = vrot.slane %v4150, 2
    %v4181 = vsel %vm3213, %v4179, %v4180
    %v4182 = vrot.slane %v4151, 2
    %v4183 = vsel %vm3213, %v4180, %v4182
    %4184 = vrot.lane.b32.xlu0 %v4166, 122
    %v4185 = vpop.permute.xlu0 %4184
    %4186 = vrot.lane.b32.xlu0 %v4168, 122
    %v4187 = vpop.permute.xlu0 %4186
    %4188 = vrot.lane.b32.xlu0 %v4171, 122
    %v4189 = vpop.permute.xlu0 %4188
    %4190 = vrot.lane.b32.xlu0 %v4173, 122
    %v4191 = vpop.permute.xlu0 %4190
    %4192 = vrot.lane.b32.xlu0 %v4176, 122
    %v4193 = vpop.permute.xlu0 %4192
    %4194 = vrot.lane.b32.xlu0 %v4178, 122
    %v4195 = vpop.permute.xlu0 %4194
    %4196 = vrot.lane.b32.xlu0 %v4181, 122
    %v4197 = vpop.permute.xlu0 %4196
    %4198 = vrot.lane.b32.xlu0 %v4183, 122
    %v4199 = vpop.permute.xlu0 %4198
    %v4208 = vadd.f32 %v3896, %v4185
    %v4209 = vadd.f32 %v3897, %v4187
    %v4210 = vadd.f32 %v3898, %v4189
    %v4211 = vadd.f32 %v3899, %v4191
    %v4212 = vadd.f32 %v3900, %v4193
    %v4213 = vadd.f32 %v3901, %v4195
    %v4214 = vadd.f32 %v3902, %v4197
    %v4215 = vadd.f32 %v3903, %v4199
    %s4216 = sld [smem:[#allocation7 + $0x15]]
    %v4217 = vstv %s4216
    %v4218 = vmul.f32 %v4217, %v1426
    %v4219 = vmul.f32 %v4217, %v1404
    %v4220 = vmul.f32 %v4217, %v1430
    %v4221 = vmul.f32 %v4217, %v1427
    %v4222 = vmul.f32 %v4217, %v1407
    %v4223 = vmul.f32 %v4217, %v1431
    %v4224 = vmul.f32 %v4217, %v1428
    %v4225 = vmul.f32 %v4217, %v1410
    %v4226 = vmul.f32 %v4217, %v1432
    %v4227 = vmul.f32 %v4217, %v1429
    %v4228 = vmul.f32 %v4217, %v1413
    %v4229 = vmul.f32 %v4217, %v1433
    %vm4242 = vcmask 1044480
    %v4243 = vrot.slane %v4218, 3
    %v4244 = vrot.slane %v4219, 3
    %v4245 = vsel %vm4242, %v4243, %v4244
    %v4246 = vrot.slane %v4220, 3
    %v4247 = vsel %vm4242, %v4244, %v4246
    %v4248 = vrot.slane %v4221, 3
    %v4249 = vrot.slane %v4222, 3
    %v4250 = vsel %vm4242, %v4248, %v4249
    %v4251 = vrot.slane %v4223, 3
    %v4252 = vsel %vm4242, %v4249, %v4251
    %v4253 = vrot.slane %v4224, 3
    %v4254 = vrot.slane %v4225, 3
    %v4255 = vsel %vm4242, %v4253, %v4254
    %v4256 = vrot.slane %v4226, 3
    %v4257 = vsel %vm4242, %v4254, %v4256
    %v4258 = vrot.slane %v4227, 3
    %v4259 = vrot.slane %v4228, 3
    %v4260 = vsel %vm4242, %v4258, %v4259
    %v4261 = vrot.slane %v4229, 3
    %v4262 = vsel %vm4242, %v4259, %v4261
    %4263 = vrot.lane.b32.xlu0 %v4245, 1
    %v4264 = vpop.permute.xlu0 %4263
    %4265 = vrot.lane.b32.xlu0 %v4247, 1
    %v4266 = vpop.permute.xlu0 %4265
    %4267 = vrot.lane.b32.xlu0 %v4250, 1
    %v4268 = vpop.permute.xlu0 %4267
    %4269 = vrot.lane.b32.xlu0 %v4252, 1
    %v4270 = vpop.permute.xlu0 %4269
    %4271 = vrot.lane.b32.xlu0 %v4255, 1
    %v4272 = vpop.permute.xlu0 %4271
    %4273 = vrot.lane.b32.xlu0 %v4257, 1
    %v4274 = vpop.permute.xlu0 %4273
    %4275 = vrot.lane.b32.xlu0 %v4260, 1
    %v4276 = vpop.permute.xlu0 %4275
    %4277 = vrot.lane.b32.xlu0 %v4262, 1
    %v4278 = vpop.permute.xlu0 %4277
    %v4287 = vadd.f32 %v3974, %v4264
    %v4288 = vadd.f32 %v3975, %v4266
    %v4289 = vadd.f32 %v3976, %v4268
    %v4290 = vadd.f32 %v3977, %v4270
    %v4291 = vadd.f32 %v3978, %v4272
    %v4292 = vadd.f32 %v3979, %v4274
    %v4293 = vadd.f32 %v3980, %v4276
    %v4294 = vadd.f32 %v3981, %v4278
    %s4295 = sld [smem:[#allocation7 + $0x46]]
    %v4296 = vstv %s4295
    %v4297 = vmul.f32 %v4296, %v1514
    %v4298 = vmul.f32 %v4296, %v1492
    %v4299 = vmul.f32 %v4296, %v1518
    %v4300 = vmul.f32 %v4296, %v1515
    %v4301 = vmul.f32 %v4296, %v1495
    %v4302 = vmul.f32 %v4296, %v1519
    %v4303 = vmul.f32 %v4296, %v1516
    %v4304 = vmul.f32 %v4296, %v1498
    %v4305 = vmul.f32 %v4296, %v1520
    %v4306 = vmul.f32 %v4296, %v1517
    %v4307 = vmul.f32 %v4296, %v1501
    %v4308 = vmul.f32 %v4296, %v1521
    %v4321 = vrot.slane %v4297, 3
    %v4322 = vrot.slane %v4298, 3
    %v4323 = vsel %vm4242, %v4321, %v4322
    %v4324 = vrot.slane %v4299, 3
    %v4325 = vsel %vm4242, %v4322, %v4324
    %v4326 = vrot.slane %v4300, 3
    %v4327 = vrot.slane %v4301, 3
    %v4328 = vsel %vm4242, %v4326, %v4327
    %v4329 = vrot.slane %v4302, 3
    %v4330 = vsel %vm4242, %v4327, %v4329
    %v4331 = vrot.slane %v4303, 3
    %v4332 = vrot.slane %v4304, 3
    %v4333 = vsel %vm4242, %v4331, %v4332
    %v4334 = vrot.slane %v4305, 3
    %v4335 = vsel %vm4242, %v4332, %v4334
    %v4336 = vrot.slane %v4306, 3
    %v4337 = vrot.slane %v4307, 3
    %v4338 = vsel %vm4242, %v4336, %v4337
    %v4339 = vrot.slane %v4308, 3
    %v4340 = vsel %vm4242, %v4337, %v4339
    %4341 = vrot.lane.b32.xlu0 %v4323, 1
    %v4342 = vpop.permute.xlu0 %4341
    %4343 = vrot.lane.b32.xlu0 %v4325, 1
    %v4344 = vpop.permute.xlu0 %4343
    %4345 = vrot.lane.b32.xlu0 %v4328, 1
    %v4346 = vpop.permute.xlu0 %4345
    %4347 = vrot.lane.b32.xlu0 %v4330, 1
    %v4348 = vpop.permute.xlu0 %4347
    %4349 = vrot.lane.b32.xlu0 %v4333, 1
    %v4350 = vpop.permute.xlu0 %4349
    %4351 = vrot.lane.b32.xlu0 %v4335, 1
    %v4352 = vpop.permute.xlu0 %4351
    %4353 = vrot.lane.b32.xlu0 %v4338, 1
    %v4354 = vpop.permute.xlu0 %4353
    %4355 = vrot.lane.b32.xlu0 %v4340, 1
    %v4356 = vpop.permute.xlu0 %4355
    %v4365 = vadd.f32 %v4052, %v4342
    %v4366 = vadd.f32 %v4053, %v4344
    %v4367 = vadd.f32 %v4054, %v4346
    %v4368 = vadd.f32 %v4055, %v4348
    %v4369 = vadd.f32 %v4056, %v4350
    %v4370 = vadd.f32 %v4057, %v4352
    %v4371 = vadd.f32 %v4058, %v4354
    %v4372 = vadd.f32 %v4059, %v4356
    %s4373 = sld [smem:[#allocation7 + $0x16]]
    %v4374 = vstv %s4373
    %v4375 = vmul.f32 %v4374, %v1426
    %v4376 = vmul.f32 %v4374, %v1404
    %v4377 = vmul.f32 %v4374, %v1430
    %v4378 = vmul.f32 %v4374, %v1427
    %v4379 = vmul.f32 %v4374, %v1407
    %v4380 = vmul.f32 %v4374, %v1431
    %v4381 = vmul.f32 %v4374, %v1428
    %v4382 = vmul.f32 %v4374, %v1410
    %v4383 = vmul.f32 %v4374, %v1432
    %v4384 = vmul.f32 %v4374, %v1429
    %v4385 = vmul.f32 %v4374, %v1413
    %v4386 = vmul.f32 %v4374, %v1433
    %v4399 = vrot.slane %v4375, 3
    %v4400 = vrot.slane %v4376, 3
    %v4401 = vsel %vm4242, %v4399, %v4400
    %v4402 = vrot.slane %v4377, 3
    %v4403 = vsel %vm4242, %v4400, %v4402
    %v4404 = vrot.slane %v4378, 3
    %v4405 = vrot.slane %v4379, 3
    %v4406 = vsel %vm4242, %v4404, %v4405
    %v4407 = vrot.slane %v4380, 3
    %v4408 = vsel %vm4242, %v4405, %v4407
    %v4409 = vrot.slane %v4381, 3
    %v4410 = vrot.slane %v4382, 3
    %v4411 = vsel %vm4242, %v4409, %v4410
    %v4412 = vrot.slane %v4383, 3
    %v4413 = vsel %vm4242, %v4410, %v4412
    %v4414 = vrot.slane %v4384, 3
    %v4415 = vrot.slane %v4385, 3
    %v4416 = vsel %vm4242, %v4414, %v4415
    %v4417 = vrot.slane %v4386, 3
    %v4418 = vsel %vm4242, %v4415, %v4417
    %4419 = vrot.lane.b32.xlu0 %v4401, 127
    %v4420 = vpop.permute.xlu0 %4419
    %4421 = vrot.lane.b32.xlu0 %v4403, 127
    %v4422 = vpop.permute.xlu0 %4421
    %4423 = vrot.lane.b32.xlu0 %v4406, 127
    %v4424 = vpop.permute.xlu0 %4423
    %4425 = vrot.lane.b32.xlu0 %v4408, 127
    %v4426 = vpop.permute.xlu0 %4425
    %4427 = vrot.lane.b32.xlu0 %v4411, 127
    %v4428 = vpop.permute.xlu0 %4427
    %4429 = vrot.lane.b32.xlu0 %v4413, 127
    %v4430 = vpop.permute.xlu0 %4429
    %4431 = vrot.lane.b32.xlu0 %v4416, 127
    %v4432 = vpop.permute.xlu0 %4431
    %4433 = vrot.lane.b32.xlu0 %v4418, 127
    %v4434 = vpop.permute.xlu0 %4433
    %v4443 = vadd.f32 %v4130, %v4420
    %v4444 = vadd.f32 %v4131, %v4422
    %v4445 = vadd.f32 %v4132, %v4424
    %v4446 = vadd.f32 %v4133, %v4426
    %v4447 = vadd.f32 %v4134, %v4428
    %v4448 = vadd.f32 %v4135, %v4430
    %v4449 = vadd.f32 %v4136, %v4432
    %v4450 = vadd.f32 %v4137, %v4434
    %s4451 = sld [smem:[#allocation7 + $0x47]]
    %v4452 = vstv %s4451
    %v4453 = vmul.f32 %v4452, %v1514
    %v4454 = vmul.f32 %v4452, %v1492
    %v4455 = vmul.f32 %v4452, %v1518
    %v4456 = vmul.f32 %v4452, %v1515
    %v4457 = vmul.f32 %v4452, %v1495
    %v4458 = vmul.f32 %v4452, %v1519
    %v4459 = vmul.f32 %v4452, %v1516
    %v4460 = vmul.f32 %v4452, %v1498
    %v4461 = vmul.f32 %v4452, %v1520
    %v4462 = vmul.f32 %v4452, %v1517
    %v4463 = vmul.f32 %v4452, %v1501
    %v4464 = vmul.f32 %v4452, %v1521
    %v4477 = vrot.slane %v4453, 3
    %v4478 = vrot.slane %v4454, 3
    %v4479 = vsel %vm4242, %v4477, %v4478
    %v4480 = vrot.slane %v4455, 3
    %v4481 = vsel %vm4242, %v4478, %v4480
    %v4482 = vrot.slane %v4456, 3
    %v4483 = vrot.slane %v4457, 3
    %v4484 = vsel %vm4242, %v4482, %v4483
    %v4485 = vrot.slane %v4458, 3
    %v4486 = vsel %vm4242, %v4483, %v4485
    %v4487 = vrot.slane %v4459, 3
    %v4488 = vrot.slane %v4460, 3
    %v4489 = vsel %vm4242, %v4487, %v4488
    %v4490 = vrot.slane %v4461, 3
    %v4491 = vsel %vm4242, %v4488, %v4490
    %v4492 = vrot.slane %v4462, 3
    %v4493 = vrot.slane %v4463, 3
    %v4494 = vsel %vm4242, %v4492, %v4493
    %v4495 = vrot.slane %v4464, 3
    %v4496 = vsel %vm4242, %v4493, %v4495
    %4497 = vrot.lane.b32.xlu0 %v4479, 127
    %v4498 = vpop.permute.xlu0 %4497
    %4499 = vrot.lane.b32.xlu0 %v4481, 127
    %v4500 = vpop.permute.xlu0 %4499
    %4501 = vrot.lane.b32.xlu0 %v4484, 127
    %v4502 = vpop.permute.xlu0 %4501
    %4503 = vrot.lane.b32.xlu0 %v4486, 127
    %v4504 = vpop.permute.xlu0 %4503
    %4505 = vrot.lane.b32.xlu0 %v4489, 127
    %v4506 = vpop.permute.xlu0 %4505
    %4507 = vrot.lane.b32.xlu0 %v4491, 127
    %v4508 = vpop.permute.xlu0 %4507
    %4509 = vrot.lane.b32.xlu0 %v4494, 127
    %v4510 = vpop.permute.xlu0 %4509
    %4511 = vrot.lane.b32.xlu0 %v4496, 127
    %v4512 = vpop.permute.xlu0 %4511
    %v4521 = vadd.f32 %v4208, %v4498
    %v4522 = vadd.f32 %v4209, %v4500
    %v4523 = vadd.f32 %v4210, %v4502
    %v4524 = vadd.f32 %v4211, %v4504
    %v4525 = vadd.f32 %v4212, %v4506
    %v4526 = vadd.f32 %v4213, %v4508
    %v4527 = vadd.f32 %v4214, %v4510
    %v4528 = vadd.f32 %v4215, %v4512
    %s4529 = sld [smem:[#allocation7 + $0x17]]
    %v4530 = vstv %s4529
    %v4531 = vmul.f32 %v4530, %v1426
    %v4532 = vmul.f32 %v4530, %v1404
    %v4533 = vmul.f32 %v4530, %v1430
    %v4534 = vmul.f32 %v4530, %v1427
    %v4535 = vmul.f32 %v4530, %v1407
    %v4536 = vmul.f32 %v4530, %v1431
    %v4537 = vmul.f32 %v4530, %v1428
    %v4538 = vmul.f32 %v4530, %v1410
    %v4539 = vmul.f32 %v4530, %v1432
    %v4540 = vmul.f32 %v4530, %v1429
    %v4541 = vmul.f32 %v4530, %v1413
    %v4542 = vmul.f32 %v4530, %v1433
    %v4555 = vrot.slane %v4531, 3
    %v4556 = vrot.slane %v4532, 3
    %v4557 = vsel %vm4242, %v4555, %v4556
    %v4558 = vrot.slane %v4533, 3
    %v4559 = vsel %vm4242, %v4556, %v4558
    %v4560 = vrot.slane %v4534, 3
    %v4561 = vrot.slane %v4535, 3
    %v4562 = vsel %vm4242, %v4560, %v4561
    %v4563 = vrot.slane %v4536, 3
    %v4564 = vsel %vm4242, %v4561, %v4563
    %v4565 = vrot.slane %v4537, 3
    %v4566 = vrot.slane %v4538, 3
    %v4567 = vsel %vm4242, %v4565, %v4566
    %v4568 = vrot.slane %v4539, 3
    %v4569 = vsel %vm4242, %v4566, %v4568
    %v4570 = vrot.slane %v4540, 3
    %v4571 = vrot.slane %v4541, 3
    %v4572 = vsel %vm4242, %v4570, %v4571
    %v4573 = vrot.slane %v4542, 3
    %v4574 = vsel %vm4242, %v4571, %v4573
    %4575 = vrot.lane.b32.xlu0 %v4557, 127
    %v4576 = vpop.permute.xlu0 %4575
    %4577 = vrot.lane.b32.xlu0 %v4559, 127
    %v4578 = vpop.permute.xlu0 %4577
    %4579 = vrot.lane.b32.xlu0 %v4562, 127
    %v4580 = vpop.permute.xlu0 %4579
    %4581 = vrot.lane.b32.xlu0 %v4564, 127
    %v4582 = vpop.permute.xlu0 %4581
    %4583 = vrot.lane.b32.xlu0 %v4567, 127
    %v4584 = vpop.permute.xlu0 %4583
    %4585 = vrot.lane.b32.xlu0 %v4569, 127
    %v4586 = vpop.permute.xlu0 %4585
    %4587 = vrot.lane.b32.xlu0 %v4572, 127
    %v4588 = vpop.permute.xlu0 %4587
    %4589 = vrot.lane.b32.xlu0 %v4574, 127
    %v4590 = vpop.permute.xlu0 %4589
    %v4599 = vadd.f32 %v4287, %v4576
    %v4600 = vadd.f32 %v4288, %v4578
    %v4601 = vadd.f32 %v4289, %v4580
    %v4602 = vadd.f32 %v4290, %v4582
    %v4603 = vadd.f32 %v4291, %v4584
    %v4604 = vadd.f32 %v4292, %v4586
    %v4605 = vadd.f32 %v4293, %v4588
    %v4606 = vadd.f32 %v4294, %v4590
    %s4607 = sld [smem:[#allocation7 + $0x48]]
    %v4608 = vstv %s4607
    %v4609 = vmul.f32 %v4608, %v1514
    %v4610 = vmul.f32 %v4608, %v1492
    %v4611 = vmul.f32 %v4608, %v1518
    %v4612 = vmul.f32 %v4608, %v1515
    %v4613 = vmul.f32 %v4608, %v1495
    %v4614 = vmul.f32 %v4608, %v1519
    %v4615 = vmul.f32 %v4608, %v1516
    %v4616 = vmul.f32 %v4608, %v1498
    %v4617 = vmul.f32 %v4608, %v1520
    %v4618 = vmul.f32 %v4608, %v1517
    %v4619 = vmul.f32 %v4608, %v1501
    %v4620 = vmul.f32 %v4608, %v1521
    %v4633 = vrot.slane %v4609, 3
    %v4634 = vrot.slane %v4610, 3
    %v4635 = vsel %vm4242, %v4633, %v4634
    %v4636 = vrot.slane %v4611, 3
    %v4637 = vsel %vm4242, %v4634, %v4636
    %v4638 = vrot.slane %v4612, 3
    %v4639 = vrot.slane %v4613, 3
    %v4640 = vsel %vm4242, %v4638, %v4639
    %v4641 = vrot.slane %v4614, 3
    %v4642 = vsel %vm4242, %v4639, %v4641
    %v4643 = vrot.slane %v4615, 3
    %v4644 = vrot.slane %v4616, 3
    %v4645 = vsel %vm4242, %v4643, %v4644
    %v4646 = vrot.slane %v4617, 3
    %v4647 = vsel %vm4242, %v4644, %v4646
    %v4648 = vrot.slane %v4618, 3
    %v4649 = vrot.slane %v4619, 3
    %v4650 = vsel %vm4242, %v4648, %v4649
    %v4651 = vrot.slane %v4620, 3
    %v4652 = vsel %vm4242, %v4649, %v4651
    %4653 = vrot.lane.b32.xlu0 %v4635, 127
    %v4654 = vpop.permute.xlu0 %4653
    %4655 = vrot.lane.b32.xlu0 %v4637, 127
    %v4656 = vpop.permute.xlu0 %4655
    %4657 = vrot.lane.b32.xlu0 %v4640, 127
    %v4658 = vpop.permute.xlu0 %4657
    %4659 = vrot.lane.b32.xlu0 %v4642, 127
    %v4660 = vpop.permute.xlu0 %4659
    %4661 = vrot.lane.b32.xlu0 %v4645, 127
    %v4662 = vpop.permute.xlu0 %4661
    %4663 = vrot.lane.b32.xlu0 %v4647, 127
    %v4664 = vpop.permute.xlu0 %4663
    %4665 = vrot.lane.b32.xlu0 %v4650, 127
    %v4666 = vpop.permute.xlu0 %4665
    %4667 = vrot.lane.b32.xlu0 %v4652, 127
    %v4668 = vpop.permute.xlu0 %4667
    %v4677 = vadd.f32 %v4365, %v4654
    %v4678 = vadd.f32 %v4366, %v4656
    %v4679 = vadd.f32 %v4367, %v4658
    %v4680 = vadd.f32 %v4368, %v4660
    %v4681 = vadd.f32 %v4369, %v4662
    %v4682 = vadd.f32 %v4370, %v4664
    %v4683 = vadd.f32 %v4371, %v4666
    %v4684 = vadd.f32 %v4372, %v4668
    %s4685 = sld [smem:[#allocation7 + $0x18]]
    %v4686 = vstv %s4685
    %v4687 = vmul.f32 %v4686, %v1426
    %v4688 = vmul.f32 %v4686, %v1404
    %v4689 = vmul.f32 %v4686, %v1430
    %v4690 = vmul.f32 %v4686, %v1427
    %v4691 = vmul.f32 %v4686, %v1407
    %v4692 = vmul.f32 %v4686, %v1431
    %v4693 = vmul.f32 %v4686, %v1428
    %v4694 = vmul.f32 %v4686, %v1410
    %v4695 = vmul.f32 %v4686, %v1432
    %v4696 = vmul.f32 %v4686, %v1429
    %v4697 = vmul.f32 %v4686, %v1413
    %v4698 = vmul.f32 %v4686, %v1433
    %v4711 = vrot.slane %v4687, 3
    %v4712 = vrot.slane %v4688, 3
    %v4713 = vsel %vm4242, %v4711, %v4712
    %v4714 = vrot.slane %v4689, 3
    %v4715 = vsel %vm4242, %v4712, %v4714
    %v4716 = vrot.slane %v4690, 3
    %v4717 = vrot.slane %v4691, 3
    %v4718 = vsel %vm4242, %v4716, %v4717
    %v4719 = vrot.slane %v4692, 3
    %v4720 = vsel %vm4242, %v4717, %v4719
    %v4721 = vrot.slane %v4693, 3
    %v4722 = vrot.slane %v4694, 3
    %v4723 = vsel %vm4242, %v4721, %v4722
    %v4724 = vrot.slane %v4695, 3
    %v4725 = vsel %vm4242, %v4722, %v4724
    %v4726 = vrot.slane %v4696, 3
    %v4727 = vrot.slane %v4697, 3
    %v4728 = vsel %vm4242, %v4726, %v4727
    %v4729 = vrot.slane %v4698, 3
    %v4730 = vsel %vm4242, %v4727, %v4729
    %4731 = vrot.lane.b32.xlu0 %v4713, 125
    %v4732 = vpop.permute.xlu0 %4731
    %4733 = vrot.lane.b32.xlu0 %v4715, 125
    %v4734 = vpop.permute.xlu0 %4733
    %4735 = vrot.lane.b32.xlu0 %v4718, 125
    %v4736 = vpop.permute.xlu0 %4735
    %4737 = vrot.lane.b32.xlu0 %v4720, 125
    %v4738 = vpop.permute.xlu0 %4737
    %4739 = vrot.lane.b32.xlu0 %v4723, 125
    %v4740 = vpop.permute.xlu0 %4739
    %4741 = vrot.lane.b32.xlu0 %v4725, 125
    %v4742 = vpop.permute.xlu0 %4741
    %4743 = vrot.lane.b32.xlu0 %v4728, 125
    %v4744 = vpop.permute.xlu0 %4743
    %4745 = vrot.lane.b32.xlu0 %v4730, 125
    %v4746 = vpop.permute.xlu0 %4745
    %v4755 = vadd.f32 %v4443, %v4732
    %v4756 = vadd.f32 %v4444, %v4734
    %v4757 = vadd.f32 %v4445, %v4736
    %v4758 = vadd.f32 %v4446, %v4738
    %v4759 = vadd.f32 %v4447, %v4740
    %v4760 = vadd.f32 %v4448, %v4742
    %v4761 = vadd.f32 %v4449, %v4744
    %v4762 = vadd.f32 %v4450, %v4746
    %s4763 = sld [smem:[#allocation7 + $0x49]]
    %v4764 = vstv %s4763
    %v4765 = vmul.f32 %v4764, %v1514
    %v4766 = vmul.f32 %v4764, %v1492
    %v4767 = vmul.f32 %v4764, %v1518
    %v4768 = vmul.f32 %v4764, %v1515
    %v4769 = vmul.f32 %v4764, %v1495
    %v4770 = vmul.f32 %v4764, %v1519
    %v4771 = vmul.f32 %v4764, %v1516
    %v4772 = vmul.f32 %v4764, %v1498
    %v4773 = vmul.f32 %v4764, %v1520
    %v4774 = vmul.f32 %v4764, %v1517
    %v4775 = vmul.f32 %v4764, %v1501
    %v4776 = vmul.f32 %v4764, %v1521
    %v4789 = vrot.slane %v4765, 3
    %v4790 = vrot.slane %v4766, 3
    %v4791 = vsel %vm4242, %v4789, %v4790
    %v4792 = vrot.slane %v4767, 3
    %v4793 = vsel %vm4242, %v4790, %v4792
    %v4794 = vrot.slane %v4768, 3
    %v4795 = vrot.slane %v4769, 3
    %v4796 = vsel %vm4242, %v4794, %v4795
    %v4797 = vrot.slane %v4770, 3
    %v4798 = vsel %vm4242, %v4795, %v4797
    %v4799 = vrot.slane %v4771, 3
    %v4800 = vrot.slane %v4772, 3
    %v4801 = vsel %vm4242, %v4799, %v4800
    %v4802 = vrot.slane %v4773, 3
    %v4803 = vsel %vm4242, %v4800, %v4802
    %v4804 = vrot.slane %v4774, 3
    %v4805 = vrot.slane %v4775, 3
    %v4806 = vsel %vm4242, %v4804, %v4805
    %v4807 = vrot.slane %v4776, 3
    %v4808 = vsel %vm4242, %v4805, %v4807
    %4809 = vrot.lane.b32.xlu0 %v4791, 125
    %v4810 = vpop.permute.xlu0 %4809
    %4811 = vrot.lane.b32.xlu0 %v4793, 125
    %v4812 = vpop.permute.xlu0 %4811
    %4813 = vrot.lane.b32.xlu0 %v4796, 125
    %v4814 = vpop.permute.xlu0 %4813
    %4815 = vrot.lane.b32.xlu0 %v4798, 125
    %v4816 = vpop.permute.xlu0 %4815
    %4817 = vrot.lane.b32.xlu0 %v4801, 125
    %v4818 = vpop.permute.xlu0 %4817
    %4819 = vrot.lane.b32.xlu0 %v4803, 125
    %v4820 = vpop.permute.xlu0 %4819
    %4821 = vrot.lane.b32.xlu0 %v4806, 125
    %v4822 = vpop.permute.xlu0 %4821
    %4823 = vrot.lane.b32.xlu0 %v4808, 125
    %v4824 = vpop.permute.xlu0 %4823
    %v4833 = vadd.f32 %v4521, %v4810
    %v4834 = vadd.f32 %v4522, %v4812
    %v4835 = vadd.f32 %v4523, %v4814
    %v4836 = vadd.f32 %v4524, %v4816
    %v4837 = vadd.f32 %v4525, %v4818
    %v4838 = vadd.f32 %v4526, %v4820
    %v4839 = vadd.f32 %v4527, %v4822
    %v4840 = vadd.f32 %v4528, %v4824
    %s4841 = sld [smem:[#allocation7 + $0x19]]
    %v4842 = vstv %s4841
    %v4843 = vmul.f32 %v4842, %v1426
    %v4844 = vmul.f32 %v4842, %v1404
    %v4845 = vmul.f32 %v4842, %v1430
    %v4846 = vmul.f32 %v4842, %v1427
    %v4847 = vmul.f32 %v4842, %v1407
    %v4848 = vmul.f32 %v4842, %v1431
    %v4849 = vmul.f32 %v4842, %v1428
    %v4850 = vmul.f32 %v4842, %v1410
    %v4851 = vmul.f32 %v4842, %v1432
    %v4852 = vmul.f32 %v4842, %v1429
    %v4853 = vmul.f32 %v4842, %v1413
    %v4854 = vmul.f32 %v4842, %v1433
    %v4867 = vrot.slane %v4843, 3
    %v4868 = vrot.slane %v4844, 3
    %v4869 = vsel %vm4242, %v4867, %v4868
    %v4870 = vrot.slane %v4845, 3
    %v4871 = vsel %vm4242, %v4868, %v4870
    %v4872 = vrot.slane %v4846, 3
    %v4873 = vrot.slane %v4847, 3
    %v4874 = vsel %vm4242, %v4872, %v4873
    %v4875 = vrot.slane %v4848, 3
    %v4876 = vsel %vm4242, %v4873, %v4875
    %v4877 = vrot.slane %v4849, 3
    %v4878 = vrot.slane %v4850, 3
    %v4879 = vsel %vm4242, %v4877, %v4878
    %v4880 = vrot.slane %v4851, 3
    %v4881 = vsel %vm4242, %v4878, %v4880
    %v4882 = vrot.slane %v4852, 3
    %v4883 = vrot.slane %v4853, 3
    %v4884 = vsel %vm4242, %v4882, %v4883
    %v4885 = vrot.slane %v4854, 3
    %v4886 = vsel %vm4242, %v4883, %v4885
    %4887 = vrot.lane.b32.xlu0 %v4869, 125
    %v4888 = vpop.permute.xlu0 %4887
    %4889 = vrot.lane.b32.xlu0 %v4871, 125
    %v4890 = vpop.permute.xlu0 %4889
    %4891 = vrot.lane.b32.xlu0 %v4874, 125
    %v4892 = vpop.permute.xlu0 %4891
    %4893 = vrot.lane.b32.xlu0 %v4876, 125
    %v4894 = vpop.permute.xlu0 %4893
    %4895 = vrot.lane.b32.xlu0 %v4879, 125
    %v4896 = vpop.permute.xlu0 %4895
    %4897 = vrot.lane.b32.xlu0 %v4881, 125
    %v4898 = vpop.permute.xlu0 %4897
    %4899 = vrot.lane.b32.xlu0 %v4884, 125
    %v4900 = vpop.permute.xlu0 %4899
    %4901 = vrot.lane.b32.xlu0 %v4886, 125
    %v4902 = vpop.permute.xlu0 %4901
    %v4911 = vadd.f32 %v4599, %v4888
    %v4912 = vadd.f32 %v4600, %v4890
    %v4913 = vadd.f32 %v4601, %v4892
    %v4914 = vadd.f32 %v4602, %v4894
    %v4915 = vadd.f32 %v4603, %v4896
    %v4916 = vadd.f32 %v4604, %v4898
    %v4917 = vadd.f32 %v4605, %v4900
    %v4918 = vadd.f32 %v4606, %v4902
    %s4919 = sld [smem:[#allocation7 + $0x4a]]
    %v4920 = vstv %s4919
    %v4921 = vmul.f32 %v4920, %v1514
    %v4922 = vmul.f32 %v4920, %v1492
    %v4923 = vmul.f32 %v4920, %v1518
    %v4924 = vmul.f32 %v4920, %v1515
    %v4925 = vmul.f32 %v4920, %v1495
    %v4926 = vmul.f32 %v4920, %v1519
    %v4927 = vmul.f32 %v4920, %v1516
    %v4928 = vmul.f32 %v4920, %v1498
    %v4929 = vmul.f32 %v4920, %v1520
    %v4930 = vmul.f32 %v4920, %v1517
    %v4931 = vmul.f32 %v4920, %v1501
    %v4932 = vmul.f32 %v4920, %v1521
    %v4945 = vrot.slane %v4921, 3
    %v4946 = vrot.slane %v4922, 3
    %v4947 = vsel %vm4242, %v4945, %v4946
    %v4948 = vrot.slane %v4923, 3
    %v4949 = vsel %vm4242, %v4946, %v4948
    %v4950 = vrot.slane %v4924, 3
    %v4951 = vrot.slane %v4925, 3
    %v4952 = vsel %vm4242, %v4950, %v4951
    %v4953 = vrot.slane %v4926, 3
    %v4954 = vsel %vm4242, %v4951, %v4953
    %v4955 = vrot.slane %v4927, 3
    %v4956 = vrot.slane %v4928, 3
    %v4957 = vsel %vm4242, %v4955, %v4956
    %v4958 = vrot.slane %v4929, 3
    %v4959 = vsel %vm4242, %v4956, %v4958
    %v4960 = vrot.slane %v4930, 3
    %v4961 = vrot.slane %v4931, 3
    %v4962 = vsel %vm4242, %v4960, %v4961
    %v4963 = vrot.slane %v4932, 3
    %v4964 = vsel %vm4242, %v4961, %v4963
    %4965 = vrot.lane.b32.xlu0 %v4947, 125
    %v4966 = vpop.permute.xlu0 %4965
    %4967 = vrot.lane.b32.xlu0 %v4949, 125
    %v4968 = vpop.permute.xlu0 %4967
    %4969 = vrot.lane.b32.xlu0 %v4952, 125
    %v4970 = vpop.permute.xlu0 %4969
    %4971 = vrot.lane.b32.xlu0 %v4954, 125
    %v4972 = vpop.permute.xlu0 %4971
    %4973 = vrot.lane.b32.xlu0 %v4957, 125
    %v4974 = vpop.permute.xlu0 %4973
    %4975 = vrot.lane.b32.xlu0 %v4959, 125
    %v4976 = vpop.permute.xlu0 %4975
    %4977 = vrot.lane.b32.xlu0 %v4962, 125
    %v4978 = vpop.permute.xlu0 %4977
    %4979 = vrot.lane.b32.xlu0 %v4964, 125
    %v4980 = vpop.permute.xlu0 %4979
    %v4989 = vadd.f32 %v4677, %v4966
    %v4990 = vadd.f32 %v4678, %v4968
    %v4991 = vadd.f32 %v4679, %v4970
    %v4992 = vadd.f32 %v4680, %v4972
    %v4993 = vadd.f32 %v4681, %v4974
    %v4994 = vadd.f32 %v4682, %v4976
    %v4995 = vadd.f32 %v4683, %v4978
    %v4996 = vadd.f32 %v4684, %v4980
    %s4997 = sld [smem:[#allocation7 + $0x1a]]
    %v4998 = vstv %s4997
    %v4999 = vmul.f32 %v4998, %v1426
    %v5000 = vmul.f32 %v4998, %v1404
    %v5001 = vmul.f32 %v4998, %v1430
    %v5002 = vmul.f32 %v4998, %v1427
    %v5003 = vmul.f32 %v4998, %v1407
    %v5004 = vmul.f32 %v4998, %v1431
    %v5005 = vmul.f32 %v4998, %v1428
    %v5006 = vmul.f32 %v4998, %v1410
    %v5007 = vmul.f32 %v4998, %v1432
    %v5008 = vmul.f32 %v4998, %v1429
    %v5009 = vmul.f32 %v4998, %v1413
    %v5010 = vmul.f32 %v4998, %v1433
    %v5023 = vrot.slane %v4999, 3
    %v5024 = vrot.slane %v5000, 3
    %v5025 = vsel %vm4242, %v5023, %v5024
    %v5026 = vrot.slane %v5001, 3
    %v5027 = vsel %vm4242, %v5024, %v5026
    %v5028 = vrot.slane %v5002, 3
    %v5029 = vrot.slane %v5003, 3
    %v5030 = vsel %vm4242, %v5028, %v5029
    %v5031 = vrot.slane %v5004, 3
    %v5032 = vsel %vm4242, %v5029, %v5031
    %v5033 = vrot.slane %v5005, 3
    %v5034 = vrot.slane %v5006, 3
    %v5035 = vsel %vm4242, %v5033, %v5034
    %v5036 = vrot.slane %v5007, 3
    %v5037 = vsel %vm4242, %v5034, %v5036
    %v5038 = vrot.slane %v5008, 3
    %v5039 = vrot.slane %v5009, 3
    %v5040 = vsel %vm4242, %v5038, %v5039
    %v5041 = vrot.slane %v5010, 3
    %v5042 = vsel %vm4242, %v5039, %v5041
    %5043 = vrot.lane.b32.xlu0 %v5025, 123
    %v5044 = vpop.permute.xlu0 %5043
    %5045 = vrot.lane.b32.xlu0 %v5027, 123
    %v5046 = vpop.permute.xlu0 %5045
    %5047 = vrot.lane.b32.xlu0 %v5030, 123
    %v5048 = vpop.permute.xlu0 %5047
    %5049 = vrot.lane.b32.xlu0 %v5032, 123
    %v5050 = vpop.permute.xlu0 %5049
    %5051 = vrot.lane.b32.xlu0 %v5035, 123
    %v5052 = vpop.permute.xlu0 %5051
    %5053 = vrot.lane.b32.xlu0 %v5037, 123
    %v5054 = vpop.permute.xlu0 %5053
    %5055 = vrot.lane.b32.xlu0 %v5040, 123
    %v5056 = vpop.permute.xlu0 %5055
    %5057 = vrot.lane.b32.xlu0 %v5042, 123
    %v5058 = vpop.permute.xlu0 %5057
    %v5067 = vadd.f32 %v4755, %v5044
    %v5068 = vadd.f32 %v4756, %v5046
    %v5069 = vadd.f32 %v4757, %v5048
    %v5070 = vadd.f32 %v4758, %v5050
    %v5071 = vadd.f32 %v4759, %v5052
    %v5072 = vadd.f32 %v4760, %v5054
    %v5073 = vadd.f32 %v4761, %v5056
    %v5074 = vadd.f32 %v4762, %v5058
    %s5075 = sld [smem:[#allocation7 + $0x4b]]
    %v5076 = vstv %s5075
    %v5077 = vmul.f32 %v5076, %v1514
    %v5078 = vmul.f32 %v5076, %v1492
    %v5079 = vmul.f32 %v5076, %v1518
    %v5080 = vmul.f32 %v5076, %v1515
    %v5081 = vmul.f32 %v5076, %v1495
    %v5082 = vmul.f32 %v5076, %v1519
    %v5083 = vmul.f32 %v5076, %v1516
    %v5084 = vmul.f32 %v5076, %v1498
    %v5085 = vmul.f32 %v5076, %v1520
    %v5086 = vmul.f32 %v5076, %v1517
    %v5087 = vmul.f32 %v5076, %v1501
    %v5088 = vmul.f32 %v5076, %v1521
    %v5101 = vrot.slane %v5077, 3
    %v5102 = vrot.slane %v5078, 3
    %v5103 = vsel %vm4242, %v5101, %v5102
    %v5104 = vrot.slane %v5079, 3
    %v5105 = vsel %vm4242, %v5102, %v5104
    %v5106 = vrot.slane %v5080, 3
    %v5107 = vrot.slane %v5081, 3
    %v5108 = vsel %vm4242, %v5106, %v5107
    %v5109 = vrot.slane %v5082, 3
    %v5110 = vsel %vm4242, %v5107, %v5109
    %v5111 = vrot.slane %v5083, 3
    %v5112 = vrot.slane %v5084, 3
    %v5113 = vsel %vm4242, %v5111, %v5112
    %v5114 = vrot.slane %v5085, 3
    %v5115 = vsel %vm4242, %v5112, %v5114
    %v5116 = vrot.slane %v5086, 3
    %v5117 = vrot.slane %v5087, 3
    %v5118 = vsel %vm4242, %v5116, %v5117
    %v5119 = vrot.slane %v5088, 3
    %v5120 = vsel %vm4242, %v5117, %v5119
    %5121 = vrot.lane.b32.xlu0 %v5103, 123
    %v5122 = vpop.permute.xlu0 %5121
    %5123 = vrot.lane.b32.xlu0 %v5105, 123
    %v5124 = vpop.permute.xlu0 %5123
    %5125 = vrot.lane.b32.xlu0 %v5108, 123
    %v5126 = vpop.permute.xlu0 %5125
    %5127 = vrot.lane.b32.xlu0 %v5110, 123
    %v5128 = vpop.permute.xlu0 %5127
    %5129 = vrot.lane.b32.xlu0 %v5113, 123
    %v5130 = vpop.permute.xlu0 %5129
    %5131 = vrot.lane.b32.xlu0 %v5115, 123
    %v5132 = vpop.permute.xlu0 %5131
    %5133 = vrot.lane.b32.xlu0 %v5118, 123
    %v5134 = vpop.permute.xlu0 %5133
    %5135 = vrot.lane.b32.xlu0 %v5120, 123
    %v5136 = vpop.permute.xlu0 %5135
    %v5145 = vadd.f32 %v4833, %v5122
    %v5146 = vadd.f32 %v4834, %v5124
    %v5147 = vadd.f32 %v4835, %v5126
    %v5148 = vadd.f32 %v4836, %v5128
    %v5149 = vadd.f32 %v4837, %v5130
    %v5150 = vadd.f32 %v4838, %v5132
    %v5151 = vadd.f32 %v4839, %v5134
    %v5152 = vadd.f32 %v4840, %v5136
    %s5153 = sld [smem:[#allocation7 + $0x1b]]
    %v5154 = vstv %s5153
    %v5155 = vmul.f32 %v5154, %v1426
    %v5156 = vmul.f32 %v5154, %v1404
    %v5157 = vmul.f32 %v5154, %v1430
    %v5158 = vmul.f32 %v5154, %v1427
    %v5159 = vmul.f32 %v5154, %v1407
    %v5160 = vmul.f32 %v5154, %v1431
    %v5161 = vmul.f32 %v5154, %v1428
    %v5162 = vmul.f32 %v5154, %v1410
    %v5163 = vmul.f32 %v5154, %v1432
    %v5164 = vmul.f32 %v5154, %v1429
    %v5165 = vmul.f32 %v5154, %v1413
    %v5166 = vmul.f32 %v5154, %v1433
    %v5179 = vrot.slane %v5155, 3
    %v5180 = vrot.slane %v5156, 3
    %v5181 = vsel %vm4242, %v5179, %v5180
    %v5182 = vrot.slane %v5157, 3
    %v5183 = vsel %vm4242, %v5180, %v5182
    %v5184 = vrot.slane %v5158, 3
    %v5185 = vrot.slane %v5159, 3
    %v5186 = vsel %vm4242, %v5184, %v5185
    %v5187 = vrot.slane %v5160, 3
    %v5188 = vsel %vm4242, %v5185, %v5187
    %v5189 = vrot.slane %v5161, 3
    %v5190 = vrot.slane %v5162, 3
    %v5191 = vsel %vm4242, %v5189, %v5190
    %v5192 = vrot.slane %v5163, 3
    %v5193 = vsel %vm4242, %v5190, %v5192
    %v5194 = vrot.slane %v5164, 3
    %v5195 = vrot.slane %v5165, 3
    %v5196 = vsel %vm4242, %v5194, %v5195
    %v5197 = vrot.slane %v5166, 3
    %v5198 = vsel %vm4242, %v5195, %v5197
    %5199 = vrot.lane.b32.xlu0 %v5181, 123
    %v5200 = vpop.permute.xlu0 %5199
    %5201 = vrot.lane.b32.xlu0 %v5183, 123
    %v5202 = vpop.permute.xlu0 %5201
    %5203 = vrot.lane.b32.xlu0 %v5186, 123
    %v5204 = vpop.permute.xlu0 %5203
    %5205 = vrot.lane.b32.xlu0 %v5188, 123
    %v5206 = vpop.permute.xlu0 %5205
    %5207 = vrot.lane.b32.xlu0 %v5191, 123
    %v5208 = vpop.permute.xlu0 %5207
    %5209 = vrot.lane.b32.xlu0 %v5193, 123
    %v5210 = vpop.permute.xlu0 %5209
    %5211 = vrot.lane.b32.xlu0 %v5196, 123
    %v5212 = vpop.permute.xlu0 %5211
    %5213 = vrot.lane.b32.xlu0 %v5198, 123
    %v5214 = vpop.permute.xlu0 %5213
    %v5223 = vadd.f32 %v4911, %v5200
    %v5224 = vadd.f32 %v4912, %v5202
    %v5225 = vadd.f32 %v4913, %v5204
    %v5226 = vadd.f32 %v4914, %v5206
    %v5227 = vadd.f32 %v4915, %v5208
    %v5228 = vadd.f32 %v4916, %v5210
    %v5229 = vadd.f32 %v4917, %v5212
    %v5230 = vadd.f32 %v4918, %v5214
    %s5231 = sld [smem:[#allocation7 + $0x4c]]
    %v5232 = vstv %s5231
    %v5233 = vmul.f32 %v5232, %v1514
    %v5234 = vmul.f32 %v5232, %v1492
    %v5235 = vmul.f32 %v5232, %v1518
    %v5236 = vmul.f32 %v5232, %v1515
    %v5237 = vmul.f32 %v5232, %v1495
    %v5238 = vmul.f32 %v5232, %v1519
    %v5239 = vmul.f32 %v5232, %v1516
    %v5240 = vmul.f32 %v5232, %v1498
    %v5241 = vmul.f32 %v5232, %v1520
    %v5242 = vmul.f32 %v5232, %v1517
    %v5243 = vmul.f32 %v5232, %v1501
    %v5244 = vmul.f32 %v5232, %v1521
    %v5257 = vrot.slane %v5233, 3
    %v5258 = vrot.slane %v5234, 3
    %v5259 = vsel %vm4242, %v5257, %v5258
    %v5260 = vrot.slane %v5235, 3
    %v5261 = vsel %vm4242, %v5258, %v5260
    %v5262 = vrot.slane %v5236, 3
    %v5263 = vrot.slane %v5237, 3
    %v5264 = vsel %vm4242, %v5262, %v5263
    %v5265 = vrot.slane %v5238, 3
    %v5266 = vsel %vm4242, %v5263, %v5265
    %v5267 = vrot.slane %v5239, 3
    %v5268 = vrot.slane %v5240, 3
    %v5269 = vsel %vm4242, %v5267, %v5268
    %v5270 = vrot.slane %v5241, 3
    %v5271 = vsel %vm4242, %v5268, %v5270
    %v5272 = vrot.slane %v5242, 3
    %v5273 = vrot.slane %v5243, 3
    %v5274 = vsel %vm4242, %v5272, %v5273
    %v5275 = vrot.slane %v5244, 3
    %v5276 = vsel %vm4242, %v5273, %v5275
    %5277 = vrot.lane.b32.xlu0 %v5259, 123
    %v5278 = vpop.permute.xlu0 %5277
    %5279 = vrot.lane.b32.xlu0 %v5261, 123
    %v5280 = vpop.permute.xlu0 %5279
    %5281 = vrot.lane.b32.xlu0 %v5264, 123
    %v5282 = vpop.permute.xlu0 %5281
    %5283 = vrot.lane.b32.xlu0 %v5266, 123
    %v5284 = vpop.permute.xlu0 %5283
    %5285 = vrot.lane.b32.xlu0 %v5269, 123
    %v5286 = vpop.permute.xlu0 %5285
    %5287 = vrot.lane.b32.xlu0 %v5271, 123
    %v5288 = vpop.permute.xlu0 %5287
    %5289 = vrot.lane.b32.xlu0 %v5274, 123
    %v5290 = vpop.permute.xlu0 %5289
    %5291 = vrot.lane.b32.xlu0 %v5276, 123
    %v5292 = vpop.permute.xlu0 %5291
    %v5301 = vadd.f32 %v4989, %v5278
    %v5302 = vadd.f32 %v4990, %v5280
    %v5303 = vadd.f32 %v4991, %v5282
    %v5304 = vadd.f32 %v4992, %v5284
    %v5305 = vadd.f32 %v4993, %v5286
    %v5306 = vadd.f32 %v4994, %v5288
    %v5307 = vadd.f32 %v4995, %v5290
    %v5308 = vadd.f32 %v4996, %v5292
    %s5309 = sld [smem:[#allocation7 + $0x1c]]
    %v5310 = vstv %s5309
    %v5311 = vmul.f32 %v5310, %v1426
    %v5312 = vmul.f32 %v5310, %v1404
    %v5313 = vmul.f32 %v5310, %v1430
    %v5314 = vmul.f32 %v5310, %v1427
    %v5315 = vmul.f32 %v5310, %v1407
    %v5316 = vmul.f32 %v5310, %v1431
    %v5317 = vmul.f32 %v5310, %v1428
    %v5318 = vmul.f32 %v5310, %v1410
    %v5319 = vmul.f32 %v5310, %v1432
    %v5320 = vmul.f32 %v5310, %v1429
    %v5321 = vmul.f32 %v5310, %v1413
    %v5322 = vmul.f32 %v5310, %v1433
    %vm5335 = vcmask 1043456
    %v5336 = vrot.slane %v5311, 4
    %v5337 = vrot.slane %v5312, 4
    %v5338 = vsel %vm5335, %v5336, %v5337
    %v5339 = vrot.slane %v5313, 4
    %v5340 = vsel %vm5335, %v5337, %v5339
    %v5341 = vrot.slane %v5314, 4
    %v5342 = vrot.slane %v5315, 4
    %v5343 = vsel %vm5335, %v5341, %v5342
    %v5344 = vrot.slane %v5316, 4
    %v5345 = vsel %vm5335, %v5342, %v5344
    %v5346 = vrot.slane %v5317, 4
    %v5347 = vrot.slane %v5318, 4
    %v5348 = vsel %vm5335, %v5346, %v5347
    %v5349 = vrot.slane %v5319, 4
    %v5350 = vsel %vm5335, %v5347, %v5349
    %v5351 = vrot.slane %v5320, 4
    %v5352 = vrot.slane %v5321, 4
    %v5353 = vsel %vm5335, %v5351, %v5352
    %v5354 = vrot.slane %v5322, 4
    %v5355 = vsel %vm5335, %v5352, %v5354
    %v5364 = vadd.f32 %v5067, %v5338
    %v5365 = vadd.f32 %v5068, %v5340
    %v5366 = vadd.f32 %v5069, %v5343
    %v5367 = vadd.f32 %v5070, %v5345
    %v5368 = vadd.f32 %v5071, %v5348
    %v5369 = vadd.f32 %v5072, %v5350
    %v5370 = vadd.f32 %v5073, %v5353
    %v5371 = vadd.f32 %v5074, %v5355
    %s5372 = sld [smem:[#allocation7 + $0x4d]]
    %v5373 = vstv %s5372
    %v5374 = vmul.f32 %v5373, %v1514
    %v5375 = vmul.f32 %v5373, %v1492
    %v5376 = vmul.f32 %v5373, %v1518
    %v5377 = vmul.f32 %v5373, %v1515
    %v5378 = vmul.f32 %v5373, %v1495
    %v5379 = vmul.f32 %v5373, %v1519
    %v5380 = vmul.f32 %v5373, %v1516
    %v5381 = vmul.f32 %v5373, %v1498
    %v5382 = vmul.f32 %v5373, %v1520
    %v5383 = vmul.f32 %v5373, %v1517
    %v5384 = vmul.f32 %v5373, %v1501
    %v5385 = vmul.f32 %v5373, %v1521
    %v5398 = vrot.slane %v5374, 4
    %v5399 = vrot.slane %v5375, 4
    %v5400 = vsel %vm5335, %v5398, %v5399
    %v5401 = vrot.slane %v5376, 4
    %v5402 = vsel %vm5335, %v5399, %v5401
    %v5403 = vrot.slane %v5377, 4
    %v5404 = vrot.slane %v5378, 4
    %v5405 = vsel %vm5335, %v5403, %v5404
    %v5406 = vrot.slane %v5379, 4
    %v5407 = vsel %vm5335, %v5404, %v5406
    %v5408 = vrot.slane %v5380, 4
    %v5409 = vrot.slane %v5381, 4
    %v5410 = vsel %vm5335, %v5408, %v5409
    %v5411 = vrot.slane %v5382, 4
    %v5412 = vsel %vm5335, %v5409, %v5411
    %v5413 = vrot.slane %v5383, 4
    %v5414 = vrot.slane %v5384, 4
    %v5415 = vsel %vm5335, %v5413, %v5414
    %v5416 = vrot.slane %v5385, 4
    %v5417 = vsel %vm5335, %v5414, %v5416
    %v5426 = vadd.f32 %v5145, %v5400
    %v5427 = vadd.f32 %v5146, %v5402
    %v5428 = vadd.f32 %v5147, %v5405
    %v5429 = vadd.f32 %v5148, %v5407
    %v5430 = vadd.f32 %v5149, %v5410
    %v5431 = vadd.f32 %v5150, %v5412
    %v5432 = vadd.f32 %v5151, %v5415
    %v5433 = vadd.f32 %v5152, %v5417
    %s5434 = sld [smem:[#allocation7 + $0x1d]]
    %v5435 = vstv %s5434
    %v5436 = vmul.f32 %v5435, %v1426
    %v5437 = vmul.f32 %v5435, %v1404
    %v5438 = vmul.f32 %v5435, %v1430
    %v5439 = vmul.f32 %v5435, %v1427
    %v5440 = vmul.f32 %v5435, %v1407
    %v5441 = vmul.f32 %v5435, %v1431
    %v5442 = vmul.f32 %v5435, %v1428
    %v5443 = vmul.f32 %v5435, %v1410
    %v5444 = vmul.f32 %v5435, %v1432
    %v5445 = vmul.f32 %v5435, %v1429
    %v5446 = vmul.f32 %v5435, %v1413
    %v5447 = vmul.f32 %v5435, %v1433
    %v5460 = vrot.slane %v5436, 4
    %v5461 = vrot.slane %v5437, 4
    %v5462 = vsel %vm5335, %v5460, %v5461
    %v5463 = vrot.slane %v5438, 4
    %v5464 = vsel %vm5335, %v5461, %v5463
    %v5465 = vrot.slane %v5439, 4
    %v5466 = vrot.slane %v5440, 4
    %v5467 = vsel %vm5335, %v5465, %v5466
    %v5468 = vrot.slane %v5441, 4
    %v5469 = vsel %vm5335, %v5466, %v5468
    %v5470 = vrot.slane %v5442, 4
    %v5471 = vrot.slane %v5443, 4
    %v5472 = vsel %vm5335, %v5470, %v5471
    %v5473 = vrot.slane %v5444, 4
    %v5474 = vsel %vm5335, %v5471, %v5473
    %v5475 = vrot.slane %v5445, 4
    %v5476 = vrot.slane %v5446, 4
    %v5477 = vsel %vm5335, %v5475, %v5476
    %v5478 = vrot.slane %v5447, 4
    %v5479 = vsel %vm5335, %v5476, %v5478
    %v5488 = vadd.f32 %v5223, %v5462
    %v5489 = vadd.f32 %v5224, %v5464
    %v5490 = vadd.f32 %v5225, %v5467
    %v5491 = vadd.f32 %v5226, %v5469
    %v5492 = vadd.f32 %v5227, %v5472
    %v5493 = vadd.f32 %v5228, %v5474
    %v5494 = vadd.f32 %v5229, %v5477
    %v5495 = vadd.f32 %v5230, %v5479
    %s5496 = sld [smem:[#allocation7 + $0x4e]]
    %v5497 = vstv %s5496
    %v5498 = vmul.f32 %v5497, %v1514
    %v5499 = vmul.f32 %v5497, %v1492
    %v5500 = vmul.f32 %v5497, %v1518
    %v5501 = vmul.f32 %v5497, %v1515
    %v5502 = vmul.f32 %v5497, %v1495
    %v5503 = vmul.f32 %v5497, %v1519
    %v5504 = vmul.f32 %v5497, %v1516
    %v5505 = vmul.f32 %v5497, %v1498
    %v5506 = vmul.f32 %v5497, %v1520
    %v5507 = vmul.f32 %v5497, %v1517
    %v5508 = vmul.f32 %v5497, %v1501
    %v5509 = vmul.f32 %v5497, %v1521
    %v5522 = vrot.slane %v5498, 4
    %v5523 = vrot.slane %v5499, 4
    %v5524 = vsel %vm5335, %v5522, %v5523
    %v5525 = vrot.slane %v5500, 4
    %v5526 = vsel %vm5335, %v5523, %v5525
    %v5527 = vrot.slane %v5501, 4
    %v5528 = vrot.slane %v5502, 4
    %v5529 = vsel %vm5335, %v5527, %v5528
    %v5530 = vrot.slane %v5503, 4
    %v5531 = vsel %vm5335, %v5528, %v5530
    %v5532 = vrot.slane %v5504, 4
    %v5533 = vrot.slane %v5505, 4
    %v5534 = vsel %vm5335, %v5532, %v5533
    %v5535 = vrot.slane %v5506, 4
    %v5536 = vsel %vm5335, %v5533, %v5535
    %v5537 = vrot.slane %v5507, 4
    %v5538 = vrot.slane %v5508, 4
    %v5539 = vsel %vm5335, %v5537, %v5538
    %v5540 = vrot.slane %v5509, 4
    %v5541 = vsel %vm5335, %v5538, %v5540
    %v5550 = vadd.f32 %v5301, %v5524
    %v5551 = vadd.f32 %v5302, %v5526
    %v5552 = vadd.f32 %v5303, %v5529
    %v5553 = vadd.f32 %v5304, %v5531
    %v5554 = vadd.f32 %v5305, %v5534
    %v5555 = vadd.f32 %v5306, %v5536
    %v5556 = vadd.f32 %v5307, %v5539
    %v5557 = vadd.f32 %v5308, %v5541
    %s5558 = sld [smem:[#allocation7 + $0x1e]]
    %v5559 = vstv %s5558
    %v5560 = vmul.f32 %v5559, %v1426
    %v5561 = vmul.f32 %v5559, %v1404
    %v5562 = vmul.f32 %v5559, %v1430
    %v5563 = vmul.f32 %v5559, %v1427
    %v5564 = vmul.f32 %v5559, %v1407
    %v5565 = vmul.f32 %v5559, %v1431
    %v5566 = vmul.f32 %v5559, %v1428
    %v5567 = vmul.f32 %v5559, %v1410
    %v5568 = vmul.f32 %v5559, %v1432
    %v5569 = vmul.f32 %v5559, %v1429
    %v5570 = vmul.f32 %v5559, %v1413
    %v5571 = vmul.f32 %v5559, %v1433
    %v5584 = vrot.slane %v5560, 4
    %v5585 = vrot.slane %v5561, 4
    %v5586 = vsel %vm5335, %v5584, %v5585
    %v5587 = vrot.slane %v5562, 4
    %v5588 = vsel %vm5335, %v5585, %v5587
    %v5589 = vrot.slane %v5563, 4
    %v5590 = vrot.slane %v5564, 4
    %v5591 = vsel %vm5335, %v5589, %v5590
    %v5592 = vrot.slane %v5565, 4
    %v5593 = vsel %vm5335, %v5590, %v5592
    %v5594 = vrot.slane %v5566, 4
    %v5595 = vrot.slane %v5567, 4
    %v5596 = vsel %vm5335, %v5594, %v5595
    %v5597 = vrot.slane %v5568, 4
    %v5598 = vsel %vm5335, %v5595, %v5597
    %v5599 = vrot.slane %v5569, 4
    %v5600 = vrot.slane %v5570, 4
    %v5601 = vsel %vm5335, %v5599, %v5600
    %v5602 = vrot.slane %v5571, 4
    %v5603 = vsel %vm5335, %v5600, %v5602
    %5604 = vrot.lane.b32.xlu0 %v5586, 126
    %v5605 = vpop.permute.xlu0 %5604
    %5606 = vrot.lane.b32.xlu0 %v5588, 126
    %v5607 = vpop.permute.xlu0 %5606
    %5608 = vrot.lane.b32.xlu0 %v5591, 126
    %v5609 = vpop.permute.xlu0 %5608
    %5610 = vrot.lane.b32.xlu0 %v5593, 126
    %v5611 = vpop.permute.xlu0 %5610
    %5612 = vrot.lane.b32.xlu0 %v5596, 126
    %v5613 = vpop.permute.xlu0 %5612
    %5614 = vrot.lane.b32.xlu0 %v5598, 126
    %v5615 = vpop.permute.xlu0 %5614
    %5616 = vrot.lane.b32.xlu0 %v5601, 126
    %v5617 = vpop.permute.xlu0 %5616
    %5618 = vrot.lane.b32.xlu0 %v5603, 126
    %v5619 = vpop.permute.xlu0 %5618
    %v5628 = vadd.f32 %v5364, %v5605
    %v5629 = vadd.f32 %v5365, %v5607
    %v5630 = vadd.f32 %v5366, %v5609
    %v5631 = vadd.f32 %v5367, %v5611
    %v5632 = vadd.f32 %v5368, %v5613
    %v5633 = vadd.f32 %v5369, %v5615
    %v5634 = vadd.f32 %v5370, %v5617
    %v5635 = vadd.f32 %v5371, %v5619
    %s5636 = sld [smem:[#allocation7 + $0x4f]]
    %v5637 = vstv %s5636
    %v5638 = vmul.f32 %v5637, %v1514
    %v5639 = vmul.f32 %v5637, %v1492
    %v5640 = vmul.f32 %v5637, %v1518
    %v5641 = vmul.f32 %v5637, %v1515
    %v5642 = vmul.f32 %v5637, %v1495
    %v5643 = vmul.f32 %v5637, %v1519
    %v5644 = vmul.f32 %v5637, %v1516
    %v5645 = vmul.f32 %v5637, %v1498
    %v5646 = vmul.f32 %v5637, %v1520
    %v5647 = vmul.f32 %v5637, %v1517
    %v5648 = vmul.f32 %v5637, %v1501
    %v5649 = vmul.f32 %v5637, %v1521
    %v5662 = vrot.slane %v5638, 4
    %v5663 = vrot.slane %v5639, 4
    %v5664 = vsel %vm5335, %v5662, %v5663
    %v5665 = vrot.slane %v5640, 4
    %v5666 = vsel %vm5335, %v5663, %v5665
    %v5667 = vrot.slane %v5641, 4
    %v5668 = vrot.slane %v5642, 4
    %v5669 = vsel %vm5335, %v5667, %v5668
    %v5670 = vrot.slane %v5643, 4
    %v5671 = vsel %vm5335, %v5668, %v5670
    %v5672 = vrot.slane %v5644, 4
    %v5673 = vrot.slane %v5645, 4
    %v5674 = vsel %vm5335, %v5672, %v5673
    %v5675 = vrot.slane %v5646, 4
    %v5676 = vsel %vm5335, %v5673, %v5675
    %v5677 = vrot.slane %v5647, 4
    %v5678 = vrot.slane %v5648, 4
    %v5679 = vsel %vm5335, %v5677, %v5678
    %v5680 = vrot.slane %v5649, 4
    %v5681 = vsel %vm5335, %v5678, %v5680
    %5682 = vrot.lane.b32.xlu0 %v5664, 126
    %v5683 = vpop.permute.xlu0 %5682
    %5684 = vrot.lane.b32.xlu0 %v5666, 126
    %v5685 = vpop.permute.xlu0 %5684
    %5686 = vrot.lane.b32.xlu0 %v5669, 126
    %v5687 = vpop.permute.xlu0 %5686
    %5688 = vrot.lane.b32.xlu0 %v5671, 126
    %v5689 = vpop.permute.xlu0 %5688
    %5690 = vrot.lane.b32.xlu0 %v5674, 126
    %v5691 = vpop.permute.xlu0 %5690
    %5692 = vrot.lane.b32.xlu0 %v5676, 126
    %v5693 = vpop.permute.xlu0 %5692
    %5694 = vrot.lane.b32.xlu0 %v5679, 126
    %v5695 = vpop.permute.xlu0 %5694
    %5696 = vrot.lane.b32.xlu0 %v5681, 126
    %v5697 = vpop.permute.xlu0 %5696
    %v5706 = vadd.f32 %v5426, %v5683
    %v5707 = vadd.f32 %v5427, %v5685
    %v5708 = vadd.f32 %v5428, %v5687
    %v5709 = vadd.f32 %v5429, %v5689
    %v5710 = vadd.f32 %v5430, %v5691
    %v5711 = vadd.f32 %v5431, %v5693
    %v5712 = vadd.f32 %v5432, %v5695
    %v5713 = vadd.f32 %v5433, %v5697
    %s5714 = sld [smem:[#allocation7 + $0x1f]]
    %v5715 = vstv %s5714
    %v5716 = vmul.f32 %v5715, %v1426
    %v5717 = vmul.f32 %v5715, %v1404
    %v5718 = vmul.f32 %v5715, %v1430
    %v5719 = vmul.f32 %v5715, %v1427
    %v5720 = vmul.f32 %v5715, %v1407
    %v5721 = vmul.f32 %v5715, %v1431
    %v5722 = vmul.f32 %v5715, %v1428
    %v5723 = vmul.f32 %v5715, %v1410
    %v5724 = vmul.f32 %v5715, %v1432
    %v5725 = vmul.f32 %v5715, %v1429
    %v5726 = vmul.f32 %v5715, %v1413
    %v5727 = vmul.f32 %v5715, %v1433
    %v5740 = vrot.slane %v5716, 4
    %v5741 = vrot.slane %v5717, 4
    %v5742 = vsel %vm5335, %v5740, %v5741
    %v5743 = vrot.slane %v5718, 4
    %v5744 = vsel %vm5335, %v5741, %v5743
    %v5745 = vrot.slane %v5719, 4
    %v5746 = vrot.slane %v5720, 4
    %v5747 = vsel %vm5335, %v5745, %v5746
    %v5748 = vrot.slane %v5721, 4
    %v5749 = vsel %vm5335, %v5746, %v5748
    %v5750 = vrot.slane %v5722, 4
    %v5751 = vrot.slane %v5723, 4
    %v5752 = vsel %vm5335, %v5750, %v5751
    %v5753 = vrot.slane %v5724, 4
    %v5754 = vsel %vm5335, %v5751, %v5753
    %v5755 = vrot.slane %v5725, 4
    %v5756 = vrot.slane %v5726, 4
    %v5757 = vsel %vm5335, %v5755, %v5756
    %v5758 = vrot.slane %v5727, 4
    %v5759 = vsel %vm5335, %v5756, %v5758
    %5760 = vrot.lane.b32.xlu0 %v5742, 126
    %v5761 = vpop.permute.xlu0 %5760
    %5762 = vrot.lane.b32.xlu0 %v5744, 126
    %v5763 = vpop.permute.xlu0 %5762
    %5764 = vrot.lane.b32.xlu0 %v5747, 126
    %v5765 = vpop.permute.xlu0 %5764
    %5766 = vrot.lane.b32.xlu0 %v5749, 126
    %v5767 = vpop.permute.xlu0 %5766
    %5768 = vrot.lane.b32.xlu0 %v5752, 126
    %v5769 = vpop.permute.xlu0 %5768
    %5770 = vrot.lane.b32.xlu0 %v5754, 126
    %v5771 = vpop.permute.xlu0 %5770
    %5772 = vrot.lane.b32.xlu0 %v5757, 126
    %v5773 = vpop.permute.xlu0 %5772
    %5774 = vrot.lane.b32.xlu0 %v5759, 126
    %v5775 = vpop.permute.xlu0 %5774
    %v5784 = vadd.f32 %v5488, %v5761
    %v5785 = vadd.f32 %v5489, %v5763
    %v5786 = vadd.f32 %v5490, %v5765
    %v5787 = vadd.f32 %v5491, %v5767
    %v5788 = vadd.f32 %v5492, %v5769
    %v5789 = vadd.f32 %v5493, %v5771
    %v5790 = vadd.f32 %v5494, %v5773
    %v5791 = vadd.f32 %v5495, %v5775
    %s5792 = sld [smem:[#allocation7 + $0x50]]
    %v5793 = vstv %s5792
    %v5794 = vmul.f32 %v5793, %v1514
    %v5795 = vmul.f32 %v5793, %v1492
    %v5796 = vmul.f32 %v5793, %v1518
    %v5797 = vmul.f32 %v5793, %v1515
    %v5798 = vmul.f32 %v5793, %v1495
    %v5799 = vmul.f32 %v5793, %v1519
    %v5800 = vmul.f32 %v5793, %v1516
    %v5801 = vmul.f32 %v5793, %v1498
    %v5802 = vmul.f32 %v5793, %v1520
    %v5803 = vmul.f32 %v5793, %v1517
    %v5804 = vmul.f32 %v5793, %v1501
    %v5805 = vmul.f32 %v5793, %v1521
    %v5818 = vrot.slane %v5794, 4
    %v5819 = vrot.slane %v5795, 4
    %v5820 = vsel %vm5335, %v5818, %v5819
    %v5821 = vrot.slane %v5796, 4
    %v5822 = vsel %vm5335, %v5819, %v5821
    %v5823 = vrot.slane %v5797, 4
    %v5824 = vrot.slane %v5798, 4
    %v5825 = vsel %vm5335, %v5823, %v5824
    %v5826 = vrot.slane %v5799, 4
    %v5827 = vsel %vm5335, %v5824, %v5826
    %v5828 = vrot.slane %v5800, 4
    %v5829 = vrot.slane %v5801, 4
    %v5830 = vsel %vm5335, %v5828, %v5829
    %v5831 = vrot.slane %v5802, 4
    %v5832 = vsel %vm5335, %v5829, %v5831
    %v5833 = vrot.slane %v5803, 4
    %v5834 = vrot.slane %v5804, 4
    %v5835 = vsel %vm5335, %v5833, %v5834
    %v5836 = vrot.slane %v5805, 4
    %v5837 = vsel %vm5335, %v5834, %v5836
    %5838 = vrot.lane.b32.xlu0 %v5820, 126
    %v5839 = vpop.permute.xlu0 %5838
    %5840 = vrot.lane.b32.xlu0 %v5822, 126
    %v5841 = vpop.permute.xlu0 %5840
    %5842 = vrot.lane.b32.xlu0 %v5825, 126
    %v5843 = vpop.permute.xlu0 %5842
    %5844 = vrot.lane.b32.xlu0 %v5827, 126
    %v5845 = vpop.permute.xlu0 %5844
    %5846 = vrot.lane.b32.xlu0 %v5830, 126
    %v5847 = vpop.permute.xlu0 %5846
    %5848 = vrot.lane.b32.xlu0 %v5832, 126
    %v5849 = vpop.permute.xlu0 %5848
    %5850 = vrot.lane.b32.xlu0 %v5835, 126
    %v5851 = vpop.permute.xlu0 %5850
    %5852 = vrot.lane.b32.xlu0 %v5837, 126
    %v5853 = vpop.permute.xlu0 %5852
    %v5862 = vadd.f32 %v5550, %v5839
    %v5863 = vadd.f32 %v5551, %v5841
    %v5864 = vadd.f32 %v5552, %v5843
    %v5865 = vadd.f32 %v5553, %v5845
    %v5866 = vadd.f32 %v5554, %v5847
    %v5867 = vadd.f32 %v5555, %v5849
    %v5868 = vadd.f32 %v5556, %v5851
    %v5869 = vadd.f32 %v5557, %v5853
    %s5870 = sld [smem:[#allocation7 + $0x20]]
    %v5871 = vstv %s5870
    %v5872 = vmul.f32 %v5871, %v1426
    %v5873 = vmul.f32 %v5871, %v1404
    %v5874 = vmul.f32 %v5871, %v1430
    %v5875 = vmul.f32 %v5871, %v1427
    %v5876 = vmul.f32 %v5871, %v1407
    %v5877 = vmul.f32 %v5871, %v1431
    %v5878 = vmul.f32 %v5871, %v1428
    %v5879 = vmul.f32 %v5871, %v1410
    %v5880 = vmul.f32 %v5871, %v1432
    %v5881 = vmul.f32 %v5871, %v1429
    %v5882 = vmul.f32 %v5871, %v1413
    %v5883 = vmul.f32 %v5871, %v1433
    %v5896 = vrot.slane %v5872, 4
    %v5897 = vrot.slane %v5873, 4
    %v5898 = vsel %vm5335, %v5896, %v5897
    %v5899 = vrot.slane %v5874, 4
    %v5900 = vsel %vm5335, %v5897, %v5899
    %v5901 = vrot.slane %v5875, 4
    %v5902 = vrot.slane %v5876, 4
    %v5903 = vsel %vm5335, %v5901, %v5902
    %v5904 = vrot.slane %v5877, 4
    %v5905 = vsel %vm5335, %v5902, %v5904
    %v5906 = vrot.slane %v5878, 4
    %v5907 = vrot.slane %v5879, 4
    %v5908 = vsel %vm5335, %v5906, %v5907
    %v5909 = vrot.slane %v5880, 4
    %v5910 = vsel %vm5335, %v5907, %v5909
    %v5911 = vrot.slane %v5881, 4
    %v5912 = vrot.slane %v5882, 4
    %v5913 = vsel %vm5335, %v5911, %v5912
    %v5914 = vrot.slane %v5883, 4
    %v5915 = vsel %vm5335, %v5912, %v5914
    %5916 = vrot.lane.b32.xlu0 %v5898, 124
    %v5917 = vpop.permute.xlu0 %5916
    %5918 = vrot.lane.b32.xlu0 %v5900, 124
    %v5919 = vpop.permute.xlu0 %5918
    %5920 = vrot.lane.b32.xlu0 %v5903, 124
    %v5921 = vpop.permute.xlu0 %5920
    %5922 = vrot.lane.b32.xlu0 %v5905, 124
    %v5923 = vpop.permute.xlu0 %5922
    %5924 = vrot.lane.b32.xlu0 %v5908, 124
    %v5925 = vpop.permute.xlu0 %5924
    %5926 = vrot.lane.b32.xlu0 %v5910, 124
    %v5927 = vpop.permute.xlu0 %5926
    %5928 = vrot.lane.b32.xlu0 %v5913, 124
    %v5929 = vpop.permute.xlu0 %5928
    %5930 = vrot.lane.b32.xlu0 %v5915, 124
    %v5931 = vpop.permute.xlu0 %5930
    %v5940 = vadd.f32 %v5628, %v5917
    %v5941 = vadd.f32 %v5629, %v5919
    %v5942 = vadd.f32 %v5630, %v5921
    %v5943 = vadd.f32 %v5631, %v5923
    %v5944 = vadd.f32 %v5632, %v5925
    %v5945 = vadd.f32 %v5633, %v5927
    %v5946 = vadd.f32 %v5634, %v5929
    %v5947 = vadd.f32 %v5635, %v5931
    %s5948 = sld [smem:[#allocation7 + $0x51]]
    %v5949 = vstv %s5948
    %v5950 = vmul.f32 %v5949, %v1514
    %v5951 = vmul.f32 %v5949, %v1492
    %v5952 = vmul.f32 %v5949, %v1518
    %v5953 = vmul.f32 %v5949, %v1515
    %v5954 = vmul.f32 %v5949, %v1495
    %v5955 = vmul.f32 %v5949, %v1519
    %v5956 = vmul.f32 %v5949, %v1516
    %v5957 = vmul.f32 %v5949, %v1498
    %v5958 = vmul.f32 %v5949, %v1520
    %v5959 = vmul.f32 %v5949, %v1517
    %v5960 = vmul.f32 %v5949, %v1501
    %v5961 = vmul.f32 %v5949, %v1521
    %v5974 = vrot.slane %v5950, 4
    %v5975 = vrot.slane %v5951, 4
    %v5976 = vsel %vm5335, %v5974, %v5975
    %v5977 = vrot.slane %v5952, 4
    %v5978 = vsel %vm5335, %v5975, %v5977
    %v5979 = vrot.slane %v5953, 4
    %v5980 = vrot.slane %v5954, 4
    %v5981 = vsel %vm5335, %v5979, %v5980
    %v5982 = vrot.slane %v5955, 4
    %v5983 = vsel %vm5335, %v5980, %v5982
    %v5984 = vrot.slane %v5956, 4
    %v5985 = vrot.slane %v5957, 4
    %v5986 = vsel %vm5335, %v5984, %v5985
    %v5987 = vrot.slane %v5958, 4
    %v5988 = vsel %vm5335, %v5985, %v5987
    %v5989 = vrot.slane %v5959, 4
    %v5990 = vrot.slane %v5960, 4
    %v5991 = vsel %vm5335, %v5989, %v5990
    %v5992 = vrot.slane %v5961, 4
    %v5993 = vsel %vm5335, %v5990, %v5992
    %5994 = vrot.lane.b32.xlu0 %v5976, 124
    %v5995 = vpop.permute.xlu0 %5994
    %5996 = vrot.lane.b32.xlu0 %v5978, 124
    %v5997 = vpop.permute.xlu0 %5996
    %5998 = vrot.lane.b32.xlu0 %v5981, 124
    %v5999 = vpop.permute.xlu0 %5998
    %6000 = vrot.lane.b32.xlu0 %v5983, 124
    %v6001 = vpop.permute.xlu0 %6000
    %6002 = vrot.lane.b32.xlu0 %v5986, 124
    %v6003 = vpop.permute.xlu0 %6002
    %6004 = vrot.lane.b32.xlu0 %v5988, 124
    %v6005 = vpop.permute.xlu0 %6004
    %6006 = vrot.lane.b32.xlu0 %v5991, 124
    %v6007 = vpop.permute.xlu0 %6006
    %6008 = vrot.lane.b32.xlu0 %v5993, 124
    %v6009 = vpop.permute.xlu0 %6008
    %v6018 = vadd.f32 %v5706, %v5995
    %v6019 = vadd.f32 %v5707, %v5997
    %v6020 = vadd.f32 %v5708, %v5999
    %v6021 = vadd.f32 %v5709, %v6001
    %v6022 = vadd.f32 %v5710, %v6003
    %v6023 = vadd.f32 %v5711, %v6005
    %v6024 = vadd.f32 %v5712, %v6007
    %v6025 = vadd.f32 %v5713, %v6009
    %s6026 = sld [smem:[#allocation7 + $0x21]]
    %v6027 = vstv %s6026
    %v6028 = vmul.f32 %v6027, %v1426
    %v6029 = vmul.f32 %v6027, %v1404
    %v6030 = vmul.f32 %v6027, %v1430
    %v6031 = vmul.f32 %v6027, %v1427
    %v6032 = vmul.f32 %v6027, %v1407
    %v6033 = vmul.f32 %v6027, %v1431
    %v6034 = vmul.f32 %v6027, %v1428
    %v6035 = vmul.f32 %v6027, %v1410
    %v6036 = vmul.f32 %v6027, %v1432
    %v6037 = vmul.f32 %v6027, %v1429
    %v6038 = vmul.f32 %v6027, %v1413
    %v6039 = vmul.f32 %v6027, %v1433
    %v6052 = vrot.slane %v6028, 4
    %v6053 = vrot.slane %v6029, 4
    %v6054 = vsel %vm5335, %v6052, %v6053
    %v6055 = vrot.slane %v6030, 4
    %v6056 = vsel %vm5335, %v6053, %v6055
    %v6057 = vrot.slane %v6031, 4
    %v6058 = vrot.slane %v6032, 4
    %v6059 = vsel %vm5335, %v6057, %v6058
    %v6060 = vrot.slane %v6033, 4
    %v6061 = vsel %vm5335, %v6058, %v6060
    %v6062 = vrot.slane %v6034, 4
    %v6063 = vrot.slane %v6035, 4
    %v6064 = vsel %vm5335, %v6062, %v6063
    %v6065 = vrot.slane %v6036, 4
    %v6066 = vsel %vm5335, %v6063, %v6065
    %v6067 = vrot.slane %v6037, 4
    %v6068 = vrot.slane %v6038, 4
    %v6069 = vsel %vm5335, %v6067, %v6068
    %v6070 = vrot.slane %v6039, 4
    %v6071 = vsel %vm5335, %v6068, %v6070
    %6072 = vrot.lane.b32.xlu0 %v6054, 124
    %v6073 = vpop.permute.xlu0 %6072
    %6074 = vrot.lane.b32.xlu0 %v6056, 124
    %v6075 = vpop.permute.xlu0 %6074
    %6076 = vrot.lane.b32.xlu0 %v6059, 124
    %v6077 = vpop.permute.xlu0 %6076
    %6078 = vrot.lane.b32.xlu0 %v6061, 124
    %v6079 = vpop.permute.xlu0 %6078
    %6080 = vrot.lane.b32.xlu0 %v6064, 124
    %v6081 = vpop.permute.xlu0 %6080
    %6082 = vrot.lane.b32.xlu0 %v6066, 124
    %v6083 = vpop.permute.xlu0 %6082
    %6084 = vrot.lane.b32.xlu0 %v6069, 124
    %v6085 = vpop.permute.xlu0 %6084
    %6086 = vrot.lane.b32.xlu0 %v6071, 124
    %v6087 = vpop.permute.xlu0 %6086
    %v6096 = vadd.f32 %v5784, %v6073
    %v6097 = vadd.f32 %v5785, %v6075
    %v6098 = vadd.f32 %v5786, %v6077
    %v6099 = vadd.f32 %v5787, %v6079
    %v6100 = vadd.f32 %v5788, %v6081
    %v6101 = vadd.f32 %v5789, %v6083
    %v6102 = vadd.f32 %v5790, %v6085
    %v6103 = vadd.f32 %v5791, %v6087
    %s6104 = sld [smem:[#allocation7 + $0x52]]
    %v6105 = vstv %s6104
    %v6106 = vmul.f32 %v6105, %v1514
    %v6107 = vmul.f32 %v6105, %v1492
    %v6108 = vmul.f32 %v6105, %v1518
    %v6109 = vmul.f32 %v6105, %v1515
    %v6110 = vmul.f32 %v6105, %v1495
    %v6111 = vmul.f32 %v6105, %v1519
    %v6112 = vmul.f32 %v6105, %v1516
    %v6113 = vmul.f32 %v6105, %v1498
    %v6114 = vmul.f32 %v6105, %v1520
    %v6115 = vmul.f32 %v6105, %v1517
    %v6116 = vmul.f32 %v6105, %v1501
    %v6117 = vmul.f32 %v6105, %v1521
    %v6130 = vrot.slane %v6106, 4
    %v6131 = vrot.slane %v6107, 4
    %v6132 = vsel %vm5335, %v6130, %v6131
    %v6133 = vrot.slane %v6108, 4
    %v6134 = vsel %vm5335, %v6131, %v6133
    %v6135 = vrot.slane %v6109, 4
    %v6136 = vrot.slane %v6110, 4
    %v6137 = vsel %vm5335, %v6135, %v6136
    %v6138 = vrot.slane %v6111, 4
    %v6139 = vsel %vm5335, %v6136, %v6138
    %v6140 = vrot.slane %v6112, 4
    %v6141 = vrot.slane %v6113, 4
    %v6142 = vsel %vm5335, %v6140, %v6141
    %v6143 = vrot.slane %v6114, 4
    %v6144 = vsel %vm5335, %v6141, %v6143
    %v6145 = vrot.slane %v6115, 4
    %v6146 = vrot.slane %v6116, 4
    %v6147 = vsel %vm5335, %v6145, %v6146
    %v6148 = vrot.slane %v6117, 4
    %v6149 = vsel %vm5335, %v6146, %v6148
    %6150 = vrot.lane.b32.xlu0 %v6132, 124
    %v6151 = vpop.permute.xlu0 %6150
    %6152 = vrot.lane.b32.xlu0 %v6134, 124
    %v6153 = vpop.permute.xlu0 %6152
    %6154 = vrot.lane.b32.xlu0 %v6137, 124
    %v6155 = vpop.permute.xlu0 %6154
    %6156 = vrot.lane.b32.xlu0 %v6139, 124
    %v6157 = vpop.permute.xlu0 %6156
    %6158 = vrot.lane.b32.xlu0 %v6142, 124
    %v6159 = vpop.permute.xlu0 %6158
    %6160 = vrot.lane.b32.xlu0 %v6144, 124
    %v6161 = vpop.permute.xlu0 %6160
    %6162 = vrot.lane.b32.xlu0 %v6147, 124
    %v6163 = vpop.permute.xlu0 %6162
    %6164 = vrot.lane.b32.xlu0 %v6149, 124
    %v6165 = vpop.permute.xlu0 %6164
    %v6174 = vadd.f32 %v5862, %v6151
    %v6175 = vadd.f32 %v5863, %v6153
    %v6176 = vadd.f32 %v5864, %v6155
    %v6177 = vadd.f32 %v5865, %v6157
    %v6178 = vadd.f32 %v5866, %v6159
    %v6179 = vadd.f32 %v5867, %v6161
    %v6180 = vadd.f32 %v5868, %v6163
    %v6181 = vadd.f32 %v5869, %v6165
    %s6182 = sld [smem:[#allocation7 + $0x22]]
    %v6183 = vstv %s6182
    %v6184 = vmul.f32 %v6183, %v1426
    %v6185 = vmul.f32 %v6183, %v1404
    %v6186 = vmul.f32 %v6183, %v1430
    %v6187 = vmul.f32 %v6183, %v1427
    %v6188 = vmul.f32 %v6183, %v1407
    %v6189 = vmul.f32 %v6183, %v1431
    %v6190 = vmul.f32 %v6183, %v1428
    %v6191 = vmul.f32 %v6183, %v1410
    %v6192 = vmul.f32 %v6183, %v1432
    %v6193 = vmul.f32 %v6183, %v1429
    %v6194 = vmul.f32 %v6183, %v1413
    %v6195 = vmul.f32 %v6183, %v1433
    %v6208 = vrot.slane %v6184, 4
    %v6209 = vrot.slane %v6185, 4
    %v6210 = vsel %vm5335, %v6208, %v6209
    %v6211 = vrot.slane %v6186, 4
    %v6212 = vsel %vm5335, %v6209, %v6211
    %v6213 = vrot.slane %v6187, 4
    %v6214 = vrot.slane %v6188, 4
    %v6215 = vsel %vm5335, %v6213, %v6214
    %v6216 = vrot.slane %v6189, 4
    %v6217 = vsel %vm5335, %v6214, %v6216
    %v6218 = vrot.slane %v6190, 4
    %v6219 = vrot.slane %v6191, 4
    %v6220 = vsel %vm5335, %v6218, %v6219
    %v6221 = vrot.slane %v6192, 4
    %v6222 = vsel %vm5335, %v6219, %v6221
    %v6223 = vrot.slane %v6193, 4
    %v6224 = vrot.slane %v6194, 4
    %v6225 = vsel %vm5335, %v6223, %v6224
    %v6226 = vrot.slane %v6195, 4
    %v6227 = vsel %vm5335, %v6224, %v6226
    %6228 = vrot.lane.b32.xlu0 %v6210, 122
    %v6229 = vpop.permute.xlu0 %6228
    %6230 = vrot.lane.b32.xlu0 %v6212, 122
    %v6231 = vpop.permute.xlu0 %6230
    %6232 = vrot.lane.b32.xlu0 %v6215, 122
    %v6233 = vpop.permute.xlu0 %6232
    %6234 = vrot.lane.b32.xlu0 %v6217, 122
    %v6235 = vpop.permute.xlu0 %6234
    %6236 = vrot.lane.b32.xlu0 %v6220, 122
    %v6237 = vpop.permute.xlu0 %6236
    %6238 = vrot.lane.b32.xlu0 %v6222, 122
    %v6239 = vpop.permute.xlu0 %6238
    %6240 = vrot.lane.b32.xlu0 %v6225, 122
    %v6241 = vpop.permute.xlu0 %6240
    %6242 = vrot.lane.b32.xlu0 %v6227, 122
    %v6243 = vpop.permute.xlu0 %6242
    %v6252 = vadd.f32 %v5940, %v6229
    %v6253 = vadd.f32 %v5941, %v6231
    %v6254 = vadd.f32 %v5942, %v6233
    %v6255 = vadd.f32 %v5943, %v6235
    %v6256 = vadd.f32 %v5944, %v6237
    %v6257 = vadd.f32 %v5945, %v6239
    %v6258 = vadd.f32 %v5946, %v6241
    %v6259 = vadd.f32 %v5947, %v6243
    %s6260 = sld [smem:[#allocation7 + $0x53]]
    %v6261 = vstv %s6260
    %v6262 = vmul.f32 %v6261, %v1514
    %v6263 = vmul.f32 %v6261, %v1492
    %v6264 = vmul.f32 %v6261, %v1518
    %v6265 = vmul.f32 %v6261, %v1515
    %v6266 = vmul.f32 %v6261, %v1495
    %v6267 = vmul.f32 %v6261, %v1519
    %v6268 = vmul.f32 %v6261, %v1516
    %v6269 = vmul.f32 %v6261, %v1498
    %v6270 = vmul.f32 %v6261, %v1520
    %v6271 = vmul.f32 %v6261, %v1517
    %v6272 = vmul.f32 %v6261, %v1501
    %v6273 = vmul.f32 %v6261, %v1521
    %v6286 = vrot.slane %v6262, 4
    %v6287 = vrot.slane %v6263, 4
    %v6288 = vsel %vm5335, %v6286, %v6287
    %v6289 = vrot.slane %v6264, 4
    %v6290 = vsel %vm5335, %v6287, %v6289
    %v6291 = vrot.slane %v6265, 4
    %v6292 = vrot.slane %v6266, 4
    %v6293 = vsel %vm5335, %v6291, %v6292
    %v6294 = vrot.slane %v6267, 4
    %v6295 = vsel %vm5335, %v6292, %v6294
    %v6296 = vrot.slane %v6268, 4
    %v6297 = vrot.slane %v6269, 4
    %v6298 = vsel %vm5335, %v6296, %v6297
    %v6299 = vrot.slane %v6270, 4
    %v6300 = vsel %vm5335, %v6297, %v6299
    %v6301 = vrot.slane %v6271, 4
    %v6302 = vrot.slane %v6272, 4
    %v6303 = vsel %vm5335, %v6301, %v6302
    %v6304 = vrot.slane %v6273, 4
    %v6305 = vsel %vm5335, %v6302, %v6304
    %6306 = vrot.lane.b32.xlu0 %v6288, 122
    %v6307 = vpop.permute.xlu0 %6306
    %6308 = vrot.lane.b32.xlu0 %v6290, 122
    %v6309 = vpop.permute.xlu0 %6308
    %6310 = vrot.lane.b32.xlu0 %v6293, 122
    %v6311 = vpop.permute.xlu0 %6310
    %6312 = vrot.lane.b32.xlu0 %v6295, 122
    %v6313 = vpop.permute.xlu0 %6312
    %6314 = vrot.lane.b32.xlu0 %v6298, 122
    %v6315 = vpop.permute.xlu0 %6314
    %6316 = vrot.lane.b32.xlu0 %v6300, 122
    %v6317 = vpop.permute.xlu0 %6316
    %6318 = vrot.lane.b32.xlu0 %v6303, 122
    %v6319 = vpop.permute.xlu0 %6318
    %6320 = vrot.lane.b32.xlu0 %v6305, 122
    %v6321 = vpop.permute.xlu0 %6320
    %v6330 = vadd.f32 %v6018, %v6307
    %v6331 = vadd.f32 %v6019, %v6309
    %v6332 = vadd.f32 %v6020, %v6311
    %v6333 = vadd.f32 %v6021, %v6313
    %v6334 = vadd.f32 %v6022, %v6315
    %v6335 = vadd.f32 %v6023, %v6317
    %v6336 = vadd.f32 %v6024, %v6319
    %v6337 = vadd.f32 %v6025, %v6321
    %s6338 = sld [smem:[#allocation7 + $0x23]]
    %v6339 = vstv %s6338
    %v6340 = vmul.f32 %v6339, %v1426
    %v6341 = vmul.f32 %v6339, %v1404
    %v6342 = vmul.f32 %v6339, %v1430
    %v6343 = vmul.f32 %v6339, %v1427
    %v6344 = vmul.f32 %v6339, %v1407
    %v6345 = vmul.f32 %v6339, %v1431
    %v6346 = vmul.f32 %v6339, %v1428
    %v6347 = vmul.f32 %v6339, %v1410
    %v6348 = vmul.f32 %v6339, %v1432
    %v6349 = vmul.f32 %v6339, %v1429
    %v6350 = vmul.f32 %v6339, %v1413
    %v6351 = vmul.f32 %v6339, %v1433
    %v6364 = vrot.slane %v6340, 5
    %v6365 = vrot.slane %v6341, 5
    %v6366 = vsel %vm1401, %v6364, %v6365
    %v6367 = vrot.slane %v6342, 5
    %v6368 = vsel %vm1401, %v6365, %v6367
    %v6369 = vrot.slane %v6343, 5
    %v6370 = vrot.slane %v6344, 5
    %v6371 = vsel %vm1401, %v6369, %v6370
    %v6372 = vrot.slane %v6345, 5
    %v6373 = vsel %vm1401, %v6370, %v6372
    %v6374 = vrot.slane %v6346, 5
    %v6375 = vrot.slane %v6347, 5
    %v6376 = vsel %vm1401, %v6374, %v6375
    %v6377 = vrot.slane %v6348, 5
    %v6378 = vsel %vm1401, %v6375, %v6377
    %v6379 = vrot.slane %v6349, 5
    %v6380 = vrot.slane %v6350, 5
    %v6381 = vsel %vm1401, %v6379, %v6380
    %v6382 = vrot.slane %v6351, 5
    %v6383 = vsel %vm1401, %v6380, %v6382
    %6384 = vrot.lane.b32.xlu0 %v6366, 1
    %v6385 = vpop.permute.xlu0 %6384
    %6386 = vrot.lane.b32.xlu0 %v6368, 1
    %v6387 = vpop.permute.xlu0 %6386
    %6388 = vrot.lane.b32.xlu0 %v6371, 1
    %v6389 = vpop.permute.xlu0 %6388
    %6390 = vrot.lane.b32.xlu0 %v6373, 1
    %v6391 = vpop.permute.xlu0 %6390
    %6392 = vrot.lane.b32.xlu0 %v6376, 1
    %v6393 = vpop.permute.xlu0 %6392
    %6394 = vrot.lane.b32.xlu0 %v6378, 1
    %v6395 = vpop.permute.xlu0 %6394
    %6396 = vrot.lane.b32.xlu0 %v6381, 1
    %v6397 = vpop.permute.xlu0 %6396
    %6398 = vrot.lane.b32.xlu0 %v6383, 1
    %v6399 = vpop.permute.xlu0 %6398
    %v6408 = vadd.f32 %v6096, %v6385
    %v6409 = vadd.f32 %v6097, %v6387
    %v6410 = vadd.f32 %v6098, %v6389
    %v6411 = vadd.f32 %v6099, %v6391
    %v6412 = vadd.f32 %v6100, %v6393
    %v6413 = vadd.f32 %v6101, %v6395
    %v6414 = vadd.f32 %v6102, %v6397
    %v6415 = vadd.f32 %v6103, %v6399
    %s6416 = sld [smem:[#allocation7 + $0x54]]
    %v6417 = vstv %s6416
    %v6418 = vmul.f32 %v6417, %v1514
    %v6419 = vmul.f32 %v6417, %v1492
    %v6420 = vmul.f32 %v6417, %v1518
    %v6421 = vmul.f32 %v6417, %v1515
    %v6422 = vmul.f32 %v6417, %v1495
    %v6423 = vmul.f32 %v6417, %v1519
    %v6424 = vmul.f32 %v6417, %v1516
    %v6425 = vmul.f32 %v6417, %v1498
    %v6426 = vmul.f32 %v6417, %v1520
    %v6427 = vmul.f32 %v6417, %v1517
    %v6428 = vmul.f32 %v6417, %v1501
    %v6429 = vmul.f32 %v6417, %v1521
    %v6442 = vrot.slane %v6418, 5
    %v6443 = vrot.slane %v6419, 5
    %v6444 = vsel %vm1401, %v6442, %v6443
    %v6445 = vrot.slane %v6420, 5
    %v6446 = vsel %vm1401, %v6443, %v6445
    %v6447 = vrot.slane %v6421, 5
    %v6448 = vrot.slane %v6422, 5
    %v6449 = vsel %vm1401, %v6447, %v6448
    %v6450 = vrot.slane %v6423, 5
    %v6451 = vsel %vm1401, %v6448, %v6450
    %v6452 = vrot.slane %v6424, 5
    %v6453 = vrot.slane %v6425, 5
    %v6454 = vsel %vm1401, %v6452, %v6453
    %v6455 = vrot.slane %v6426, 5
    %v6456 = vsel %vm1401, %v6453, %v6455
    %v6457 = vrot.slane %v6427, 5
    %v6458 = vrot.slane %v6428, 5
    %v6459 = vsel %vm1401, %v6457, %v6458
    %v6460 = vrot.slane %v6429, 5
    %v6461 = vsel %vm1401, %v6458, %v6460
    %6462 = vrot.lane.b32.xlu0 %v6444, 1
    %v6463 = vpop.permute.xlu0 %6462
    %6464 = vrot.lane.b32.xlu0 %v6446, 1
    %v6465 = vpop.permute.xlu0 %6464
    %6466 = vrot.lane.b32.xlu0 %v6449, 1
    %v6467 = vpop.permute.xlu0 %6466
    %6468 = vrot.lane.b32.xlu0 %v6451, 1
    %v6469 = vpop.permute.xlu0 %6468
    %6470 = vrot.lane.b32.xlu0 %v6454, 1
    %v6471 = vpop.permute.xlu0 %6470
    %6472 = vrot.lane.b32.xlu0 %v6456, 1
    %v6473 = vpop.permute.xlu0 %6472
    %6474 = vrot.lane.b32.xlu0 %v6459, 1
    %v6475 = vpop.permute.xlu0 %6474
    %6476 = vrot.lane.b32.xlu0 %v6461, 1
    %v6477 = vpop.permute.xlu0 %6476
    %v6486 = vadd.f32 %v6174, %v6463
    %v6487 = vadd.f32 %v6175, %v6465
    %v6488 = vadd.f32 %v6176, %v6467
    %v6489 = vadd.f32 %v6177, %v6469
    %v6490 = vadd.f32 %v6178, %v6471
    %v6491 = vadd.f32 %v6179, %v6473
    %v6492 = vadd.f32 %v6180, %v6475
    %v6493 = vadd.f32 %v6181, %v6477
    %s6494 = sld [smem:[#allocation7 + $0x24]]
    %v6495 = vstv %s6494
    %v6496 = vmul.f32 %v6495, %v1426
    %v6497 = vmul.f32 %v6495, %v1404
    %v6498 = vmul.f32 %v6495, %v1430
    %v6499 = vmul.f32 %v6495, %v1427
    %v6500 = vmul.f32 %v6495, %v1407
    %v6501 = vmul.f32 %v6495, %v1431
    %v6502 = vmul.f32 %v6495, %v1428
    %v6503 = vmul.f32 %v6495, %v1410
    %v6504 = vmul.f32 %v6495, %v1432
    %v6505 = vmul.f32 %v6495, %v1429
    %v6506 = vmul.f32 %v6495, %v1413
    %v6507 = vmul.f32 %v6495, %v1433
    %v6520 = vrot.slane %v6496, 5
    %v6521 = vrot.slane %v6497, 5
    %v6522 = vsel %vm1401, %v6520, %v6521
    %v6523 = vrot.slane %v6498, 5
    %v6524 = vsel %vm1401, %v6521, %v6523
    %v6525 = vrot.slane %v6499, 5
    %v6526 = vrot.slane %v6500, 5
    %v6527 = vsel %vm1401, %v6525, %v6526
    %v6528 = vrot.slane %v6501, 5
    %v6529 = vsel %vm1401, %v6526, %v6528
    %v6530 = vrot.slane %v6502, 5
    %v6531 = vrot.slane %v6503, 5
    %v6532 = vsel %vm1401, %v6530, %v6531
    %v6533 = vrot.slane %v6504, 5
    %v6534 = vsel %vm1401, %v6531, %v6533
    %v6535 = vrot.slane %v6505, 5
    %v6536 = vrot.slane %v6506, 5
    %v6537 = vsel %vm1401, %v6535, %v6536
    %v6538 = vrot.slane %v6507, 5
    %v6539 = vsel %vm1401, %v6536, %v6538
    %6540 = vrot.lane.b32.xlu0 %v6522, 127
    %v6541 = vpop.permute.xlu0 %6540
    %6542 = vrot.lane.b32.xlu0 %v6524, 127
    %v6543 = vpop.permute.xlu0 %6542
    %6544 = vrot.lane.b32.xlu0 %v6527, 127
    %v6545 = vpop.permute.xlu0 %6544
    %6546 = vrot.lane.b32.xlu0 %v6529, 127
    %v6547 = vpop.permute.xlu0 %6546
    %6548 = vrot.lane.b32.xlu0 %v6532, 127
    %v6549 = vpop.permute.xlu0 %6548
    %6550 = vrot.lane.b32.xlu0 %v6534, 127
    %v6551 = vpop.permute.xlu0 %6550
    %6552 = vrot.lane.b32.xlu0 %v6537, 127
    %v6553 = vpop.permute.xlu0 %6552
    %6554 = vrot.lane.b32.xlu0 %v6539, 127
    %v6555 = vpop.permute.xlu0 %6554
    %v6564 = vadd.f32 %v6252, %v6541
    %v6565 = vadd.f32 %v6253, %v6543
    %v6566 = vadd.f32 %v6254, %v6545
    %v6567 = vadd.f32 %v6255, %v6547
    %v6568 = vadd.f32 %v6256, %v6549
    %v6569 = vadd.f32 %v6257, %v6551
    %v6570 = vadd.f32 %v6258, %v6553
    %v6571 = vadd.f32 %v6259, %v6555
    %s6572 = sld [smem:[#allocation7 + $0x55]]
    %v6573 = vstv %s6572
    %v6574 = vmul.f32 %v6573, %v1514
    %v6575 = vmul.f32 %v6573, %v1492
    %v6576 = vmul.f32 %v6573, %v1518
    %v6577 = vmul.f32 %v6573, %v1515
    %v6578 = vmul.f32 %v6573, %v1495
    %v6579 = vmul.f32 %v6573, %v1519
    %v6580 = vmul.f32 %v6573, %v1516
    %v6581 = vmul.f32 %v6573, %v1498
    %v6582 = vmul.f32 %v6573, %v1520
    %v6583 = vmul.f32 %v6573, %v1517
    %v6584 = vmul.f32 %v6573, %v1501
    %v6585 = vmul.f32 %v6573, %v1521
    %v6598 = vrot.slane %v6574, 5
    %v6599 = vrot.slane %v6575, 5
    %v6600 = vsel %vm1401, %v6598, %v6599
    %v6601 = vrot.slane %v6576, 5
    %v6602 = vsel %vm1401, %v6599, %v6601
    %v6603 = vrot.slane %v6577, 5
    %v6604 = vrot.slane %v6578, 5
    %v6605 = vsel %vm1401, %v6603, %v6604
    %v6606 = vrot.slane %v6579, 5
    %v6607 = vsel %vm1401, %v6604, %v6606
    %v6608 = vrot.slane %v6580, 5
    %v6609 = vrot.slane %v6581, 5
    %v6610 = vsel %vm1401, %v6608, %v6609
    %v6611 = vrot.slane %v6582, 5
    %v6612 = vsel %vm1401, %v6609, %v6611
    %v6613 = vrot.slane %v6583, 5
    %v6614 = vrot.slane %v6584, 5
    %v6615 = vsel %vm1401, %v6613, %v6614
    %v6616 = vrot.slane %v6585, 5
    %v6617 = vsel %vm1401, %v6614, %v6616
    %6618 = vrot.lane.b32.xlu0 %v6600, 127
    %v6619 = vpop.permute.xlu0 %6618
    %6620 = vrot.lane.b32.xlu0 %v6602, 127
    %v6621 = vpop.permute.xlu0 %6620
    %6622 = vrot.lane.b32.xlu0 %v6605, 127
    %v6623 = vpop.permute.xlu0 %6622
    %6624 = vrot.lane.b32.xlu0 %v6607, 127
    %v6625 = vpop.permute.xlu0 %6624
    %6626 = vrot.lane.b32.xlu0 %v6610, 127
    %v6627 = vpop.permute.xlu0 %6626
    %6628 = vrot.lane.b32.xlu0 %v6612, 127
    %v6629 = vpop.permute.xlu0 %6628
    %6630 = vrot.lane.b32.xlu0 %v6615, 127
    %v6631 = vpop.permute.xlu0 %6630
    %6632 = vrot.lane.b32.xlu0 %v6617, 127
    %v6633 = vpop.permute.xlu0 %6632
    %v6642 = vadd.f32 %v6330, %v6619
    %v6643 = vadd.f32 %v6331, %v6621
    %v6644 = vadd.f32 %v6332, %v6623
    %v6645 = vadd.f32 %v6333, %v6625
    %v6646 = vadd.f32 %v6334, %v6627
    %v6647 = vadd.f32 %v6335, %v6629
    %v6648 = vadd.f32 %v6336, %v6631
    %v6649 = vadd.f32 %v6337, %v6633
    %s6650 = sld [smem:[#allocation7 + $0x25]]
    %v6651 = vstv %s6650
    %v6652 = vmul.f32 %v6651, %v1426
    %v6653 = vmul.f32 %v6651, %v1404
    %v6654 = vmul.f32 %v6651, %v1430
    %v6655 = vmul.f32 %v6651, %v1427
    %v6656 = vmul.f32 %v6651, %v1407
    %v6657 = vmul.f32 %v6651, %v1431
    %v6658 = vmul.f32 %v6651, %v1428
    %v6659 = vmul.f32 %v6651, %v1410
    %v6660 = vmul.f32 %v6651, %v1432
    %v6661 = vmul.f32 %v6651, %v1429
    %v6662 = vmul.f32 %v6651, %v1413
    %v6663 = vmul.f32 %v6651, %v1433
    %v6676 = vrot.slane %v6652, 5
    %v6677 = vrot.slane %v6653, 5
    %v6678 = vsel %vm1401, %v6676, %v6677
    %v6679 = vrot.slane %v6654, 5
    %v6680 = vsel %vm1401, %v6677, %v6679
    %v6681 = vrot.slane %v6655, 5
    %v6682 = vrot.slane %v6656, 5
    %v6683 = vsel %vm1401, %v6681, %v6682
    %v6684 = vrot.slane %v6657, 5
    %v6685 = vsel %vm1401, %v6682, %v6684
    %v6686 = vrot.slane %v6658, 5
    %v6687 = vrot.slane %v6659, 5
    %v6688 = vsel %vm1401, %v6686, %v6687
    %v6689 = vrot.slane %v6660, 5
    %v6690 = vsel %vm1401, %v6687, %v6689
    %v6691 = vrot.slane %v6661, 5
    %v6692 = vrot.slane %v6662, 5
    %v6693 = vsel %vm1401, %v6691, %v6692
    %v6694 = vrot.slane %v6663, 5
    %v6695 = vsel %vm1401, %v6692, %v6694
    %6696 = vrot.lane.b32.xlu0 %v6678, 127
    %v6697 = vpop.permute.xlu0 %6696
    %6698 = vrot.lane.b32.xlu0 %v6680, 127
    %v6699 = vpop.permute.xlu0 %6698
    %6700 = vrot.lane.b32.xlu0 %v6683, 127
    %v6701 = vpop.permute.xlu0 %6700
    %6702 = vrot.lane.b32.xlu0 %v6685, 127
    %v6703 = vpop.permute.xlu0 %6702
    %6704 = vrot.lane.b32.xlu0 %v6688, 127
    %v6705 = vpop.permute.xlu0 %6704
    %6706 = vrot.lane.b32.xlu0 %v6690, 127
    %v6707 = vpop.permute.xlu0 %6706
    %6708 = vrot.lane.b32.xlu0 %v6693, 127
    %v6709 = vpop.permute.xlu0 %6708
    %6710 = vrot.lane.b32.xlu0 %v6695, 127
    %v6711 = vpop.permute.xlu0 %6710
    %v6720 = vadd.f32 %v6408, %v6697
    %v6721 = vadd.f32 %v6409, %v6699
    %v6722 = vadd.f32 %v6410, %v6701
    %v6723 = vadd.f32 %v6411, %v6703
    %v6724 = vadd.f32 %v6412, %v6705
    %v6725 = vadd.f32 %v6413, %v6707
    %v6726 = vadd.f32 %v6414, %v6709
    %v6727 = vadd.f32 %v6415, %v6711
    %s6728 = sld [smem:[#allocation7 + $0x56]]
    %v6729 = vstv %s6728
    %v6730 = vmul.f32 %v6729, %v1514
    %v6731 = vmul.f32 %v6729, %v1492
    %v6732 = vmul.f32 %v6729, %v1518
    %v6733 = vmul.f32 %v6729, %v1515
    %v6734 = vmul.f32 %v6729, %v1495
    %v6735 = vmul.f32 %v6729, %v1519
    %v6736 = vmul.f32 %v6729, %v1516
    %v6737 = vmul.f32 %v6729, %v1498
    %v6738 = vmul.f32 %v6729, %v1520
    %v6739 = vmul.f32 %v6729, %v1517
    %v6740 = vmul.f32 %v6729, %v1501
    %v6741 = vmul.f32 %v6729, %v1521
    %v6754 = vrot.slane %v6730, 5
    %v6755 = vrot.slane %v6731, 5
    %v6756 = vsel %vm1401, %v6754, %v6755
    %v6757 = vrot.slane %v6732, 5
    %v6758 = vsel %vm1401, %v6755, %v6757
    %v6759 = vrot.slane %v6733, 5
    %v6760 = vrot.slane %v6734, 5
    %v6761 = vsel %vm1401, %v6759, %v6760
    %v6762 = vrot.slane %v6735, 5
    %v6763 = vsel %vm1401, %v6760, %v6762
    %v6764 = vrot.slane %v6736, 5
    %v6765 = vrot.slane %v6737, 5
    %v6766 = vsel %vm1401, %v6764, %v6765
    %v6767 = vrot.slane %v6738, 5
    %v6768 = vsel %vm1401, %v6765, %v6767
    %v6769 = vrot.slane %v6739, 5
    %v6770 = vrot.slane %v6740, 5
    %v6771 = vsel %vm1401, %v6769, %v6770
    %v6772 = vrot.slane %v6741, 5
    %v6773 = vsel %vm1401, %v6770, %v6772
    %6774 = vrot.lane.b32.xlu0 %v6756, 127
    %v6775 = vpop.permute.xlu0 %6774
    %6776 = vrot.lane.b32.xlu0 %v6758, 127
    %v6777 = vpop.permute.xlu0 %6776
    %6778 = vrot.lane.b32.xlu0 %v6761, 127
    %v6779 = vpop.permute.xlu0 %6778
    %6780 = vrot.lane.b32.xlu0 %v6763, 127
    %v6781 = vpop.permute.xlu0 %6780
    %6782 = vrot.lane.b32.xlu0 %v6766, 127
    %v6783 = vpop.permute.xlu0 %6782
    %6784 = vrot.lane.b32.xlu0 %v6768, 127
    %v6785 = vpop.permute.xlu0 %6784
    %6786 = vrot.lane.b32.xlu0 %v6771, 127
    %v6787 = vpop.permute.xlu0 %6786
    %6788 = vrot.lane.b32.xlu0 %v6773, 127
    %v6789 = vpop.permute.xlu0 %6788
    %v6798 = vadd.f32 %v6486, %v6775
    %v6799 = vadd.f32 %v6487, %v6777
    %v6800 = vadd.f32 %v6488, %v6779
    %v6801 = vadd.f32 %v6489, %v6781
    %v6802 = vadd.f32 %v6490, %v6783
    %v6803 = vadd.f32 %v6491, %v6785
    %v6804 = vadd.f32 %v6492, %v6787
    %v6805 = vadd.f32 %v6493, %v6789
    %s6806 = sld [smem:[#allocation7 + $0x26]]
    %v6807 = vstv %s6806
    %v6808 = vmul.f32 %v6807, %v1426
    %v6809 = vmul.f32 %v6807, %v1404
    %v6810 = vmul.f32 %v6807, %v1430
    %v6811 = vmul.f32 %v6807, %v1427
    %v6812 = vmul.f32 %v6807, %v1407
    %v6813 = vmul.f32 %v6807, %v1431
    %v6814 = vmul.f32 %v6807, %v1428
    %v6815 = vmul.f32 %v6807, %v1410
    %v6816 = vmul.f32 %v6807, %v1432
    %v6817 = vmul.f32 %v6807, %v1429
    %v6818 = vmul.f32 %v6807, %v1413
    %v6819 = vmul.f32 %v6807, %v1433
    %v6832 = vrot.slane %v6808, 5
    %v6833 = vrot.slane %v6809, 5
    %v6834 = vsel %vm1401, %v6832, %v6833
    %v6835 = vrot.slane %v6810, 5
    %v6836 = vsel %vm1401, %v6833, %v6835
    %v6837 = vrot.slane %v6811, 5
    %v6838 = vrot.slane %v6812, 5
    %v6839 = vsel %vm1401, %v6837, %v6838
    %v6840 = vrot.slane %v6813, 5
    %v6841 = vsel %vm1401, %v6838, %v6840
    %v6842 = vrot.slane %v6814, 5
    %v6843 = vrot.slane %v6815, 5
    %v6844 = vsel %vm1401, %v6842, %v6843
    %v6845 = vrot.slane %v6816, 5
    %v6846 = vsel %vm1401, %v6843, %v6845
    %v6847 = vrot.slane %v6817, 5
    %v6848 = vrot.slane %v6818, 5
    %v6849 = vsel %vm1401, %v6847, %v6848
    %v6850 = vrot.slane %v6819, 5
    %v6851 = vsel %vm1401, %v6848, %v6850
    %6852 = vrot.lane.b32.xlu0 %v6834, 125
    %v6853 = vpop.permute.xlu0 %6852
    %6854 = vrot.lane.b32.xlu0 %v6836, 125
    %v6855 = vpop.permute.xlu0 %6854
    %6856 = vrot.lane.b32.xlu0 %v6839, 125
    %v6857 = vpop.permute.xlu0 %6856
    %6858 = vrot.lane.b32.xlu0 %v6841, 125
    %v6859 = vpop.permute.xlu0 %6858
    %6860 = vrot.lane.b32.xlu0 %v6844, 125
    %v6861 = vpop.permute.xlu0 %6860
    %6862 = vrot.lane.b32.xlu0 %v6846, 125
    %v6863 = vpop.permute.xlu0 %6862
    %6864 = vrot.lane.b32.xlu0 %v6849, 125
    %v6865 = vpop.permute.xlu0 %6864
    %6866 = vrot.lane.b32.xlu0 %v6851, 125
    %v6867 = vpop.permute.xlu0 %6866
    %v6876 = vadd.f32 %v6564, %v6853
    %v6877 = vadd.f32 %v6565, %v6855
    %v6878 = vadd.f32 %v6566, %v6857
    %v6879 = vadd.f32 %v6567, %v6859
    %v6880 = vadd.f32 %v6568, %v6861
    %v6881 = vadd.f32 %v6569, %v6863
    %v6882 = vadd.f32 %v6570, %v6865
    %v6883 = vadd.f32 %v6571, %v6867
    %s6884 = sld [smem:[#allocation7 + $0x57]]
    %v6885 = vstv %s6884
    %v6886 = vmul.f32 %v6885, %v1514
    %v6887 = vmul.f32 %v6885, %v1492
    %v6888 = vmul.f32 %v6885, %v1518
    %v6889 = vmul.f32 %v6885, %v1515
    %v6890 = vmul.f32 %v6885, %v1495
    %v6891 = vmul.f32 %v6885, %v1519
    %v6892 = vmul.f32 %v6885, %v1516
    %v6893 = vmul.f32 %v6885, %v1498
    %v6894 = vmul.f32 %v6885, %v1520
    %v6895 = vmul.f32 %v6885, %v1517
    %v6896 = vmul.f32 %v6885, %v1501
    %v6897 = vmul.f32 %v6885, %v1521
    %v6910 = vrot.slane %v6886, 5
    %v6911 = vrot.slane %v6887, 5
    %v6912 = vsel %vm1401, %v6910, %v6911
    %v6913 = vrot.slane %v6888, 5
    %v6914 = vsel %vm1401, %v6911, %v6913
    %v6915 = vrot.slane %v6889, 5
    %v6916 = vrot.slane %v6890, 5
    %v6917 = vsel %vm1401, %v6915, %v6916
    %v6918 = vrot.slane %v6891, 5
    %v6919 = vsel %vm1401, %v6916, %v6918
    %v6920 = vrot.slane %v6892, 5
    %v6921 = vrot.slane %v6893, 5
    %v6922 = vsel %vm1401, %v6920, %v6921
    %v6923 = vrot.slane %v6894, 5
    %v6924 = vsel %vm1401, %v6921, %v6923
    %v6925 = vrot.slane %v6895, 5
    %v6926 = vrot.slane %v6896, 5
    %v6927 = vsel %vm1401, %v6925, %v6926
    %v6928 = vrot.slane %v6897, 5
    %v6929 = vsel %vm1401, %v6926, %v6928
    %6930 = vrot.lane.b32.xlu0 %v6912, 125
    %v6931 = vpop.permute.xlu0 %6930
    %6932 = vrot.lane.b32.xlu0 %v6914, 125
    %v6933 = vpop.permute.xlu0 %6932
    %6934 = vrot.lane.b32.xlu0 %v6917, 125
    %v6935 = vpop.permute.xlu0 %6934
    %6936 = vrot.lane.b32.xlu0 %v6919, 125
    %v6937 = vpop.permute.xlu0 %6936
    %6938 = vrot.lane.b32.xlu0 %v6922, 125
    %v6939 = vpop.permute.xlu0 %6938
    %6940 = vrot.lane.b32.xlu0 %v6924, 125
    %v6941 = vpop.permute.xlu0 %6940
    %6942 = vrot.lane.b32.xlu0 %v6927, 125
    %v6943 = vpop.permute.xlu0 %6942
    %6944 = vrot.lane.b32.xlu0 %v6929, 125
    %v6945 = vpop.permute.xlu0 %6944
    %v6954 = vadd.f32 %v6642, %v6931
    %v6955 = vadd.f32 %v6643, %v6933
    %v6956 = vadd.f32 %v6644, %v6935
    %v6957 = vadd.f32 %v6645, %v6937
    %v6958 = vadd.f32 %v6646, %v6939
    %v6959 = vadd.f32 %v6647, %v6941
    %v6960 = vadd.f32 %v6648, %v6943
    %v6961 = vadd.f32 %v6649, %v6945
    %s6962 = sld [smem:[#allocation7 + $0x27]]
    %v6963 = vstv %s6962
    %v6964 = vmul.f32 %v6963, %v1426
    %v6965 = vmul.f32 %v6963, %v1404
    %v6966 = vmul.f32 %v6963, %v1430
    %v6967 = vmul.f32 %v6963, %v1427
    %v6968 = vmul.f32 %v6963, %v1407
    %v6969 = vmul.f32 %v6963, %v1431
    %v6970 = vmul.f32 %v6963, %v1428
    %v6971 = vmul.f32 %v6963, %v1410
    %v6972 = vmul.f32 %v6963, %v1432
    %v6973 = vmul.f32 %v6963, %v1429
    %v6974 = vmul.f32 %v6963, %v1413
    %v6975 = vmul.f32 %v6963, %v1433
    %v6988 = vrot.slane %v6964, 5
    %v6989 = vrot.slane %v6965, 5
    %v6990 = vsel %vm1401, %v6988, %v6989
    %v6991 = vrot.slane %v6966, 5
    %v6992 = vsel %vm1401, %v6989, %v6991
    %v6993 = vrot.slane %v6967, 5
    %v6994 = vrot.slane %v6968, 5
    %v6995 = vsel %vm1401, %v6993, %v6994
    %v6996 = vrot.slane %v6969, 5
    %v6997 = vsel %vm1401, %v6994, %v6996
    %v6998 = vrot.slane %v6970, 5
    %v6999 = vrot.slane %v6971, 5
    %v7000 = vsel %vm1401, %v6998, %v6999
    %v7001 = vrot.slane %v6972, 5
    %v7002 = vsel %vm1401, %v6999, %v7001
    %v7003 = vrot.slane %v6973, 5
    %v7004 = vrot.slane %v6974, 5
    %v7005 = vsel %vm1401, %v7003, %v7004
    %v7006 = vrot.slane %v6975, 5
    %v7007 = vsel %vm1401, %v7004, %v7006
    %7008 = vrot.lane.b32.xlu0 %v6990, 125
    %v7009 = vpop.permute.xlu0 %7008
    %7010 = vrot.lane.b32.xlu0 %v6992, 125
    %v7011 = vpop.permute.xlu0 %7010
    %7012 = vrot.lane.b32.xlu0 %v6995, 125
    %v7013 = vpop.permute.xlu0 %7012
    %7014 = vrot.lane.b32.xlu0 %v6997, 125
    %v7015 = vpop.permute.xlu0 %7014
    %7016 = vrot.lane.b32.xlu0 %v7000, 125
    %v7017 = vpop.permute.xlu0 %7016
    %7018 = vrot.lane.b32.xlu0 %v7002, 125
    %v7019 = vpop.permute.xlu0 %7018
    %7020 = vrot.lane.b32.xlu0 %v7005, 125
    %v7021 = vpop.permute.xlu0 %7020
    %7022 = vrot.lane.b32.xlu0 %v7007, 125
    %v7023 = vpop.permute.xlu0 %7022
    %v7032 = vadd.f32 %v6720, %v7009
    %v7033 = vadd.f32 %v6721, %v7011
    %v7034 = vadd.f32 %v6722, %v7013
    %v7035 = vadd.f32 %v6723, %v7015
    %v7036 = vadd.f32 %v6724, %v7017
    %v7037 = vadd.f32 %v6725, %v7019
    %v7038 = vadd.f32 %v6726, %v7021
    %v7039 = vadd.f32 %v6727, %v7023
    %s7040 = sld [smem:[#allocation7 + $0x58]]
    %v7041 = vstv %s7040
    %v7042 = vmul.f32 %v7041, %v1514
    %v7043 = vmul.f32 %v7041, %v1492
    %v7044 = vmul.f32 %v7041, %v1518
    %v7045 = vmul.f32 %v7041, %v1515
    %v7046 = vmul.f32 %v7041, %v1495
    %v7047 = vmul.f32 %v7041, %v1519
    %v7048 = vmul.f32 %v7041, %v1516
    %v7049 = vmul.f32 %v7041, %v1498
    %v7050 = vmul.f32 %v7041, %v1520
    %v7051 = vmul.f32 %v7041, %v1517
    %v7052 = vmul.f32 %v7041, %v1501
    %v7053 = vmul.f32 %v7041, %v1521
    %v7066 = vrot.slane %v7042, 5
    %v7067 = vrot.slane %v7043, 5
    %v7068 = vsel %vm1401, %v7066, %v7067
    %v7069 = vrot.slane %v7044, 5
    %v7070 = vsel %vm1401, %v7067, %v7069
    %v7071 = vrot.slane %v7045, 5
    %v7072 = vrot.slane %v7046, 5
    %v7073 = vsel %vm1401, %v7071, %v7072
    %v7074 = vrot.slane %v7047, 5
    %v7075 = vsel %vm1401, %v7072, %v7074
    %v7076 = vrot.slane %v7048, 5
    %v7077 = vrot.slane %v7049, 5
    %v7078 = vsel %vm1401, %v7076, %v7077
    %v7079 = vrot.slane %v7050, 5
    %v7080 = vsel %vm1401, %v7077, %v7079
    %v7081 = vrot.slane %v7051, 5
    %v7082 = vrot.slane %v7052, 5
    %v7083 = vsel %vm1401, %v7081, %v7082
    %v7084 = vrot.slane %v7053, 5
    %v7085 = vsel %vm1401, %v7082, %v7084
    %7086 = vrot.lane.b32.xlu0 %v7068, 125
    %v7087 = vpop.permute.xlu0 %7086
    %7088 = vrot.lane.b32.xlu0 %v7070, 125
    %v7089 = vpop.permute.xlu0 %7088
    %7090 = vrot.lane.b32.xlu0 %v7073, 125
    %v7091 = vpop.permute.xlu0 %7090
    %7092 = vrot.lane.b32.xlu0 %v7075, 125
    %v7093 = vpop.permute.xlu0 %7092
    %7094 = vrot.lane.b32.xlu0 %v7078, 125
    %v7095 = vpop.permute.xlu0 %7094
    %7096 = vrot.lane.b32.xlu0 %v7080, 125
    %v7097 = vpop.permute.xlu0 %7096
    %7098 = vrot.lane.b32.xlu0 %v7083, 125
    %v7099 = vpop.permute.xlu0 %7098
    %7100 = vrot.lane.b32.xlu0 %v7085, 125
    %v7101 = vpop.permute.xlu0 %7100
    %v7110 = vadd.f32 %v6798, %v7087
    %v7111 = vadd.f32 %v6799, %v7089
    %v7112 = vadd.f32 %v6800, %v7091
    %v7113 = vadd.f32 %v6801, %v7093
    %v7114 = vadd.f32 %v6802, %v7095
    %v7115 = vadd.f32 %v6803, %v7097
    %v7116 = vadd.f32 %v6804, %v7099
    %v7117 = vadd.f32 %v6805, %v7101
    %s7118 = sld [smem:[#allocation7 + $0x28]]
    %v7119 = vstv %s7118
    %v7120 = vmul.f32 %v7119, %v1426
    %v7121 = vmul.f32 %v7119, %v1404
    %v7122 = vmul.f32 %v7119, %v1430
    %v7123 = vmul.f32 %v7119, %v1427
    %v7124 = vmul.f32 %v7119, %v1407
    %v7125 = vmul.f32 %v7119, %v1431
    %v7126 = vmul.f32 %v7119, %v1428
    %v7127 = vmul.f32 %v7119, %v1410
    %v7128 = vmul.f32 %v7119, %v1432
    %v7129 = vmul.f32 %v7119, %v1429
    %v7130 = vmul.f32 %v7119, %v1413
    %v7131 = vmul.f32 %v7119, %v1433
    %v7144 = vrot.slane %v7120, 5
    %v7145 = vrot.slane %v7121, 5
    %v7146 = vsel %vm1401, %v7144, %v7145
    %v7147 = vrot.slane %v7122, 5
    %v7148 = vsel %vm1401, %v7145, %v7147
    %v7149 = vrot.slane %v7123, 5
    %v7150 = vrot.slane %v7124, 5
    %v7151 = vsel %vm1401, %v7149, %v7150
    %v7152 = vrot.slane %v7125, 5
    %v7153 = vsel %vm1401, %v7150, %v7152
    %v7154 = vrot.slane %v7126, 5
    %v7155 = vrot.slane %v7127, 5
    %v7156 = vsel %vm1401, %v7154, %v7155
    %v7157 = vrot.slane %v7128, 5
    %v7158 = vsel %vm1401, %v7155, %v7157
    %v7159 = vrot.slane %v7129, 5
    %v7160 = vrot.slane %v7130, 5
    %v7161 = vsel %vm1401, %v7159, %v7160
    %v7162 = vrot.slane %v7131, 5
    %v7163 = vsel %vm1401, %v7160, %v7162
    %7164 = vrot.lane.b32.xlu0 %v7146, 123
    %v7165 = vpop.permute.xlu0 %7164
    %7166 = vrot.lane.b32.xlu0 %v7148, 123
    %v7167 = vpop.permute.xlu0 %7166
    %7168 = vrot.lane.b32.xlu0 %v7151, 123
    %v7169 = vpop.permute.xlu0 %7168
    %7170 = vrot.lane.b32.xlu0 %v7153, 123
    %v7171 = vpop.permute.xlu0 %7170
    %7172 = vrot.lane.b32.xlu0 %v7156, 123
    %v7173 = vpop.permute.xlu0 %7172
    %7174 = vrot.lane.b32.xlu0 %v7158, 123
    %v7175 = vpop.permute.xlu0 %7174
    %7176 = vrot.lane.b32.xlu0 %v7161, 123
    %v7177 = vpop.permute.xlu0 %7176
    %7178 = vrot.lane.b32.xlu0 %v7163, 123
    %v7179 = vpop.permute.xlu0 %7178
    %v7188 = vadd.f32 %v6876, %v7165
    %v7189 = vadd.f32 %v6877, %v7167
    %v7190 = vadd.f32 %v6878, %v7169
    %v7191 = vadd.f32 %v6879, %v7171
    %v7192 = vadd.f32 %v6880, %v7173
    %v7193 = vadd.f32 %v6881, %v7175
    %v7194 = vadd.f32 %v6882, %v7177
    %v7195 = vadd.f32 %v6883, %v7179
    %s7196 = sld [smem:[#allocation7 + $0x59]]
    %v7197 = vstv %s7196
    %v7198 = vmul.f32 %v7197, %v1514
    %v7199 = vmul.f32 %v7197, %v1492
    %v7200 = vmul.f32 %v7197, %v1518
    %v7201 = vmul.f32 %v7197, %v1515
    %v7202 = vmul.f32 %v7197, %v1495
    %v7203 = vmul.f32 %v7197, %v1519
    %v7204 = vmul.f32 %v7197, %v1516
    %v7205 = vmul.f32 %v7197, %v1498
    %v7206 = vmul.f32 %v7197, %v1520
    %v7207 = vmul.f32 %v7197, %v1517
    %v7208 = vmul.f32 %v7197, %v1501
    %v7209 = vmul.f32 %v7197, %v1521
    %v7222 = vrot.slane %v7198, 5
    %v7223 = vrot.slane %v7199, 5
    %v7224 = vsel %vm1401, %v7222, %v7223
    %v7225 = vrot.slane %v7200, 5
    %v7226 = vsel %vm1401, %v7223, %v7225
    %v7227 = vrot.slane %v7201, 5
    %v7228 = vrot.slane %v7202, 5
    %v7229 = vsel %vm1401, %v7227, %v7228
    %v7230 = vrot.slane %v7203, 5
    %v7231 = vsel %vm1401, %v7228, %v7230
    %v7232 = vrot.slane %v7204, 5
    %v7233 = vrot.slane %v7205, 5
    %v7234 = vsel %vm1401, %v7232, %v7233
    %v7235 = vrot.slane %v7206, 5
    %v7236 = vsel %vm1401, %v7233, %v7235
    %v7237 = vrot.slane %v7207, 5
    %v7238 = vrot.slane %v7208, 5
    %v7239 = vsel %vm1401, %v7237, %v7238
    %v7240 = vrot.slane %v7209, 5
    %v7241 = vsel %vm1401, %v7238, %v7240
    %7242 = vrot.lane.b32.xlu0 %v7224, 123
    %v7243 = vpop.permute.xlu0 %7242
    %7244 = vrot.lane.b32.xlu0 %v7226, 123
    %v7245 = vpop.permute.xlu0 %7244
    %7246 = vrot.lane.b32.xlu0 %v7229, 123
    %v7247 = vpop.permute.xlu0 %7246
    %7248 = vrot.lane.b32.xlu0 %v7231, 123
    %v7249 = vpop.permute.xlu0 %7248
    %7250 = vrot.lane.b32.xlu0 %v7234, 123
    %v7251 = vpop.permute.xlu0 %7250
    %7252 = vrot.lane.b32.xlu0 %v7236, 123
    %v7253 = vpop.permute.xlu0 %7252
    %7254 = vrot.lane.b32.xlu0 %v7239, 123
    %v7255 = vpop.permute.xlu0 %7254
    %7256 = vrot.lane.b32.xlu0 %v7241, 123
    %v7257 = vpop.permute.xlu0 %7256
    %v7266 = vadd.f32 %v6954, %v7243
    %v7267 = vadd.f32 %v6955, %v7245
    %v7268 = vadd.f32 %v6956, %v7247
    %v7269 = vadd.f32 %v6957, %v7249
    %v7270 = vadd.f32 %v6958, %v7251
    %v7271 = vadd.f32 %v6959, %v7253
    %v7272 = vadd.f32 %v6960, %v7255
    %v7273 = vadd.f32 %v6961, %v7257
    %s7274 = sld [smem:[#allocation7 + $0x29]]
    %v7275 = vstv %s7274
    %v7276 = vmul.f32 %v7275, %v1426
    %v7277 = vmul.f32 %v7275, %v1404
    %v7278 = vmul.f32 %v7275, %v1430
    %v7279 = vmul.f32 %v7275, %v1427
    %v7280 = vmul.f32 %v7275, %v1407
    %v7281 = vmul.f32 %v7275, %v1431
    %v7282 = vmul.f32 %v7275, %v1428
    %v7283 = vmul.f32 %v7275, %v1410
    %v7284 = vmul.f32 %v7275, %v1432
    %v7285 = vmul.f32 %v7275, %v1429
    %v7286 = vmul.f32 %v7275, %v1413
    %v7287 = vmul.f32 %v7275, %v1433
    %v7300 = vrot.slane %v7276, 5
    %v7301 = vrot.slane %v7277, 5
    %v7302 = vsel %vm1401, %v7300, %v7301
    %v7303 = vrot.slane %v7278, 5
    %v7304 = vsel %vm1401, %v7301, %v7303
    %v7305 = vrot.slane %v7279, 5
    %v7306 = vrot.slane %v7280, 5
    %v7307 = vsel %vm1401, %v7305, %v7306
    %v7308 = vrot.slane %v7281, 5
    %v7309 = vsel %vm1401, %v7306, %v7308
    %v7310 = vrot.slane %v7282, 5
    %v7311 = vrot.slane %v7283, 5
    %v7312 = vsel %vm1401, %v7310, %v7311
    %v7313 = vrot.slane %v7284, 5
    %v7314 = vsel %vm1401, %v7311, %v7313
    %v7315 = vrot.slane %v7285, 5
    %v7316 = vrot.slane %v7286, 5
    %v7317 = vsel %vm1401, %v7315, %v7316
    %v7318 = vrot.slane %v7287, 5
    %v7319 = vsel %vm1401, %v7316, %v7318
    %7320 = vrot.lane.b32.xlu0 %v7302, 123
    %v7321 = vpop.permute.xlu0 %7320
    %7322 = vrot.lane.b32.xlu0 %v7304, 123
    %v7323 = vpop.permute.xlu0 %7322
    %7324 = vrot.lane.b32.xlu0 %v7307, 123
    %v7325 = vpop.permute.xlu0 %7324
    %7326 = vrot.lane.b32.xlu0 %v7309, 123
    %v7327 = vpop.permute.xlu0 %7326
    %7328 = vrot.lane.b32.xlu0 %v7312, 123
    %v7329 = vpop.permute.xlu0 %7328
    %7330 = vrot.lane.b32.xlu0 %v7314, 123
    %v7331 = vpop.permute.xlu0 %7330
    %7332 = vrot.lane.b32.xlu0 %v7317, 123
    %v7333 = vpop.permute.xlu0 %7332
    %7334 = vrot.lane.b32.xlu0 %v7319, 123
    %v7335 = vpop.permute.xlu0 %7334
    %v7344 = vadd.f32 %v7032, %v7321
    %v7345 = vadd.f32 %v7033, %v7323
    %v7346 = vadd.f32 %v7034, %v7325
    %v7347 = vadd.f32 %v7035, %v7327
    %v7348 = vadd.f32 %v7036, %v7329
    %v7349 = vadd.f32 %v7037, %v7331
    %v7350 = vadd.f32 %v7038, %v7333
    %v7351 = vadd.f32 %v7039, %v7335
    %s7352 = sld [smem:[#allocation7 + $0x5a]]
    %v7353 = vstv %s7352
    %v7354 = vmul.f32 %v7353, %v1514
    %v7355 = vmul.f32 %v7353, %v1492
    %v7356 = vmul.f32 %v7353, %v1518
    %v7357 = vmul.f32 %v7353, %v1515
    %v7358 = vmul.f32 %v7353, %v1495
    %v7359 = vmul.f32 %v7353, %v1519
    %v7360 = vmul.f32 %v7353, %v1516
    %v7361 = vmul.f32 %v7353, %v1498
    %v7362 = vmul.f32 %v7353, %v1520
    %v7363 = vmul.f32 %v7353, %v1517
    %v7364 = vmul.f32 %v7353, %v1501
    %v7365 = vmul.f32 %v7353, %v1521
    %v7378 = vrot.slane %v7354, 5
    %v7379 = vrot.slane %v7355, 5
    %v7380 = vsel %vm1401, %v7378, %v7379
    %v7381 = vrot.slane %v7356, 5
    %v7382 = vsel %vm1401, %v7379, %v7381
    %v7383 = vrot.slane %v7357, 5
    %v7384 = vrot.slane %v7358, 5
    %v7385 = vsel %vm1401, %v7383, %v7384
    %v7386 = vrot.slane %v7359, 5
    %v7387 = vsel %vm1401, %v7384, %v7386
    %v7388 = vrot.slane %v7360, 5
    %v7389 = vrot.slane %v7361, 5
    %v7390 = vsel %vm1401, %v7388, %v7389
    %v7391 = vrot.slane %v7362, 5
    %v7392 = vsel %vm1401, %v7389, %v7391
    %v7393 = vrot.slane %v7363, 5
    %v7394 = vrot.slane %v7364, 5
    %v7395 = vsel %vm1401, %v7393, %v7394
    %v7396 = vrot.slane %v7365, 5
    %v7397 = vsel %vm1401, %v7394, %v7396
    %7398 = vrot.lane.b32.xlu0 %v7380, 123
    %v7399 = vpop.permute.xlu0 %7398
    %7400 = vrot.lane.b32.xlu0 %v7382, 123
    %v7401 = vpop.permute.xlu0 %7400
    %7402 = vrot.lane.b32.xlu0 %v7385, 123
    %v7403 = vpop.permute.xlu0 %7402
    %7404 = vrot.lane.b32.xlu0 %v7387, 123
    %v7405 = vpop.permute.xlu0 %7404
    %7406 = vrot.lane.b32.xlu0 %v7390, 123
    %v7407 = vpop.permute.xlu0 %7406
    %7408 = vrot.lane.b32.xlu0 %v7392, 123
    %v7409 = vpop.permute.xlu0 %7408
    %7410 = vrot.lane.b32.xlu0 %v7395, 123
    %v7411 = vpop.permute.xlu0 %7410
    %7412 = vrot.lane.b32.xlu0 %v7397, 123
    %v7413 = vpop.permute.xlu0 %7412
    %v7422 = vadd.f32 %v7110, %v7399
    %v7423 = vadd.f32 %v7111, %v7401
    %v7424 = vadd.f32 %v7112, %v7403
    %v7425 = vadd.f32 %v7113, %v7405
    %v7426 = vadd.f32 %v7114, %v7407
    %v7427 = vadd.f32 %v7115, %v7409
    %v7428 = vadd.f32 %v7116, %v7411
    %v7429 = vadd.f32 %v7117, %v7413
    %s7430 = sld [smem:[#allocation7 + $0x2a]]
    %v7431 = vstv %s7430
    %v7432 = vmul.f32 %v7431, %v1426
    %v7433 = vmul.f32 %v7431, %v1404
    %v7434 = vmul.f32 %v7431, %v1430
    %v7435 = vmul.f32 %v7431, %v1427
    %v7436 = vmul.f32 %v7431, %v1407
    %v7437 = vmul.f32 %v7431, %v1431
    %v7438 = vmul.f32 %v7431, %v1428
    %v7439 = vmul.f32 %v7431, %v1410
    %v7440 = vmul.f32 %v7431, %v1432
    %v7441 = vmul.f32 %v7431, %v1429
    %v7442 = vmul.f32 %v7431, %v1413
    %v7443 = vmul.f32 %v7431, %v1433
    %vm7456 = vcmask 1041408
    %v7457 = vrot.slane %v7432, 6
    %v7458 = vrot.slane %v7433, 6
    %v7459 = vsel %vm7456, %v7457, %v7458
    %v7460 = vrot.slane %v7434, 6
    %v7461 = vsel %vm7456, %v7458, %v7460
    %v7462 = vrot.slane %v7435, 6
    %v7463 = vrot.slane %v7436, 6
    %v7464 = vsel %vm7456, %v7462, %v7463
    %v7465 = vrot.slane %v7437, 6
    %v7466 = vsel %vm7456, %v7463, %v7465
    %v7467 = vrot.slane %v7438, 6
    %v7468 = vrot.slane %v7439, 6
    %v7469 = vsel %vm7456, %v7467, %v7468
    %v7470 = vrot.slane %v7440, 6
    %v7471 = vsel %vm7456, %v7468, %v7470
    %v7472 = vrot.slane %v7441, 6
    %v7473 = vrot.slane %v7442, 6
    %v7474 = vsel %vm7456, %v7472, %v7473
    %v7475 = vrot.slane %v7443, 6
    %v7476 = vsel %vm7456, %v7473, %v7475
    %v7485 = vadd.f32 %v7188, %v7459
    %v7486 = vadd.f32 %v7189, %v7461
    %v7487 = vadd.f32 %v7190, %v7464
    %v7488 = vadd.f32 %v7191, %v7466
    %v7489 = vadd.f32 %v7192, %v7469
    %v7490 = vadd.f32 %v7193, %v7471
    %v7491 = vadd.f32 %v7194, %v7474
    %v7492 = vadd.f32 %v7195, %v7476
    %s7493 = sld [smem:[#allocation7 + $0x5b]]
    %v7494 = vstv %s7493
    %v7495 = vmul.f32 %v7494, %v1514
    %v7496 = vmul.f32 %v7494, %v1492
    %v7497 = vmul.f32 %v7494, %v1518
    %v7498 = vmul.f32 %v7494, %v1515
    %v7499 = vmul.f32 %v7494, %v1495
    %v7500 = vmul.f32 %v7494, %v1519
    %v7501 = vmul.f32 %v7494, %v1516
    %v7502 = vmul.f32 %v7494, %v1498
    %v7503 = vmul.f32 %v7494, %v1520
    %v7504 = vmul.f32 %v7494, %v1517
    %v7505 = vmul.f32 %v7494, %v1501
    %v7506 = vmul.f32 %v7494, %v1521
    %v7519 = vrot.slane %v7495, 6
    %v7520 = vrot.slane %v7496, 6
    %v7521 = vsel %vm7456, %v7519, %v7520
    %v7522 = vrot.slane %v7497, 6
    %v7523 = vsel %vm7456, %v7520, %v7522
    %v7524 = vrot.slane %v7498, 6
    %v7525 = vrot.slane %v7499, 6
    %v7526 = vsel %vm7456, %v7524, %v7525
    %v7527 = vrot.slane %v7500, 6
    %v7528 = vsel %vm7456, %v7525, %v7527
    %v7529 = vrot.slane %v7501, 6
    %v7530 = vrot.slane %v7502, 6
    %v7531 = vsel %vm7456, %v7529, %v7530
    %v7532 = vrot.slane %v7503, 6
    %v7533 = vsel %vm7456, %v7530, %v7532
    %v7534 = vrot.slane %v7504, 6
    %v7535 = vrot.slane %v7505, 6
    %v7536 = vsel %vm7456, %v7534, %v7535
    %v7537 = vrot.slane %v7506, 6
    %v7538 = vsel %vm7456, %v7535, %v7537
    %v7547 = vadd.f32 %v7266, %v7521
    %v7548 = vadd.f32 %v7267, %v7523
    %v7549 = vadd.f32 %v7268, %v7526
    %v7550 = vadd.f32 %v7269, %v7528
    %v7551 = vadd.f32 %v7270, %v7531
    %v7552 = vadd.f32 %v7271, %v7533
    %v7553 = vadd.f32 %v7272, %v7536
    %v7554 = vadd.f32 %v7273, %v7538
    %s7555 = sld [smem:[#allocation7 + $0x2b]]
    %v7556 = vstv %s7555
    %v7557 = vmul.f32 %v7556, %v1426
    %v7558 = vmul.f32 %v7556, %v1404
    %v7559 = vmul.f32 %v7556, %v1430
    %v7560 = vmul.f32 %v7556, %v1427
    %v7561 = vmul.f32 %v7556, %v1407
    %v7562 = vmul.f32 %v7556, %v1431
    %v7563 = vmul.f32 %v7556, %v1428
    %v7564 = vmul.f32 %v7556, %v1410
    %v7565 = vmul.f32 %v7556, %v1432
    %v7566 = vmul.f32 %v7556, %v1429
    %v7567 = vmul.f32 %v7556, %v1413
    %v7568 = vmul.f32 %v7556, %v1433
    %v7581 = vrot.slane %v7557, 6
    %v7582 = vrot.slane %v7558, 6
    %v7583 = vsel %vm7456, %v7581, %v7582
    %v7584 = vrot.slane %v7559, 6
    %v7585 = vsel %vm7456, %v7582, %v7584
    %v7586 = vrot.slane %v7560, 6
    %v7587 = vrot.slane %v7561, 6
    %v7588 = vsel %vm7456, %v7586, %v7587
    %v7589 = vrot.slane %v7562, 6
    %v7590 = vsel %vm7456, %v7587, %v7589
    %v7591 = vrot.slane %v7563, 6
    %v7592 = vrot.slane %v7564, 6
    %v7593 = vsel %vm7456, %v7591, %v7592
    %v7594 = vrot.slane %v7565, 6
    %v7595 = vsel %vm7456, %v7592, %v7594
    %v7596 = vrot.slane %v7566, 6
    %v7597 = vrot.slane %v7567, 6
    %v7598 = vsel %vm7456, %v7596, %v7597
    %v7599 = vrot.slane %v7568, 6
    %v7600 = vsel %vm7456, %v7597, %v7599
    %v7609 = vadd.f32 %v7344, %v7583
    %v7610 = vadd.f32 %v7345, %v7585
    %v7611 = vadd.f32 %v7346, %v7588
    %v7612 = vadd.f32 %v7347, %v7590
    %v7613 = vadd.f32 %v7348, %v7593
    %v7614 = vadd.f32 %v7349, %v7595
    %v7615 = vadd.f32 %v7350, %v7598
    %v7616 = vadd.f32 %v7351, %v7600
    %s7617 = sld [smem:[#allocation7 + $0x5c]]
    %v7618 = vstv %s7617
    %v7619 = vmul.f32 %v7618, %v1514
    %v7620 = vmul.f32 %v7618, %v1492
    %v7621 = vmul.f32 %v7618, %v1518
    %v7622 = vmul.f32 %v7618, %v1515
    %v7623 = vmul.f32 %v7618, %v1495
    %v7624 = vmul.f32 %v7618, %v1519
    %v7625 = vmul.f32 %v7618, %v1516
    %v7626 = vmul.f32 %v7618, %v1498
    %v7627 = vmul.f32 %v7618, %v1520
    %v7628 = vmul.f32 %v7618, %v1517
    %v7629 = vmul.f32 %v7618, %v1501
    %v7630 = vmul.f32 %v7618, %v1521
    %v7643 = vrot.slane %v7619, 6
    %v7644 = vrot.slane %v7620, 6
    %v7645 = vsel %vm7456, %v7643, %v7644
    %v7646 = vrot.slane %v7621, 6
    %v7647 = vsel %vm7456, %v7644, %v7646
    %v7648 = vrot.slane %v7622, 6
    %v7649 = vrot.slane %v7623, 6
    %v7650 = vsel %vm7456, %v7648, %v7649
    %v7651 = vrot.slane %v7624, 6
    %v7652 = vsel %vm7456, %v7649, %v7651
    %v7653 = vrot.slane %v7625, 6
    %v7654 = vrot.slane %v7626, 6
    %v7655 = vsel %vm7456, %v7653, %v7654
    %v7656 = vrot.slane %v7627, 6
    %v7657 = vsel %vm7456, %v7654, %v7656
    %v7658 = vrot.slane %v7628, 6
    %v7659 = vrot.slane %v7629, 6
    %v7660 = vsel %vm7456, %v7658, %v7659
    %v7661 = vrot.slane %v7630, 6
    %v7662 = vsel %vm7456, %v7659, %v7661
    %v7671 = vadd.f32 %v7422, %v7645
    %v7672 = vadd.f32 %v7423, %v7647
    %v7673 = vadd.f32 %v7424, %v7650
    %v7674 = vadd.f32 %v7425, %v7652
    %v7675 = vadd.f32 %v7426, %v7655
    %v7676 = vadd.f32 %v7427, %v7657
    %v7677 = vadd.f32 %v7428, %v7660
    %v7678 = vadd.f32 %v7429, %v7662
    %s7679 = sld [smem:[#allocation7 + $0x2c]]
    %v7680 = vstv %s7679
    %v7681 = vmul.f32 %v7680, %v1426
    %v7682 = vmul.f32 %v7680, %v1404
    %v7683 = vmul.f32 %v7680, %v1430
    %v7684 = vmul.f32 %v7680, %v1427
    %v7685 = vmul.f32 %v7680, %v1407
    %v7686 = vmul.f32 %v7680, %v1431
    %v7687 = vmul.f32 %v7680, %v1428
    %v7688 = vmul.f32 %v7680, %v1410
    %v7689 = vmul.f32 %v7680, %v1432
    %v7690 = vmul.f32 %v7680, %v1429
    %v7691 = vmul.f32 %v7680, %v1413
    %v7692 = vmul.f32 %v7680, %v1433
    %v7705 = vrot.slane %v7681, 6
    %v7706 = vrot.slane %v7682, 6
    %v7707 = vsel %vm7456, %v7705, %v7706
    %v7708 = vrot.slane %v7683, 6
    %v7709 = vsel %vm7456, %v7706, %v7708
    %v7710 = vrot.slane %v7684, 6
    %v7711 = vrot.slane %v7685, 6
    %v7712 = vsel %vm7456, %v7710, %v7711
    %v7713 = vrot.slane %v7686, 6
    %v7714 = vsel %vm7456, %v7711, %v7713
    %v7715 = vrot.slane %v7687, 6
    %v7716 = vrot.slane %v7688, 6
    %v7717 = vsel %vm7456, %v7715, %v7716
    %v7718 = vrot.slane %v7689, 6
    %v7719 = vsel %vm7456, %v7716, %v7718
    %v7720 = vrot.slane %v7690, 6
    %v7721 = vrot.slane %v7691, 6
    %v7722 = vsel %vm7456, %v7720, %v7721
    %v7723 = vrot.slane %v7692, 6
    %v7724 = vsel %vm7456, %v7721, %v7723
    %7725 = vrot.lane.b32.xlu0 %v7707, 126
    %v7726 = vpop.permute.xlu0 %7725
    %7727 = vrot.lane.b32.xlu0 %v7709, 126
    %v7728 = vpop.permute.xlu0 %7727
    %7729 = vrot.lane.b32.xlu0 %v7712, 126
    %v7730 = vpop.permute.xlu0 %7729
    %7731 = vrot.lane.b32.xlu0 %v7714, 126
    %v7732 = vpop.permute.xlu0 %7731
    %7733 = vrot.lane.b32.xlu0 %v7717, 126
    %v7734 = vpop.permute.xlu0 %7733
    %7735 = vrot.lane.b32.xlu0 %v7719, 126
    %v7736 = vpop.permute.xlu0 %7735
    %7737 = vrot.lane.b32.xlu0 %v7722, 126
    %v7738 = vpop.permute.xlu0 %7737
    %7739 = vrot.lane.b32.xlu0 %v7724, 126
    %v7740 = vpop.permute.xlu0 %7739
    %v7749 = vadd.f32 %v7485, %v7726
    %v7750 = vadd.f32 %v7486, %v7728
    %v7751 = vadd.f32 %v7487, %v7730
    %v7752 = vadd.f32 %v7488, %v7732
    %v7753 = vadd.f32 %v7489, %v7734
    %v7754 = vadd.f32 %v7490, %v7736
    %v7755 = vadd.f32 %v7491, %v7738
    %v7756 = vadd.f32 %v7492, %v7740
    %s7757 = sld [smem:[#allocation7 + $0x5d]]
    %v7758 = vstv %s7757
    %v7759 = vmul.f32 %v7758, %v1514
    %v7760 = vmul.f32 %v7758, %v1492
    %v7761 = vmul.f32 %v7758, %v1518
    %v7762 = vmul.f32 %v7758, %v1515
    %v7763 = vmul.f32 %v7758, %v1495
    %v7764 = vmul.f32 %v7758, %v1519
    %v7765 = vmul.f32 %v7758, %v1516
    %v7766 = vmul.f32 %v7758, %v1498
    %v7767 = vmul.f32 %v7758, %v1520
    %v7768 = vmul.f32 %v7758, %v1517
    %v7769 = vmul.f32 %v7758, %v1501
    %v7770 = vmul.f32 %v7758, %v1521
    %v7783 = vrot.slane %v7759, 6
    %v7784 = vrot.slane %v7760, 6
    %v7785 = vsel %vm7456, %v7783, %v7784
    %v7786 = vrot.slane %v7761, 6
    %v7787 = vsel %vm7456, %v7784, %v7786
    %v7788 = vrot.slane %v7762, 6
    %v7789 = vrot.slane %v7763, 6
    %v7790 = vsel %vm7456, %v7788, %v7789
    %v7791 = vrot.slane %v7764, 6
    %v7792 = vsel %vm7456, %v7789, %v7791
    %v7793 = vrot.slane %v7765, 6
    %v7794 = vrot.slane %v7766, 6
    %v7795 = vsel %vm7456, %v7793, %v7794
    %v7796 = vrot.slane %v7767, 6
    %v7797 = vsel %vm7456, %v7794, %v7796
    %v7798 = vrot.slane %v7768, 6
    %v7799 = vrot.slane %v7769, 6
    %v7800 = vsel %vm7456, %v7798, %v7799
    %v7801 = vrot.slane %v7770, 6
    %v7802 = vsel %vm7456, %v7799, %v7801
    %7803 = vrot.lane.b32.xlu0 %v7785, 126
    %v7804 = vpop.permute.xlu0 %7803
    %7805 = vrot.lane.b32.xlu0 %v7787, 126
    %v7806 = vpop.permute.xlu0 %7805
    %7807 = vrot.lane.b32.xlu0 %v7790, 126
    %v7808 = vpop.permute.xlu0 %7807
    %7809 = vrot.lane.b32.xlu0 %v7792, 126
    %v7810 = vpop.permute.xlu0 %7809
    %7811 = vrot.lane.b32.xlu0 %v7795, 126
    %v7812 = vpop.permute.xlu0 %7811
    %7813 = vrot.lane.b32.xlu0 %v7797, 126
    %v7814 = vpop.permute.xlu0 %7813
    %7815 = vrot.lane.b32.xlu0 %v7800, 126
    %v7816 = vpop.permute.xlu0 %7815
    %7817 = vrot.lane.b32.xlu0 %v7802, 126
    %v7818 = vpop.permute.xlu0 %7817
    %v7827 = vadd.f32 %v7547, %v7804
    %v7828 = vadd.f32 %v7548, %v7806
    %v7829 = vadd.f32 %v7549, %v7808
    %v7830 = vadd.f32 %v7550, %v7810
    %v7831 = vadd.f32 %v7551, %v7812
    %v7832 = vadd.f32 %v7552, %v7814
    %v7833 = vadd.f32 %v7553, %v7816
    %v7834 = vadd.f32 %v7554, %v7818
    %s7835 = sld [smem:[#allocation7 + $0x2d]]
    %v7836 = vstv %s7835
    %v7837 = vmul.f32 %v7836, %v1426
    %v7838 = vmul.f32 %v7836, %v1404
    %v7839 = vmul.f32 %v7836, %v1430
    %v7840 = vmul.f32 %v7836, %v1427
    %v7841 = vmul.f32 %v7836, %v1407
    %v7842 = vmul.f32 %v7836, %v1431
    %v7843 = vmul.f32 %v7836, %v1428
    %v7844 = vmul.f32 %v7836, %v1410
    %v7845 = vmul.f32 %v7836, %v1432
    %v7846 = vmul.f32 %v7836, %v1429
    %v7847 = vmul.f32 %v7836, %v1413
    %v7848 = vmul.f32 %v7836, %v1433
    %v7861 = vrot.slane %v7837, 6
    %v7862 = vrot.slane %v7838, 6
    %v7863 = vsel %vm7456, %v7861, %v7862
    %v7864 = vrot.slane %v7839, 6
    %v7865 = vsel %vm7456, %v7862, %v7864
    %v7866 = vrot.slane %v7840, 6
    %v7867 = vrot.slane %v7841, 6
    %v7868 = vsel %vm7456, %v7866, %v7867
    %v7869 = vrot.slane %v7842, 6
    %v7870 = vsel %vm7456, %v7867, %v7869
    %v7871 = vrot.slane %v7843, 6
    %v7872 = vrot.slane %v7844, 6
    %v7873 = vsel %vm7456, %v7871, %v7872
    %v7874 = vrot.slane %v7845, 6
    %v7875 = vsel %vm7456, %v7872, %v7874
    %v7876 = vrot.slane %v7846, 6
    %v7877 = vrot.slane %v7847, 6
    %v7878 = vsel %vm7456, %v7876, %v7877
    %v7879 = vrot.slane %v7848, 6
    %v7880 = vsel %vm7456, %v7877, %v7879
    %7881 = vrot.lane.b32.xlu0 %v7863, 126
    %v7882 = vpop.permute.xlu0 %7881
    %7883 = vrot.lane.b32.xlu0 %v7865, 126
    %v7884 = vpop.permute.xlu0 %7883
    %7885 = vrot.lane.b32.xlu0 %v7868, 126
    %v7886 = vpop.permute.xlu0 %7885
    %7887 = vrot.lane.b32.xlu0 %v7870, 126
    %v7888 = vpop.permute.xlu0 %7887
    %7889 = vrot.lane.b32.xlu0 %v7873, 126
    %v7890 = vpop.permute.xlu0 %7889
    %7891 = vrot.lane.b32.xlu0 %v7875, 126
    %v7892 = vpop.permute.xlu0 %7891
    %7893 = vrot.lane.b32.xlu0 %v7878, 126
    %v7894 = vpop.permute.xlu0 %7893
    %7895 = vrot.lane.b32.xlu0 %v7880, 126
    %v7896 = vpop.permute.xlu0 %7895
    %v7905 = vadd.f32 %v7609, %v7882
    %v7906 = vadd.f32 %v7610, %v7884
    %v7907 = vadd.f32 %v7611, %v7886
    %v7908 = vadd.f32 %v7612, %v7888
    %v7909 = vadd.f32 %v7613, %v7890
    %v7910 = vadd.f32 %v7614, %v7892
    %v7911 = vadd.f32 %v7615, %v7894
    %v7912 = vadd.f32 %v7616, %v7896
    %s7913 = sld [smem:[#allocation7 + $0x5e]]
    %v7914 = vstv %s7913
    %v7915 = vmul.f32 %v7914, %v1514
    %v7916 = vmul.f32 %v7914, %v1492
    %v7917 = vmul.f32 %v7914, %v1518
    %v7918 = vmul.f32 %v7914, %v1515
    %v7919 = vmul.f32 %v7914, %v1495
    %v7920 = vmul.f32 %v7914, %v1519
    %v7921 = vmul.f32 %v7914, %v1516
    %v7922 = vmul.f32 %v7914, %v1498
    %v7923 = vmul.f32 %v7914, %v1520
    %v7924 = vmul.f32 %v7914, %v1517
    %v7925 = vmul.f32 %v7914, %v1501
    %v7926 = vmul.f32 %v7914, %v1521
    %v7939 = vrot.slane %v7915, 6
    %v7940 = vrot.slane %v7916, 6
    %v7941 = vsel %vm7456, %v7939, %v7940
    %v7942 = vrot.slane %v7917, 6
    %v7943 = vsel %vm7456, %v7940, %v7942
    %v7944 = vrot.slane %v7918, 6
    %v7945 = vrot.slane %v7919, 6
    %v7946 = vsel %vm7456, %v7944, %v7945
    %v7947 = vrot.slane %v7920, 6
    %v7948 = vsel %vm7456, %v7945, %v7947
    %v7949 = vrot.slane %v7921, 6
    %v7950 = vrot.slane %v7922, 6
    %v7951 = vsel %vm7456, %v7949, %v7950
    %v7952 = vrot.slane %v7923, 6
    %v7953 = vsel %vm7456, %v7950, %v7952
    %v7954 = vrot.slane %v7924, 6
    %v7955 = vrot.slane %v7925, 6
    %v7956 = vsel %vm7456, %v7954, %v7955
    %v7957 = vrot.slane %v7926, 6
    %v7958 = vsel %vm7456, %v7955, %v7957
    %7959 = vrot.lane.b32.xlu0 %v7941, 126
    %v7960 = vpop.permute.xlu0 %7959
    %7961 = vrot.lane.b32.xlu0 %v7943, 126
    %v7962 = vpop.permute.xlu0 %7961
    %7963 = vrot.lane.b32.xlu0 %v7946, 126
    %v7964 = vpop.permute.xlu0 %7963
    %7965 = vrot.lane.b32.xlu0 %v7948, 126
    %v7966 = vpop.permute.xlu0 %7965
    %7967 = vrot.lane.b32.xlu0 %v7951, 126
    %v7968 = vpop.permute.xlu0 %7967
    %7969 = vrot.lane.b32.xlu0 %v7953, 126
    %v7970 = vpop.permute.xlu0 %7969
    %7971 = vrot.lane.b32.xlu0 %v7956, 126
    %v7972 = vpop.permute.xlu0 %7971
    %7973 = vrot.lane.b32.xlu0 %v7958, 126
    %v7974 = vpop.permute.xlu0 %7973
    %v7983 = vadd.f32 %v7671, %v7960
    %v7984 = vadd.f32 %v7672, %v7962
    %v7985 = vadd.f32 %v7673, %v7964
    %v7986 = vadd.f32 %v7674, %v7966
    %v7987 = vadd.f32 %v7675, %v7968
    %v7988 = vadd.f32 %v7676, %v7970
    %v7989 = vadd.f32 %v7677, %v7972
    %v7990 = vadd.f32 %v7678, %v7974
    %s7991 = sld [smem:[#allocation7 + $0x2e]]
    %v7992 = vstv %s7991
    %v7993 = vmul.f32 %v7992, %v1426
    %v7994 = vmul.f32 %v7992, %v1404
    %v7995 = vmul.f32 %v7992, %v1430
    %v7996 = vmul.f32 %v7992, %v1427
    %v7997 = vmul.f32 %v7992, %v1407
    %v7998 = vmul.f32 %v7992, %v1431
    %v7999 = vmul.f32 %v7992, %v1428
    %v8000 = vmul.f32 %v7992, %v1410
    %v8001 = vmul.f32 %v7992, %v1432
    %v8002 = vmul.f32 %v7992, %v1429
    %v8003 = vmul.f32 %v7992, %v1413
    %v8004 = vmul.f32 %v7992, %v1433
    %v8017 = vrot.slane %v7993, 6
    %v8018 = vrot.slane %v7994, 6
    %v8019 = vsel %vm7456, %v8017, %v8018
    %v8020 = vrot.slane %v7995, 6
    %v8021 = vsel %vm7456, %v8018, %v8020
    %v8022 = vrot.slane %v7996, 6
    %v8023 = vrot.slane %v7997, 6
    %v8024 = vsel %vm7456, %v8022, %v8023
    %v8025 = vrot.slane %v7998, 6
    %v8026 = vsel %vm7456, %v8023, %v8025
    %v8027 = vrot.slane %v7999, 6
    %v8028 = vrot.slane %v8000, 6
    %v8029 = vsel %vm7456, %v8027, %v8028
    %v8030 = vrot.slane %v8001, 6
    %v8031 = vsel %vm7456, %v8028, %v8030
    %v8032 = vrot.slane %v8002, 6
    %v8033 = vrot.slane %v8003, 6
    %v8034 = vsel %vm7456, %v8032, %v8033
    %v8035 = vrot.slane %v8004, 6
    %v8036 = vsel %vm7456, %v8033, %v8035
    %8037 = vrot.lane.b32.xlu0 %v8019, 124
    %v8038 = vpop.permute.xlu0 %8037
    %8039 = vrot.lane.b32.xlu0 %v8021, 124
    %v8040 = vpop.permute.xlu0 %8039
    %8041 = vrot.lane.b32.xlu0 %v8024, 124
    %v8042 = vpop.permute.xlu0 %8041
    %8043 = vrot.lane.b32.xlu0 %v8026, 124
    %v8044 = vpop.permute.xlu0 %8043
    %8045 = vrot.lane.b32.xlu0 %v8029, 124
    %v8046 = vpop.permute.xlu0 %8045
    %8047 = vrot.lane.b32.xlu0 %v8031, 124
    %v8048 = vpop.permute.xlu0 %8047
    %8049 = vrot.lane.b32.xlu0 %v8034, 124
    %v8050 = vpop.permute.xlu0 %8049
    %8051 = vrot.lane.b32.xlu0 %v8036, 124
    %v8052 = vpop.permute.xlu0 %8051
    %v8061 = vadd.f32 %v7749, %v8038
    %v8062 = vadd.f32 %v7750, %v8040
    %v8063 = vadd.f32 %v7751, %v8042
    %v8064 = vadd.f32 %v7752, %v8044
    %v8065 = vadd.f32 %v7753, %v8046
    %v8066 = vadd.f32 %v7754, %v8048
    %v8067 = vadd.f32 %v7755, %v8050
    %v8068 = vadd.f32 %v7756, %v8052
    %s8069 = sld [smem:[#allocation7 + $0x5f]]
    %v8070 = vstv %s8069
    %v8071 = vmul.f32 %v8070, %v1514
    %v8072 = vmul.f32 %v8070, %v1492
    %v8073 = vmul.f32 %v8070, %v1518
    %v8074 = vmul.f32 %v8070, %v1515
    %v8075 = vmul.f32 %v8070, %v1495
    %v8076 = vmul.f32 %v8070, %v1519
    %v8077 = vmul.f32 %v8070, %v1516
    %v8078 = vmul.f32 %v8070, %v1498
    %v8079 = vmul.f32 %v8070, %v1520
    %v8080 = vmul.f32 %v8070, %v1517
    %v8081 = vmul.f32 %v8070, %v1501
    %v8082 = vmul.f32 %v8070, %v1521
    %v8095 = vrot.slane %v8071, 6
    %v8096 = vrot.slane %v8072, 6
    %v8097 = vsel %vm7456, %v8095, %v8096
    %v8098 = vrot.slane %v8073, 6
    %v8099 = vsel %vm7456, %v8096, %v8098
    %v8100 = vrot.slane %v8074, 6
    %v8101 = vrot.slane %v8075, 6
    %v8102 = vsel %vm7456, %v8100, %v8101
    %v8103 = vrot.slane %v8076, 6
    %v8104 = vsel %vm7456, %v8101, %v8103
    %v8105 = vrot.slane %v8077, 6
    %v8106 = vrot.slane %v8078, 6
    %v8107 = vsel %vm7456, %v8105, %v8106
    %v8108 = vrot.slane %v8079, 6
    %v8109 = vsel %vm7456, %v8106, %v8108
    %v8110 = vrot.slane %v8080, 6
    %v8111 = vrot.slane %v8081, 6
    %v8112 = vsel %vm7456, %v8110, %v8111
    %v8113 = vrot.slane %v8082, 6
    %v8114 = vsel %vm7456, %v8111, %v8113
    %8115 = vrot.lane.b32.xlu0 %v8097, 124
    %v8116 = vpop.permute.xlu0 %8115
    %8117 = vrot.lane.b32.xlu0 %v8099, 124
    %v8118 = vpop.permute.xlu0 %8117
    %8119 = vrot.lane.b32.xlu0 %v8102, 124
    %v8120 = vpop.permute.xlu0 %8119
    %8121 = vrot.lane.b32.xlu0 %v8104, 124
    %v8122 = vpop.permute.xlu0 %8121
    %8123 = vrot.lane.b32.xlu0 %v8107, 124
    %v8124 = vpop.permute.xlu0 %8123
    %8125 = vrot.lane.b32.xlu0 %v8109, 124
    %v8126 = vpop.permute.xlu0 %8125
    %8127 = vrot.lane.b32.xlu0 %v8112, 124
    %v8128 = vpop.permute.xlu0 %8127
    %8129 = vrot.lane.b32.xlu0 %v8114, 124
    %v8130 = vpop.permute.xlu0 %8129
    %v8139 = vadd.f32 %v7827, %v8116
    %v8140 = vadd.f32 %v7828, %v8118
    %v8141 = vadd.f32 %v7829, %v8120
    %v8142 = vadd.f32 %v7830, %v8122
    %v8143 = vadd.f32 %v7831, %v8124
    %v8144 = vadd.f32 %v7832, %v8126
    %v8145 = vadd.f32 %v7833, %v8128
    %v8146 = vadd.f32 %v7834, %v8130
    %s8147 = sld [smem:[#allocation7 + $0x2f]]
    %v8148 = vstv %s8147
    %v8149 = vmul.f32 %v8148, %v1426
    %v8150 = vmul.f32 %v8148, %v1404
    %v8151 = vmul.f32 %v8148, %v1430
    %v8152 = vmul.f32 %v8148, %v1427
    %v8153 = vmul.f32 %v8148, %v1407
    %v8154 = vmul.f32 %v8148, %v1431
    %v8155 = vmul.f32 %v8148, %v1428
    %v8156 = vmul.f32 %v8148, %v1410
    %v8157 = vmul.f32 %v8148, %v1432
    %v8158 = vmul.f32 %v8148, %v1429
    %v8159 = vmul.f32 %v8148, %v1413
    %v8160 = vmul.f32 %v8148, %v1433
    %v8173 = vrot.slane %v8149, 6
    %v8174 = vrot.slane %v8150, 6
    %v8175 = vsel %vm7456, %v8173, %v8174
    %v8176 = vrot.slane %v8151, 6
    %v8177 = vsel %vm7456, %v8174, %v8176
    %v8178 = vrot.slane %v8152, 6
    %v8179 = vrot.slane %v8153, 6
    %v8180 = vsel %vm7456, %v8178, %v8179
    %v8181 = vrot.slane %v8154, 6
    %v8182 = vsel %vm7456, %v8179, %v8181
    %v8183 = vrot.slane %v8155, 6
    %v8184 = vrot.slane %v8156, 6
    %v8185 = vsel %vm7456, %v8183, %v8184
    %v8186 = vrot.slane %v8157, 6
    %v8187 = vsel %vm7456, %v8184, %v8186
    %v8188 = vrot.slane %v8158, 6
    %v8189 = vrot.slane %v8159, 6
    %v8190 = vsel %vm7456, %v8188, %v8189
    %v8191 = vrot.slane %v8160, 6
    %v8192 = vsel %vm7456, %v8189, %v8191
    %8193 = vrot.lane.b32.xlu0 %v8175, 124
    %v8194 = vpop.permute.xlu0 %8193
    %8195 = vrot.lane.b32.xlu0 %v8177, 124
    %v8196 = vpop.permute.xlu0 %8195
    %8197 = vrot.lane.b32.xlu0 %v8180, 124
    %v8198 = vpop.permute.xlu0 %8197
    %8199 = vrot.lane.b32.xlu0 %v8182, 124
    %v8200 = vpop.permute.xlu0 %8199
    %8201 = vrot.lane.b32.xlu0 %v8185, 124
    %v8202 = vpop.permute.xlu0 %8201
    %8203 = vrot.lane.b32.xlu0 %v8187, 124
    %v8204 = vpop.permute.xlu0 %8203
    %8205 = vrot.lane.b32.xlu0 %v8190, 124
    %v8206 = vpop.permute.xlu0 %8205
    %8207 = vrot.lane.b32.xlu0 %v8192, 124
    %v8208 = vpop.permute.xlu0 %8207
    %v8217 = vadd.f32 %v7905, %v8194
    %v8218 = vadd.f32 %v7906, %v8196
    %v8219 = vadd.f32 %v7907, %v8198
    %v8220 = vadd.f32 %v7908, %v8200
    %v8221 = vadd.f32 %v7909, %v8202
    %v8222 = vadd.f32 %v7910, %v8204
    %v8223 = vadd.f32 %v7911, %v8206
    %v8224 = vadd.f32 %v7912, %v8208
    %s8225 = sld [smem:[#allocation7 + $0x60]]
    %v8226 = vstv %s8225
    %v8227 = vmul.f32 %v8226, %v1514
    %v8228 = vmul.f32 %v8226, %v1492
    %v8229 = vmul.f32 %v8226, %v1518
    %v8230 = vmul.f32 %v8226, %v1515
    %v8231 = vmul.f32 %v8226, %v1495
    %v8232 = vmul.f32 %v8226, %v1519
    %v8233 = vmul.f32 %v8226, %v1516
    %v8234 = vmul.f32 %v8226, %v1498
    %v8235 = vmul.f32 %v8226, %v1520
    %v8236 = vmul.f32 %v8226, %v1517
    %v8237 = vmul.f32 %v8226, %v1501
    %v8238 = vmul.f32 %v8226, %v1521
    %v8251 = vrot.slane %v8227, 6
    %v8252 = vrot.slane %v8228, 6
    %v8253 = vsel %vm7456, %v8251, %v8252
    %v8254 = vrot.slane %v8229, 6
    %v8255 = vsel %vm7456, %v8252, %v8254
    %v8256 = vrot.slane %v8230, 6
    %v8257 = vrot.slane %v8231, 6
    %v8258 = vsel %vm7456, %v8256, %v8257
    %v8259 = vrot.slane %v8232, 6
    %v8260 = vsel %vm7456, %v8257, %v8259
    %v8261 = vrot.slane %v8233, 6
    %v8262 = vrot.slane %v8234, 6
    %v8263 = vsel %vm7456, %v8261, %v8262
    %v8264 = vrot.slane %v8235, 6
    %v8265 = vsel %vm7456, %v8262, %v8264
    %v8266 = vrot.slane %v8236, 6
    %v8267 = vrot.slane %v8237, 6
    %v8268 = vsel %vm7456, %v8266, %v8267
    %v8269 = vrot.slane %v8238, 6
    %v8270 = vsel %vm7456, %v8267, %v8269
    %8271 = vrot.lane.b32.xlu0 %v8253, 124
    %v8272 = vpop.permute.xlu0 %8271
    %8273 = vrot.lane.b32.xlu0 %v8255, 124
    %v8274 = vpop.permute.xlu0 %8273
    %8275 = vrot.lane.b32.xlu0 %v8258, 124
    %v8276 = vpop.permute.xlu0 %8275
    %8277 = vrot.lane.b32.xlu0 %v8260, 124
    %v8278 = vpop.permute.xlu0 %8277
    %8279 = vrot.lane.b32.xlu0 %v8263, 124
    %v8280 = vpop.permute.xlu0 %8279
    %8281 = vrot.lane.b32.xlu0 %v8265, 124
    %v8282 = vpop.permute.xlu0 %8281
    %8283 = vrot.lane.b32.xlu0 %v8268, 124
    %v8284 = vpop.permute.xlu0 %8283
    %8285 = vrot.lane.b32.xlu0 %v8270, 124
    %v8286 = vpop.permute.xlu0 %8285
    %v8295 = vadd.f32 %v7983, %v8272
    %v8296 = vadd.f32 %v7984, %v8274
    %v8297 = vadd.f32 %v7985, %v8276
    %v8298 = vadd.f32 %v7986, %v8278
    %v8299 = vadd.f32 %v7987, %v8280
    %v8300 = vadd.f32 %v7988, %v8282
    %v8301 = vadd.f32 %v7989, %v8284
    %v8302 = vadd.f32 %v7990, %v8286
    %s8303 = sld [smem:[#allocation7 + $0x30]]
    %v8304 = vstv %s8303
    %v8305 = vmul.f32 %v8304, %v1426
    %v8306 = vmul.f32 %v8304, %v1404
    %v8307 = vmul.f32 %v8304, %v1430
    %v8308 = vmul.f32 %v8304, %v1427
    %v8309 = vmul.f32 %v8304, %v1407
    %v8310 = vmul.f32 %v8304, %v1431
    %v8311 = vmul.f32 %v8304, %v1428
    %v8312 = vmul.f32 %v8304, %v1410
    %v8313 = vmul.f32 %v8304, %v1432
    %v8314 = vmul.f32 %v8304, %v1429
    %v8315 = vmul.f32 %v8304, %v1413
    %v8316 = vmul.f32 %v8304, %v1433
    %v8329 = vrot.slane %v8305, 6
    %v8330 = vrot.slane %v8306, 6
    %v8331 = vsel %vm7456, %v8329, %v8330
    %v8332 = vrot.slane %v8307, 6
    %v8333 = vsel %vm7456, %v8330, %v8332
    %v8334 = vrot.slane %v8308, 6
    %v8335 = vrot.slane %v8309, 6
    %v8336 = vsel %vm7456, %v8334, %v8335
    %v8337 = vrot.slane %v8310, 6
    %v8338 = vsel %vm7456, %v8335, %v8337
    %v8339 = vrot.slane %v8311, 6
    %v8340 = vrot.slane %v8312, 6
    %v8341 = vsel %vm7456, %v8339, %v8340
    %v8342 = vrot.slane %v8313, 6
    %v8343 = vsel %vm7456, %v8340, %v8342
    %v8344 = vrot.slane %v8314, 6
    %v8345 = vrot.slane %v8315, 6
    %v8346 = vsel %vm7456, %v8344, %v8345
    %v8347 = vrot.slane %v8316, 6
    %v8348 = vsel %vm7456, %v8345, %v8347
    %8349 = vrot.lane.b32.xlu0 %v8331, 122
    %v8350 = vpop.permute.xlu0 %8349
    %8351 = vrot.lane.b32.xlu0 %v8333, 122
    %v8352 = vpop.permute.xlu0 %8351
    %8353 = vrot.lane.b32.xlu0 %v8336, 122
    %v8354 = vpop.permute.xlu0 %8353
    %8355 = vrot.lane.b32.xlu0 %v8338, 122
    %v8356 = vpop.permute.xlu0 %8355
    %8357 = vrot.lane.b32.xlu0 %v8341, 122
    %v8358 = vpop.permute.xlu0 %8357
    %8359 = vrot.lane.b32.xlu0 %v8343, 122
    %v8360 = vpop.permute.xlu0 %8359
    %8361 = vrot.lane.b32.xlu0 %v8346, 122
    %v8362 = vpop.permute.xlu0 %8361
    %8363 = vrot.lane.b32.xlu0 %v8348, 122
    %v8364 = vpop.permute.xlu0 %8363
    %v8373 = vadd.f32 %v8061, %v8350
    %v8374 = vadd.f32 %v8062, %v8352
    %v8375 = vadd.f32 %v8063, %v8354
    %v8376 = vadd.f32 %v8064, %v8356
    %v8377 = vadd.f32 %v8065, %v8358
    %v8378 = vadd.f32 %v8066, %v8360
    %v8379 = vadd.f32 %v8067, %v8362
    %v8380 = vadd.f32 %v8068, %v8364
    %s8381 = sld [smem:[#allocation7 + $0x61]]
    %v8382 = vstv %s8381
    %v8383 = vmul.f32 %v8382, %v1514
    %v8384 = vmul.f32 %v8382, %v1492
    %v8385 = vmul.f32 %v8382, %v1518
    %v8386 = vmul.f32 %v8382, %v1515
    %v8387 = vmul.f32 %v8382, %v1495
    %v8388 = vmul.f32 %v8382, %v1519
    %v8389 = vmul.f32 %v8382, %v1516
    %v8390 = vmul.f32 %v8382, %v1498
    %v8391 = vmul.f32 %v8382, %v1520
    %v8392 = vmul.f32 %v8382, %v1517
    %v8393 = vmul.f32 %v8382, %v1501
    %v8394 = vmul.f32 %v8382, %v1521
    %v8407 = vrot.slane %v8383, 6
    %v8408 = vrot.slane %v8384, 6
    %v8409 = vsel %vm7456, %v8407, %v8408
    %v8410 = vrot.slane %v8385, 6
    %v8411 = vsel %vm7456, %v8408, %v8410
    %v8412 = vrot.slane %v8386, 6
    %v8413 = vrot.slane %v8387, 6
    %v8414 = vsel %vm7456, %v8412, %v8413
    %v8415 = vrot.slane %v8388, 6
    %v8416 = vsel %vm7456, %v8413, %v8415
    %v8417 = vrot.slane %v8389, 6
    %v8418 = vrot.slane %v8390, 6
    %v8419 = vsel %vm7456, %v8417, %v8418
    %v8420 = vrot.slane %v8391, 6
    %v8421 = vsel %vm7456, %v8418, %v8420
    %v8422 = vrot.slane %v8392, 6
    %v8423 = vrot.slane %v8393, 6
    %v8424 = vsel %vm7456, %v8422, %v8423
    %v8425 = vrot.slane %v8394, 6
    %v8426 = vsel %vm7456, %v8423, %v8425
    %8427 = vrot.lane.b32.xlu0 %v8409, 122
    %v8428 = vpop.permute.xlu0 %8427
    %8429 = vrot.lane.b32.xlu0 %v8411, 122
    %v8430 = vpop.permute.xlu0 %8429
    %8431 = vrot.lane.b32.xlu0 %v8414, 122
    %v8432 = vpop.permute.xlu0 %8431
    %8433 = vrot.lane.b32.xlu0 %v8416, 122
    %v8434 = vpop.permute.xlu0 %8433
    %8435 = vrot.lane.b32.xlu0 %v8419, 122
    %v8436 = vpop.permute.xlu0 %8435
    %8437 = vrot.lane.b32.xlu0 %v8421, 122
    %v8438 = vpop.permute.xlu0 %8437
    %8439 = vrot.lane.b32.xlu0 %v8424, 122
    %v8440 = vpop.permute.xlu0 %8439
    %8441 = vrot.lane.b32.xlu0 %v8426, 122
    %v8442 = vpop.permute.xlu0 %8441
    %v8451 = vadd.f32 %v8139, %v8428
    %v8452 = vadd.f32 %v8140, %v8430
    %v8453 = vadd.f32 %v8141, %v8432
    %v8454 = vadd.f32 %v8142, %v8434
    %v8455 = vadd.f32 %v8143, %v8436
    %v8456 = vadd.f32 %v8144, %v8438
    %v8457 = vadd.f32 %v8145, %v8440
    %v8458 = vadd.f32 %v8146, %v8442
    %v8459 = vadd.f32 %v8373, %v8451
    %v8460 = vadd.f32 %v8374, %v8452
    %v8461 = vadd.f32 %v8375, %v8453
    %v8462 = vadd.f32 %v8376, %v8454
    %v8463 = vadd.f32 %v8377, %v8455
    %v8464 = vadd.f32 %v8378, %v8456
    %v8465 = vadd.f32 %v8379, %v8457
    %v8466 = vadd.f32 %v8380, %v8458
    %v8467 = vadd.f32 %v8217, %v8295
    %v8468 = vadd.f32 %v8218, %v8296
    %v8469 = vadd.f32 %v8219, %v8297
    %v8470 = vadd.f32 %v8220, %v8298
    %v8471 = vadd.f32 %v8221, %v8299
    %v8472 = vadd.f32 %v8222, %v8300
    %v8473 = vadd.f32 %v8223, %v8301
    %v8474 = vadd.f32 %v8224, %v8302
    %8483 = vrot.lane.b32.xlu0 %v8467, 127
    %v8484 = vpop.permute.xlu0 %8483
    %8485 = vrot.lane.b32.xlu0 %v8468, 127
    %v8486 = vpop.permute.xlu0 %8485
    %8487 = vrot.lane.b32.xlu0 %v8469, 127
    %v8488 = vpop.permute.xlu0 %8487
    %8489 = vrot.lane.b32.xlu0 %v8470, 127
    %v8490 = vpop.permute.xlu0 %8489
    %8491 = vrot.lane.b32.xlu0 %v8471, 127
    %v8492 = vpop.permute.xlu0 %8491
    %8493 = vrot.lane.b32.xlu0 %v8472, 127
    %v8494 = vpop.permute.xlu0 %8493
    %8495 = vrot.lane.b32.xlu0 %v8473, 127
    %v8496 = vpop.permute.xlu0 %8495
    %8497 = vrot.lane.b32.xlu0 %v8474, 127
    %v8498 = vpop.permute.xlu0 %8497
    %v8507 = vadd.f32 %v8459, %v8484
    %v8508 = vadd.f32 %v8460, %v8486
    %v8509 = vadd.f32 %v8461, %v8488
    %v8510 = vadd.f32 %v8462, %v8490
    %v8511 = vadd.f32 %v8463, %v8492
    %v8512 = vadd.f32 %v8464, %v8494
    %v8513 = vadd.f32 %v8465, %v8496
    %v8514 = vadd.f32 %v8466, %v8498
    %s8515 = sld [smem:[#allocation2]]
    %v8516 = vstv %s8515
    %v8517 = vadd.f32 %v8507, %v8516
    %v8518 = vadd.f32 %v8508, %v8516
    %v8519 = vadd.f32 %v8509, %v8516
    %v8520 = vadd.f32 %v8510, %v8516
    %v8521 = vadd.f32 %v8511, %v8516
    %v8522 = vadd.f32 %v8512, %v8516
    %v8523 = vadd.f32 %v8513, %v8516
    %v8524 = vadd.f32 %v8514, %v8516
    %v8525 = vxor.u32 %v8517, 2147483648
    %v8526 = vxor.u32 %v8518, 2147483648
    %v8527 = vxor.u32 %v8519, 2147483648
    %v8528 = vxor.u32 %v8520, 2147483648
    %v8529 = vxor.u32 %v8521, 2147483648
    %v8530 = vxor.u32 %v8522, 2147483648
    %v8531 = vxor.u32 %v8523, 2147483648
    %v8532 = vxor.u32 %v8524, 2147483648
    %v8533 = vmul.f32 %v8525, 1.442695
    %v8534 = vpow.pop %v8533
    %v8535 = vmul.f32 %v8526, 1.442695
    %v8536 = vpow.pop %v8535
    %v8537 = vmul.f32 %v8527, 1.442695
    %v8538 = vpow.pop %v8537
    %v8539 = vmul.f32 %v8528, 1.442695
    %v8540 = vpow.pop %v8539
    %v8541 = vmul.f32 %v8529, 1.442695
    %v8542 = vpow.pop %v8541
    %v8543 = vmul.f32 %v8530, 1.442695
    %v8544 = vpow.pop %v8543
    %v8545 = vmul.f32 %v8531, 1.442695
    %v8546 = vpow.pop %v8545
    %v8547 = vmul.f32 %v8532, 1.442695
    %v8548 = vpow.pop %v8547
    %v8549 = vadd.f32 %v8534, 1.0
    %v8550 = vadd.f32 %v8536, 1.0
    %v8551 = vadd.f32 %v8538, 1.0
    %v8552 = vadd.f32 %v8540, 1.0
    %v8553 = vadd.f32 %v8542, 1.0
    %v8554 = vadd.f32 %v8544, 1.0
    %v8555 = vadd.f32 %v8546, 1.0
    %v8556 = vadd.f32 %v8548, 1.0
    %v8557 = vrcp.pop %v8549
    %v8558 = vmul.f32 1.0, %v8557
    %v8559 = vrcp.pop %v8550
    %v8560 = vmul.f32 1.0, %v8559
    %v8561 = vrcp.pop %v8551
    %v8562 = vmul.f32 1.0, %v8561
    %v8563 = vrcp.pop %v8552
    %v8564 = vmul.f32 1.0, %v8563
    %v8565 = vrcp.pop %v8553
    %v8566 = vmul.f32 1.0, %v8565
    %v8567 = vrcp.pop %v8554
    %v8568 = vmul.f32 1.0, %v8567
    %v8569 = vrcp.pop %v8555
    %v8570 = vmul.f32 1.0, %v8569
    %v8571 = vrcp.pop %v8556
    %v8572 = vmul.f32 1.0, %v8571
    %v8573 = vxor.u32 %v8558, 2147483648
    %v8574 = vxor.u32 %v8560, 2147483648
    %v8575 = vxor.u32 %v8562, 2147483648
    %v8576 = vxor.u32 %v8564, 2147483648
    %v8577 = vxor.u32 %v8566, 2147483648
    %v8578 = vxor.u32 %v8568, 2147483648
    %v8579 = vxor.u32 %v8570, 2147483648
    %v8580 = vxor.u32 %v8572, 2147483648
    %v8581 = vmul.f32 %v8573, 1.442695
    %v8582 = vpow.pop %v8581
    %v8583 = vmul.f32 %v8574, 1.442695
    %v8584 = vpow.pop %v8583
    %v8585 = vmul.f32 %v8575, 1.442695
    %v8586 = vpow.pop %v8585
    %v8587 = vmul.f32 %v8576, 1.442695
    %v8588 = vpow.pop %v8587
    %v8589 = vmul.f32 %v8577, 1.442695
    %v8590 = vpow.pop %v8589
    %v8591 = vmul.f32 %v8578, 1.442695
    %v8592 = vpow.pop %v8591
    %v8593 = vmul.f32 %v8579, 1.442695
    %v8594 = vpow.pop %v8593
    %v8595 = vmul.f32 %v8580, 1.442695
    %v8596 = vpow.pop %v8595
    %v8597 = vadd.f32 %v8582, 1.0
    %v8598 = vadd.f32 %v8584, 1.0
    %v8599 = vadd.f32 %v8586, 1.0
    %v8600 = vadd.f32 %v8588, 1.0
    %v8601 = vadd.f32 %v8590, 1.0
    %v8602 = vadd.f32 %v8592, 1.0
    %v8603 = vadd.f32 %v8594, 1.0
    %v8604 = vadd.f32 %v8596, 1.0
    %v8605 = vrcp.pop %v8597
    %v8606 = vmul.f32 1.0, %v8605
    %v8607 = vrcp.pop %v8598
    %v8608 = vmul.f32 1.0, %v8607
    %v8609 = vrcp.pop %v8599
    %v8610 = vmul.f32 1.0, %v8609
    %v8611 = vrcp.pop %v8600
    %v8612 = vmul.f32 1.0, %v8611
    %v8613 = vrcp.pop %v8601
    %v8614 = vmul.f32 1.0, %v8613
    %v8615 = vrcp.pop %v8602
    %v8616 = vmul.f32 1.0, %v8615
    %v8617 = vrcp.pop %v8603
    %v8618 = vmul.f32 1.0, %v8617
    %v8619 = vrcp.pop %v8604
    %v8620 = vmul.f32 1.0, %v8619
    %v8621 = vcombine.high %v8606, 0.0
    %v8623 = vunpack.c.l.s4 1983009808
    %v8624 = vunpack.c.0.s8 %v8623
    %v8625 = vlaneseq
    %v8626 = vshrl.u32 %v8625, 7
    %v8627 = vsub.s32 %v8624, %v8626
    %v8628 = vrot.slane %v8606, %v8627
    %v8630 = vunpack.c.l.s4 1983009808
    %v8631 = vunpack.c.0.s8 %v8630
    %v8632 = vlaneseq
    %v8633 = vshrl.u32 %v8632, 7
    %v8634 = vsub.s32 %v8631, %v8633
    %v8635 = vrot.slane %v8621, %v8634
    %v8636 = vcombine.high %v8628, 0.0
    %v8638 = vunpack.c.l.s4 1934713408
    %v8639 = vunpack.c.0.s8 %v8638
    %v8640 = vlaneseq
    %v8641 = vshrl.u32 %v8640, 7
    %v8642 = vsub.s32 %v8639, %v8641
    %v8643 = vrot.slane %v8628, %v8642
    %v8645 = vunpack.c.l.s4 1934713408
    %v8646 = vunpack.c.0.s8 %v8645
    %v8647 = vlaneseq
    %v8648 = vshrl.u32 %v8647, 7
    %v8649 = vsub.s32 %v8646, %v8648
    %v8650 = vrot.slane %v8636, %v8649
    %v8651 = vcombine.high %v8635, 0.0
    %v8653 = vunpack.c.l.s4 1934713408
    %v8654 = vunpack.c.0.s8 %v8653
    %v8655 = vlaneseq
    %v8656 = vshrl.u32 %v8655, 7
    %v8657 = vsub.s32 %v8654, %v8656
    %v8658 = vrot.slane %v8635, %v8657
    %v8660 = vunpack.c.l.s4 1934713408
    %v8661 = vunpack.c.0.s8 %v8660
    %v8662 = vlaneseq
    %v8663 = vshrl.u32 %v8662, 7
    %v8664 = vsub.s32 %v8661, %v8663
    %v8665 = vrot.slane %v8651, %v8664
    %v8666 = vcombine.high %v8643, 0.0
    %v8667 = vcombine.high %v8650, 0.0
    %v8668 = vcombine.high %v8658, 0.0
    %v8669 = vcombine.high %v8665, 0.0
    %v8670 = vcombine.high %v8608, 0.0
    %v8672 = vunpack.c.l.s4 1983009808
    %v8673 = vunpack.c.0.s8 %v8672
    %v8674 = vlaneseq
    %v8675 = vshrl.u32 %v8674, 7
    %v8676 = vsub.s32 %v8673, %v8675
    %v8677 = vrot.slane %v8608, %v8676
    %v8679 = vunpack.c.l.s4 1983009808
    %v8680 = vunpack.c.0.s8 %v8679
    %v8681 = vlaneseq
    %v8682 = vshrl.u32 %v8681, 7
    %v8683 = vsub.s32 %v8680, %v8682
    %v8684 = vrot.slane %v8670, %v8683
    %v8685 = vcombine.high %v8677, 0.0
    %v8687 = vunpack.c.l.s4 1934713408
    %v8688 = vunpack.c.0.s8 %v8687
    %v8689 = vlaneseq
    %v8690 = vshrl.u32 %v8689, 7
    %v8691 = vsub.s32 %v8688, %v8690
    %v8692 = vrot.slane %v8677, %v8691
    %v8694 = vunpack.c.l.s4 1934713408
    %v8695 = vunpack.c.0.s8 %v8694
    %v8696 = vlaneseq
    %v8697 = vshrl.u32 %v8696, 7
    %v8698 = vsub.s32 %v8695, %v8697
    %v8699 = vrot.slane %v8685, %v8698
    %v8700 = vcombine.high %v8684, 0.0
    %v8702 = vunpack.c.l.s4 1934713408
    %v8703 = vunpack.c.0.s8 %v8702
    %v8704 = vlaneseq
    %v8705 = vshrl.u32 %v8704, 7
    %v8706 = vsub.s32 %v8703, %v8705
    %v8707 = vrot.slane %v8684, %v8706
    %v8709 = vunpack.c.l.s4 1934713408
    %v8710 = vunpack.c.0.s8 %v8709
    %v8711 = vlaneseq
    %v8712 = vshrl.u32 %v8711, 7
    %v8713 = vsub.s32 %v8710, %v8712
    %v8714 = vrot.slane %v8700, %v8713
    %v8715 = vcombine.high %v8692, 0.0
    %v8716 = vcombine.high %v8699, 0.0
    %v8717 = vcombine.high %v8707, 0.0
    %v8718 = vcombine.high %v8714, 0.0
    %v8719 = vcombine.high %v8610, 0.0
    %v8721 = vunpack.c.l.s4 1983009808
    %v8722 = vunpack.c.0.s8 %v8721
    %v8723 = vlaneseq
    %v8724 = vshrl.u32 %v8723, 7
    %v8725 = vsub.s32 %v8722, %v8724
    %v8726 = vrot.slane %v8610, %v8725
    %v8728 = vunpack.c.l.s4 1983009808
    %v8729 = vunpack.c.0.s8 %v8728
    %v8730 = vlaneseq
    %v8731 = vshrl.u32 %v8730, 7
    %v8732 = vsub.s32 %v8729, %v8731
    %v8733 = vrot.slane %v8719, %v8732
    %v8734 = vcombine.high %v8726, 0.0
    %v8736 = vunpack.c.l.s4 1934713408
    %v8737 = vunpack.c.0.s8 %v8736
    %v8738 = vlaneseq
    %v8739 = vshrl.u32 %v8738, 7
    %v8740 = vsub.s32 %v8737, %v8739
    %v8741 = vrot.slane %v8726, %v8740
    %v8743 = vunpack.c.l.s4 1934713408
    %v8744 = vunpack.c.0.s8 %v8743
    %v8745 = vlaneseq
    %v8746 = vshrl.u32 %v8745, 7
    %v8747 = vsub.s32 %v8744, %v8746
    %v8748 = vrot.slane %v8734, %v8747
    %v8749 = vcombine.high %v8733, 0.0
    %v8751 = vunpack.c.l.s4 1934713408
    %v8752 = vunpack.c.0.s8 %v8751
    %v8753 = vlaneseq
    %v8754 = vshrl.u32 %v8753, 7
    %v8755 = vsub.s32 %v8752, %v8754
    %v8756 = vrot.slane %v8733, %v8755
    %v8758 = vunpack.c.l.s4 1934713408
    %v8759 = vunpack.c.0.s8 %v8758
    %v8760 = vlaneseq
    %v8761 = vshrl.u32 %v8760, 7
    %v8762 = vsub.s32 %v8759, %v8761
    %v8763 = vrot.slane %v8749, %v8762
    %v8764 = vcombine.high %v8741, 0.0
    %v8765 = vcombine.high %v8748, 0.0
    %v8766 = vcombine.high %v8756, 0.0
    %v8767 = vcombine.high %v8763, 0.0
    %v8768 = vcombine.high %v8612, 0.0
    %v8770 = vunpack.c.l.s4 1983009808
    %v8771 = vunpack.c.0.s8 %v8770
    %v8772 = vlaneseq
    %v8773 = vshrl.u32 %v8772, 7
    %v8774 = vsub.s32 %v8771, %v8773
    %v8775 = vrot.slane %v8612, %v8774
    %v8777 = vunpack.c.l.s4 1983009808
    %v8778 = vunpack.c.0.s8 %v8777
    %v8779 = vlaneseq
    %v8780 = vshrl.u32 %v8779, 7
    %v8781 = vsub.s32 %v8778, %v8780
    %v8782 = vrot.slane %v8768, %v8781
    %v8783 = vcombine.high %v8775, 0.0
    %v8785 = vunpack.c.l.s4 1934713408
    %v8786 = vunpack.c.0.s8 %v8785
    %v8787 = vlaneseq
    %v8788 = vshrl.u32 %v8787, 7
    %v8789 = vsub.s32 %v8786, %v8788
    %v8790 = vrot.slane %v8775, %v8789
    %v8792 = vunpack.c.l.s4 1934713408
    %v8793 = vunpack.c.0.s8 %v8792
    %v8794 = vlaneseq
    %v8795 = vshrl.u32 %v8794, 7
    %v8796 = vsub.s32 %v8793, %v8795
    %v8797 = vrot.slane %v8783, %v8796
    %v8798 = vcombine.high %v8782, 0.0
    %v8800 = vunpack.c.l.s4 1934713408
    %v8801 = vunpack.c.0.s8 %v8800
    %v8802 = vlaneseq
    %v8803 = vshrl.u32 %v8802, 7
    %v8804 = vsub.s32 %v8801, %v8803
    %v8805 = vrot.slane %v8782, %v8804
    %v8807 = vunpack.c.l.s4 1934713408
    %v8808 = vunpack.c.0.s8 %v8807
    %v8809 = vlaneseq
    %v8810 = vshrl.u32 %v8809, 7
    %v8811 = vsub.s32 %v8808, %v8810
    %v8812 = vrot.slane %v8798, %v8811
    %v8813 = vcombine.high %v8790, 0.0
    %v8814 = vcombine.high %v8797, 0.0
    %v8815 = vcombine.high %v8805, 0.0
    %v8816 = vcombine.high %v8812, 0.0
    %v8817 = vcombine.high %v8614, 0.0
    %v8819 = vunpack.c.l.s4 1983009808
    %v8820 = vunpack.c.0.s8 %v8819
    %v8821 = vlaneseq
    %v8822 = vshrl.u32 %v8821, 7
    %v8823 = vsub.s32 %v8820, %v8822
    %v8824 = vrot.slane %v8614, %v8823
    %v8826 = vunpack.c.l.s4 1983009808
    %v8827 = vunpack.c.0.s8 %v8826
    %v8828 = vlaneseq
    %v8829 = vshrl.u32 %v8828, 7
    %v8830 = vsub.s32 %v8827, %v8829
    %v8831 = vrot.slane %v8817, %v8830
    %v8832 = vcombine.high %v8824, 0.0
    %v8834 = vunpack.c.l.s4 1934713408
    %v8835 = vunpack.c.0.s8 %v8834
    %v8836 = vlaneseq
    %v8837 = vshrl.u32 %v8836, 7
    %v8838 = vsub.s32 %v8835, %v8837
    %v8839 = vrot.slane %v8824, %v8838
    %v8841 = vunpack.c.l.s4 1934713408
    %v8842 = vunpack.c.0.s8 %v8841
    %v8843 = vlaneseq
    %v8844 = vshrl.u32 %v8843, 7
    %v8845 = vsub.s32 %v8842, %v8844
    %v8846 = vrot.slane %v8832, %v8845
    %v8847 = vcombine.high %v8831, 0.0
    %v8849 = vunpack.c.l.s4 1934713408
    %v8850 = vunpack.c.0.s8 %v8849
    %v8851 = vlaneseq
    %v8852 = vshrl.u32 %v8851, 7
    %v8853 = vsub.s32 %v8850, %v8852
    %v8854 = vrot.slane %v8831, %v8853
    %v8856 = vunpack.c.l.s4 1934713408
    %v8857 = vunpack.c.0.s8 %v8856
    %v8858 = vlaneseq
    %v8859 = vshrl.u32 %v8858, 7
    %v8860 = vsub.s32 %v8857, %v8859
    %v8861 = vrot.slane %v8847, %v8860
    %v8862 = vcombine.high %v8839, 0.0
    %v8863 = vcombine.high %v8846, 0.0
    %v8864 = vcombine.high %v8854, 0.0
    %v8865 = vcombine.high %v8861, 0.0
    %v8866 = vcombine.high %v8616, 0.0
    %v8868 = vunpack.c.l.s4 1983009808
    %v8869 = vunpack.c.0.s8 %v8868
    %v8870 = vlaneseq
    %v8871 = vshrl.u32 %v8870, 7
    %v8872 = vsub.s32 %v8869, %v8871
    %v8873 = vrot.slane %v8616, %v8872
    %v8875 = vunpack.c.l.s4 1983009808
    %v8876 = vunpack.c.0.s8 %v8875
    %v8877 = vlaneseq
    %v8878 = vshrl.u32 %v8877, 7
    %v8879 = vsub.s32 %v8876, %v8878
    %v8880 = vrot.slane %v8866, %v8879
    %v8881 = vcombine.high %v8873, 0.0
    %v8883 = vunpack.c.l.s4 1934713408
    %v8884 = vunpack.c.0.s8 %v8883
    %v8885 = vlaneseq
    %v8886 = vshrl.u32 %v8885, 7
    %v8887 = vsub.s32 %v8884, %v8886
    %v8888 = vrot.slane %v8873, %v8887
    %v8890 = vunpack.c.l.s4 1934713408
    %v8891 = vunpack.c.0.s8 %v8890
    %v8892 = vlaneseq
    %v8893 = vshrl.u32 %v8892, 7
    %v8894 = vsub.s32 %v8891, %v8893
    %v8895 = vrot.slane %v8881, %v8894
    %v8896 = vcombine.high %v8880, 0.0
    %v8898 = vunpack.c.l.s4 1934713408
    %v8899 = vunpack.c.0.s8 %v8898
    %v8900 = vlaneseq
    %v8901 = vshrl.u32 %v8900, 7
    %v8902 = vsub.s32 %v8899, %v8901
    %v8903 = vrot.slane %v8880, %v8902
    %v8905 = vunpack.c.l.s4 1934713408
    %v8906 = vunpack.c.0.s8 %v8905
    %v8907 = vlaneseq
    %v8908 = vshrl.u32 %v8907, 7
    %v8909 = vsub.s32 %v8906, %v8908
    %v8910 = vrot.slane %v8896, %v8909
    %v8911 = vcombine.high %v8888, 0.0
    %v8912 = vcombine.high %v8895, 0.0
    %v8913 = vcombine.high %v8903, 0.0
    %v8914 = vcombine.high %v8910, 0.0
    %v8915 = vcombine.high %v8618, 0.0
    %v8917 = vunpack.c.l.s4 1983009808
    %v8918 = vunpack.c.0.s8 %v8917
    %v8919 = vlaneseq
    %v8920 = vshrl.u32 %v8919, 7
    %v8921 = vsub.s32 %v8918, %v8920
    %v8922 = vrot.slane %v8618, %v8921
    %v8924 = vunpack.c.l.s4 1983009808
    %v8925 = vunpack.c.0.s8 %v8924
    %v8926 = vlaneseq
    %v8927 = vshrl.u32 %v8926, 7
    %v8928 = vsub.s32 %v8925, %v8927
    %v8929 = vrot.slane %v8915, %v8928
    %v8930 = vcombine.high %v8922, 0.0
    %v8932 = vunpack.c.l.s4 1934713408
    %v8933 = vunpack.c.0.s8 %v8932
    %v8934 = vlaneseq
    %v8935 = vshrl.u32 %v8934, 7
    %v8936 = vsub.s32 %v8933, %v8935
    %v8937 = vrot.slane %v8922, %v8936
    %v8939 = vunpack.c.l.s4 1934713408
    %v8940 = vunpack.c.0.s8 %v8939
    %v8941 = vlaneseq
    %v8942 = vshrl.u32 %v8941, 7
    %v8943 = vsub.s32 %v8940, %v8942
    %v8944 = vrot.slane %v8930, %v8943
    %v8945 = vcombine.high %v8929, 0.0
    %v8947 = vunpack.c.l.s4 1934713408
    %v8948 = vunpack.c.0.s8 %v8947
    %v8949 = vlaneseq
    %v8950 = vshrl.u32 %v8949, 7
    %v8951 = vsub.s32 %v8948, %v8950
    %v8952 = vrot.slane %v8929, %v8951
    %v8954 = vunpack.c.l.s4 1934713408
    %v8955 = vunpack.c.0.s8 %v8954
    %v8956 = vlaneseq
    %v8957 = vshrl.u32 %v8956, 7
    %v8958 = vsub.s32 %v8955, %v8957
    %v8959 = vrot.slane %v8945, %v8958
    %v8960 = vcombine.high %v8937, 0.0
    %v8961 = vcombine.high %v8944, 0.0
    %v8962 = vcombine.high %v8952, 0.0
    %v8963 = vcombine.high %v8959, 0.0
    %v8964 = vcombine.high %v8620, 0.0
    %v8966 = vunpack.c.l.s4 1983009808
    %v8967 = vunpack.c.0.s8 %v8966
    %v8968 = vlaneseq
    %v8969 = vshrl.u32 %v8968, 7
    %v8970 = vsub.s32 %v8967, %v8969
    %v8971 = vrot.slane %v8620, %v8970
    %v8973 = vunpack.c.l.s4 1983009808
    %v8974 = vunpack.c.0.s8 %v8973
    %v8975 = vlaneseq
    %v8976 = vshrl.u32 %v8975, 7
    %v8977 = vsub.s32 %v8974, %v8976
    %v8978 = vrot.slane %v8964, %v8977
    %v8979 = vcombine.high %v8971, 0.0
    %v8981 = vunpack.c.l.s4 1934713408
    %v8982 = vunpack.c.0.s8 %v8981
    %v8983 = vlaneseq
    %v8984 = vshrl.u32 %v8983, 7
    %v8985 = vsub.s32 %v8982, %v8984
    %v8986 = vrot.slane %v8971, %v8985
    %v8988 = vunpack.c.l.s4 1934713408
    %v8989 = vunpack.c.0.s8 %v8988
    %v8990 = vlaneseq
    %v8991 = vshrl.u32 %v8990, 7
    %v8992 = vsub.s32 %v8989, %v8991
    %v8993 = vrot.slane %v8979, %v8992
    %v8994 = vcombine.high %v8978, 0.0
    %v8996 = vunpack.c.l.s4 1934713408
    %v8997 = vunpack.c.0.s8 %v8996
    %v8998 = vlaneseq
    %v8999 = vshrl.u32 %v8998, 7
    %v9000 = vsub.s32 %v8997, %v8999
    %v9001 = vrot.slane %v8978, %v9000
    %v9003 = vunpack.c.l.s4 1934713408
    %v9004 = vunpack.c.0.s8 %v9003
    %v9005 = vlaneseq
    %v9006 = vshrl.u32 %v9005, 7
    %v9007 = vsub.s32 %v9004, %v9006
    %v9008 = vrot.slane %v8994, %v9007
    %v9009 = vcombine.high %v8986, 0.0
    %v9010 = vcombine.high %v8993, 0.0
    %v9011 = vcombine.high %v9001, 0.0
    %v9012 = vcombine.high %v9008, 0.0
    %9017 = vrot.lane.b32.xlu0 %v8666, 16
    %v9018 = vpop.permute.xlu0 %9017
    %9019 = vrot.lane.b32.xlu0 %v8764, 16
    %v9020 = vpop.permute.xlu0 %9019
    %9021 = vrot.lane.b32.xlu0 %v8862, 16
    %v9022 = vpop.permute.xlu0 %9021
    %9023 = vrot.lane.b32.xlu0 %v8960, 16
    %v9024 = vpop.permute.xlu0 %9023
    %9033 = vrot.lane.b32.xlu0 %v8650, 32
    %v9034 = vpop.permute.xlu0 %9033
    %9035 = vrot.lane.b32.xlu0 %v8748, 32
    %v9036 = vpop.permute.xlu0 %9035
    %9037 = vrot.lane.b32.xlu0 %v8846, 32
    %v9038 = vpop.permute.xlu0 %9037
    %9039 = vrot.lane.b32.xlu0 %v8944, 32
    %v9040 = vpop.permute.xlu0 %9039
    %9049 = vrot.lane.b32.xlu0 %v8667, 48
    %v9050 = vpop.permute.xlu0 %9049
    %9051 = vrot.lane.b32.xlu0 %v8765, 48
    %v9052 = vpop.permute.xlu0 %9051
    %9053 = vrot.lane.b32.xlu0 %v8863, 48
    %v9054 = vpop.permute.xlu0 %9053
    %9055 = vrot.lane.b32.xlu0 %v8961, 48
    %v9056 = vpop.permute.xlu0 %9055
    %9065 = vrot.lane.b32.xlu0 %v8658, 64
    %v9066 = vpop.permute.xlu0 %9065
    %9067 = vrot.lane.b32.xlu0 %v8756, 64
    %v9068 = vpop.permute.xlu0 %9067
    %9069 = vrot.lane.b32.xlu0 %v8854, 64
    %v9070 = vpop.permute.xlu0 %9069
    %9071 = vrot.lane.b32.xlu0 %v8952, 64
    %v9072 = vpop.permute.xlu0 %9071
    %9081 = vrot.lane.b32.xlu0 %v8668, 80
    %v9082 = vpop.permute.xlu0 %9081
    %9083 = vrot.lane.b32.xlu0 %v8766, 80
    %v9084 = vpop.permute.xlu0 %9083
    %9085 = vrot.lane.b32.xlu0 %v8864, 80
    %v9086 = vpop.permute.xlu0 %9085
    %9087 = vrot.lane.b32.xlu0 %v8962, 80
    %v9088 = vpop.permute.xlu0 %9087
    %9097 = vrot.lane.b32.xlu0 %v8665, 96
    %v9098 = vpop.permute.xlu0 %9097
    %9099 = vrot.lane.b32.xlu0 %v8763, 96
    %v9100 = vpop.permute.xlu0 %9099
    %9101 = vrot.lane.b32.xlu0 %v8861, 96
    %v9102 = vpop.permute.xlu0 %9101
    %9103 = vrot.lane.b32.xlu0 %v8959, 96
    %v9104 = vpop.permute.xlu0 %9103
    %9113 = vrot.lane.b32.xlu0 %v8669, 112
    %v9114 = vpop.permute.xlu0 %9113
    %9115 = vrot.lane.b32.xlu0 %v8767, 112
    %v9116 = vpop.permute.xlu0 %9115
    %9117 = vrot.lane.b32.xlu0 %v8865, 112
    %v9118 = vpop.permute.xlu0 %9117
    %9119 = vrot.lane.b32.xlu0 %v8963, 112
    %v9120 = vpop.permute.xlu0 %9119
    %9129 = vrot.lane.b32.xlu0 %v8715, 16
    %v9130 = vpop.permute.xlu0 %9129
    %9131 = vrot.lane.b32.xlu0 %v8813, 16
    %v9132 = vpop.permute.xlu0 %9131
    %9133 = vrot.lane.b32.xlu0 %v8911, 16
    %v9134 = vpop.permute.xlu0 %9133
    %9135 = vrot.lane.b32.xlu0 %v9009, 16
    %v9136 = vpop.permute.xlu0 %9135
    %9145 = vrot.lane.b32.xlu0 %v8699, 32
    %v9146 = vpop.permute.xlu0 %9145
    %9147 = vrot.lane.b32.xlu0 %v8797, 32
    %v9148 = vpop.permute.xlu0 %9147
    %9149 = vrot.lane.b32.xlu0 %v8895, 32
    %v9150 = vpop.permute.xlu0 %9149
    %9151 = vrot.lane.b32.xlu0 %v8993, 32
    %v9152 = vpop.permute.xlu0 %9151
    %9161 = vrot.lane.b32.xlu0 %v8716, 48
    %v9162 = vpop.permute.xlu0 %9161
    %9163 = vrot.lane.b32.xlu0 %v8814, 48
    %v9164 = vpop.permute.xlu0 %9163
    %9165 = vrot.lane.b32.xlu0 %v8912, 48
    %v9166 = vpop.permute.xlu0 %9165
    %9167 = vrot.lane.b32.xlu0 %v9010, 48
    %v9168 = vpop.permute.xlu0 %9167
    %9177 = vrot.lane.b32.xlu0 %v8707, 64
    %v9178 = vpop.permute.xlu0 %9177
    %9179 = vrot.lane.b32.xlu0 %v8805, 64
    %v9180 = vpop.permute.xlu0 %9179
    %9181 = vrot.lane.b32.xlu0 %v8903, 64
    %v9182 = vpop.permute.xlu0 %9181
    %9183 = vrot.lane.b32.xlu0 %v9001, 64
    %v9184 = vpop.permute.xlu0 %9183
    %9193 = vrot.lane.b32.xlu0 %v8717, 80
    %v9194 = vpop.permute.xlu0 %9193
    %9195 = vrot.lane.b32.xlu0 %v8815, 80
    %v9196 = vpop.permute.xlu0 %9195
    %9197 = vrot.lane.b32.xlu0 %v8913, 80
    %v9198 = vpop.permute.xlu0 %9197
    %9199 = vrot.lane.b32.xlu0 %v9011, 80
    %v9200 = vpop.permute.xlu0 %9199
    %9209 = vrot.lane.b32.xlu0 %v8714, 96
    %v9210 = vpop.permute.xlu0 %9209
    %9211 = vrot.lane.b32.xlu0 %v8812, 96
    %v9212 = vpop.permute.xlu0 %9211
    %9213 = vrot.lane.b32.xlu0 %v8910, 96
    %v9214 = vpop.permute.xlu0 %9213
    %9215 = vrot.lane.b32.xlu0 %v9008, 96
    %v9216 = vpop.permute.xlu0 %9215
    %9225 = vrot.lane.b32.xlu0 %v8718, 112
    %v9226 = vpop.permute.xlu0 %9225
    %9227 = vrot.lane.b32.xlu0 %v8816, 112
    %v9228 = vpop.permute.xlu0 %9227
    %9229 = vrot.lane.b32.xlu0 %v8914, 112
    %v9230 = vpop.permute.xlu0 %9229
    %9231 = vrot.lane.b32.xlu0 %v9012, 112
    %v9232 = vpop.permute.xlu0 %9231
    %vm9237 = vcmask 130048
    %v9238 = vsel %vm9237, %v8643, %v9018
    %v9239 = vsel %vm9237, %v8741, %v9020
    %v9240 = vsel %vm9237, %v8839, %v9022
    %v9241 = vsel %vm9237, %v8937, %v9024
    %vm9242 = vcmask 261120
    %v9243 = vsel %vm9242, %v9238, %v9034
    %v9244 = vsel %vm9242, %v9239, %v9036
    %v9245 = vsel %vm9242, %v9240, %v9038
    %v9246 = vsel %vm9242, %v9241, %v9040
    %vm9247 = vcmask 392192
    %v9248 = vsel %vm9247, %v9243, %v9050
    %v9249 = vsel %vm9247, %v9244, %v9052
    %v9250 = vsel %vm9247, %v9245, %v9054
    %v9251 = vsel %vm9247, %v9246, %v9056
    %vm9252 = vcmask 523264
    %v9253 = vsel %vm9252, %v9248, %v9066
    %v9254 = vsel %vm9252, %v9249, %v9068
    %v9255 = vsel %vm9252, %v9250, %v9070
    %v9256 = vsel %vm9252, %v9251, %v9072
    %vm9257 = vcmask 654336
    %v9258 = vsel %vm9257, %v9253, %v9082
    %v9259 = vsel %vm9257, %v9254, %v9084
    %v9260 = vsel %vm9257, %v9255, %v9086
    %v9261 = vsel %vm9257, %v9256, %v9088
    %vm9262 = vcmask 785408
    %v9263 = vsel %vm9262, %v9258, %v9098
    %v9264 = vsel %vm9262, %v9259, %v9100
    %v9265 = vsel %vm9262, %v9260, %v9102
    %v9266 = vsel %vm9262, %v9261, %v9104
    %vm9267 = vcmask 916480
    %v9268 = vsel %vm9267, %v9263, %v9114
    %v9269 = vsel %vm9267, %v9264, %v9116
    %v9270 = vsel %vm9267, %v9265, %v9118
    %v9271 = vsel %vm9267, %v9266, %v9120
    %v9272 = vsel %vm9237, %v8692, %v9130
    %v9273 = vsel %vm9237, %v8790, %v9132
    %v9274 = vsel %vm9237, %v8888, %v9134
    %v9275 = vsel %vm9237, %v8986, %v9136
    %v9276 = vsel %vm9242, %v9272, %v9146
    %v9277 = vsel %vm9242, %v9273, %v9148
    %v9278 = vsel %vm9242, %v9274, %v9150
    %v9279 = vsel %vm9242, %v9275, %v9152
    %v9280 = vsel %vm9247, %v9276, %v9162
    %v9281 = vsel %vm9247, %v9277, %v9164
    %v9282 = vsel %vm9247, %v9278, %v9166
    %v9283 = vsel %vm9247, %v9279, %v9168
    %v9284 = vsel %vm9252, %v9280, %v9178
    %v9285 = vsel %vm9252, %v9281, %v9180
    %v9286 = vsel %vm9252, %v9282, %v9182
    %v9287 = vsel %vm9252, %v9283, %v9184
    %v9288 = vsel %vm9257, %v9284, %v9194
    %v9289 = vsel %vm9257, %v9285, %v9196
    %v9290 = vsel %vm9257, %v9286, %v9198
    %v9291 = vsel %vm9257, %v9287, %v9200
    %v9292 = vsel %vm9262, %v9288, %v9210
    %v9293 = vsel %vm9262, %v9289, %v9212
    %v9294 = vsel %vm9262, %v9290, %v9214
    %v9295 = vsel %vm9262, %v9291, %v9216
    %v9296 = vsel %vm9267, %v9292, %v9226
    %v9297 = vsel %vm9267, %v9293, %v9228
    %v9298 = vsel %vm9267, %v9294, %v9230
    %v9299 = vsel %vm9267, %v9295, %v9232
    %v9300 = vlaneseq
    %v9301 = vshrl.u32 %v9300, 7
    %v9302 = vsub.s32 0, %v9301
    %v9303 = vrot.slane %v9268, %v9302
    %v9304 = vlaneseq
    %v9305 = vshrl.u32 %v9304, 7
    %v9306 = vsub.s32 0, %v9305
    %v9307 = vrot.slane %v9296, %v9306
    %v9308 = vlaneseq
    %v9309 = vshrl.u32 %v9308, 7
    %v9310 = vsub.s32 0, %v9309
    %v9311 = vrot.slane %v9269, %v9310
    %v9312 = vlaneseq
    %v9313 = vshrl.u32 %v9312, 7
    %v9314 = vsub.s32 0, %v9313
    %v9315 = vrot.slane %v9297, %v9314
    %v9316 = vlaneseq
    %v9317 = vshrl.u32 %v9316, 7
    %v9318 = vsub.s32 0, %v9317
    %v9319 = vrot.slane %v9270, %v9318
    %v9320 = vlaneseq
    %v9321 = vshrl.u32 %v9320, 7
    %v9322 = vsub.s32 0, %v9321
    %v9323 = vrot.slane %v9298, %v9322
    %v9324 = vlaneseq
    %v9325 = vshrl.u32 %v9324, 7
    %v9326 = vsub.s32 0, %v9325
    %v9327 = vrot.slane %v9271, %v9326
    %v9328 = vlaneseq
    %v9329 = vshrl.u32 %v9328, 7
    %v9330 = vsub.s32 0, %v9329
    %v9331 = vrot.slane %v9299, %v9330
    %v9332 = vmul.f32 %v467, %v9303
    %v9333 = vmul.f32 %v468, %v9307
    %v9334 = vmul.f32 %v469, %v9303
    %v9335 = vmul.f32 %v470, %v9307
    %v9336 = vmul.f32 %v471, %v9311
    %v9337 = vmul.f32 %v472, %v9315
    %v9338 = vmul.f32 %v473, %v9311
    %v9339 = vmul.f32 %v474, %v9315
    %v9340 = vmul.f32 %v475, %v9319
    %v9341 = vmul.f32 %v476, %v9323
    %v9342 = vmul.f32 %v477, %v9319
    %v9343 = vmul.f32 %v478, %v9323
    %v9344 = vmul.f32 %v479, %v9327
    %v9345 = vmul.f32 %v480, %v9331
    %v9346 = vmul.f32 %v481, %v9327
    %v9347 = vmul.f32 %v482, %v9331
    %9348 = vst [vmem:[#allocation8] sm:$0xff] %v9332
    %9349 = vst [vmem:[#allocation8 + $0x8] sm:$0xff] %v9333
    %9350 = vst [vmem:[#allocation8 + $0x10] sm:$0xff] %v9334
    %9351 = vst [vmem:[#allocation8 + $0x18] sm:$0xff] %v9335
    %9352 = vst [vmem:[#allocation8 + $0x20] sm:$0xff] %v9336
    %9353 = vst [vmem:[#allocation8 + $0x28] sm:$0xff] %v9337
    %9354 = vst [vmem:[#allocation8 + $0x30] sm:$0xff] %v9338
    %9355 = vst [vmem:[#allocation8 + $0x38] sm:$0xff] %v9339
    %9356 = vst [vmem:[#allocation8 + $0x40] sm:$0xff] %v9340
    %9357 = vst [vmem:[#allocation8 + $0x48] sm:$0xff] %v9341
    %9358 = vst [vmem:[#allocation8 + $0x50] sm:$0xff] %v9342
    %9359 = vst [vmem:[#allocation8 + $0x58] sm:$0xff] %v9343
    %9360 = vst [vmem:[#allocation8 + $0x60] sm:$0xff] %v9344
    %9361 = vst [vmem:[#allocation8 + $0x68] sm:$0xff] %v9345
    %9362 = vst [vmem:[#allocation8 + $0x70] sm:$0xff] %v9346
    %9363 = vst [vmem:[#allocation8 + $0x78] sm:$0xff] %v9347
    // Predicated region
    $region38: #{tpu_custom_call.1} parent=1 // pred_check
      _
    $region39: #{tpu_custom_call.1} parent=1 // pred_check_branch
      %9365 = sbr.rel (0) target = $region41
    $region40: #{tpu_custom_call.1} parent=1 // pred_region
      %s9367 = ssub.s32 2048, 2048
      %9368 = vsyncadd [#allocation5], %s9367
      %s9369 = sshll.u32 [#allocation8], 4
      %s9370 = int_to_ptr.vmem [resolvable:$true] %s9369
      %9375 = dma.vmem_to_hbm [thread:$0]  %s9370, 2048, %s7, [#allocation5], 256, 256, 16
    $region41: #{tpu_custom_call.1} parent=1 // pred_fallthru
      _
    // Predicated region
    $region42: #{tpu_custom_call.1} parent=1 // pred_check
      _
    $region43: #{tpu_custom_call.1} parent=1 // pred_check_branch
      %9377 = sbr.rel (0) target = $region45
    $region44: #{tpu_custom_call.1} parent=1 // pred_region
      %9378 = dma.done [#allocation5], 2048
    $region45: #{tpu_custom_call.1} parent=1 // pred_fallthru
      _
    %9379 = vsyncpa [#allocation4], 1
    %9380 = vsyncpa [#allocation5], 1
    %9381 = vsyncpa [#allocation6], 1

</llo_original>
